<compile_context>
chip_gen: v7x
topology: tpu7x:2x2x1
jax: 0.10.0
libtpu: 0.0.40
codegen_flags: <defaults>
</compile_context>

<pallas_src>
import functools

import numpy as np
import jax
import jax.numpy as jnp
from jax import lax
from jax.experimental import pallas as pl
from jax.experimental.pallas import tpu as pltpu


_OUT_PAD = 128          # final Cout zero-padded to a full lane register
_PY, _PX = 1, 8         # halo offsets; PX=8 keeps center stores sublane aligned


def _round_up(x, m):
    return ((x + m - 1) // m) * m


# (kernel, stride, pad, cin, cout) of the PyTorch module, in order.
def _layer_defs(input_ch, output_ch):
    return [
        (7, 1, 3, input_ch, 32),
        (3, 1, 1, 32, 32),
        (3, 2, 1, 32, 64),
        (3, 1, 1, 64, 64),
        (3, 2, 1, 64, 128),
        (3, 1, 1, 128, 128),
        (1, 1, 0, 128, output_ch),
    ]


# ------------------------------ fused kernel --------------------------------

def _jakab_kernel(xcol_ref,
                  w1, b1, w2, b2, w3, b3, w4, b4, w5, b5, w6, b6, w7, b7,
                  o_ref, buf_s1, buf_s2, *, H, W):
    # buf_s1 (bf16): activations read by the stride-1 3x3 convs (L1/L3/L5 out).
    # buf_s2 (f32) : activations read by the stride-2 3x3 convs (L2/L4 out).

    def zero_halo(buf, h, w, c):
        """Zero only the 1-pixel ring around the (h, w, c) center region."""
        zrow = jnp.zeros((1, w + 2, c), buf.dtype)
        zcol = jnp.zeros((h, 1, c), buf.dtype)
        buf[pl.ds(_PY - 1, 1), pl.ds(_PX - 1, w + 2), pl.ds(0, c)] = zrow
        buf[pl.ds(_PY + h, 1), pl.ds(_PX - 1, w + 2), pl.ds(0, c)] = zrow
        buf[pl.ds(_PY, h), pl.ds(_PX - 1, 1), pl.ds(0, c)] = zcol
        buf[pl.ds(_PY, h), pl.ds(_PX + w, 1), pl.ds(0, c)] = zcol

    def write_center(buf, val, h, w, c):
        zero_halo(buf, h, w, c)
        buf[pl.ds(_PY, h), pl.ds(_PX, w), pl.ds(0, c)] = (
            val.reshape(h, w, c).astype(buf.dtype))

    def conv3x3(buf_in, w_ref, b_ref, h_in, w_in, cin, cout, stride):
        """3x3 conv (+bias+ReLU) as ONE K-stacked MXU matmul at native res."""
        h_out, w_out = h_in // stride, w_in // stride
        taps = []
        for t in range(9):
            dy, dx = divmod(t, 3)
            r0 = _PY + dy - 1
            c0 = _PX + dx - 1
            if stride == 1:
                patch = buf_in[pl.ds(r0, h_out), pl.ds(c0, w_out),
                               pl.ds(0, cin)]
            else:   # decimating reads: only the surviving lattice is computed
                patch = buf_in[pl.ds(r0, h_out, stride=stride),
                               pl.ds(c0, w_out, stride=stride),
                               pl.ds(0, cin)]
            taps.append(patch.reshape(h_out * w_out, cin))
        slab = jnp.concatenate(taps, axis=-1)                 # (M, 9*cin)
        if slab.dtype != jnp.bfloat16:
            slab = slab.astype(jnp.bfloat16)
        acc = jnp.dot(slab, w_ref[...], preferred_element_type=jnp.float32)
        acc = acc + b_ref[...]
        return jnp.maximum(acc, 0.0), h_out, w_out

    # ---- layer 1: 7x7 conv as a single im2col matmul (K padded to 128-mult)
    a = jnp.dot(xcol_ref[0], w1[...], preferred_element_type=jnp.float32)
    a = jnp.maximum(a + b1[...], 0.0)
    write_center(buf_s1, a, H, W, 32)

    # ---- layer 2: 32->32, s=1 (reads bf16 buf, writes f32 buf) --------------
    a, h, w = conv3x3(buf_s1, w2, b2, H, W, 32, 32, 1)
    write_center(buf_s2, a, h, w, 32)
    # ---- layer 3: 32->64, s=2 ----------------------------------------------
    a, h, w = conv3x3(buf_s2, w3, b3, h, w, 32, 64, 2)
    write_center(buf_s1, a, h, w, 64)
    # ---- layer 4: 64->64, s=1 ----------------------------------------------
    a, h, w = conv3x3(buf_s1, w4, b4, h, w, 64, 64, 1)
    write_center(buf_s2, a, h, w, 64)
    # ---- layer 5: 64->128, s=2 ---------------------------------------------
    a, h, w = conv3x3(buf_s2, w5, b5, h, w, 64, 128, 2)
    write_center(buf_s1, a, h, w, 128)
    # ---- layer 6: 128->128, s=1 (result stays in registers) -----------------
    a, h, w = conv3x3(buf_s1, w6, b6, h, w, 128, 128, 1)
    # ---- layer 7: 1x1 conv, Cout zero-padded to 128 for a lane-dense store --
    out = jnp.dot(a.astype(jnp.bfloat16), w7[...],
                  preferred_element_type=jnp.float32) + b7[...]
    o_ref[0] = out.reshape(h, w, _OUT_PAD).astype(o_ref.dtype)


# ------------------------------ host wrapper --------------------------------

def _prepare_kernel_params(params):
    """Canonical HWIO/f32 params -> kernel layouts (bf16 weights, f32 biases)."""
    kp = []
    n = len(params)
    for i, (w, b) in enumerate(params):
        k, _, cin, cout = w.shape
        if i == 0:                         # 7x7 layer: (49*Cin -> pad128, 32)
            k1 = k * k * cin
            k1p = _round_up(k1, 128)
            wk = jnp.pad(w.reshape(k1, cout), ((0, k1p - k1), (0, 0)))
            bk = b.reshape(1, cout)
        elif i == n - 1:                   # 1x1 layer: pad Cout -> 128 lanes
            wk = jnp.pad(w.reshape(cin, cout), ((0, 0), (0, _OUT_PAD - cout)))
            bk = jnp.pad(b.reshape(1, cout), ((0, 0), (0, _OUT_PAD - cout)))
        else:                              # 3x3 layers: K-stacked (9*Cin, Cout)
            wk = w.reshape(k * k * cin, cout)
            bk = b.reshape(1, cout)
        kp.append(wk.astype(jnp.bfloat16))
        kp.append(bk.astype(jnp.float32))
    return tuple(kp)


def _full_block(arr):
    zeros = (0,) * arr.ndim
    return pl.BlockSpec(arr.shape, lambda n, _z=zeros: _z)


def jakab_conv_net(x_nchw, params):
    """JakabConvNet forward: (N, Cin, H, W) NCHW -> (N, Cout, H//4, W//4)."""
    output_ch = params[-1][0].shape[-1]
    assert output_ch <= _OUT_PAD
    x = jnp.transpose(x_nchw, (0, 2, 3, 1)).astype(jnp.float32)   # NHWC
    N, H, W, cin = x.shape
    assert H % 4 == 0 and W % 4 == 0, (H, W)

    # Layer-1 im2col (7x7, pad=3) as thin XLA glue; K zero-padded to 128-mult
    # so the (H*W, K) bf16 LHS of the first matmul is lane dense.
    xp = jnp.pad(x, ((0, 0), (3, 3), (3, 3), (0, 0)))
    cols = [xp[:, dy:dy + H, dx:dx + W, :] for dy in range(7) for dx in range(7)]
    x_col = jnp.concatenate(cols, axis=-1).reshape(N, H * W, 49 * cin)
    k1 = 49 * cin
    k1p = _round_up(k1, 128)
    x_col = jnp.pad(x_col, ((0, 0), (0, 0), (0, k1p - k1))).astype(jnp.bfloat16)

    kp = _prepare_kernel_params(params)
    Ho, Wo = H // 4, W // 4
    HP = H + 2 * _PY                       # rows 0 .. PY+H are touched
    WP = _round_up(_PX + W + 1, 8)         # cols PX-1 .. PX+W are touched

    out_pad = pl.pallas_call(
        functools.partial(_jakab_kernel, H=H, W=W),
        out_shape=jax.ShapeDtypeStruct((N, Ho, Wo, _OUT_PAD), jnp.float32),
        grid_spec=pltpu.PrefetchScalarGridSpec(
            num_scalar_prefetch=0,
            grid=(N,),
            in_specs=[pl.BlockSpec((1, H * W, k1p), lambda n: (n, 0, 0))]
                     + [_full_block(a) for a in kp],
            out_specs=pl.BlockSpec((1, Ho, Wo, _OUT_PAD),
                                   lambda n: (n, 0, 0, 0)),
            scratch_shapes=[
                pltpu.VMEM((HP, WP, 128), jnp.bfloat16),   # stride-1 reads
                pltpu.VMEM((HP, WP, 64), jnp.float32),     # stride-2 reads
            ],
        ),
        compiler_params=pltpu.CompilerParams(
            dimension_semantics=("parallel",),
        ),
    )(x_col, *kp)

    out = out_pad[..., :output_ch]                 # drop lane padding
    return jnp.transpose(out, (0, 3, 1, 2))        # NHWC -> NCHW


# ------------------------------ params / reference --------------------------

def init_params(key, input_ch, output_ch):
    params = []
    for i, (k, s, p, cin, cout) in enumerate(_layer_defs(input_ch, output_ch)):
        kw, kb = jax.random.split(jax.random.fold_in(key, i))
        fan_in = k * k * cin
        w = jax.random.normal(kw, (k, k, cin, cout), jnp.float32) * np.sqrt(2.0 / fan_in)
        b = 0.01 * jax.random.normal(kb, (cout,), jnp.float32)
        params.append((w, b))
    return params


def reference_forward(x_nchw, params):
    """Pure-JAX f32 reference with the exact strided convs of the PyTorch module."""
    x = jnp.transpose(x_nchw, (0, 2, 3, 1)).astype(jnp.float32)
    defs = _layer_defs(x.shape[-1], params[-1][0].shape[-1])
    for i, ((w, b), (k, s, p, cin, cout)) in enumerate(zip(params, defs)):
        y = lax.conv_general_dilated(
            x, w, window_strides=(s, s), padding=[(p, p), (p, p)],
            dimension_numbers=('NHWC', 'HWIO', 'NHWC'))
        y = y + b.reshape(1, 1, 1, -1)
        if i < len(params) - 1:
            y = jnp.maximum(y, 0.0)
        x = y
    return jnp.transpose(x, (0, 3, 1, 2))


if __name__ == "__main__":
    key = jax.random.PRNGKey(0)
    input_ch, output_ch, N = 4, 3, 2
    x = jax.random.normal(jax.random.fold_in(key, 100),
                          (N, input_ch, 16, 16), jnp.float32)
    params = init_params(key, input_ch, output_ch)

    out = jax.jit(jakab_conv_net)(x, params)
    out = jax.block_until_ready(out)
    assert out.shape == (N, output_ch, 4, 4), out.shape
    assert bool(np.all(np.isfinite(np.asarray(out))))

    # bf16 weights/activations vs f32 reference -> inference-grade tolerance.
    ref = jax.block_until_ready(reference_forward(x, params))
    np.testing.assert_allclose(np.asarray(out), np.asarray(ref),
                               rtol=5e-2, atol=5e-2)
    print("KERNEL_OK")
</pallas_src>

<mosaic_0001>
module attributes {stable_mosaic.version = 11 : i64} {
  func.func @_jakab_kernel(%arg0: i32, %arg1: memref<1x256x256xbf16, #tpu.memory_space<vmem>>, %arg2: memref<256x32xbf16, #tpu.memory_space<vmem>>, %arg3: memref<1x32xf32, #tpu.memory_space<vmem>>, %arg4: memref<288x32xbf16, #tpu.memory_space<vmem>>, %arg5: memref<1x32xf32, #tpu.memory_space<vmem>>, %arg6: memref<288x64xbf16, #tpu.memory_space<vmem>>, %arg7: memref<1x64xf32, #tpu.memory_space<vmem>>, %arg8: memref<576x64xbf16, #tpu.memory_space<vmem>>, %arg9: memref<1x64xf32, #tpu.memory_space<vmem>>, %arg10: memref<576x128xbf16, #tpu.memory_space<vmem>>, %arg11: memref<1x128xf32, #tpu.memory_space<vmem>>, %arg12: memref<1152x128xbf16, #tpu.memory_space<vmem>>, %arg13: memref<1x128xf32, #tpu.memory_space<vmem>>, %arg14: memref<128x128xbf16, #tpu.memory_space<vmem>>, %arg15: memref<1x128xf32, #tpu.memory_space<vmem>>, %arg16: memref<1x4x4x128xf32, #tpu.memory_space<vmem>>, %arg17: memref<18x32x128xbf16, #tpu.memory_space<vmem>>, %arg18: memref<18x32x64xf32, #tpu.memory_space<vmem>>) attributes {dimension_semantics = [#tpu.dimension_semantics<parallel>], iteration_bounds = array<i64: 2>, scalar_prefetch = 0 : i64, scratch_operands = 2 : i64, tpu.core_type = #tpu.core_type<tc>, window_params = [{transform_indices = @transform_0, window_bounds = array<i64: 1, 256, 256>}, {pipeline_mode = #tpu.pipeline_mode<synchronous>, transform_indices = @transform_1, window_bounds = array<i64: 256, 32>}, {pipeline_mode = #tpu.pipeline_mode<synchronous>, transform_indices = @transform_2, window_bounds = array<i64: 1, 32>}, {pipeline_mode = #tpu.pipeline_mode<synchronous>, transform_indices = @transform_3, window_bounds = array<i64: 288, 32>}, {pipeline_mode = #tpu.pipeline_mode<synchronous>, transform_indices = @transform_4, window_bounds = array<i64: 1, 32>}, {pipeline_mode = #tpu.pipeline_mode<synchronous>, transform_indices = @transform_5, window_bounds = array<i64: 288, 64>}, {pipeline_mode = #tpu.pipeline_mode<synchronous>, transform_indices = @transform_6, window_bounds = array<i64: 1, 64>}, {pipeline_mode = #tpu.pipeline_mode<synchronous>, transform_indices = @transform_7, window_bounds = array<i64: 576, 64>}, {pipeline_mode = #tpu.pipeline_mode<synchronous>, transform_indices = @transform_8, window_bounds = array<i64: 1, 64>}, {pipeline_mode = #tpu.pipeline_mode<synchronous>, transform_indices = @transform_9, window_bounds = array<i64: 576, 128>}, {pipeline_mode = #tpu.pipeline_mode<synchronous>, transform_indices = @transform_10, window_bounds = array<i64: 1, 128>}, {pipeline_mode = #tpu.pipeline_mode<synchronous>, transform_indices = @transform_11, window_bounds = array<i64: 1152, 128>}, {pipeline_mode = #tpu.pipeline_mode<synchronous>, transform_indices = @transform_12, window_bounds = array<i64: 1, 128>}, {pipeline_mode = #tpu.pipeline_mode<synchronous>, transform_indices = @transform_13, window_bounds = array<i64: 128, 128>}, {pipeline_mode = #tpu.pipeline_mode<synchronous>, transform_indices = @transform_14, window_bounds = array<i64: 1, 128>}, {transform_indices = @transform_15, window_bounds = array<i64: 1, 4, 4, 128>}]} {
    %c0 = arith.constant 0 : index
    %c0_0 = arith.constant 0 : index
    %c0_1 = arith.constant 0 : index
    %0 = vector.load %arg1[%c0, %c0_0, %c0_1] : memref<1x256x256xbf16, #tpu.memory_space<vmem>>, vector<1x256x256xbf16>
    %1 = vector.shape_cast %0 : vector<1x256x256xbf16> to vector<256x256xbf16>
    %c0_2 = arith.constant 0 : index
    %c0_3 = arith.constant 0 : index
    %2 = vector.load %arg2[%c0_2, %c0_3] : memref<256x32xbf16, #tpu.memory_space<vmem>>, vector<256x32xbf16>
    %cst = arith.constant dense<0.000000e+00> : vector<256x32xf32>
    %3 = tpu.matmul %1, %2, %cst {dimension_numbers = #tpu.dot_dimension_numbers<[1], [0], [0], [1], [0, 0, 1, 1], [], []>} : vector<256x256xbf16>, vector<256x32xbf16>, vector<256x32xf32> -> vector<256x32xf32>
    %c0_4 = arith.constant 0 : index
    %c0_5 = arith.constant 0 : index
    %4 = vector.load %arg3[%c0_4, %c0_5] : memref<1x32xf32, #tpu.memory_space<vmem>>, vector<1x32xf32>
    %5 = vector.broadcast %4 : vector<1x32xf32> to vector<256x32xf32>
    %6 = arith.addf %3, %5 : vector<256x32xf32>
    %cst_6 = arith.constant 0.000000e+00 : f32
    %7 = vector.broadcast %cst_6 : f32 to vector<256x32xf32>
    %8 = arith.maximumf %6, %7 : vector<256x32xf32>
    %cst_7 = arith.constant 0.000000e+00 : bf16
    %9 = vector.broadcast %cst_7 : bf16 to vector<1x18x32xbf16>
    %cst_8 = arith.constant 0.000000e+00 : bf16
    %10 = vector.broadcast %cst_8 : bf16 to vector<16x1x32xbf16>
    %c0_9 = arith.constant 0 : index
    %c7 = arith.constant 7 : index
    %c0_10 = arith.constant 0 : index
    %11 = vector.load %arg17[%c0_9, %c7, %c0_10] : memref<18x32x128xbf16, #tpu.memory_space<vmem>>, vector<1x18x32xbf16>
    tpu.vector_store %arg17[%c0_9, %c7, %c0_10], %9 {strides = array<i32>} : memref<18x32x128xbf16, #tpu.memory_space<vmem>>, vector<1x18x32xbf16>,
    %c17 = arith.constant 17 : index
    %c7_11 = arith.constant 7 : index
    %c0_12 = arith.constant 0 : index
    %12 = vector.load %arg17[%c17, %c7_11, %c0_12] : memref<18x32x128xbf16, #tpu.memory_space<vmem>>, vector<1x18x32xbf16>
    tpu.vector_store %arg17[%c17, %c7_11, %c0_12], %9 {strides = array<i32>} : memref<18x32x128xbf16, #tpu.memory_space<vmem>>, vector<1x18x32xbf16>,
    %c1 = arith.constant 1 : index
    %c7_13 = arith.constant 7 : index
    %c0_14 = arith.constant 0 : index
    %13 = vector.load %arg17[%c1, %c7_13, %c0_14] : memref<18x32x128xbf16, #tpu.memory_space<vmem>>, vector<16x1x32xbf16>
    tpu.vector_store %arg17[%c1, %c7_13, %c0_14], %10 {strides = array<i32>} : memref<18x32x128xbf16, #tpu.memory_space<vmem>>, vector<16x1x32xbf16>,
    %c1_15 = arith.constant 1 : index
    %c24 = arith.constant 24 : index
    %c0_16 = arith.constant 0 : index
    %14 = vector.load %arg17[%c1_15, %c24, %c0_16] : memref<18x32x128xbf16, #tpu.memory_space<vmem>>, vector<16x1x32xbf16>
    tpu.vector_store %arg17[%c1_15, %c24, %c0_16], %10 {strides = array<i32>} : memref<18x32x128xbf16, #tpu.memory_space<vmem>>, vector<16x1x32xbf16>,
    %15 = vector.shape_cast %8 : vector<256x32xf32> to vector<16x16x32xf32>
    %16 = arith.truncf %15 : vector<16x16x32xf32> to vector<16x16x32xbf16>
    %c1_17 = arith.constant 1 : index
    %c8 = arith.constant 8 : index
    %c0_18 = arith.constant 0 : index
    %17 = vector.load %arg17[%c1_17, %c8, %c0_18] : memref<18x32x128xbf16, #tpu.memory_space<vmem>>, vector<16x16x32xbf16>
    tpu.vector_store %arg17[%c1_17, %c8, %c0_18], %16 {strides = array<i32>} : memref<18x32x128xbf16, #tpu.memory_space<vmem>>, vector<16x16x32xbf16>,
    %c0_19 = arith.constant 0 : index
    %c7_20 = arith.constant 7 : index
    %c0_21 = arith.constant 0 : index
    %18 = vector.load %arg17[%c0_19, %c7_20, %c0_21] : memref<18x32x128xbf16, #tpu.memory_space<vmem>>, vector<16x16x32xbf16>
    %19 = vector.shape_cast %18 : vector<16x16x32xbf16> to vector<256x32xbf16>
    %c0_22 = arith.constant 0 : index
    %c8_23 = arith.constant 8 : index
    %c0_24 = arith.constant 0 : index
    %20 = vector.load %arg17[%c0_22, %c8_23, %c0_24] : memref<18x32x128xbf16, #tpu.memory_space<vmem>>, vector<16x16x32xbf16>
    %21 = vector.shape_cast %20 : vector<16x16x32xbf16> to vector<256x32xbf16>
    %c0_25 = arith.constant 0 : index
    %c9 = arith.constant 9 : index
    %c0_26 = arith.constant 0 : index
    %22 = vector.load %arg17[%c0_25, %c9, %c0_26] : memref<18x32x128xbf16, #tpu.memory_space<vmem>>, vector<16x16x32xbf16>
    %23 = vector.shape_cast %22 : vector<16x16x32xbf16> to vector<256x32xbf16>
    %c1_27 = arith.constant 1 : index
    %c7_28 = arith.constant 7 : index
    %c0_29 = arith.constant 0 : index
    %24 = vector.load %arg17[%c1_27, %c7_28, %c0_29] : memref<18x32x128xbf16, #tpu.memory_space<vmem>>, vector<16x16x32xbf16>
    %25 = vector.shape_cast %24 : vector<16x16x32xbf16> to vector<256x32xbf16>
    %c1_30 = arith.constant 1 : index
    %c8_31 = arith.constant 8 : index
    %c0_32 = arith.constant 0 : index
    %26 = vector.load %arg17[%c1_30, %c8_31, %c0_32] : memref<18x32x128xbf16, #tpu.memory_space<vmem>>, vector<16x16x32xbf16>
    %27 = vector.shape_cast %26 : vector<16x16x32xbf16> to vector<256x32xbf16>
    %c1_33 = arith.constant 1 : index
    %c9_34 = arith.constant 9 : index
    %c0_35 = arith.constant 0 : index
    %28 = vector.load %arg17[%c1_33, %c9_34, %c0_35] : memref<18x32x128xbf16, #tpu.memory_space<vmem>>, vector<16x16x32xbf16>
    %29 = vector.shape_cast %28 : vector<16x16x32xbf16> to vector<256x32xbf16>
    %c2 = arith.constant 2 : index
    %c7_36 = arith.constant 7 : index
    %c0_37 = arith.constant 0 : index
    %30 = vector.load %arg17[%c2, %c7_36, %c0_37] : memref<18x32x128xbf16, #tpu.memory_space<vmem>>, vector<16x16x32xbf16>
    %31 = vector.shape_cast %30 : vector<16x16x32xbf16> to vector<256x32xbf16>
    %c2_38 = arith.constant 2 : index
    %c8_39 = arith.constant 8 : index
    %c0_40 = arith.constant 0 : index
    %32 = vector.load %arg17[%c2_38, %c8_39, %c0_40] : memref<18x32x128xbf16, #tpu.memory_space<vmem>>, vector<16x16x32xbf16>
    %33 = vector.shape_cast %32 : vector<16x16x32xbf16> to vector<256x32xbf16>
    %c2_41 = arith.constant 2 : index
    %c9_42 = arith.constant 9 : index
    %c0_43 = arith.constant 0 : index
    %34 = vector.load %arg17[%c2_41, %c9_42, %c0_43] : memref<18x32x128xbf16, #tpu.memory_space<vmem>>, vector<16x16x32xbf16>
    %35 = vector.shape_cast %34 : vector<16x16x32xbf16> to vector<256x32xbf16>
    %36 = tpu.concatenate %19, %21, %23, %25, %27, %29, %31, %33, %35 in 1 : vector<256x32xbf16>, vector<256x32xbf16>, vector<256x32xbf16>, vector<256x32xbf16>, vector<256x32xbf16>, vector<256x32xbf16>, vector<256x32xbf16>, vector<256x32xbf16>, vector<256x32xbf16> -> vector<256x288xbf16>
    %c0_44 = arith.constant 0 : index
    %c0_45 = arith.constant 0 : index
    %37 = vector.load %arg4[%c0_44, %c0_45] : memref<288x32xbf16, #tpu.memory_space<vmem>>, vector<288x32xbf16>
    %cst_46 = arith.constant dense<0.000000e+00> : vector<256x32xf32>
    %38 = tpu.matmul %36, %37, %cst_46 {dimension_numbers = #tpu.dot_dimension_numbers<[1], [0], [0], [1], [0, 0, 1, 1], [], []>} : vector<256x288xbf16>, vector<288x32xbf16>, vector<256x32xf32> -> vector<256x32xf32>
    %c0_47 = arith.constant 0 : index
    %c0_48 = arith.constant 0 : index
    %39 = vector.load %arg5[%c0_47, %c0_48] : memref<1x32xf32, #tpu.memory_space<vmem>>, vector<1x32xf32>
    %40 = vector.broadcast %39 : vector<1x32xf32> to vector<256x32xf32>
    %41 = arith.addf %38, %40 : vector<256x32xf32>
    %cst_49 = arith.constant 0.000000e+00 : f32
    %42 = vector.broadcast %cst_49 : f32 to vector<256x32xf32>
    %43 = arith.maximumf %41, %42 : vector<256x32xf32>
    %cst_50 = arith.constant 0.000000e+00 : f32
    %44 = vector.broadcast %cst_50 : f32 to vector<1x18x32xf32>
    %cst_51 = arith.constant 0.000000e+00 : f32
    %45 = vector.broadcast %cst_51 : f32 to vector<16x1x32xf32>
    %c0_52 = arith.constant 0 : index
    %c7_53 = arith.constant 7 : index
    %c0_54 = arith.constant 0 : index
    %46 = vector.load %arg18[%c0_52, %c7_53, %c0_54] : memref<18x32x64xf32, #tpu.memory_space<vmem>>, vector<1x18x32xf32>
    tpu.vector_store %arg18[%c0_52, %c7_53, %c0_54], %44 {strides = array<i32>} : memref<18x32x64xf32, #tpu.memory_space<vmem>>, vector<1x18x32xf32>,
    %c17_55 = arith.constant 17 : index
    %c7_56 = arith.constant 7 : index
    %c0_57 = arith.constant 0 : index
    %47 = vector.load %arg18[%c17_55, %c7_56, %c0_57] : memref<18x32x64xf32, #tpu.memory_space<vmem>>, vector<1x18x32xf32>
    tpu.vector_store %arg18[%c17_55, %c7_56, %c0_57], %44 {strides = array<i32>} : memref<18x32x64xf32, #tpu.memory_space<vmem>>, vector<1x18x32xf32>,
    %c1_58 = arith.constant 1 : index
    %c7_59 = arith.constant 7 : index
    %c0_60 = arith.constant 0 : index
    %48 = vector.load %arg18[%c1_58, %c7_59, %c0_60] : memref<18x32x64xf32, #tpu.memory_space<vmem>>, vector<16x1x32xf32>
    tpu.vector_store %arg18[%c1_58, %c7_59, %c0_60], %45 {strides = array<i32>} : memref<18x32x64xf32, #tpu.memory_space<vmem>>, vector<16x1x32xf32>,
    %c1_61 = arith.constant 1 : index
    %c24_62 = arith.constant 24 : index
    %c0_63 = arith.constant 0 : index
    %49 = vector.load %arg18[%c1_61, %c24_62, %c0_63] : memref<18x32x64xf32, #tpu.memory_space<vmem>>, vector<16x1x32xf32>
    tpu.vector_store %arg18[%c1_61, %c24_62, %c0_63], %45 {strides = array<i32>} : memref<18x32x64xf32, #tpu.memory_space<vmem>>, vector<16x1x32xf32>,
    %50 = vector.shape_cast %43 : vector<256x32xf32> to vector<16x16x32xf32>
    %c1_64 = arith.constant 1 : index
    %c8_65 = arith.constant 8 : index
    %c0_66 = arith.constant 0 : index
    %51 = vector.load %arg18[%c1_64, %c8_65, %c0_66] : memref<18x32x64xf32, #tpu.memory_space<vmem>>, vector<16x16x32xf32>
    tpu.vector_store %arg18[%c1_64, %c8_65, %c0_66], %50 {strides = array<i32>} : memref<18x32x64xf32, #tpu.memory_space<vmem>>, vector<16x16x32xf32>,
    %c0_67 = arith.constant 0 : index
    %c7_68 = arith.constant 7 : index
    %c0_69 = arith.constant 0 : index
    %52 = tpu.strided_load %arg18[%c0_67, %c7_68, %c0_69] {strides = array<i32: 2, 2, 1>} : memref<18x32x64xf32, #tpu.memory_space<vmem>>, vector<8x8x32xf32>
    %53 = vector.shape_cast %52 : vector<8x8x32xf32> to vector<64x32xf32>
    %c0_70 = arith.constant 0 : index
    %c8_71 = arith.constant 8 : index
    %c0_72 = arith.constant 0 : index
    %54 = tpu.strided_load %arg18[%c0_70, %c8_71, %c0_72] {strides = array<i32: 2, 2, 1>} : memref<18x32x64xf32, #tpu.memory_space<vmem>>, vector<8x8x32xf32>
    %55 = vector.shape_cast %54 : vector<8x8x32xf32> to vector<64x32xf32>
    %c0_73 = arith.constant 0 : index
    %c9_74 = arith.constant 9 : index
    %c0_75 = arith.constant 0 : index
    %56 = tpu.strided_load %arg18[%c0_73, %c9_74, %c0_75] {strides = array<i32: 2, 2, 1>} : memref<18x32x64xf32, #tpu.memory_space<vmem>>, vector<8x8x32xf32>
    %57 = vector.shape_cast %56 : vector<8x8x32xf32> to vector<64x32xf32>
    %c1_76 = arith.constant 1 : index
    %c7_77 = arith.constant 7 : index
    %c0_78 = arith.constant 0 : index
    %58 = tpu.strided_load %arg18[%c1_76, %c7_77, %c0_78] {strides = array<i32: 2, 2, 1>} : memref<18x32x64xf32, #tpu.memory_space<vmem>>, vector<8x8x32xf32>
    %59 = vector.shape_cast %58 : vector<8x8x32xf32> to vector<64x32xf32>
    %c1_79 = arith.constant 1 : index
    %c8_80 = arith.constant 8 : index
    %c0_81 = arith.constant 0 : index
    %60 = tpu.strided_load %arg18[%c1_79, %c8_80, %c0_81] {strides = array<i32: 2, 2, 1>} : memref<18x32x64xf32, #tpu.memory_space<vmem>>, vector<8x8x32xf32>
    %61 = vector.shape_cast %60 : vector<8x8x32xf32> to vector<64x32xf32>
    %c1_82 = arith.constant 1 : index
    %c9_83 = arith.constant 9 : index
    %c0_84 = arith.constant 0 : index
    %62 = tpu.strided_load %arg18[%c1_82, %c9_83, %c0_84] {strides = array<i32: 2, 2, 1>} : memref<18x32x64xf32, #tpu.memory_space<vmem>>, vector<8x8x32xf32>
    %63 = vector.shape_cast %62 : vector<8x8x32xf32> to vector<64x32xf32>
    %c2_85 = arith.constant 2 : index
    %c7_86 = arith.constant 7 : index
    %c0_87 = arith.constant 0 : index
    %64 = tpu.strided_load %arg18[%c2_85, %c7_86, %c0_87] {strides = array<i32: 2, 2, 1>} : memref<18x32x64xf32, #tpu.memory_space<vmem>>, vector<8x8x32xf32>
    %65 = vector.shape_cast %64 : vector<8x8x32xf32> to vector<64x32xf32>
    %c2_88 = arith.constant 2 : index
    %c8_89 = arith.constant 8 : index
    %c0_90 = arith.constant 0 : index
    %66 = tpu.strided_load %arg18[%c2_88, %c8_89, %c0_90] {strides = array<i32: 2, 2, 1>} : memref<18x32x64xf32, #tpu.memory_space<vmem>>, vector<8x8x32xf32>
    %67 = vector.shape_cast %66 : vector<8x8x32xf32> to vector<64x32xf32>
    %c2_91 = arith.constant 2 : index
    %c9_92 = arith.constant 9 : index
    %c0_93 = arith.constant 0 : index
    %68 = tpu.strided_load %arg18[%c2_91, %c9_92, %c0_93] {strides = array<i32: 2, 2, 1>} : memref<18x32x64xf32, #tpu.memory_space<vmem>>, vector<8x8x32xf32>
    %69 = vector.shape_cast %68 : vector<8x8x32xf32> to vector<64x32xf32>
    %70 = tpu.concatenate %53, %55, %57, %59, %61, %63, %65, %67, %69 in 1 : vector<64x32xf32>, vector<64x32xf32>, vector<64x32xf32>, vector<64x32xf32>, vector<64x32xf32>, vector<64x32xf32>, vector<64x32xf32>, vector<64x32xf32>, vector<64x32xf32> -> vector<64x288xf32>
    %71 = arith.truncf %70 : vector<64x288xf32> to vector<64x288xbf16>
    %c0_94 = arith.constant 0 : index
    %c0_95 = arith.constant 0 : index
    %72 = vector.load %arg6[%c0_94, %c0_95] : memref<288x64xbf16, #tpu.memory_space<vmem>>, vector<288x64xbf16>
    %cst_96 = arith.constant dense<0.000000e+00> : vector<64x64xf32>
    %73 = tpu.matmul %71, %72, %cst_96 {dimension_numbers = #tpu.dot_dimension_numbers<[1], [0], [0], [1], [0, 0, 1, 1], [], []>} : vector<64x288xbf16>, vector<288x64xbf16>, vector<64x64xf32> -> vector<64x64xf32>
    %c0_97 = arith.constant 0 : index
    %c0_98 = arith.constant 0 : index
    %74 = vector.load %arg7[%c0_97, %c0_98] : memref<1x64xf32, #tpu.memory_space<vmem>>, vector<1x64xf32>
    %75 = vector.broadcast %74 : vector<1x64xf32> to vector<64x64xf32>
    %76 = arith.addf %73, %75 : vector<64x64xf32>
    %cst_99 = arith.constant 0.000000e+00 : f32
    %77 = vector.broadcast %cst_99 : f32 to vector<64x64xf32>
    %78 = arith.maximumf %76, %77 : vector<64x64xf32>
    %cst_100 = arith.constant 0.000000e+00 : bf16
    %79 = vector.broadcast %cst_100 : bf16 to vector<1x10x64xbf16>
    %cst_101 = arith.constant 0.000000e+00 : bf16
    %80 = vector.broadcast %cst_101 : bf16 to vector<8x1x64xbf16>
    %c0_102 = arith.constant 0 : index
    %c7_103 = arith.constant 7 : index
    %c0_104 = arith.constant 0 : index
    %81 = vector.load %arg17[%c0_102, %c7_103, %c0_104] : memref<18x32x128xbf16, #tpu.memory_space<vmem>>, vector<1x10x64xbf16>
    tpu.vector_store %arg17[%c0_102, %c7_103, %c0_104], %79 {strides = array<i32>} : memref<18x32x128xbf16, #tpu.memory_space<vmem>>, vector<1x10x64xbf16>,
    %c9_105 = arith.constant 9 : index
    %c7_106 = arith.constant 7 : index
    %c0_107 = arith.constant 0 : index
    %82 = vector.load %arg17[%c9_105, %c7_106, %c0_107] : memref<18x32x128xbf16, #tpu.memory_space<vmem>>, vector<1x10x64xbf16>
    tpu.vector_store %arg17[%c9_105, %c7_106, %c0_107], %79 {strides = array<i32>} : memref<18x32x128xbf16, #tpu.memory_space<vmem>>, vector<1x10x64xbf16>,
    %c1_108 = arith.constant 1 : index
    %c7_109 = arith.constant 7 : index
    %c0_110 = arith.constant 0 : index
    %83 = vector.load %arg17[%c1_108, %c7_109, %c0_110] : memref<18x32x128xbf16, #tpu.memory_space<vmem>>, vector<8x1x64xbf16>
    tpu.vector_store %arg17[%c1_108, %c7_109, %c0_110], %80 {strides = array<i32>} : memref<18x32x128xbf16, #tpu.memory_space<vmem>>, vector<8x1x64xbf16>,
    %c1_111 = arith.constant 1 : index
    %c16 = arith.constant 16 : index
    %c0_112 = arith.constant 0 : index
    %84 = vector.load %arg17[%c1_111, %c16, %c0_112] : memref<18x32x128xbf16, #tpu.memory_space<vmem>>, vector<8x1x64xbf16>
    tpu.vector_store %arg17[%c1_111, %c16, %c0_112], %80 {strides = array<i32>} : memref<18x32x128xbf16, #tpu.memory_space<vmem>>, vector<8x1x64xbf16>,
    %85 = vector.shape_cast %78 : vector<64x64xf32> to vector<8x8x64xf32>
    %86 = arith.truncf %85 : vector<8x8x64xf32> to vector<8x8x64xbf16>
    %c1_113 = arith.constant 1 : index
    %c8_114 = arith.constant 8 : index
    %c0_115 = arith.constant 0 : index
    %87 = vector.load %arg17[%c1_113, %c8_114, %c0_115] : memref<18x32x128xbf16, #tpu.memory_space<vmem>>, vector<8x8x64xbf16>
    tpu.vector_store %arg17[%c1_113, %c8_114, %c0_115], %86 {strides = array<i32>} : memref<18x32x128xbf16, #tpu.memory_space<vmem>>, vector<8x8x64xbf16>,
    %c0_116 = arith.constant 0 : index
    %c7_117 = arith.constant 7 : index
    %c0_118 = arith.constant 0 : index
    %88 = vector.load %arg17[%c0_116, %c7_117, %c0_118] : memref<18x32x128xbf16, #tpu.memory_space<vmem>>, vector<8x8x64xbf16>
    %89 = vector.shape_cast %88 : vector<8x8x64xbf16> to vector<64x64xbf16>
    %c0_119 = arith.constant 0 : index
    %c8_120 = arith.constant 8 : index
    %c0_121 = arith.constant 0 : index
    %90 = vector.load %arg17[%c0_119, %c8_120, %c0_121] : memref<18x32x128xbf16, #tpu.memory_space<vmem>>, vector<8x8x64xbf16>
    %91 = vector.shape_cast %90 : vector<8x8x64xbf16> to vector<64x64xbf16>
    %c0_122 = arith.constant 0 : index
    %c9_123 = arith.constant 9 : index
    %c0_124 = arith.constant 0 : index
    %92 = vector.load %arg17[%c0_122, %c9_123, %c0_124] : memref<18x32x128xbf16, #tpu.memory_space<vmem>>, vector<8x8x64xbf16>
    %93 = vector.shape_cast %92 : vector<8x8x64xbf16> to vector<64x64xbf16>
    %c1_125 = arith.constant 1 : index
    %c7_126 = arith.constant 7 : index
    %c0_127 = arith.constant 0 : index
    %94 = vector.load %arg17[%c1_125, %c7_126, %c0_127] : memref<18x32x128xbf16, #tpu.memory_space<vmem>>, vector<8x8x64xbf16>
    %95 = vector.shape_cast %94 : vector<8x8x64xbf16> to vector<64x64xbf16>
    %c1_128 = arith.constant 1 : index
    %c8_129 = arith.constant 8 : index
    %c0_130 = arith.constant 0 : index
    %96 = vector.load %arg17[%c1_128, %c8_129, %c0_130] : memref<18x32x128xbf16, #tpu.memory_space<vmem>>, vector<8x8x64xbf16>
    %97 = vector.shape_cast %96 : vector<8x8x64xbf16> to vector<64x64xbf16>
    %c1_131 = arith.constant 1 : index
    %c9_132 = arith.constant 9 : index
    %c0_133 = arith.constant 0 : index
    %98 = vector.load %arg17[%c1_131, %c9_132, %c0_133] : memref<18x32x128xbf16, #tpu.memory_space<vmem>>, vector<8x8x64xbf16>
    %99 = vector.shape_cast %98 : vector<8x8x64xbf16> to vector<64x64xbf16>
    %c2_134 = arith.constant 2 : index
    %c7_135 = arith.constant 7 : index
    %c0_136 = arith.constant 0 : index
    %100 = vector.load %arg17[%c2_134, %c7_135, %c0_136] : memref<18x32x128xbf16, #tpu.memory_space<vmem>>, vector<8x8x64xbf16>
    %101 = vector.shape_cast %100 : vector<8x8x64xbf16> to vector<64x64xbf16>
    %c2_137 = arith.constant 2 : index
    %c8_138 = arith.constant 8 : index
    %c0_139 = arith.constant 0 : index
    %102 = vector.load %arg17[%c2_137, %c8_138, %c0_139] : memref<18x32x128xbf16, #tpu.memory_space<vmem>>, vector<8x8x64xbf16>
    %103 = vector.shape_cast %102 : vector<8x8x64xbf16> to vector<64x64xbf16>
    %c2_140 = arith.constant 2 : index
    %c9_141 = arith.constant 9 : index
    %c0_142 = arith.constant 0 : index
    %104 = vector.load %arg17[%c2_140, %c9_141, %c0_142] : memref<18x32x128xbf16, #tpu.memory_space<vmem>>, vector<8x8x64xbf16>
    %105 = vector.shape_cast %104 : vector<8x8x64xbf16> to vector<64x64xbf16>
    %106 = tpu.concatenate %89, %91, %93, %95, %97, %99, %101, %103, %105 in 1 : vector<64x64xbf16>, vector<64x64xbf16>, vector<64x64xbf16>, vector<64x64xbf16>, vector<64x64xbf16>, vector<64x64xbf16>, vector<64x64xbf16>, vector<64x64xbf16>, vector<64x64xbf16> -> vector<64x576xbf16>
    %c0_143 = arith.constant 0 : index
    %c0_144 = arith.constant 0 : index
    %107 = vector.load %arg8[%c0_143, %c0_144] : memref<576x64xbf16, #tpu.memory_space<vmem>>, vector<576x64xbf16>
    %cst_145 = arith.constant dense<0.000000e+00> : vector<64x64xf32>
    %108 = tpu.matmul %106, %107, %cst_145 {dimension_numbers = #tpu.dot_dimension_numbers<[1], [0], [0], [1], [0, 0, 1, 1], [], []>} : vector<64x576xbf16>, vector<576x64xbf16>, vector<64x64xf32> -> vector<64x64xf32>
    %c0_146 = arith.constant 0 : index
    %c0_147 = arith.constant 0 : index
    %109 = vector.load %arg9[%c0_146, %c0_147] : memref<1x64xf32, #tpu.memory_space<vmem>>, vector<1x64xf32>
    %110 = vector.broadcast %109 : vector<1x64xf32> to vector<64x64xf32>
    %111 = arith.addf %108, %110 : vector<64x64xf32>
    %cst_148 = arith.constant 0.000000e+00 : f32
    %112 = vector.broadcast %cst_148 : f32 to vector<64x64xf32>
    %113 = arith.maximumf %111, %112 : vector<64x64xf32>
    %cst_149 = arith.constant 0.000000e+00 : f32
    %114 = vector.broadcast %cst_149 : f32 to vector<1x10x64xf32>
    %cst_150 = arith.constant 0.000000e+00 : f32
    %115 = vector.broadcast %cst_150 : f32 to vector<8x1x64xf32>
    %c0_151 = arith.constant 0 : index
    %c7_152 = arith.constant 7 : index
    %c0_153 = arith.constant 0 : index
    %116 = vector.load %arg18[%c0_151, %c7_152, %c0_153] : memref<18x32x64xf32, #tpu.memory_space<vmem>>, vector<1x10x64xf32>
    tpu.vector_store %arg18[%c0_151, %c7_152, %c0_153], %114 {strides = array<i32>} : memref<18x32x64xf32, #tpu.memory_space<vmem>>, vector<1x10x64xf32>,
    %c9_154 = arith.constant 9 : index
    %c7_155 = arith.constant 7 : index
    %c0_156 = arith.constant 0 : index
    %117 = vector.load %arg18[%c9_154, %c7_155, %c0_156] : memref<18x32x64xf32, #tpu.memory_space<vmem>>, vector<1x10x64xf32>
    tpu.vector_store %arg18[%c9_154, %c7_155, %c0_156], %114 {strides = array<i32>} : memref<18x32x64xf32, #tpu.memory_space<vmem>>, vector<1x10x64xf32>,
    %c1_157 = arith.constant 1 : index
    %c7_158 = arith.constant 7 : index
    %c0_159 = arith.constant 0 : index
    %118 = vector.load %arg18[%c1_157, %c7_158, %c0_159] : memref<18x32x64xf32, #tpu.memory_space<vmem>>, vector<8x1x64xf32>
    tpu.vector_store %arg18[%c1_157, %c7_158, %c0_159], %115 {strides = array<i32>} : memref<18x32x64xf32, #tpu.memory_space<vmem>>, vector<8x1x64xf32>,
    %c1_160 = arith.constant 1 : index
    %c16_161 = arith.constant 16 : index
    %c0_162 = arith.constant 0 : index
    %119 = vector.load %arg18[%c1_160, %c16_161, %c0_162] : memref<18x32x64xf32, #tpu.memory_space<vmem>>, vector<8x1x64xf32>
    tpu.vector_store %arg18[%c1_160, %c16_161, %c0_162], %115 {strides = array<i32>} : memref<18x32x64xf32, #tpu.memory_space<vmem>>, vector<8x1x64xf32>,
    %120 = vector.shape_cast %113 : vector<64x64xf32> to vector<8x8x64xf32>
    %c1_163 = arith.constant 1 : index
    %c8_164 = arith.constant 8 : index
    %c0_165 = arith.constant 0 : index
    %121 = vector.load %arg18[%c1_163, %c8_164, %c0_165] : memref<18x32x64xf32, #tpu.memory_space<vmem>>, vector<8x8x64xf32>
    tpu.vector_store %arg18[%c1_163, %c8_164, %c0_165], %120 {strides = array<i32>} : memref<18x32x64xf32, #tpu.memory_space<vmem>>, vector<8x8x64xf32>,
    %c0_166 = arith.constant 0 : index
    %c7_167 = arith.constant 7 : index
    %c0_168 = arith.constant 0 : index
    %122 = tpu.strided_load %arg18[%c0_166, %c7_167, %c0_168] {strides = array<i32: 2, 2, 1>} : memref<18x32x64xf32, #tpu.memory_space<vmem>>, vector<4x4x64xf32>
    %123 = vector.shape_cast %122 : vector<4x4x64xf32> to vector<16x64xf32>
    %c0_169 = arith.constant 0 : index
    %c8_170 = arith.constant 8 : index
    %c0_171 = arith.constant 0 : index
    %124 = tpu.strided_load %arg18[%c0_169, %c8_170, %c0_171] {strides = array<i32: 2, 2, 1>} : memref<18x32x64xf32, #tpu.memory_space<vmem>>, vector<4x4x64xf32>
    %125 = vector.shape_cast %124 : vector<4x4x64xf32> to vector<16x64xf32>
    %c0_172 = arith.constant 0 : index
    %c9_173 = arith.constant 9 : index
    %c0_174 = arith.constant 0 : index
    %126 = tpu.strided_load %arg18[%c0_172, %c9_173, %c0_174] {strides = array<i32: 2, 2, 1>} : memref<18x32x64xf32, #tpu.memory_space<vmem>>, vector<4x4x64xf32>
    %127 = vector.shape_cast %126 : vector<4x4x64xf32> to vector<16x64xf32>
    %c1_175 = arith.constant 1 : index
    %c7_176 = arith.constant 7 : index
    %c0_177 = arith.constant 0 : index
    %128 = tpu.strided_load %arg18[%c1_175, %c7_176, %c0_177] {strides = array<i32: 2, 2, 1>} : memref<18x32x64xf32, #tpu.memory_space<vmem>>, vector<4x4x64xf32>
    %129 = vector.shape_cast %128 : vector<4x4x64xf32> to vector<16x64xf32>
    %c1_178 = arith.constant 1 : index
    %c8_179 = arith.constant 8 : index
    %c0_180 = arith.constant 0 : index
    %130 = tpu.strided_load %arg18[%c1_178, %c8_179, %c0_180] {strides = array<i32: 2, 2, 1>} : memref<18x32x64xf32, #tpu.memory_space<vmem>>, vector<4x4x64xf32>
    %131 = vector.shape_cast %130 : vector<4x4x64xf32> to vector<16x64xf32>
    %c1_181 = arith.constant 1 : index
    %c9_182 = arith.constant 9 : index
    %c0_183 = arith.constant 0 : index
    %132 = tpu.strided_load %arg18[%c1_181, %c9_182, %c0_183] {strides = array<i32: 2, 2, 1>} : memref<18x32x64xf32, #tpu.memory_space<vmem>>, vector<4x4x64xf32>
    %133 = vector.shape_cast %132 : vector<4x4x64xf32> to vector<16x64xf32>
    %c2_184 = arith.constant 2 : index
    %c7_185 = arith.constant 7 : index
    %c0_186 = arith.constant 0 : index
    %134 = tpu.strided_load %arg18[%c2_184, %c7_185, %c0_186] {strides = array<i32: 2, 2, 1>} : memref<18x32x64xf32, #tpu.memory_space<vmem>>, vector<4x4x64xf32>
    %135 = vector.shape_cast %134 : vector<4x4x64xf32> to vector<16x64xf32>
    %c2_187 = arith.constant 2 : index
    %c8_188 = arith.constant 8 : index
    %c0_189 = arith.constant 0 : index
    %136 = tpu.strided_load %arg18[%c2_187, %c8_188, %c0_189] {strides = array<i32: 2, 2, 1>} : memref<18x32x64xf32, #tpu.memory_space<vmem>>, vector<4x4x64xf32>
    %137 = vector.shape_cast %136 : vector<4x4x64xf32> to vector<16x64xf32>
    %c2_190 = arith.constant 2 : index
    %c9_191 = arith.constant 9 : index
    %c0_192 = arith.constant 0 : index
    %138 = tpu.strided_load %arg18[%c2_190, %c9_191, %c0_192] {strides = array<i32: 2, 2, 1>} : memref<18x32x64xf32, #tpu.memory_space<vmem>>, vector<4x4x64xf32>
    %139 = vector.shape_cast %138 : vector<4x4x64xf32> to vector<16x64xf32>
    %140 = tpu.concatenate %123, %125, %127, %129, %131, %133, %135, %137, %139 in 1 : vector<16x64xf32>, vector<16x64xf32>, vector<16x64xf32>, vector<16x64xf32>, vector<16x64xf32>, vector<16x64xf32>, vector<16x64xf32>, vector<16x64xf32>, vector<16x64xf32> -> vector<16x576xf32>
    %141 = arith.truncf %140 : vector<16x576xf32> to vector<16x576xbf16>
    %c0_193 = arith.constant 0 : index
    %c0_194 = arith.constant 0 : index
    %142 = vector.load %arg10[%c0_193, %c0_194] : memref<576x128xbf16, #tpu.memory_space<vmem>>, vector<576x128xbf16>
    %cst_195 = arith.constant dense<0.000000e+00> : vector<16x128xf32>
    %143 = tpu.matmul %141, %142, %cst_195 {dimension_numbers = #tpu.dot_dimension_numbers<[1], [0], [0], [1], [0, 0, 1, 1], [], []>} : vector<16x576xbf16>, vector<576x128xbf16>, vector<16x128xf32> -> vector<16x128xf32>
    %c0_196 = arith.constant 0 : index
    %c0_197 = arith.constant 0 : index
    %144 = vector.load %arg11[%c0_196, %c0_197] : memref<1x128xf32, #tpu.memory_space<vmem>>, vector<1x128xf32>
    %145 = vector.broadcast %144 : vector<1x128xf32> to vector<16x128xf32>
    %146 = arith.addf %143, %145 : vector<16x128xf32>
    %cst_198 = arith.constant 0.000000e+00 : f32
    %147 = vector.broadcast %cst_198 : f32 to vector<16x128xf32>
    %148 = arith.maximumf %146, %147 : vector<16x128xf32>
    %cst_199 = arith.constant 0.000000e+00 : bf16
    %149 = vector.broadcast %cst_199 : bf16 to vector<1x6x128xbf16>
    %cst_200 = arith.constant 0.000000e+00 : bf16
    %150 = vector.broadcast %cst_200 : bf16 to vector<4x1x128xbf16>
    %c0_201 = arith.constant 0 : index
    %c7_202 = arith.constant 7 : index
    %c0_203 = arith.constant 0 : index
    %151 = vector.load %arg17[%c0_201, %c7_202, %c0_203] : memref<18x32x128xbf16, #tpu.memory_space<vmem>>, vector<1x6x128xbf16>
    tpu.vector_store %arg17[%c0_201, %c7_202, %c0_203], %149 {strides = array<i32>} : memref<18x32x128xbf16, #tpu.memory_space<vmem>>, vector<1x6x128xbf16>,
    %c5 = arith.constant 5 : index
    %c7_204 = arith.constant 7 : index
    %c0_205 = arith.constant 0 : index
    %152 = vector.load %arg17[%c5, %c7_204, %c0_205] : memref<18x32x128xbf16, #tpu.memory_space<vmem>>, vector<1x6x128xbf16>
    tpu.vector_store %arg17[%c5, %c7_204, %c0_205], %149 {strides = array<i32>} : memref<18x32x128xbf16, #tpu.memory_space<vmem>>, vector<1x6x128xbf16>,
    %c1_206 = arith.constant 1 : index
    %c7_207 = arith.constant 7 : index
    %c0_208 = arith.constant 0 : index
    %153 = vector.load %arg17[%c1_206, %c7_207, %c0_208] : memref<18x32x128xbf16, #tpu.memory_space<vmem>>, vector<4x1x128xbf16>
    tpu.vector_store %arg17[%c1_206, %c7_207, %c0_208], %150 {strides = array<i32>} : memref<18x32x128xbf16, #tpu.memory_space<vmem>>, vector<4x1x128xbf16>,
    %c1_209 = arith.constant 1 : index
    %c12 = arith.constant 12 : index
    %c0_210 = arith.constant 0 : index
    %154 = vector.load %arg17[%c1_209, %c12, %c0_210] : memref<18x32x128xbf16, #tpu.memory_space<vmem>>, vector<4x1x128xbf16>
    tpu.vector_store %arg17[%c1_209, %c12, %c0_210], %150 {strides = array<i32>} : memref<18x32x128xbf16, #tpu.memory_space<vmem>>, vector<4x1x128xbf16>,
    %155 = vector.shape_cast %148 : vector<16x128xf32> to vector<4x4x128xf32>
    %156 = arith.truncf %155 : vector<4x4x128xf32> to vector<4x4x128xbf16>
    %c1_211 = arith.constant 1 : index
    %c8_212 = arith.constant 8 : index
    %c0_213 = arith.constant 0 : index
    %157 = vector.load %arg17[%c1_211, %c8_212, %c0_213] : memref<18x32x128xbf16, #tpu.memory_space<vmem>>, vector<4x4x128xbf16>
    tpu.vector_store %arg17[%c1_211, %c8_212, %c0_213], %156 {strides = array<i32>} : memref<18x32x128xbf16, #tpu.memory_space<vmem>>, vector<4x4x128xbf16>,
    %c0_214 = arith.constant 0 : index
    %c7_215 = arith.constant 7 : index
    %c0_216 = arith.constant 0 : index
    %158 = vector.load %arg17[%c0_214, %c7_215, %c0_216] : memref<18x32x128xbf16, #tpu.memory_space<vmem>>, vector<4x4x128xbf16>
    %159 = vector.shape_cast %158 : vector<4x4x128xbf16> to vector<16x128xbf16>
    %c0_217 = arith.constant 0 : index
    %c8_218 = arith.constant 8 : index
    %c0_219 = arith.constant 0 : index
    %160 = vector.load %arg17[%c0_217, %c8_218, %c0_219] : memref<18x32x128xbf16, #tpu.memory_space<vmem>>, vector<4x4x128xbf16>
    %161 = vector.shape_cast %160 : vector<4x4x128xbf16> to vector<16x128xbf16>
    %c0_220 = arith.constant 0 : index
    %c9_221 = arith.constant 9 : index
    %c0_222 = arith.constant 0 : index
    %162 = vector.load %arg17[%c0_220, %c9_221, %c0_222] : memref<18x32x128xbf16, #tpu.memory_space<vmem>>, vector<4x4x128xbf16>
    %163 = vector.shape_cast %162 : vector<4x4x128xbf16> to vector<16x128xbf16>
    %c1_223 = arith.constant 1 : index
    %c7_224 = arith.constant 7 : index
    %c0_225 = arith.constant 0 : index
    %164 = vector.load %arg17[%c1_223, %c7_224, %c0_225] : memref<18x32x128xbf16, #tpu.memory_space<vmem>>, vector<4x4x128xbf16>
    %165 = vector.shape_cast %164 : vector<4x4x128xbf16> to vector<16x128xbf16>
    %c1_226 = arith.constant 1 : index
    %c8_227 = arith.constant 8 : index
    %c0_228 = arith.constant 0 : index
    %166 = vector.load %arg17[%c1_226, %c8_227, %c0_228] : memref<18x32x128xbf16, #tpu.memory_space<vmem>>, vector<4x4x128xbf16>
    %167 = vector.shape_cast %166 : vector<4x4x128xbf16> to vector<16x128xbf16>
    %c1_229 = arith.constant 1 : index
    %c9_230 = arith.constant 9 : index
    %c0_231 = arith.constant 0 : index
    %168 = vector.load %arg17[%c1_229, %c9_230, %c0_231] : memref<18x32x128xbf16, #tpu.memory_space<vmem>>, vector<4x4x128xbf16>
    %169 = vector.shape_cast %168 : vector<4x4x128xbf16> to vector<16x128xbf16>
    %c2_232 = arith.constant 2 : index
    %c7_233 = arith.constant 7 : index
    %c0_234 = arith.constant 0 : index
    %170 = vector.load %arg17[%c2_232, %c7_233, %c0_234] : memref<18x32x128xbf16, #tpu.memory_space<vmem>>, vector<4x4x128xbf16>
    %171 = vector.shape_cast %170 : vector<4x4x128xbf16> to vector<16x128xbf16>
    %c2_235 = arith.constant 2 : index
    %c8_236 = arith.constant 8 : index
    %c0_237 = arith.constant 0 : index
    %172 = vector.load %arg17[%c2_235, %c8_236, %c0_237] : memref<18x32x128xbf16, #tpu.memory_space<vmem>>, vector<4x4x128xbf16>
    %173 = vector.shape_cast %172 : vector<4x4x128xbf16> to vector<16x128xbf16>
    %c2_238 = arith.constant 2 : index
    %c9_239 = arith.constant 9 : index
    %c0_240 = arith.constant 0 : index
    %174 = vector.load %arg17[%c2_238, %c9_239, %c0_240] : memref<18x32x128xbf16, #tpu.memory_space<vmem>>, vector<4x4x128xbf16>
    %175 = vector.shape_cast %174 : vector<4x4x128xbf16> to vector<16x128xbf16>
    %176 = tpu.concatenate %159, %161, %163, %165, %167, %169, %171, %173, %175 in 1 : vector<16x128xbf16>, vector<16x128xbf16>, vector<16x128xbf16>, vector<16x128xbf16>, vector<16x128xbf16>, vector<16x128xbf16>, vector<16x128xbf16>, vector<16x128xbf16>, vector<16x128xbf16> -> vector<16x1152xbf16>
    %c0_241 = arith.constant 0 : index
    %c0_242 = arith.constant 0 : index
    %177 = vector.load %arg12[%c0_241, %c0_242] : memref<1152x128xbf16, #tpu.memory_space<vmem>>, vector<1152x128xbf16>
    %cst_243 = arith.constant dense<0.000000e+00> : vector<16x128xf32>
    %178 = tpu.matmul %176, %177, %cst_243 {dimension_numbers = #tpu.dot_dimension_numbers<[1], [0], [0], [1], [0, 0, 1, 1], [], []>} : vector<16x1152xbf16>, vector<1152x128xbf16>, vector<16x128xf32> -> vector<16x128xf32>
    %c0_244 = arith.constant 0 : index
    %c0_245 = arith.constant 0 : index
    %179 = vector.load %arg13[%c0_244, %c0_245] : memref<1x128xf32, #tpu.memory_space<vmem>>, vector<1x128xf32>
    %180 = vector.broadcast %179 : vector<1x128xf32> to vector<16x128xf32>
    %181 = arith.addf %178, %180 : vector<16x128xf32>
    %cst_246 = arith.constant 0.000000e+00 : f32
    %182 = vector.broadcast %cst_246 : f32 to vector<16x128xf32>
    %183 = arith.maximumf %181, %182 : vector<16x128xf32>
    %184 = arith.truncf %183 : vector<16x128xf32> to vector<16x128xbf16>
    %c0_247 = arith.constant 0 : index
    %c0_248 = arith.constant 0 : index
    %185 = vector.load %arg14[%c0_247, %c0_248] : memref<128x128xbf16, #tpu.memory_space<vmem>>, vector<128x128xbf16>
    %cst_249 = arith.constant dense<0.000000e+00> : vector<16x128xf32>
    %186 = tpu.matmul %184, %185, %cst_249 {dimension_numbers = #tpu.dot_dimension_numbers<[1], [0], [0], [1], [0, 0, 1, 1], [], []>} : vector<16x128xbf16>, vector<128x128xbf16>, vector<16x128xf32> -> vector<16x128xf32>
    %c0_250 = arith.constant 0 : index
    %c0_251 = arith.constant 0 : index
    %187 = vector.load %arg15[%c0_250, %c0_251] : memref<1x128xf32, #tpu.memory_space<vmem>>, vector<1x128xf32>
    %188 = vector.broadcast %187 : vector<1x128xf32> to vector<16x128xf32>
    %189 = arith.addf %186, %188 : vector<16x128xf32>
    %190 = vector.shape_cast %189 : vector<16x128xf32> to vector<4x4x128xf32>
    %c0_252 = arith.constant 0 : index
    %c0_253 = arith.constant 0 : index
    %c0_254 = arith.constant 0 : index
    %c0_255 = arith.constant 0 : index
    %191 = vector.load %arg16[%c0_252, %c0_253, %c0_254, %c0_255] : memref<1x4x4x128xf32, #tpu.memory_space<vmem>>, vector<1x4x4x128xf32>
    %192 = vector.shape_cast %191 : vector<1x4x4x128xf32> to vector<4x4x128xf32>
    %193 = vector.shape_cast %190 : vector<4x4x128xf32> to vector<1x4x4x128xf32>
    tpu.vector_store %arg16[%c0_252, %c0_253, %c0_254, %c0_255], %193 {strides = array<i32>} : memref<1x4x4x128xf32, #tpu.memory_space<vmem>>, vector<1x4x4x128xf32>,
    return
  }
  func.func @transform_0(%arg0: i32) -> (i32, i32, i32) {
    %c0_i32 = arith.constant 0 : i32
    %c0_i32_0 = arith.constant 0 : i32
    %c0_i32_1 = arith.constant 0 : i32
    return %arg0, %c0_i32, %c0_i32_0 : i32, i32, i32
  }
  func.func @transform_1(%arg0: i32) -> (i32, i32) {
    %c0_i32 = arith.constant 0 : i32
    %c0_i32_0 = arith.constant 0 : i32
    %c0_i32_1 = arith.constant 0 : i32
    return %c0_i32, %c0_i32_0 : i32, i32
  }
  func.func @transform_2(%arg0: i32) -> (i32, i32) {
    %c0_i32 = arith.constant 0 : i32
    %c0_i32_0 = arith.constant 0 : i32
    %c0_i32_1 = arith.constant 0 : i32
    return %c0_i32, %c0_i32_0 : i32, i32
  }
  func.func @transform_3(%arg0: i32) -> (i32, i32) {
    %c0_i32 = arith.constant 0 : i32
    %c0_i32_0 = arith.constant 0 : i32
    %c0_i32_1 = arith.constant 0 : i32
    return %c0_i32, %c0_i32_0 : i32, i32
  }
  func.func @transform_4(%arg0: i32) -> (i32, i32) {
    %c0_i32 = arith.constant 0 : i32
    %c0_i32_0 = arith.constant 0 : i32
    %c0_i32_1 = arith.constant 0 : i32
    return %c0_i32, %c0_i32_0 : i32, i32
  }
  func.func @transform_5(%arg0: i32) -> (i32, i32) {
    %c0_i32 = arith.constant 0 : i32
    %c0_i32_0 = arith.constant 0 : i32
    %c0_i32_1 = arith.constant 0 : i32
    return %c0_i32, %c0_i32_0 : i32, i32
  }
  func.func @transform_6(%arg0: i32) -> (i32, i32) {
    %c0_i32 = arith.constant 0 : i32
    %c0_i32_0 = arith.constant 0 : i32
    %c0_i32_1 = arith.constant 0 : i32
    return %c0_i32, %c0_i32_0 : i32, i32
  }
  func.func @transform_7(%arg0: i32) -> (i32, i32) {
    %c0_i32 = arith.constant 0 : i32
    %c0_i32_0 = arith.constant 0 : i32
    %c0_i32_1 = arith.constant 0 : i32
    return %c0_i32, %c0_i32_0 : i32, i32
  }
  func.func @transform_8(%arg0: i32) -> (i32, i32) {
    %c0_i32 = arith.constant 0 : i32
    %c0_i32_0 = arith.constant 0 : i32
    %c0_i32_1 = arith.constant 0 : i32
    return %c0_i32, %c0_i32_0 : i32, i32
  }
  func.func @transform_9(%arg0: i32) -> (i32, i32) {
    %c0_i32 = arith.constant 0 : i32
    %c0_i32_0 = arith.constant 0 : i32
    %c0_i32_1 = arith.constant 0 : i32
    return %c0_i32, %c0_i32_0 : i32, i32
  }
  func.func @transform_10(%arg0: i32) -> (i32, i32) {
    %c0_i32 = arith.constant 0 : i32
    %c0_i32_0 = arith.constant 0 : i32
    %c0_i32_1 = arith.constant 0 : i32
    return %c0_i32, %c0_i32_0 : i32, i32
  }
  func.func @transform_11(%arg0: i32) -> (i32, i32) {
    %c0_i32 = arith.constant 0 : i32
    %c0_i32_0 = arith.constant 0 : i32
    %c0_i32_1 = arith.constant 0 : i32
    return %c0_i32, %c0_i32_0 : i32, i32
  }
  func.func @transform_12(%arg0: i32) -> (i32, i32) {
    %c0_i32 = arith.constant 0 : i32
    %c0_i32_0 = arith.constant 0 : i32
    %c0_i32_1 = arith.constant 0 : i32
    return %c0_i32, %c0_i32_0 : i32, i32
  }
  func.func @transform_13(%arg0: i32) -> (i32, i32) {
    %c0_i32 = arith.constant 0 : i32
    %c0_i32_0 = arith.constant 0 : i32
    %c0_i32_1 = arith.constant 0 : i32
    return %c0_i32, %c0_i32_0 : i32, i32
  }
  func.func @transform_14(%arg0: i32) -> (i32, i32) {
    %c0_i32 = arith.constant 0 : i32
    %c0_i32_0 = arith.constant 0 : i32
    %c0_i32_1 = arith.constant 0 : i32
    return %c0_i32, %c0_i32_0 : i32, i32
  }
  func.func @transform_15(%arg0: i32) -> (i32, i32, i32, i32) {
    %c0_i32 = arith.constant 0 : i32
    %c0_i32_0 = arith.constant 0 : i32
    %c0_i32_1 = arith.constant 0 : i32
    %c0_i32_2 = arith.constant 0 : i32
    return %arg0, %c0_i32, %c0_i32_0, %c0_i32_1 : i32, i32, i32, i32
  }
}

</mosaic_0001>

<llo_original>
// kernel: jakab_conv_net.1
$region0: #{jakab_conv_net.1}
  #allocation0 [shape = 'u32[]', space=smem, size = 0x4, offset = 0x4, fixed_abs, tag = 'smem constant byte address 0x4 - core index']
  #allocation1 [shape = 'u32[144,128]{1,0:T(1,128)}', space=vmem, size = 0x12000, scoped, tag = 'internal scratch']
  #allocation2 [shape = 'bf16[18,32,128]{2,1,0:T(16,128)(2,1)}', space=vmem, size = 0x24000, scoped, tag = 'scratch operand']
  #allocation3 [shape = 'f32[18,32,64]{2,1,0:T(8,128)}', space=vmem, size = 0x48000, scoped, tag = 'scratch operand']
  %s0 = inlined_call_operand.vmem [shape: bf16[2,256,256], index: 0, kind: input, shape index: {}]
  %s1 = inlined_call_operand.vmem [shape: bf16[256,32], index: 1, kind: input, shape index: {}]
  %s2 = inlined_call_operand.vmem [shape: f32[1,32], index: 2, kind: input, shape index: {}]
  %s3 = inlined_call_operand.vmem [shape: bf16[288,32], index: 3, kind: input, shape index: {}]
  %s4 = inlined_call_operand.vmem [shape: f32[1,32], index: 4, kind: input, shape index: {}]
  %s5 = inlined_call_operand.vmem [shape: bf16[288,64], index: 5, kind: input, shape index: {}]
  %s6 = inlined_call_operand.vmem [shape: f32[1,64], index: 6, kind: input, shape index: {}]
  %s7 = inlined_call_operand.vmem [shape: bf16[576,64], index: 7, kind: input, shape index: {}]
  %s8 = inlined_call_operand.vmem [shape: f32[1,64], index: 8, kind: input, shape index: {}]
  %s9 = inlined_call_operand.vmem [shape: bf16[576,128], index: 9, kind: input, shape index: {}]
  %s10 = inlined_call_operand.vmem [shape: f32[1,128], index: 10, kind: input, shape index: {}]
  %s11 = inlined_call_operand.vmem [shape: bf16[1152,128], index: 11, kind: input, shape index: {}]
  %s12 = inlined_call_operand.vmem [shape: f32[1,128], index: 12, kind: input, shape index: {}]
  %s13 = inlined_call_operand.vmem [shape: bf16[128,128], index: 13, kind: input, shape index: {}]
  %s14 = inlined_call_operand.vmem [shape: f32[1,128], index: 14, kind: input, shape index: {}]
  %s15 = inlined_call_operand.vmem [shape: f32[2,4,4,128], index: 15, kind: output, shape index: {}]
  %s16 = sld [smem:[#allocation0]]
  $region93: #{jakab_conv_net.1} parent=0
    _
  %s18 = ssub.s32 1, %s16
  %s19 = scalar_select 0, %s18, %s16
  loop: start=0, step=1, limit=4
  $region2: #{jakab_conv_net.1} parent=0 // loop_pre_header
    _
  $region3: #{jakab_conv_net.1} parent=0 // loop_header
    %s21 = sphi 0, %s25
    %p22 = scmp.ge.s32.totalorder %s21, 4
    %s31 = sphi 0, %s33
    %s34 = sphi 0, %s31
    %s35 = sphi 0, %s34
    %s51 = sphi 0, %s35
    %s55 = sphi 0, %s55
    %s57 = sphi 0, %s55
    %s58 = sphi 0, %s57
    %s72 = sphi 0, %s58
    %s76 = sphi 0, %s76
    %s78 = sphi 0, %s76
    %s79 = sphi 0, %s78
    %s93 = sphi 0, %s79
    %s97 = sphi 0, %s97
    %s99 = sphi 0, %s97
    %s100 = sphi 0, %s99
    %s114 = sphi 0, %s100
    %s118 = sphi 0, %s118
    %s120 = sphi 0, %s118
    %s121 = sphi 0, %s120
    %s135 = sphi 0, %s121
    %s139 = sphi 0, %s139
    %s141 = sphi 0, %s139
    %s142 = sphi 0, %s141
    %s156 = sphi 0, %s142
    %s160 = sphi 0, %s160
    %s162 = sphi 0, %s160
    %s163 = sphi 0, %s162
    %s177 = sphi 0, %s163
    %s181 = sphi 0, %s181
    %s183 = sphi 0, %s181
    %s184 = sphi 0, %s183
    %s198 = sphi 0, %s184
    %s202 = sphi 0, %s202
    %s204 = sphi 0, %s202
    %s205 = sphi 0, %s204
    %s219 = sphi 0, %s205
    %s223 = sphi 0, %s223
    %s225 = sphi 0, %s223
    %s226 = sphi 0, %s225
    %s240 = sphi 0, %s226
    %s244 = sphi 0, %s244
    %s246 = sphi 0, %s244
    %s247 = sphi 0, %s246
    %s261 = sphi 0, %s247
    %s265 = sphi 0, %s265
    %s267 = sphi 0, %s265
    %s268 = sphi 0, %s267
    %s282 = sphi 0, %s268
    %s286 = sphi 0, %s286
    %s288 = sphi 0, %s286
    %s289 = sphi 0, %s288
    %s303 = sphi 0, %s289
    %s307 = sphi 0, %s307
    %s309 = sphi 0, %s307
    %s310 = sphi 0, %s309
    %s324 = sphi 0, %s310
    %s328 = sphi 0, %s328
    %s330 = sphi 0, %s328
    %s331 = sphi 0, %s330
    %s345 = sphi 0, %s331
    %s351 = sphi 0, %s353
    %s354 = sphi 0, %s351
    %s355 = sphi 0, %s354
    %s371 = sphi 0, %s355
  $region4: #{jakab_conv_net.1} parent=0 // loop_header_branch
    %24 = sbr.rel (%p22) target = $region8
  $region5: #{jakab_conv_net.1} parent=0 // loop_body
    %s26 = ssub.s32 %s21, 1
    %s27 = ssub.s32 %s21, 2
    %s28 = sadd.s32 %s21, 1
    %s29 = ssub.s32 %s21, %s28
    %p30 = scmp.eq.s32.totalorder %s29, 0
    %s32 = sadd.s32 %s31, 1
    %s33 = scalar_select %p30, %s31, %s32
    %p36 = pneg %p30
    %p37 = scmp.eq.s32.totalorder %s21, 1
    %p38 = por %p36, %p37
    %p39 = scmp.ne.s32.totalorder %s31, %s34
    %p40 = scmp.eq.s32.totalorder %s21, 0
    %p41 = por %p39, %p40
    %p42 = scmp.ne.s32.totalorder %s31, %s34
    %p43 = scmp.eq.s32.totalorder %s26, 1
    %p44 = por %p42, %p43
    %p45 = scmp.ne.s32.totalorder %s34, %s35
    %p46 = scmp.eq.s32.totalorder %s26, 0
    %p47 = por %p45, %p46
    %p48 = scmp.ne.s32.totalorder %s34, %s35
    %p49 = scmp.eq.s32.totalorder %s27, 1
    %p50 = por %p48, %p49
    %p52 = scmp.ne.s32.totalorder %s35, %s51
    %p53 = scmp.eq.s32.totalorder %s27, 0
    %p54 = por %p52, %p53
    %s56 = sadd.s32 %s55, 1
    %p59 = scmp.eq.s32.totalorder %s21, 1
    %p60 = scmp.ne.s32.totalorder %s55, %s57
    %p61 = scmp.eq.s32.totalorder %s21, 0
    %p62 = por %p60, %p61
    %p63 = scmp.ne.s32.totalorder %s55, %s57
    %p64 = scmp.eq.s32.totalorder %s26, 1
    %p65 = por %p63, %p64
    %p66 = scmp.ne.s32.totalorder %s57, %s58
    %p67 = scmp.eq.s32.totalorder %s26, 0
    %p68 = por %p66, %p67
    %p69 = scmp.ne.s32.totalorder %s57, %s58
    %p70 = scmp.eq.s32.totalorder %s27, 1
    %p71 = por %p69, %p70
    %p73 = scmp.ne.s32.totalorder %s58, %s72
    %p74 = scmp.eq.s32.totalorder %s27, 0
    %p75 = por %p73, %p74
    %s77 = sadd.s32 %s76, 1
    %p80 = scmp.eq.s32.totalorder %s21, 1
    %p81 = scmp.ne.s32.totalorder %s76, %s78
    %p82 = scmp.eq.s32.totalorder %s21, 0
    %p83 = por %p81, %p82
    %p84 = scmp.ne.s32.totalorder %s76, %s78
    %p85 = scmp.eq.s32.totalorder %s26, 1
    %p86 = por %p84, %p85
    %p87 = scmp.ne.s32.totalorder %s78, %s79
    %p88 = scmp.eq.s32.totalorder %s26, 0
    %p89 = por %p87, %p88
    %p90 = scmp.ne.s32.totalorder %s78, %s79
    %p91 = scmp.eq.s32.totalorder %s27, 1
    %p92 = por %p90, %p91
    %p94 = scmp.ne.s32.totalorder %s79, %s93
    %p95 = scmp.eq.s32.totalorder %s27, 0
    %p96 = por %p94, %p95
    %s98 = sadd.s32 %s97, 1
    %p101 = scmp.eq.s32.totalorder %s21, 1
    %p102 = scmp.ne.s32.totalorder %s97, %s99
    %p103 = scmp.eq.s32.totalorder %s21, 0
    %p104 = por %p102, %p103
    %p105 = scmp.ne.s32.totalorder %s97, %s99
    %p106 = scmp.eq.s32.totalorder %s26, 1
    %p107 = por %p105, %p106
    %p108 = scmp.ne.s32.totalorder %s99, %s100
    %p109 = scmp.eq.s32.totalorder %s26, 0
    %p110 = por %p108, %p109
    %p111 = scmp.ne.s32.totalorder %s99, %s100
    %p112 = scmp.eq.s32.totalorder %s27, 1
    %p113 = por %p111, %p112
    %p115 = scmp.ne.s32.totalorder %s100, %s114
    %p116 = scmp.eq.s32.totalorder %s27, 0
    %p117 = por %p115, %p116
    %s119 = sadd.s32 %s118, 1
    %p122 = scmp.eq.s32.totalorder %s21, 1
    %p123 = scmp.ne.s32.totalorder %s118, %s120
    %p124 = scmp.eq.s32.totalorder %s21, 0
    %p125 = por %p123, %p124
    %p126 = scmp.ne.s32.totalorder %s118, %s120
    %p127 = scmp.eq.s32.totalorder %s26, 1
    %p128 = por %p126, %p127
    %p129 = scmp.ne.s32.totalorder %s120, %s121
    %p130 = scmp.eq.s32.totalorder %s26, 0
    %p131 = por %p129, %p130
    %p132 = scmp.ne.s32.totalorder %s120, %s121
    %p133 = scmp.eq.s32.totalorder %s27, 1
    %p134 = por %p132, %p133
    %p136 = scmp.ne.s32.totalorder %s121, %s135
    %p137 = scmp.eq.s32.totalorder %s27, 0
    %p138 = por %p136, %p137
    %s140 = sadd.s32 %s139, 1
    %p143 = scmp.eq.s32.totalorder %s21, 1
    %p144 = scmp.ne.s32.totalorder %s139, %s141
    %p145 = scmp.eq.s32.totalorder %s21, 0
    %p146 = por %p144, %p145
    %p147 = scmp.ne.s32.totalorder %s139, %s141
    %p148 = scmp.eq.s32.totalorder %s26, 1
    %p149 = por %p147, %p148
    %p150 = scmp.ne.s32.totalorder %s141, %s142
    %p151 = scmp.eq.s32.totalorder %s26, 0
    %p152 = por %p150, %p151
    %p153 = scmp.ne.s32.totalorder %s141, %s142
    %p154 = scmp.eq.s32.totalorder %s27, 1
    %p155 = por %p153, %p154
    %p157 = scmp.ne.s32.totalorder %s142, %s156
    %p158 = scmp.eq.s32.totalorder %s27, 0
    %p159 = por %p157, %p158
    %s161 = sadd.s32 %s160, 1
    %p164 = scmp.eq.s32.totalorder %s21, 1
    %p165 = scmp.ne.s32.totalorder %s160, %s162
    %p166 = scmp.eq.s32.totalorder %s21, 0
    %p167 = por %p165, %p166
    %p168 = scmp.ne.s32.totalorder %s160, %s162
    %p169 = scmp.eq.s32.totalorder %s26, 1
    %p170 = por %p168, %p169
    %p171 = scmp.ne.s32.totalorder %s162, %s163
    %p172 = scmp.eq.s32.totalorder %s26, 0
    %p173 = por %p171, %p172
    %p174 = scmp.ne.s32.totalorder %s162, %s163
    %p175 = scmp.eq.s32.totalorder %s27, 1
    %p176 = por %p174, %p175
    %p178 = scmp.ne.s32.totalorder %s163, %s177
    %p179 = scmp.eq.s32.totalorder %s27, 0
    %p180 = por %p178, %p179
    %s182 = sadd.s32 %s181, 1
    %p185 = scmp.eq.s32.totalorder %s21, 1
    %p186 = scmp.ne.s32.totalorder %s181, %s183
    %p187 = scmp.eq.s32.totalorder %s21, 0
    %p188 = por %p186, %p187
    %p189 = scmp.ne.s32.totalorder %s181, %s183
    %p190 = scmp.eq.s32.totalorder %s26, 1
    %p191 = por %p189, %p190
    %p192 = scmp.ne.s32.totalorder %s183, %s184
    %p193 = scmp.eq.s32.totalorder %s26, 0
    %p194 = por %p192, %p193
    %p195 = scmp.ne.s32.totalorder %s183, %s184
    %p196 = scmp.eq.s32.totalorder %s27, 1
    %p197 = por %p195, %p196
    %p199 = scmp.ne.s32.totalorder %s184, %s198
    %p200 = scmp.eq.s32.totalorder %s27, 0
    %p201 = por %p199, %p200
    %s203 = sadd.s32 %s202, 1
    %p206 = scmp.eq.s32.totalorder %s21, 1
    %p207 = scmp.ne.s32.totalorder %s202, %s204
    %p208 = scmp.eq.s32.totalorder %s21, 0
    %p209 = por %p207, %p208
    %p210 = scmp.ne.s32.totalorder %s202, %s204
    %p211 = scmp.eq.s32.totalorder %s26, 1
    %p212 = por %p210, %p211
    %p213 = scmp.ne.s32.totalorder %s204, %s205
    %p214 = scmp.eq.s32.totalorder %s26, 0
    %p215 = por %p213, %p214
    %p216 = scmp.ne.s32.totalorder %s204, %s205
    %p217 = scmp.eq.s32.totalorder %s27, 1
    %p218 = por %p216, %p217
    %p220 = scmp.ne.s32.totalorder %s205, %s219
    %p221 = scmp.eq.s32.totalorder %s27, 0
    %p222 = por %p220, %p221
    %s224 = sadd.s32 %s223, 1
    %p227 = scmp.eq.s32.totalorder %s21, 1
    %p228 = scmp.ne.s32.totalorder %s223, %s225
    %p229 = scmp.eq.s32.totalorder %s21, 0
    %p230 = por %p228, %p229
    %p231 = scmp.ne.s32.totalorder %s223, %s225
    %p232 = scmp.eq.s32.totalorder %s26, 1
    %p233 = por %p231, %p232
    %p234 = scmp.ne.s32.totalorder %s225, %s226
    %p235 = scmp.eq.s32.totalorder %s26, 0
    %p236 = por %p234, %p235
    %p237 = scmp.ne.s32.totalorder %s225, %s226
    %p238 = scmp.eq.s32.totalorder %s27, 1
    %p239 = por %p237, %p238
    %p241 = scmp.ne.s32.totalorder %s226, %s240
    %p242 = scmp.eq.s32.totalorder %s27, 0
    %p243 = por %p241, %p242
    %s245 = sadd.s32 %s244, 1
    %p248 = scmp.eq.s32.totalorder %s21, 1
    %p249 = scmp.ne.s32.totalorder %s244, %s246
    %p250 = scmp.eq.s32.totalorder %s21, 0
    %p251 = por %p249, %p250
    %p252 = scmp.ne.s32.totalorder %s244, %s246
    %p253 = scmp.eq.s32.totalorder %s26, 1
    %p254 = por %p252, %p253
    %p255 = scmp.ne.s32.totalorder %s246, %s247
    %p256 = scmp.eq.s32.totalorder %s26, 0
    %p257 = por %p255, %p256
    %p258 = scmp.ne.s32.totalorder %s246, %s247
    %p259 = scmp.eq.s32.totalorder %s27, 1
    %p260 = por %p258, %p259
    %p262 = scmp.ne.s32.totalorder %s247, %s261
    %p263 = scmp.eq.s32.totalorder %s27, 0
    %p264 = por %p262, %p263
    %s266 = sadd.s32 %s265, 1
    %p269 = scmp.eq.s32.totalorder %s21, 1
    %p270 = scmp.ne.s32.totalorder %s265, %s267
    %p271 = scmp.eq.s32.totalorder %s21, 0
    %p272 = por %p270, %p271
    %p273 = scmp.ne.s32.totalorder %s265, %s267
    %p274 = scmp.eq.s32.totalorder %s26, 1
    %p275 = por %p273, %p274
    %p276 = scmp.ne.s32.totalorder %s267, %s268
    %p277 = scmp.eq.s32.totalorder %s26, 0
    %p278 = por %p276, %p277
    %p279 = scmp.ne.s32.totalorder %s267, %s268
    %p280 = scmp.eq.s32.totalorder %s27, 1
    %p281 = por %p279, %p280
    %p283 = scmp.ne.s32.totalorder %s268, %s282
    %p284 = scmp.eq.s32.totalorder %s27, 0
    %p285 = por %p283, %p284
    %s287 = sadd.s32 %s286, 1
    %p290 = scmp.eq.s32.totalorder %s21, 1
    %p291 = scmp.ne.s32.totalorder %s286, %s288
    %p292 = scmp.eq.s32.totalorder %s21, 0
    %p293 = por %p291, %p292
    %p294 = scmp.ne.s32.totalorder %s286, %s288
    %p295 = scmp.eq.s32.totalorder %s26, 1
    %p296 = por %p294, %p295
    %p297 = scmp.ne.s32.totalorder %s288, %s289
    %p298 = scmp.eq.s32.totalorder %s26, 0
    %p299 = por %p297, %p298
    %p300 = scmp.ne.s32.totalorder %s288, %s289
    %p301 = scmp.eq.s32.totalorder %s27, 1
    %p302 = por %p300, %p301
    %p304 = scmp.ne.s32.totalorder %s289, %s303
    %p305 = scmp.eq.s32.totalorder %s27, 0
    %p306 = por %p304, %p305
    %s308 = sadd.s32 %s307, 1
    %p311 = scmp.eq.s32.totalorder %s21, 1
    %p312 = scmp.ne.s32.totalorder %s307, %s309
    %p313 = scmp.eq.s32.totalorder %s21, 0
    %p314 = por %p312, %p313
    %p315 = scmp.ne.s32.totalorder %s307, %s309
    %p316 = scmp.eq.s32.totalorder %s26, 1
    %p317 = por %p315, %p316
    %p318 = scmp.ne.s32.totalorder %s309, %s310
    %p319 = scmp.eq.s32.totalorder %s26, 0
    %p320 = por %p318, %p319
    %p321 = scmp.ne.s32.totalorder %s309, %s310
    %p322 = scmp.eq.s32.totalorder %s27, 1
    %p323 = por %p321, %p322
    %p325 = scmp.ne.s32.totalorder %s310, %s324
    %p326 = scmp.eq.s32.totalorder %s27, 0
    %p327 = por %p325, %p326
    %s329 = sadd.s32 %s328, 1
    %p332 = scmp.eq.s32.totalorder %s21, 1
    %p333 = scmp.ne.s32.totalorder %s328, %s330
    %p334 = scmp.eq.s32.totalorder %s21, 0
    %p335 = por %p333, %p334
    %p336 = scmp.ne.s32.totalorder %s328, %s330
    %p337 = scmp.eq.s32.totalorder %s26, 1
    %p338 = por %p336, %p337
    %p339 = scmp.ne.s32.totalorder %s330, %s331
    %p340 = scmp.eq.s32.totalorder %s26, 0
    %p341 = por %p339, %p340
    %p342 = scmp.ne.s32.totalorder %s330, %s331
    %p343 = scmp.eq.s32.totalorder %s27, 1
    %p344 = por %p342, %p343
    %p346 = scmp.ne.s32.totalorder %s331, %s345
    %p347 = scmp.eq.s32.totalorder %s27, 0
    %p348 = por %p346, %p347
    %s349 = ssub.s32 %s21, %s28
    %p350 = scmp.eq.s32.totalorder %s349, 0
    %s352 = sadd.s32 %s351, 1
    %s353 = scalar_select %p350, %s351, %s352
    %p356 = pneg %p350
    %p357 = scmp.eq.s32.totalorder %s21, 1
    %p358 = por %p356, %p357
    %p359 = scmp.ne.s32.totalorder %s351, %s354
    %p360 = scmp.eq.s32.totalorder %s21, 0
    %p361 = por %p359, %p360
    %p362 = scmp.ne.s32.totalorder %s351, %s354
    %p363 = scmp.eq.s32.totalorder %s26, 1
    %p364 = por %p362, %p363
    %p365 = scmp.ne.s32.totalorder %s354, %s355
    %p366 = scmp.eq.s32.totalorder %s26, 0
    %p367 = por %p365, %p366
    %p368 = scmp.ne.s32.totalorder %s354, %s355
    %p369 = scmp.eq.s32.totalorder %s27, 1
    %p370 = por %p368, %p369
    %p372 = scmp.ne.s32.totalorder %s355, %s371
    %p373 = scmp.eq.s32.totalorder %s27, 0
    %p374 = por %p372, %p373
    %p375 = scmp.le.s32.totalorder 1, %s21
    %p376 = scmp.lt.s32.totalorder %s21, 3
    %p377 = pnand %p375, %p376
    %p378 = pneg %p377
    // Predicated region
    $region9: #{jakab_conv_net.1} parent=5 // pred_check
      _
    $region10: #{jakab_conv_net.1} parent=5 // pred_check_branch
      %380 = sbr.rel (%p377) target = $region12
    $region11: #{jakab_conv_net.1} parent=5 // pred_region
      %s381 = ssub.s32 %s21, 1
      // Predicated region
      $region13: #{jakab_conv_net.1} parent=11 // pred_check
        %p382 = pneg %p68
      $region14: #{jakab_conv_net.1} parent=11 // pred_check_branch
        %384 = sbr.rel (%p382) target = $region16
      $region15: #{jakab_conv_net.1} parent=11 // pred_region
        _
      $region16: #{jakab_conv_net.1} parent=11 // pred_fallthru
        _
      // Predicated region
      $region17: #{jakab_conv_net.1} parent=11 // pred_check
        %p385 = pneg %p89
      $region18: #{jakab_conv_net.1} parent=11 // pred_check_branch
        %387 = sbr.rel (%p385) target = $region20
      $region19: #{jakab_conv_net.1} parent=11 // pred_region
        _
      $region20: #{jakab_conv_net.1} parent=11 // pred_fallthru
        _
      // Predicated region
      $region21: #{jakab_conv_net.1} parent=11 // pred_check
        %p388 = pneg %p110
      $region22: #{jakab_conv_net.1} parent=11 // pred_check_branch
        %390 = sbr.rel (%p388) target = $region24
      $region23: #{jakab_conv_net.1} parent=11 // pred_region
        _
      $region24: #{jakab_conv_net.1} parent=11 // pred_fallthru
        _
      // Predicated region
      $region25: #{jakab_conv_net.1} parent=11 // pred_check
        %p391 = pneg %p131
      $region26: #{jakab_conv_net.1} parent=11 // pred_check_branch
        %393 = sbr.rel (%p391) target = $region28
      $region27: #{jakab_conv_net.1} parent=11 // pred_region
        _
      $region28: #{jakab_conv_net.1} parent=11 // pred_fallthru
        _
      // Predicated region
      $region29: #{jakab_conv_net.1} parent=11 // pred_check
        %p394 = pneg %p152
      $region30: #{jakab_conv_net.1} parent=11 // pred_check_branch
        %396 = sbr.rel (%p394) target = $region32
      $region31: #{jakab_conv_net.1} parent=11 // pred_region
        _
      $region32: #{jakab_conv_net.1} parent=11 // pred_fallthru
        _
      // Predicated region
      $region33: #{jakab_conv_net.1} parent=11 // pred_check
        %p397 = pneg %p173
      $region34: #{jakab_conv_net.1} parent=11 // pred_check_branch
        %399 = sbr.rel (%p397) target = $region36
      $region35: #{jakab_conv_net.1} parent=11 // pred_region
        _
      $region36: #{jakab_conv_net.1} parent=11 // pred_fallthru
        _
      // Predicated region
      $region37: #{jakab_conv_net.1} parent=11 // pred_check
        %p400 = pneg %p194
      $region38: #{jakab_conv_net.1} parent=11 // pred_check_branch
        %402 = sbr.rel (%p400) target = $region40
      $region39: #{jakab_conv_net.1} parent=11 // pred_region
        _
      $region40: #{jakab_conv_net.1} parent=11 // pred_fallthru
        _
      // Predicated region
      $region41: #{jakab_conv_net.1} parent=11 // pred_check
        %p403 = pneg %p215
      $region42: #{jakab_conv_net.1} parent=11 // pred_check_branch
        %405 = sbr.rel (%p403) target = $region44
      $region43: #{jakab_conv_net.1} parent=11 // pred_region
        _
      $region44: #{jakab_conv_net.1} parent=11 // pred_fallthru
        _
      // Predicated region
      $region45: #{jakab_conv_net.1} parent=11 // pred_check
        %p406 = pneg %p236
      $region46: #{jakab_conv_net.1} parent=11 // pred_check_branch
        %408 = sbr.rel (%p406) target = $region48
      $region47: #{jakab_conv_net.1} parent=11 // pred_region
        _
      $region48: #{jakab_conv_net.1} parent=11 // pred_fallthru
        _
      // Predicated region
      $region49: #{jakab_conv_net.1} parent=11 // pred_check
        %p409 = pneg %p257
      $region50: #{jakab_conv_net.1} parent=11 // pred_check_branch
        %411 = sbr.rel (%p409) target = $region52
      $region51: #{jakab_conv_net.1} parent=11 // pred_region
        _
      $region52: #{jakab_conv_net.1} parent=11 // pred_fallthru
        _
      // Predicated region
      $region53: #{jakab_conv_net.1} parent=11 // pred_check
        %p412 = pneg %p278
      $region54: #{jakab_conv_net.1} parent=11 // pred_check_branch
        %414 = sbr.rel (%p412) target = $region56
      $region55: #{jakab_conv_net.1} parent=11 // pred_region
        _
      $region56: #{jakab_conv_net.1} parent=11 // pred_fallthru
        _
      // Predicated region
      $region57: #{jakab_conv_net.1} parent=11 // pred_check
        %p415 = pneg %p299
      $region58: #{jakab_conv_net.1} parent=11 // pred_check_branch
        %417 = sbr.rel (%p415) target = $region60
      $region59: #{jakab_conv_net.1} parent=11 // pred_region
        _
      $region60: #{jakab_conv_net.1} parent=11 // pred_fallthru
        _
      // Predicated region
      $region61: #{jakab_conv_net.1} parent=11 // pred_check
        %p418 = pneg %p320
      $region62: #{jakab_conv_net.1} parent=11 // pred_check_branch
        %420 = sbr.rel (%p418) target = $region64
      $region63: #{jakab_conv_net.1} parent=11 // pred_region
        _
      $region64: #{jakab_conv_net.1} parent=11 // pred_fallthru
        _
      // Predicated region
      $region65: #{jakab_conv_net.1} parent=11 // pred_check
        %p421 = pneg %p341
      $region66: #{jakab_conv_net.1} parent=11 // pred_check_branch
        %423 = sbr.rel (%p421) target = $region68
      $region67: #{jakab_conv_net.1} parent=11 // pred_region
        _
      $region68: #{jakab_conv_net.1} parent=11 // pred_fallthru
        _
    $region12: #{jakab_conv_net.1} parent=5 // pred_fallthru
      _
    %p424 = scmp.lt.s32.totalorder %s21, 2
    // Predicated region
    $region69: #{jakab_conv_net.1} parent=5 // pred_check
      %p425 = pneg %p424
    $region70: #{jakab_conv_net.1} parent=5 // pred_check_branch
      %427 = sbr.rel (%p425) target = $region72
    $region71: #{jakab_conv_net.1} parent=5 // pred_region
      // Predicated region
      $region73: #{jakab_conv_net.1} parent=71 // pred_check
        %p428 = pneg %p41
      $region74: #{jakab_conv_net.1} parent=71 // pred_check_branch
        %430 = sbr.rel (%p428) target = $region76
      $region75: #{jakab_conv_net.1} parent=71 // pred_region
        %p431 = scmp.lt.s32.totalorder %s21, 1
        %s432 = scalar_select %p431, %s21, 1
        %s433 = smul.addr %s432, 64
        %s434 = smul.addr %s433, 4
        %s435 = scalar_lea.vmem %s0, %s434
      $region76: #{jakab_conv_net.1} parent=71 // pred_fallthru
        _
    $region72: #{jakab_conv_net.1} parent=5 // pred_fallthru
      _
    %p436 = scmp.le.s32.totalorder 1, %s21
    %p437 = scmp.lt.s32.totalorder %s21, 3
    %p438 = pnand %p436, %p437
    %p439 = pneg %p438
    // Predicated region
    $region77: #{jakab_conv_net.1} parent=5 // pred_check
      _
    $region78: #{jakab_conv_net.1} parent=5 // pred_check_branch
      %441 = sbr.rel (%p438) target = $region80
    $region79: #{jakab_conv_net.1} parent=5 // pred_region
      %s442 = ssub.s32 %s21, 1
      %p443 = scmp.lt.s32.totalorder %s26, 1
      %s444 = scalar_select %p443, %s26, 1
      %s445 = smul.addr %s444, 64
      %s446 = smul.addr %s445, 4
      %s447 = scalar_lea.vmem %s0, %s446
      %p448 = pneg %p47
      %p449 = pneg %p44
      %p450 = pneg %p68
      %p451 = pneg %p65
      %p452 = pneg %p89
      %p453 = pneg %p86
      %p454 = pneg %p110
      %p455 = pneg %p107
      %p456 = pneg %p131
      %p457 = pneg %p128
      %p458 = pneg %p152
      %p459 = pneg %p149
      %p460 = pneg %p173
      %p461 = pneg %p170
      %p462 = pneg %p194
      %p463 = pneg %p191
      %p464 = pneg %p215
      %p465 = pneg %p212
      %p466 = pneg %p236
      %p467 = pneg %p233
      %p468 = pneg %p257
      %p469 = pneg %p254
      %p470 = pneg %p278
      %p471 = pneg %p275
      %p472 = pneg %p299
      %p473 = pneg %p296
      %p474 = pneg %p320
      %p475 = pneg %p317
      %p476 = pneg %p341
      %p477 = pneg %p338
      %p478 = pneg %p367
      %p479 = pneg %p364
      %p480 = scmp.lt.s32.totalorder %s26, 1
      %s481 = scalar_select %p480, %s26, 1
      %s482 = smul.addr %s481, 4
      %s483 = smul.addr %s482, 4
      %s484 = scalar_lea.vmem %s15, %s483
      %p485 = scmp.lt.s32.totalorder %s26, 1
      %s486 = scalar_select %p485, %s26, 1
      %s487 = smul.addr %s486, 64
      %s488 = smul.addr %s487, 4
      %s489 = scalar_lea.vmem %s0, %s488
      %p490 = scmp.lt.s32.totalorder %s26, 1
      %s491 = scalar_select %p490, %s26, 1
      %s492 = smul.addr %s491, 4
      %s493 = smul.addr %s492, 4
      %s494 = scalar_lea.vmem %s15, %s493
      %v496 = vld [vmem:[%s489] sm:$0xff]
      %v497 = vld [vmem:[%s489 + $0x8] sm:$0xff]
      %v498 = vld [vmem:[%s489 + $0x10] sm:$0xff]
      %v499 = vld [vmem:[%s489 + $0x18] sm:$0xff]
      %v500 = vld [vmem:[%s489 + $0x20] sm:$0xff]
      %v501 = vld [vmem:[%s489 + $0x28] sm:$0xff]
      %v502 = vld [vmem:[%s489 + $0x30] sm:$0xff]
      %v503 = vld [vmem:[%s489 + $0x38] sm:$0xff]
      %v504 = vld [vmem:[%s489 + $0x40] sm:$0xff]
      %v505 = vld [vmem:[%s489 + $0x48] sm:$0xff]
      %v506 = vld [vmem:[%s489 + $0x50] sm:$0xff]
      %v507 = vld [vmem:[%s489 + $0x58] sm:$0xff]
      %v508 = vld [vmem:[%s489 + $0x60] sm:$0xff]
      %v509 = vld [vmem:[%s489 + $0x68] sm:$0xff]
      %v510 = vld [vmem:[%s489 + $0x70] sm:$0xff]
      %v511 = vld [vmem:[%s489 + $0x78] sm:$0xff]
      %v512 = vld [vmem:[%s489 + $0x80] sm:$0xff]
      %v513 = vld [vmem:[%s489 + $0x88] sm:$0xff]
      %v514 = vld [vmem:[%s489 + $0x90] sm:$0xff]
      %v515 = vld [vmem:[%s489 + $0x98] sm:$0xff]
      %v516 = vld [vmem:[%s489 + $0xa0] sm:$0xff]
      %v517 = vld [vmem:[%s489 + $0xa8] sm:$0xff]
      %v518 = vld [vmem:[%s489 + $0xb0] sm:$0xff]
      %v519 = vld [vmem:[%s489 + $0xb8] sm:$0xff]
      %v520 = vld [vmem:[%s489 + $0xc0] sm:$0xff]
      %v521 = vld [vmem:[%s489 + $0xc8] sm:$0xff]
      %v522 = vld [vmem:[%s489 + $0xd0] sm:$0xff]
      %v523 = vld [vmem:[%s489 + $0xd8] sm:$0xff]
      %v524 = vld [vmem:[%s489 + $0xe0] sm:$0xff]
      %v525 = vld [vmem:[%s489 + $0xe8] sm:$0xff]
      %v526 = vld [vmem:[%s489 + $0xf0] sm:$0xff]
      %v527 = vld [vmem:[%s489 + $0xf8] sm:$0xff]
      %v528 = vld [vmem:[%s1] sm:$0xf]
      %v529 = vld [vmem:[%s1 + $0x4] sm:$0xf]
      %v530 = vld [vmem:[%s1 + $0x8] sm:$0xf]
      %v531 = vld [vmem:[%s1 + $0xc] sm:$0xf]
      %v532 = vld [vmem:[%s1 + $0x10] sm:$0xf]
      %v533 = vld [vmem:[%s1 + $0x14] sm:$0xf]
      %v534 = vld [vmem:[%s1 + $0x18] sm:$0xf]
      %v535 = vld [vmem:[%s1 + $0x1c] sm:$0xf]
      %v536 = vld [vmem:[%s1 + $0x20] sm:$0xf]
      %v537 = vld [vmem:[%s1 + $0x24] sm:$0xf]
      %v538 = vld [vmem:[%s1 + $0x28] sm:$0xf]
      %v539 = vld [vmem:[%s1 + $0x2c] sm:$0xf]
      %v540 = vld [vmem:[%s1 + $0x30] sm:$0xf]
      %v541 = vld [vmem:[%s1 + $0x34] sm:$0xf]
      %v542 = vld [vmem:[%s1 + $0x38] sm:$0xf]
      %v543 = vld [vmem:[%s1 + $0x3c] sm:$0xf]
      %v544 = vld [vmem:[%s1 + $0x40] sm:$0xf]
      %v545 = vld [vmem:[%s1 + $0x44] sm:$0xf]
      %v546 = vld [vmem:[%s1 + $0x48] sm:$0xf]
      %v547 = vld [vmem:[%s1 + $0x4c] sm:$0xf]
      %v548 = vld [vmem:[%s1 + $0x50] sm:$0xf]
      %v549 = vld [vmem:[%s1 + $0x54] sm:$0xf]
      %v550 = vld [vmem:[%s1 + $0x58] sm:$0xf]
      %v551 = vld [vmem:[%s1 + $0x5c] sm:$0xf]
      %v552 = vld [vmem:[%s1 + $0x60] sm:$0xf]
      %v553 = vld [vmem:[%s1 + $0x64] sm:$0xf]
      %v554 = vld [vmem:[%s1 + $0x68] sm:$0xf]
      %v555 = vld [vmem:[%s1 + $0x6c] sm:$0xf]
      %v556 = vld [vmem:[%s1 + $0x70] sm:$0xf]
      %v557 = vld [vmem:[%s1 + $0x74] sm:$0xf]
      %v558 = vld [vmem:[%s1 + $0x78] sm:$0xf]
      %v559 = vld [vmem:[%s1 + $0x7c] sm:$0xf]
      %v560 = vld [vmem:[%s2] sm:$0x1]
      %v562 = vlaneseq
      %v563 = vshrl.u32 %v562, 7
      %v564 = vsub.s32 0, %v563
      %v565 = vrot.slane %v560, %v564
      %v599 = vunpack.c.l.b16 %v496
      %v600 = vunpack.c.h.b16 %v496
      %v601 = vunpack.c.l.b16 %v497
      %v602 = vunpack.c.h.b16 %v497
      %v603 = vunpack.c.l.b16 %v498
      %v604 = vunpack.c.h.b16 %v498
      %v605 = vunpack.c.l.b16 %v499
      %v606 = vunpack.c.h.b16 %v499
      %v607 = vunpack.c.l.b16 %v500
      %v608 = vunpack.c.h.b16 %v500
      %v609 = vunpack.c.l.b16 %v501
      %v610 = vunpack.c.h.b16 %v501
      %v611 = vunpack.c.l.b16 %v502
      %v612 = vunpack.c.h.b16 %v502
      %v613 = vunpack.c.l.b16 %v503
      %v614 = vunpack.c.h.b16 %v503
      %v615 = vunpack.c.l.b16 %v504
      %v616 = vunpack.c.h.b16 %v504
      %v617 = vunpack.c.l.b16 %v505
      %v618 = vunpack.c.h.b16 %v505
      %v619 = vunpack.c.l.b16 %v506
      %v620 = vunpack.c.h.b16 %v506
      %v621 = vunpack.c.l.b16 %v507
      %v622 = vunpack.c.h.b16 %v507
      %v623 = vunpack.c.l.b16 %v508
      %v624 = vunpack.c.h.b16 %v508
      %v625 = vunpack.c.l.b16 %v509
      %v626 = vunpack.c.h.b16 %v509
      %v627 = vunpack.c.l.b16 %v510
      %v628 = vunpack.c.h.b16 %v510
      %v629 = vunpack.c.l.b16 %v511
      %v630 = vunpack.c.h.b16 %v511
      %v631 = vunpack.c.l.b16 %v512
      %v632 = vunpack.c.h.b16 %v512
      %v633 = vunpack.c.l.b16 %v513
      %v634 = vunpack.c.h.b16 %v513
      %v635 = vunpack.c.l.b16 %v514
      %v636 = vunpack.c.h.b16 %v514
      %v637 = vunpack.c.l.b16 %v515
      %v638 = vunpack.c.h.b16 %v515
      %v639 = vunpack.c.l.b16 %v516
      %v640 = vunpack.c.h.b16 %v516
      %v641 = vunpack.c.l.b16 %v517
      %v642 = vunpack.c.h.b16 %v517
      %v643 = vunpack.c.l.b16 %v518
      %v644 = vunpack.c.h.b16 %v518
      %v645 = vunpack.c.l.b16 %v519
      %v646 = vunpack.c.h.b16 %v519
      %v647 = vunpack.c.l.b16 %v520
      %v648 = vunpack.c.h.b16 %v520
      %v649 = vunpack.c.l.b16 %v521
      %v650 = vunpack.c.h.b16 %v521
      %v651 = vunpack.c.l.b16 %v522
      %v652 = vunpack.c.h.b16 %v522
      %v653 = vunpack.c.l.b16 %v523
      %v654 = vunpack.c.h.b16 %v523
      %v655 = vunpack.c.l.b16 %v524
      %v656 = vunpack.c.h.b16 %v524
      %v657 = vunpack.c.l.b16 %v525
      %v658 = vunpack.c.h.b16 %v525
      %v659 = vunpack.c.l.b16 %v526
      %v660 = vunpack.c.h.b16 %v526
      %v661 = vunpack.c.l.b16 %v527
      %v662 = vunpack.c.h.b16 %v527
      %v663 = vpack.c.b16 %v601, %v599
      %v664 = vpack.c.b16 %v602, %v600
      %v665 = vpack.c.b16 %v605, %v603
      %v666 = vpack.c.b16 %v606, %v604
      %v667 = vpack.c.b16 %v609, %v607
      %v668 = vpack.c.b16 %v610, %v608
      %v669 = vpack.c.b16 %v613, %v611
      %v670 = vpack.c.b16 %v614, %v612
      %v671 = vpack.c.b16 %v617, %v615
      %v672 = vpack.c.b16 %v618, %v616
      %v673 = vpack.c.b16 %v621, %v619
      %v674 = vpack.c.b16 %v622, %v620
      %v675 = vpack.c.b16 %v625, %v623
      %v676 = vpack.c.b16 %v626, %v624
      %v677 = vpack.c.b16 %v629, %v627
      %v678 = vpack.c.b16 %v630, %v628
      %v679 = vpack.c.b16 %v633, %v631
      %v680 = vpack.c.b16 %v634, %v632
      %v681 = vpack.c.b16 %v637, %v635
      %v682 = vpack.c.b16 %v638, %v636
      %v683 = vpack.c.b16 %v641, %v639
      %v684 = vpack.c.b16 %v642, %v640
      %v685 = vpack.c.b16 %v645, %v643
      %v686 = vpack.c.b16 %v646, %v644
      %v687 = vpack.c.b16 %v649, %v647
      %v688 = vpack.c.b16 %v650, %v648
      %v689 = vpack.c.b16 %v653, %v651
      %v690 = vpack.c.b16 %v654, %v652
      %v691 = vpack.c.b16 %v657, %v655
      %v692 = vpack.c.b16 %v658, %v656
      %v693 = vpack.c.b16 %v661, %v659
      %v694 = vpack.c.b16 %v662, %v660
      %v759 = vunpack.c.l.b16 %v528
      %v760 = vunpack.c.l.b16 %v529
      %v761 = vunpack.c.l.b16 %v530
      %v762 = vunpack.c.l.b16 %v531
      %v763 = vunpack.c.l.b16 %v532
      %v764 = vunpack.c.l.b16 %v533
      %v765 = vunpack.c.l.b16 %v534
      %v766 = vunpack.c.l.b16 %v535
      %v767 = vunpack.c.l.b16 %v536
      %v768 = vunpack.c.l.b16 %v537
      %v769 = vunpack.c.l.b16 %v538
      %v770 = vunpack.c.l.b16 %v539
      %v771 = vunpack.c.l.b16 %v540
      %v772 = vunpack.c.l.b16 %v541
      %v773 = vunpack.c.l.b16 %v542
      %v774 = vunpack.c.l.b16 %v543
      %v775 = vunpack.c.l.b16 %v544
      %v776 = vunpack.c.l.b16 %v545
      %v777 = vunpack.c.l.b16 %v546
      %v778 = vunpack.c.l.b16 %v547
      %v779 = vunpack.c.l.b16 %v548
      %v780 = vunpack.c.l.b16 %v549
      %v781 = vunpack.c.l.b16 %v550
      %v782 = vunpack.c.l.b16 %v551
      %v783 = vunpack.c.l.b16 %v552
      %v784 = vunpack.c.l.b16 %v553
      %v785 = vunpack.c.l.b16 %v554
      %v786 = vunpack.c.l.b16 %v555
      %v787 = vunpack.c.l.b16 %v556
      %v788 = vunpack.c.l.b16 %v557
      %v789 = vunpack.c.l.b16 %v558
      %v790 = vunpack.c.l.b16 %v559
      %v791 = vpack.c.b16 %v760, %v759
      %v792 = vpack.c.b16 %v762, %v761
      %v793 = vpack.c.b16 %v764, %v763
      %v794 = vpack.c.b16 %v766, %v765
      %v795 = vpack.c.b16 %v768, %v767
      %v796 = vpack.c.b16 %v770, %v769
      %v797 = vpack.c.b16 %v772, %v771
      %v798 = vpack.c.b16 %v774, %v773
      %v799 = vpack.c.b16 %v776, %v775
      %v800 = vpack.c.b16 %v778, %v777
      %v801 = vpack.c.b16 %v780, %v779
      %v802 = vpack.c.b16 %v782, %v781
      %v803 = vpack.c.b16 %v784, %v783
      %v804 = vpack.c.b16 %v786, %v785
      %v805 = vpack.c.b16 %v788, %v787
      %v806 = vpack.c.b16 %v790, %v789
      %823 = vmatprep.subr.bf16.mxu0 0
      %824 = vmatpush1.bf16.msra.mxu0 %v791
      %825 = vmatprep.subr.bf16.mxu0 0
      %826 = vmatpush1.bf16.msra.mxu0 %v792
      %827 = vmatprep.subr.bf16.mxu0 0
      %828 = vmatpush1.bf16.msra.mxu0 %v793
      %829 = vmatprep.subr.bf16.mxu0 0
      %830 = vmatpush1.bf16.msra.mxu0 %v794
      %831 = vmatprep.subr.bf16.mxu0 0
      %832 = vmatpush1.bf16.msra.mxu0 %v795
      %833 = vmatprep.subr.bf16.mxu0 0
      %834 = vmatpush1.bf16.msra.mxu0 %v796
      %835 = vmatprep.subr.bf16.mxu0 0
      %836 = vmatpush1.bf16.msra.mxu0 %v797
      %837 = vmatprep.subr.bf16.mxu0 0
      %838 = vmatpush1.bf16.msra.mxu0 %v798
      %839 = vmatprep.subr.bf16.mxu0 0
      %840 = vmatpush1.bf16.msra.mxu0 %v799
      %841 = vmatprep.subr.bf16.mxu0 0
      %842 = vmatpush1.bf16.msra.mxu0 %v800
      %843 = vmatprep.subr.bf16.mxu0 0
      %844 = vmatpush1.bf16.msra.mxu0 %v801
      %845 = vmatprep.subr.bf16.mxu0 0
      %846 = vmatpush1.bf16.msra.mxu0 %v802
      %847 = vmatprep.subr.bf16.mxu0 0
      %848 = vmatpush1.bf16.msra.mxu0 %v803
      %849 = vmatprep.subr.bf16.mxu0 0
      %850 = vmatpush1.bf16.msra.mxu0 %v804
      %851 = vmatprep.subr.bf16.mxu0 0
      %852 = vmatpush1.bf16.msra.mxu0 %v805
      %853 = vmatprep.subr.bf16.mxu0 0
      %854 = vmatpush1.bf16.msra.mxu0 %v806
      %855 = vmatprep.mubr.bf16.mxu0 %v664
      %856 = vmatmul.mubr.bf16.gmra.mrb[0].mxu0 %v663
      %v857 = vpop.f32.mrb[0].mxu0
      %v858 = vadd.f32 %v565, %v857
      %v859 = vpop.f32.mrb[0].mxu0
      %v860 = vpop.f32.mrb[0].mxu0
      %v861 = vadd.f32 %v565, %v860
      %v862 = vpop.f32.mrb[0].mxu0
      %863 = vmatprep.mubr.bf16.mxu0 %v666
      %864 = vmatmul.mubr.bf16.gmra.mrb[0].mxu0 %v665
      %v865 = vpop.f32.mrb[0].mxu0
      %v866 = vadd.f32 %v565, %v865
      %v867 = vpop.f32.mrb[0].mxu0
      %v868 = vpop.f32.mrb[0].mxu0
      %v869 = vadd.f32 %v565, %v868
      %v870 = vpop.f32.mrb[0].mxu0
      %871 = vmatprep.mubr.bf16.mxu0 %v668
      %872 = vmatmul.mubr.bf16.gmra.mrb[0].mxu0 %v667
      %v873 = vpop.f32.mrb[0].mxu0
      %v874 = vadd.f32 %v565, %v873
      %v875 = vpop.f32.mrb[0].mxu0
      %v876 = vpop.f32.mrb[0].mxu0
      %v877 = vadd.f32 %v565, %v876
      %v878 = vpop.f32.mrb[0].mxu0
      %879 = vmatprep.mubr.bf16.mxu0 %v670
      %880 = vmatmul.mubr.bf16.gmra.mrb[0].mxu0 %v669
      %v881 = vpop.f32.mrb[0].mxu0
      %v882 = vadd.f32 %v565, %v881
      %v883 = vpop.f32.mrb[0].mxu0
      %v884 = vpop.f32.mrb[0].mxu0
      %v885 = vadd.f32 %v565, %v884
      %v886 = vpop.f32.mrb[0].mxu0
      %887 = vmatprep.mubr.bf16.mxu0 %v672
      %888 = vmatmul.mubr.bf16.gmra.mrb[0].mxu0 %v671
      %v889 = vpop.f32.mrb[0].mxu0
      %v890 = vadd.f32 %v565, %v889
      %v891 = vpop.f32.mrb[0].mxu0
      %v892 = vpop.f32.mrb[0].mxu0
      %v893 = vadd.f32 %v565, %v892
      %v894 = vpop.f32.mrb[0].mxu0
      %895 = vmatprep.mubr.bf16.mxu0 %v674
      %896 = vmatmul.mubr.bf16.gmra.mrb[0].mxu0 %v673
      %v897 = vpop.f32.mrb[0].mxu0
      %v898 = vadd.f32 %v565, %v897
      %v899 = vpop.f32.mrb[0].mxu0
      %v900 = vpop.f32.mrb[0].mxu0
      %v901 = vadd.f32 %v565, %v900
      %v902 = vpop.f32.mrb[0].mxu0
      %903 = vmatprep.mubr.bf16.mxu0 %v676
      %904 = vmatmul.mubr.bf16.gmra.mrb[0].mxu0 %v675
      %v905 = vpop.f32.mrb[0].mxu0
      %v906 = vadd.f32 %v565, %v905
      %v907 = vpop.f32.mrb[0].mxu0
      %v908 = vpop.f32.mrb[0].mxu0
      %v909 = vadd.f32 %v565, %v908
      %v910 = vpop.f32.mrb[0].mxu0
      %911 = vmatprep.mubr.bf16.mxu0 %v678
      %912 = vmatmul.mubr.bf16.gmra.mrb[0].mxu0 %v677
      %v913 = vpop.f32.mrb[0].mxu0
      %v914 = vadd.f32 %v565, %v913
      %v915 = vpop.f32.mrb[0].mxu0
      %v916 = vpop.f32.mrb[0].mxu0
      %v917 = vadd.f32 %v565, %v916
      %v918 = vpop.f32.mrb[0].mxu0
      %919 = vmatprep.mubr.bf16.mxu0 %v680
      %920 = vmatmul.mubr.bf16.gmra.mrb[0].mxu0 %v679
      %v921 = vpop.f32.mrb[0].mxu0
      %v922 = vadd.f32 %v565, %v921
      %v923 = vpop.f32.mrb[0].mxu0
      %v924 = vpop.f32.mrb[0].mxu0
      %v925 = vadd.f32 %v565, %v924
      %v926 = vpop.f32.mrb[0].mxu0
      %927 = vmatprep.mubr.bf16.mxu0 %v682
      %928 = vmatmul.mubr.bf16.gmra.mrb[0].mxu0 %v681
      %v929 = vpop.f32.mrb[0].mxu0
      %v930 = vadd.f32 %v565, %v929
      %v931 = vpop.f32.mrb[0].mxu0
      %v932 = vpop.f32.mrb[0].mxu0
      %v933 = vadd.f32 %v565, %v932
      %v934 = vpop.f32.mrb[0].mxu0
      %935 = vmatprep.mubr.bf16.mxu0 %v684
      %936 = vmatmul.mubr.bf16.gmra.mrb[0].mxu0 %v683
      %v937 = vpop.f32.mrb[0].mxu0
      %v938 = vadd.f32 %v565, %v937
      %v939 = vpop.f32.mrb[0].mxu0
      %v940 = vpop.f32.mrb[0].mxu0
      %v941 = vadd.f32 %v565, %v940
      %v942 = vpop.f32.mrb[0].mxu0
      %943 = vmatprep.mubr.bf16.mxu0 %v686
      %944 = vmatmul.mubr.bf16.gmra.mrb[0].mxu0 %v685
      %v945 = vpop.f32.mrb[0].mxu0
      %v946 = vadd.f32 %v565, %v945
      %v947 = vpop.f32.mrb[0].mxu0
      %v948 = vpop.f32.mrb[0].mxu0
      %v949 = vadd.f32 %v565, %v948
      %v950 = vpop.f32.mrb[0].mxu0
      %951 = vmatprep.mubr.bf16.mxu0 %v688
      %952 = vmatmul.mubr.bf16.gmra.mrb[0].mxu0 %v687
      %v953 = vpop.f32.mrb[0].mxu0
      %v954 = vadd.f32 %v565, %v953
      %v955 = vpop.f32.mrb[0].mxu0
      %v956 = vpop.f32.mrb[0].mxu0
      %v957 = vadd.f32 %v565, %v956
      %v958 = vpop.f32.mrb[0].mxu0
      %959 = vmatprep.mubr.bf16.mxu0 %v690
      %960 = vmatmul.mubr.bf16.gmra.mrb[0].mxu0 %v689
      %v961 = vpop.f32.mrb[0].mxu0
      %v962 = vadd.f32 %v565, %v961
      %v963 = vpop.f32.mrb[0].mxu0
      %v964 = vpop.f32.mrb[0].mxu0
      %v965 = vadd.f32 %v565, %v964
      %v966 = vpop.f32.mrb[0].mxu0
      %967 = vmatprep.mubr.bf16.mxu0 %v692
      %968 = vmatmul.mubr.bf16.gmra.mrb[0].mxu0 %v691
      %v969 = vpop.f32.mrb[0].mxu0
      %v970 = vadd.f32 %v565, %v969
      %v971 = vpop.f32.mrb[0].mxu0
      %v972 = vpop.f32.mrb[0].mxu0
      %v973 = vadd.f32 %v565, %v972
      %v974 = vpop.f32.mrb[0].mxu0
      %975 = vmatprep.mubr.bf16.mxu0 %v694
      %976 = vmatmul.mubr.bf16.gmra.mrb[0].mxu0 %v693
      %v977 = vpop.f32.mrb[0].mxu0
      %v978 = vadd.f32 %v565, %v977
      %v979 = vpop.f32.mrb[0].mxu0
      %v980 = vpop.f32.mrb[0].mxu0
      %v981 = vadd.f32 %v565, %v980
      %v982 = vpop.f32.mrb[0].mxu0
      %983 = vdwg.mxu0
      %v984 = vmax.f32 %v858, 0.0
      %v985 = vmax.f32 %v861, 0.0
      %v986 = vmax.f32 %v866, 0.0
      %v987 = vmax.f32 %v869, 0.0
      %v988 = vmax.f32 %v874, 0.0
      %v989 = vmax.f32 %v877, 0.0
      %v990 = vmax.f32 %v882, 0.0
      %v991 = vmax.f32 %v885, 0.0
      %v992 = vmax.f32 %v890, 0.0
      %v993 = vmax.f32 %v893, 0.0
      %v994 = vmax.f32 %v898, 0.0
      %v995 = vmax.f32 %v901, 0.0
      %v996 = vmax.f32 %v906, 0.0
      %v997 = vmax.f32 %v909, 0.0
      %v998 = vmax.f32 %v914, 0.0
      %v999 = vmax.f32 %v917, 0.0
      %v1000 = vmax.f32 %v922, 0.0
      %v1001 = vmax.f32 %v925, 0.0
      %v1002 = vmax.f32 %v930, 0.0
      %v1003 = vmax.f32 %v933, 0.0
      %v1004 = vmax.f32 %v938, 0.0
      %v1005 = vmax.f32 %v941, 0.0
      %v1006 = vmax.f32 %v946, 0.0
      %v1007 = vmax.f32 %v949, 0.0
      %v1008 = vmax.f32 %v954, 0.0
      %v1009 = vmax.f32 %v957, 0.0
      %v1010 = vmax.f32 %v962, 0.0
      %v1011 = vmax.f32 %v965, 0.0
      %v1012 = vmax.f32 %v970, 0.0
      %v1013 = vmax.f32 %v973, 0.0
      %v1014 = vmax.f32 %v978, 0.0
      %v1015 = vmax.f32 %v981, 0.0
      %vm1016 = vcmask 261123
      %vm1017 = vsmask.f32 7950
      %vm1018 = vmand %vm1016, %vm1017
      %v1019 = vld [vmem:[#allocation2] sm:$0xf8]
      %v1020 = vsel %vm1018, 0, %v1019
      %1021 = vst [vmem:[#allocation2] sm:$0xf8] %v1020
      %vm1022 = vcmask 258048
      %vm1023 = vsmask.f32 4352
      %vm1024 = vmand %vm1022, %vm1023
      %v1025 = vld [vmem:[#allocation2 + $0x8] sm:$0x1f]
      %v1026 = vsel %vm1024, 0, %v1025
      %1027 = vst [vmem:[#allocation2 + $0x8] sm:$0x1f] %v1026
      %s1028 = scalar_lea.vmem [#allocation2], 272
      %v1029 = vld [vmem:[%s1028] sm:$0xf8]
      %v1030 = vsel %vm1018, 0, %v1029
      %1031 = vst [vmem:[%s1028] sm:$0xf8] %v1030
      %v1032 = vld [vmem:[%s1028 + $0x8] sm:$0x1f]
      %v1033 = vsel %vm1024, 0, %v1032
      %1034 = vst [vmem:[%s1028 + $0x8] sm:$0x1f] %v1033
      %s1035 = scalar_lea.vmem [#allocation2], 16
      %vm1036 = vcmask 257027
      %vm1037 = vmand %vm1036, %vm1017
      %v1038 = vld [vmem:[%s1035] sm:$0x8]
      %v1039 = vsel %vm1037, 0, %v1038
      %1040 = vst [vmem:[%s1035] sm:$0x8] %v1039
      %v1041 = vld [vmem:[%s1035 + $0x10] sm:$0x8]
      %v1042 = vsel %vm1037, 0, %v1041
      %1043 = vst [vmem:[%s1035 + $0x10] sm:$0x8] %v1042
      %v1044 = vld [vmem:[%s1035 + $0x20] sm:$0x8]
      %v1045 = vsel %vm1037, 0, %v1044
      %1046 = vst [vmem:[%s1035 + $0x20] sm:$0x8] %v1045
      %v1047 = vld [vmem:[%s1035 + $0x30] sm:$0x8]
      %v1048 = vsel %vm1037, 0, %v1047
      %1049 = vst [vmem:[%s1035 + $0x30] sm:$0x8] %v1048
      %v1050 = vld [vmem:[%s1035 + $0x40] sm:$0x8]
      %v1051 = vsel %vm1037, 0, %v1050
      %1052 = vst [vmem:[%s1035 + $0x40] sm:$0x8] %v1051
      %v1053 = vld [vmem:[%s1035 + $0x50] sm:$0x8]
      %v1054 = vsel %vm1037, 0, %v1053
      %1055 = vst [vmem:[%s1035 + $0x50] sm:$0x8] %v1054
      %v1056 = vld [vmem:[%s1035 + $0x60] sm:$0x8]
      %v1057 = vsel %vm1037, 0, %v1056
      %1058 = vst [vmem:[%s1035 + $0x60] sm:$0x8] %v1057
      %v1059 = vld [vmem:[%s1035 + $0x70] sm:$0x8]
      %v1060 = vsel %vm1037, 0, %v1059
      %1061 = vst [vmem:[%s1035 + $0x70] sm:$0x8] %v1060
      %v1062 = vld [vmem:[%s1035 + $0x80] sm:$0x8]
      %v1063 = vsel %vm1037, 0, %v1062
      %1064 = vst [vmem:[%s1035 + $0x80] sm:$0x8] %v1063
      %v1065 = vld [vmem:[%s1035 + $0x90] sm:$0x8]
      %v1066 = vsel %vm1037, 0, %v1065
      %1067 = vst [vmem:[%s1035 + $0x90] sm:$0x8] %v1066
      %v1068 = vld [vmem:[%s1035 + $0xa0] sm:$0x8]
      %v1069 = vsel %vm1037, 0, %v1068
      %1070 = vst [vmem:[%s1035 + $0xa0] sm:$0x8] %v1069
      %v1071 = vld [vmem:[%s1035 + $0xb0] sm:$0x8]
      %v1072 = vsel %vm1037, 0, %v1071
      %1073 = vst [vmem:[%s1035 + $0xb0] sm:$0x8] %v1072
      %v1074 = vld [vmem:[%s1035 + $0xc0] sm:$0x8]
      %v1075 = vsel %vm1037, 0, %v1074
      %1076 = vst [vmem:[%s1035 + $0xc0] sm:$0x8] %v1075
      %v1077 = vld [vmem:[%s1035 + $0xd0] sm:$0x8]
      %v1078 = vsel %vm1037, 0, %v1077
      %1079 = vst [vmem:[%s1035 + $0xd0] sm:$0x8] %v1078
      %v1080 = vld [vmem:[%s1035 + $0xe0] sm:$0x8]
      %v1081 = vsel %vm1037, 0, %v1080
      %1082 = vst [vmem:[%s1035 + $0xe0] sm:$0x8] %v1081
      %v1083 = vld [vmem:[%s1035 + $0xf0] sm:$0x8]
      %v1084 = vsel %vm1037, 0, %v1083
      %1085 = vst [vmem:[%s1035 + $0xf0] sm:$0x8] %v1084
      %vm1086 = vcmask 258052
      %vm1087 = vmand %vm1086, %vm1023
      %v1088 = vld [vmem:[%s1035 + $0x8] sm:$0x10]
      %v1089 = vsel %vm1087, 0, %v1088
      %1090 = vst [vmem:[%s1035 + $0x8] sm:$0x10] %v1089
      %v1091 = vld [vmem:[%s1035 + $0x18] sm:$0x10]
      %v1092 = vsel %vm1087, 0, %v1091
      %1093 = vst [vmem:[%s1035 + $0x18] sm:$0x10] %v1092
      %v1094 = vld [vmem:[%s1035 + $0x28] sm:$0x10]
      %v1095 = vsel %vm1087, 0, %v1094
      %1096 = vst [vmem:[%s1035 + $0x28] sm:$0x10] %v1095
      %v1097 = vld [vmem:[%s1035 + $0x38] sm:$0x10]
      %v1098 = vsel %vm1087, 0, %v1097
      %1099 = vst [vmem:[%s1035 + $0x38] sm:$0x10] %v1098
      %v1100 = vld [vmem:[%s1035 + $0x48] sm:$0x10]
      %v1101 = vsel %vm1087, 0, %v1100
      %1102 = vst [vmem:[%s1035 + $0x48] sm:$0x10] %v1101
      %v1103 = vld [vmem:[%s1035 + $0x58] sm:$0x10]
      %v1104 = vsel %vm1087, 0, %v1103
      %1105 = vst [vmem:[%s1035 + $0x58] sm:$0x10] %v1104
      %v1106 = vld [vmem:[%s1035 + $0x68] sm:$0x10]
      %v1107 = vsel %vm1087, 0, %v1106
      %1108 = vst [vmem:[%s1035 + $0x68] sm:$0x10] %v1107
      %v1109 = vld [vmem:[%s1035 + $0x78] sm:$0x10]
      %v1110 = vsel %vm1087, 0, %v1109
      %1111 = vst [vmem:[%s1035 + $0x78] sm:$0x10] %v1110
      %v1112 = vld [vmem:[%s1035 + $0x88] sm:$0x10]
      %v1113 = vsel %vm1087, 0, %v1112
      %1114 = vst [vmem:[%s1035 + $0x88] sm:$0x10] %v1113
      %v1115 = vld [vmem:[%s1035 + $0x98] sm:$0x10]
      %v1116 = vsel %vm1087, 0, %v1115
      %1117 = vst [vmem:[%s1035 + $0x98] sm:$0x10] %v1116
      %v1118 = vld [vmem:[%s1035 + $0xa8] sm:$0x10]
      %v1119 = vsel %vm1087, 0, %v1118
      %1120 = vst [vmem:[%s1035 + $0xa8] sm:$0x10] %v1119
      %v1121 = vld [vmem:[%s1035 + $0xb8] sm:$0x10]
      %v1122 = vsel %vm1087, 0, %v1121
      %1123 = vst [vmem:[%s1035 + $0xb8] sm:$0x10] %v1122
      %v1124 = vld [vmem:[%s1035 + $0xc8] sm:$0x10]
      %v1125 = vsel %vm1087, 0, %v1124
      %1126 = vst [vmem:[%s1035 + $0xc8] sm:$0x10] %v1125
      %v1127 = vld [vmem:[%s1035 + $0xd8] sm:$0x10]
      %v1128 = vsel %vm1087, 0, %v1127
      %1129 = vst [vmem:[%s1035 + $0xd8] sm:$0x10] %v1128
      %v1130 = vld [vmem:[%s1035 + $0xe8] sm:$0x10]
      %v1131 = vsel %vm1087, 0, %v1130
      %1132 = vst [vmem:[%s1035 + $0xe8] sm:$0x10] %v1131
      %v1133 = vld [vmem:[%s1035 + $0xf8] sm:$0x10]
      %v1134 = vsel %vm1087, 0, %v1133
      %1135 = vst [vmem:[%s1035 + $0xf8] sm:$0x10] %v1134
      %v1136 = vpack.c.bf16 %v985, %v984
      %v1137 = vpack.c.bf16 %v987, %v986
      %v1138 = vpack.c.bf16 %v989, %v988
      %v1139 = vpack.c.bf16 %v991, %v990
      %v1140 = vpack.c.bf16 %v993, %v992
      %v1141 = vpack.c.bf16 %v995, %v994
      %v1142 = vpack.c.bf16 %v997, %v996
      %v1143 = vpack.c.bf16 %v999, %v998
      %v1144 = vpack.c.bf16 %v1001, %v1000
      %v1145 = vpack.c.bf16 %v1003, %v1002
      %v1146 = vpack.c.bf16 %v1005, %v1004
      %v1147 = vpack.c.bf16 %v1007, %v1006
      %v1148 = vpack.c.bf16 %v1009, %v1008
      %v1149 = vpack.c.bf16 %v1011, %v1010
      %v1150 = vpack.c.bf16 %v1013, %v1012
      %v1151 = vpack.c.bf16 %v1015, %v1014
      %v1168 = vrot.slane %v1136, 4
      %v1169 = vrot.slane %v1137, 4
      %v1170 = vrot.slane %v1138, 4
      %v1171 = vrot.slane %v1139, 4
      %v1172 = vrot.slane %v1140, 4
      %v1173 = vrot.slane %v1141, 4
      %v1174 = vrot.slane %v1142, 4
      %v1175 = vrot.slane %v1143, 4
      %v1176 = vrot.slane %v1144, 4
      %v1177 = vrot.slane %v1145, 4
      %v1178 = vrot.slane %v1146, 4
      %v1179 = vrot.slane %v1147, 4
      %v1180 = vrot.slane %v1148, 4
      %v1181 = vrot.slane %v1149, 4
      %v1182 = vrot.slane %v1150, 4
      %v1183 = vrot.slane %v1151, 4
      %vm1200 = vcmask 261124
      %1201 = vst.msk [vmem:[%s1035] sm:$0xf0] %vm1200, %v1168
      %vm1202 = vcmask 257024
      %1203 = vst.msk [vmem:[%s1035 + $0x8] sm:$0xf] %vm1202, %v1168
      %1204 = vst.msk [vmem:[%s1035 + $0x10] sm:$0xf0] %vm1200, %v1169
      %1205 = vst.msk [vmem:[%s1035 + $0x18] sm:$0xf] %vm1202, %v1169
      %1206 = vst.msk [vmem:[%s1035 + $0x20] sm:$0xf0] %vm1200, %v1170
      %1207 = vst.msk [vmem:[%s1035 + $0x28] sm:$0xf] %vm1202, %v1170
      %1208 = vst.msk [vmem:[%s1035 + $0x30] sm:$0xf0] %vm1200, %v1171
      %1209 = vst.msk [vmem:[%s1035 + $0x38] sm:$0xf] %vm1202, %v1171
      %1210 = vst.msk [vmem:[%s1035 + $0x40] sm:$0xf0] %vm1200, %v1172
      %1211 = vst.msk [vmem:[%s1035 + $0x48] sm:$0xf] %vm1202, %v1172
      %1212 = vst.msk [vmem:[%s1035 + $0x50] sm:$0xf0] %vm1200, %v1173
      %1213 = vst.msk [vmem:[%s1035 + $0x58] sm:$0xf] %vm1202, %v1173
      %1214 = vst.msk [vmem:[%s1035 + $0x60] sm:$0xf0] %vm1200, %v1174
      %1215 = vst.msk [vmem:[%s1035 + $0x68] sm:$0xf] %vm1202, %v1174
      %1216 = vst.msk [vmem:[%s1035 + $0x70] sm:$0xf0] %vm1200, %v1175
      %1217 = vst.msk [vmem:[%s1035 + $0x78] sm:$0xf] %vm1202, %v1175
      %1218 = vst.msk [vmem:[%s1035 + $0x80] sm:$0xf0] %vm1200, %v1176
      %1219 = vst.msk [vmem:[%s1035 + $0x88] sm:$0xf] %vm1202, %v1176
      %1220 = vst.msk [vmem:[%s1035 + $0x90] sm:$0xf0] %vm1200, %v1177
      %1221 = vst.msk [vmem:[%s1035 + $0x98] sm:$0xf] %vm1202, %v1177
      %1222 = vst.msk [vmem:[%s1035 + $0xa0] sm:$0xf0] %vm1200, %v1178
      %1223 = vst.msk [vmem:[%s1035 + $0xa8] sm:$0xf] %vm1202, %v1178
      %1224 = vst.msk [vmem:[%s1035 + $0xb0] sm:$0xf0] %vm1200, %v1179
      %1225 = vst.msk [vmem:[%s1035 + $0xb8] sm:$0xf] %vm1202, %v1179
      %1226 = vst.msk [vmem:[%s1035 + $0xc0] sm:$0xf0] %vm1200, %v1180
      %1227 = vst.msk [vmem:[%s1035 + $0xc8] sm:$0xf] %vm1202, %v1180
      %1228 = vst.msk [vmem:[%s1035 + $0xd0] sm:$0xf0] %vm1200, %v1181
      %1229 = vst.msk [vmem:[%s1035 + $0xd8] sm:$0xf] %vm1202, %v1181
      %1230 = vst.msk [vmem:[%s1035 + $0xe0] sm:$0xf0] %vm1200, %v1182
      %1231 = vst.msk [vmem:[%s1035 + $0xe8] sm:$0xf] %vm1202, %v1182
      %1232 = vst.msk [vmem:[%s1035 + $0xf0] sm:$0xf0] %vm1200, %v1183
      %1233 = vst.msk [vmem:[%s1035 + $0xf8] sm:$0xf] %vm1202, %v1183
      %v1234 = vld [vmem:[#allocation2] sm:$0xf8]
      %v1235 = vld [vmem:[#allocation2 + $0x8] sm:$0xf]
      %v1236 = vld [vmem:[#allocation2 + $0x10] sm:$0xf8]
      %v1237 = vld [vmem:[#allocation2 + $0x18] sm:$0xf]
      %v1238 = vld [vmem:[#allocation2 + $0x20] sm:$0xf8]
      %v1239 = vld [vmem:[#allocation2 + $0x28] sm:$0xf]
      %v1240 = vld [vmem:[#allocation2 + $0x30] sm:$0xf8]
      %v1241 = vld [vmem:[#allocation2 + $0x38] sm:$0xf]
      %v1242 = vld [vmem:[#allocation2 + $0x40] sm:$0xf8]
      %v1243 = vld [vmem:[#allocation2 + $0x48] sm:$0xf]
      %v1244 = vld [vmem:[#allocation2 + $0x50] sm:$0xf8]
      %v1245 = vld [vmem:[#allocation2 + $0x58] sm:$0xf]
      %v1246 = vld [vmem:[#allocation2 + $0x60] sm:$0xf8]
      %v1247 = vld [vmem:[#allocation2 + $0x68] sm:$0xf]
      %v1248 = vld [vmem:[#allocation2 + $0x70] sm:$0xf8]
      %v1249 = vld [vmem:[#allocation2 + $0x78] sm:$0xf]
      %v1250 = vld [vmem:[#allocation2 + $0x80] sm:$0xf8]
      %v1251 = vld [vmem:[#allocation2 + $0x88] sm:$0xf]
      %v1252 = vld [vmem:[#allocation2 + $0x90] sm:$0xf8]
      %v1253 = vld [vmem:[#allocation2 + $0x98] sm:$0xf]
      %v1254 = vld [vmem:[#allocation2 + $0xa0] sm:$0xf8]
      %v1255 = vld [vmem:[#allocation2 + $0xa8] sm:$0xf]
      %v1256 = vld [vmem:[#allocation2 + $0xb0] sm:$0xf8]
      %v1257 = vld [vmem:[#allocation2 + $0xb8] sm:$0xf]
      %v1258 = vld [vmem:[#allocation2 + $0xc0] sm:$0xf8]
      %v1259 = vld [vmem:[#allocation2 + $0xc8] sm:$0xf]
      %v1260 = vld [vmem:[#allocation2 + $0xd0] sm:$0xf8]
      %v1261 = vld [vmem:[#allocation2 + $0xd8] sm:$0xf]
      %v1262 = vld [vmem:[#allocation2 + $0xe0] sm:$0xf8]
      %v1263 = vld [vmem:[#allocation2 + $0xe8] sm:$0xf]
      %v1264 = vld [vmem:[#allocation2 + $0xf0] sm:$0xf8]
      %v1265 = vld [vmem:[#allocation2 + $0xf8] sm:$0xf]
      %v1267 = vshrl.u32 %v1234, 16
      %v1269 = vrot.slane %v1267, 3
      %v1270 = vshll.u32 %v1234, 16
      %v1272 = vrot.slane %v1270, 4
      %v1273 = vor.u32 %v1269, %v1272
      %v1275 = vshrl.u32 %v1235, 16
      %v1277 = vrot.slane %v1275, 3
      %v1278 = vshll.u32 %v1235, 16
      %v1280 = vrot.slane %v1278, 4
      %v1281 = vor.u32 %v1277, %v1280
      %v1282 = vsel %vm1023, %v1273, %v1281
      %v1284 = vshrl.u32 %v1236, 16
      %v1286 = vrot.slane %v1284, 3
      %v1287 = vshll.u32 %v1236, 16
      %v1289 = vrot.slane %v1287, 4
      %v1290 = vor.u32 %v1286, %v1289
      %v1292 = vshrl.u32 %v1237, 16
      %v1294 = vrot.slane %v1292, 3
      %v1295 = vshll.u32 %v1237, 16
      %v1297 = vrot.slane %v1295, 4
      %v1298 = vor.u32 %v1294, %v1297
      %v1299 = vsel %vm1023, %v1290, %v1298
      %v1301 = vshrl.u32 %v1238, 16
      %v1303 = vrot.slane %v1301, 3
      %v1304 = vshll.u32 %v1238, 16
      %v1306 = vrot.slane %v1304, 4
      %v1307 = vor.u32 %v1303, %v1306
      %v1309 = vshrl.u32 %v1239, 16
      %v1311 = vrot.slane %v1309, 3
      %v1312 = vshll.u32 %v1239, 16
      %v1314 = vrot.slane %v1312, 4
      %v1315 = vor.u32 %v1311, %v1314
      %v1316 = vsel %vm1023, %v1307, %v1315
      %v1318 = vshrl.u32 %v1240, 16
      %v1320 = vrot.slane %v1318, 3
      %v1321 = vshll.u32 %v1240, 16
      %v1323 = vrot.slane %v1321, 4
      %v1324 = vor.u32 %v1320, %v1323
      %v1326 = vshrl.u32 %v1241, 16
      %v1328 = vrot.slane %v1326, 3
      %v1329 = vshll.u32 %v1241, 16
      %v1331 = vrot.slane %v1329, 4
      %v1332 = vor.u32 %v1328, %v1331
      %v1333 = vsel %vm1023, %v1324, %v1332
      %v1335 = vshrl.u32 %v1242, 16
      %v1337 = vrot.slane %v1335, 3
      %v1338 = vshll.u32 %v1242, 16
      %v1340 = vrot.slane %v1338, 4
      %v1341 = vor.u32 %v1337, %v1340
      %v1343 = vshrl.u32 %v1243, 16
      %v1345 = vrot.slane %v1343, 3
      %v1346 = vshll.u32 %v1243, 16
      %v1348 = vrot.slane %v1346, 4
      %v1349 = vor.u32 %v1345, %v1348
      %v1350 = vsel %vm1023, %v1341, %v1349
      %v1352 = vshrl.u32 %v1244, 16
      %v1354 = vrot.slane %v1352, 3
      %v1355 = vshll.u32 %v1244, 16
      %v1357 = vrot.slane %v1355, 4
      %v1358 = vor.u32 %v1354, %v1357
      %v1360 = vshrl.u32 %v1245, 16
      %v1362 = vrot.slane %v1360, 3
      %v1363 = vshll.u32 %v1245, 16
      %v1365 = vrot.slane %v1363, 4
      %v1366 = vor.u32 %v1362, %v1365
      %v1367 = vsel %vm1023, %v1358, %v1366
      %v1369 = vshrl.u32 %v1246, 16
      %v1371 = vrot.slane %v1369, 3
      %v1372 = vshll.u32 %v1246, 16
      %v1374 = vrot.slane %v1372, 4
      %v1375 = vor.u32 %v1371, %v1374
      %v1377 = vshrl.u32 %v1247, 16
      %v1379 = vrot.slane %v1377, 3
      %v1380 = vshll.u32 %v1247, 16
      %v1382 = vrot.slane %v1380, 4
      %v1383 = vor.u32 %v1379, %v1382
      %v1384 = vsel %vm1023, %v1375, %v1383
      %v1386 = vshrl.u32 %v1248, 16
      %v1388 = vrot.slane %v1386, 3
      %v1389 = vshll.u32 %v1248, 16
      %v1391 = vrot.slane %v1389, 4
      %v1392 = vor.u32 %v1388, %v1391
      %v1394 = vshrl.u32 %v1249, 16
      %v1396 = vrot.slane %v1394, 3
      %v1397 = vshll.u32 %v1249, 16
      %v1399 = vrot.slane %v1397, 4
      %v1400 = vor.u32 %v1396, %v1399
      %v1401 = vsel %vm1023, %v1392, %v1400
      %v1403 = vshrl.u32 %v1250, 16
      %v1405 = vrot.slane %v1403, 3
      %v1406 = vshll.u32 %v1250, 16
      %v1408 = vrot.slane %v1406, 4
      %v1409 = vor.u32 %v1405, %v1408
      %v1411 = vshrl.u32 %v1251, 16
      %v1413 = vrot.slane %v1411, 3
      %v1414 = vshll.u32 %v1251, 16
      %v1416 = vrot.slane %v1414, 4
      %v1417 = vor.u32 %v1413, %v1416
      %v1418 = vsel %vm1023, %v1409, %v1417
      %v1420 = vshrl.u32 %v1252, 16
      %v1422 = vrot.slane %v1420, 3
      %v1423 = vshll.u32 %v1252, 16
      %v1425 = vrot.slane %v1423, 4
      %v1426 = vor.u32 %v1422, %v1425
      %v1428 = vshrl.u32 %v1253, 16
      %v1430 = vrot.slane %v1428, 3
      %v1431 = vshll.u32 %v1253, 16
      %v1433 = vrot.slane %v1431, 4
      %v1434 = vor.u32 %v1430, %v1433
      %v1435 = vsel %vm1023, %v1426, %v1434
      %v1437 = vshrl.u32 %v1254, 16
      %v1439 = vrot.slane %v1437, 3
      %v1440 = vshll.u32 %v1254, 16
      %v1442 = vrot.slane %v1440, 4
      %v1443 = vor.u32 %v1439, %v1442
      %v1445 = vshrl.u32 %v1255, 16
      %v1447 = vrot.slane %v1445, 3
      %v1448 = vshll.u32 %v1255, 16
      %v1450 = vrot.slane %v1448, 4
      %v1451 = vor.u32 %v1447, %v1450
      %v1452 = vsel %vm1023, %v1443, %v1451
      %v1454 = vshrl.u32 %v1256, 16
      %v1456 = vrot.slane %v1454, 3
      %v1457 = vshll.u32 %v1256, 16
      %v1459 = vrot.slane %v1457, 4
      %v1460 = vor.u32 %v1456, %v1459
      %v1462 = vshrl.u32 %v1257, 16
      %v1464 = vrot.slane %v1462, 3
      %v1465 = vshll.u32 %v1257, 16
      %v1467 = vrot.slane %v1465, 4
      %v1468 = vor.u32 %v1464, %v1467
      %v1469 = vsel %vm1023, %v1460, %v1468
      %v1471 = vshrl.u32 %v1258, 16
      %v1473 = vrot.slane %v1471, 3
      %v1474 = vshll.u32 %v1258, 16
      %v1476 = vrot.slane %v1474, 4
      %v1477 = vor.u32 %v1473, %v1476
      %v1479 = vshrl.u32 %v1259, 16
      %v1481 = vrot.slane %v1479, 3
      %v1482 = vshll.u32 %v1259, 16
      %v1484 = vrot.slane %v1482, 4
      %v1485 = vor.u32 %v1481, %v1484
      %v1486 = vsel %vm1023, %v1477, %v1485
      %v1488 = vshrl.u32 %v1260, 16
      %v1490 = vrot.slane %v1488, 3
      %v1491 = vshll.u32 %v1260, 16
      %v1493 = vrot.slane %v1491, 4
      %v1494 = vor.u32 %v1490, %v1493
      %v1496 = vshrl.u32 %v1261, 16
      %v1498 = vrot.slane %v1496, 3
      %v1499 = vshll.u32 %v1261, 16
      %v1501 = vrot.slane %v1499, 4
      %v1502 = vor.u32 %v1498, %v1501
      %v1503 = vsel %vm1023, %v1494, %v1502
      %v1505 = vshrl.u32 %v1262, 16
      %v1507 = vrot.slane %v1505, 3
      %v1508 = vshll.u32 %v1262, 16
      %v1510 = vrot.slane %v1508, 4
      %v1511 = vor.u32 %v1507, %v1510
      %v1513 = vshrl.u32 %v1263, 16
      %v1515 = vrot.slane %v1513, 3
      %v1516 = vshll.u32 %v1263, 16
      %v1518 = vrot.slane %v1516, 4
      %v1519 = vor.u32 %v1515, %v1518
      %v1520 = vsel %vm1023, %v1511, %v1519
      %v1522 = vshrl.u32 %v1264, 16
      %v1524 = vrot.slane %v1522, 3
      %v1525 = vshll.u32 %v1264, 16
      %v1527 = vrot.slane %v1525, 4
      %v1528 = vor.u32 %v1524, %v1527
      %v1530 = vshrl.u32 %v1265, 16
      %v1532 = vrot.slane %v1530, 3
      %v1533 = vshll.u32 %v1265, 16
      %v1535 = vrot.slane %v1533, 4
      %v1536 = vor.u32 %v1532, %v1535
      %v1537 = vsel %vm1023, %v1528, %v1536
      %v1538 = vld [vmem:[#allocation2] sm:$0xf0]
      %v1539 = vld [vmem:[#allocation2 + $0x10] sm:$0xf0]
      %v1540 = vld [vmem:[#allocation2 + $0x20] sm:$0xf0]
      %v1541 = vld [vmem:[#allocation2 + $0x30] sm:$0xf0]
      %v1542 = vld [vmem:[#allocation2 + $0x40] sm:$0xf0]
      %v1543 = vld [vmem:[#allocation2 + $0x50] sm:$0xf0]
      %v1544 = vld [vmem:[#allocation2 + $0x60] sm:$0xf0]
      %v1545 = vld [vmem:[#allocation2 + $0x70] sm:$0xf0]
      %v1546 = vld [vmem:[#allocation2 + $0x80] sm:$0xf0]
      %v1547 = vld [vmem:[#allocation2 + $0x90] sm:$0xf0]
      %v1548 = vld [vmem:[#allocation2 + $0xa0] sm:$0xf0]
      %v1549 = vld [vmem:[#allocation2 + $0xb0] sm:$0xf0]
      %v1550 = vld [vmem:[#allocation2 + $0xc0] sm:$0xf0]
      %v1551 = vld [vmem:[#allocation2 + $0xd0] sm:$0xf0]
      %v1552 = vld [vmem:[#allocation2 + $0xe0] sm:$0xf0]
      %v1553 = vld [vmem:[#allocation2 + $0xf0] sm:$0xf0]
      %vm1586 = vcmask 1043456
      %v1587 = vrot.slane %v1538, 4
      %v1588 = vrot.slane %v1235, 4
      %v1589 = vsel %vm1586, %v1587, %v1588
      %v1590 = vrot.slane %v1539, 4
      %v1591 = vrot.slane %v1237, 4
      %v1592 = vsel %vm1586, %v1590, %v1591
      %v1593 = vrot.slane %v1540, 4
      %v1594 = vrot.slane %v1239, 4
      %v1595 = vsel %vm1586, %v1593, %v1594
      %v1596 = vrot.slane %v1541, 4
      %v1597 = vrot.slane %v1241, 4
      %v1598 = vsel %vm1586, %v1596, %v1597
      %v1599 = vrot.slane %v1542, 4
      %v1600 = vrot.slane %v1243, 4
      %v1601 = vsel %vm1586, %v1599, %v1600
      %v1602 = vrot.slane %v1543, 4
      %v1603 = vrot.slane %v1245, 4
      %v1604 = vsel %vm1586, %v1602, %v1603
      %v1605 = vrot.slane %v1544, 4
      %v1606 = vrot.slane %v1247, 4
      %v1607 = vsel %vm1586, %v1605, %v1606
      %v1608 = vrot.slane %v1545, 4
      %v1609 = vrot.slane %v1249, 4
      %v1610 = vsel %vm1586, %v1608, %v1609
      %v1611 = vrot.slane %v1546, 4
      %v1612 = vrot.slane %v1251, 4
      %v1613 = vsel %vm1586, %v1611, %v1612
      %v1614 = vrot.slane %v1547, 4
      %v1615 = vrot.slane %v1253, 4
      %v1616 = vsel %vm1586, %v1614, %v1615
      %v1617 = vrot.slane %v1548, 4
      %v1618 = vrot.slane %v1255, 4
      %v1619 = vsel %vm1586, %v1617, %v1618
      %v1620 = vrot.slane %v1549, 4
      %v1621 = vrot.slane %v1257, 4
      %v1622 = vsel %vm1586, %v1620, %v1621
      %v1623 = vrot.slane %v1550, 4
      %v1624 = vrot.slane %v1259, 4
      %v1625 = vsel %vm1586, %v1623, %v1624
      %v1626 = vrot.slane %v1551, 4
      %v1627 = vrot.slane %v1261, 4
      %v1628 = vsel %vm1586, %v1626, %v1627
      %v1629 = vrot.slane %v1552, 4
      %v1630 = vrot.slane %v1263, 4
      %v1631 = vsel %vm1586, %v1629, %v1630
      %v1632 = vrot.slane %v1553, 4
      %v1633 = vrot.slane %v1265, 4
      %v1634 = vsel %vm1586, %v1632, %v1633
      %v1635 = vld [vmem:[#allocation2 + $0x8] sm:$0x1f]
      %v1636 = vld [vmem:[#allocation2 + $0x18] sm:$0x1f]
      %v1637 = vld [vmem:[#allocation2 + $0x28] sm:$0x1f]
      %v1638 = vld [vmem:[#allocation2 + $0x38] sm:$0x1f]
      %v1639 = vld [vmem:[#allocation2 + $0x48] sm:$0x1f]
      %v1640 = vld [vmem:[#allocation2 + $0x58] sm:$0x1f]
      %v1641 = vld [vmem:[#allocation2 + $0x68] sm:$0x1f]
      %v1642 = vld [vmem:[#allocation2 + $0x78] sm:$0x1f]
      %v1643 = vld [vmem:[#allocation2 + $0x88] sm:$0x1f]
      %v1644 = vld [vmem:[#allocation2 + $0x98] sm:$0x1f]
      %v1645 = vld [vmem:[#allocation2 + $0xa8] sm:$0x1f]
      %v1646 = vld [vmem:[#allocation2 + $0xb8] sm:$0x1f]
      %v1647 = vld [vmem:[#allocation2 + $0xc8] sm:$0x1f]
      %v1648 = vld [vmem:[#allocation2 + $0xd8] sm:$0x1f]
      %v1649 = vld [vmem:[#allocation2 + $0xe8] sm:$0x1f]
      %v1650 = vld [vmem:[#allocation2 + $0xf8] sm:$0x1f]
      %vm1651 = vsmask.f32 3328
      %v1653 = vshrl.u32 %v1538, 16
      %v1655 = vrot.slane %v1653, 4
      %v1656 = vshll.u32 %v1538, 16
      %v1658 = vrot.slane %v1656, 5
      %v1659 = vor.u32 %v1655, %v1658
      %v1661 = vshrl.u32 %v1635, 16
      %v1663 = vrot.slane %v1661, 4
      %v1664 = vshll.u32 %v1635, 16
      %v1666 = vrot.slane %v1664, 5
      %v1667 = vor.u32 %v1663, %v1666
      %v1668 = vsel %vm1651, %v1659, %v1667
      %v1670 = vshrl.u32 %v1539, 16
      %v1672 = vrot.slane %v1670, 4
      %v1673 = vshll.u32 %v1539, 16
      %v1675 = vrot.slane %v1673, 5
      %v1676 = vor.u32 %v1672, %v1675
      %v1678 = vshrl.u32 %v1636, 16
      %v1680 = vrot.slane %v1678, 4
      %v1681 = vshll.u32 %v1636, 16
      %v1683 = vrot.slane %v1681, 5
      %v1684 = vor.u32 %v1680, %v1683
      %v1685 = vsel %vm1651, %v1676, %v1684
      %v1687 = vshrl.u32 %v1540, 16
      %v1689 = vrot.slane %v1687, 4
      %v1690 = vshll.u32 %v1540, 16
      %v1692 = vrot.slane %v1690, 5
      %v1693 = vor.u32 %v1689, %v1692
      %v1695 = vshrl.u32 %v1637, 16
      %v1697 = vrot.slane %v1695, 4
      %v1698 = vshll.u32 %v1637, 16
      %v1700 = vrot.slane %v1698, 5
      %v1701 = vor.u32 %v1697, %v1700
      %v1702 = vsel %vm1651, %v1693, %v1701
      %v1704 = vshrl.u32 %v1541, 16
      %v1706 = vrot.slane %v1704, 4
      %v1707 = vshll.u32 %v1541, 16
      %v1709 = vrot.slane %v1707, 5
      %v1710 = vor.u32 %v1706, %v1709
      %v1712 = vshrl.u32 %v1638, 16
      %v1714 = vrot.slane %v1712, 4
      %v1715 = vshll.u32 %v1638, 16
      %v1717 = vrot.slane %v1715, 5
      %v1718 = vor.u32 %v1714, %v1717
      %v1719 = vsel %vm1651, %v1710, %v1718
      %v1721 = vshrl.u32 %v1542, 16
      %v1723 = vrot.slane %v1721, 4
      %v1724 = vshll.u32 %v1542, 16
      %v1726 = vrot.slane %v1724, 5
      %v1727 = vor.u32 %v1723, %v1726
      %v1729 = vshrl.u32 %v1639, 16
      %v1731 = vrot.slane %v1729, 4
      %v1732 = vshll.u32 %v1639, 16
      %v1734 = vrot.slane %v1732, 5
      %v1735 = vor.u32 %v1731, %v1734
      %v1736 = vsel %vm1651, %v1727, %v1735
      %v1738 = vshrl.u32 %v1543, 16
      %v1740 = vrot.slane %v1738, 4
      %v1741 = vshll.u32 %v1543, 16
      %v1743 = vrot.slane %v1741, 5
      %v1744 = vor.u32 %v1740, %v1743
      %v1746 = vshrl.u32 %v1640, 16
      %v1748 = vrot.slane %v1746, 4
      %v1749 = vshll.u32 %v1640, 16
      %v1751 = vrot.slane %v1749, 5
      %v1752 = vor.u32 %v1748, %v1751
      %v1753 = vsel %vm1651, %v1744, %v1752
      %v1755 = vshrl.u32 %v1544, 16
      %v1757 = vrot.slane %v1755, 4
      %v1758 = vshll.u32 %v1544, 16
      %v1760 = vrot.slane %v1758, 5
      %v1761 = vor.u32 %v1757, %v1760
      %v1763 = vshrl.u32 %v1641, 16
      %v1765 = vrot.slane %v1763, 4
      %v1766 = vshll.u32 %v1641, 16
      %v1768 = vrot.slane %v1766, 5
      %v1769 = vor.u32 %v1765, %v1768
      %v1770 = vsel %vm1651, %v1761, %v1769
      %v1772 = vshrl.u32 %v1545, 16
      %v1774 = vrot.slane %v1772, 4
      %v1775 = vshll.u32 %v1545, 16
      %v1777 = vrot.slane %v1775, 5
      %v1778 = vor.u32 %v1774, %v1777
      %v1780 = vshrl.u32 %v1642, 16
      %v1782 = vrot.slane %v1780, 4
      %v1783 = vshll.u32 %v1642, 16
      %v1785 = vrot.slane %v1783, 5
      %v1786 = vor.u32 %v1782, %v1785
      %v1787 = vsel %vm1651, %v1778, %v1786
      %v1789 = vshrl.u32 %v1546, 16
      %v1791 = vrot.slane %v1789, 4
      %v1792 = vshll.u32 %v1546, 16
      %v1794 = vrot.slane %v1792, 5
      %v1795 = vor.u32 %v1791, %v1794
      %v1797 = vshrl.u32 %v1643, 16
      %v1799 = vrot.slane %v1797, 4
      %v1800 = vshll.u32 %v1643, 16
      %v1802 = vrot.slane %v1800, 5
      %v1803 = vor.u32 %v1799, %v1802
      %v1804 = vsel %vm1651, %v1795, %v1803
      %v1806 = vshrl.u32 %v1547, 16
      %v1808 = vrot.slane %v1806, 4
      %v1809 = vshll.u32 %v1547, 16
      %v1811 = vrot.slane %v1809, 5
      %v1812 = vor.u32 %v1808, %v1811
      %v1814 = vshrl.u32 %v1644, 16
      %v1816 = vrot.slane %v1814, 4
      %v1817 = vshll.u32 %v1644, 16
      %v1819 = vrot.slane %v1817, 5
      %v1820 = vor.u32 %v1816, %v1819
      %v1821 = vsel %vm1651, %v1812, %v1820
      %v1823 = vshrl.u32 %v1548, 16
      %v1825 = vrot.slane %v1823, 4
      %v1826 = vshll.u32 %v1548, 16
      %v1828 = vrot.slane %v1826, 5
      %v1829 = vor.u32 %v1825, %v1828
      %v1831 = vshrl.u32 %v1645, 16
      %v1833 = vrot.slane %v1831, 4
      %v1834 = vshll.u32 %v1645, 16
      %v1836 = vrot.slane %v1834, 5
      %v1837 = vor.u32 %v1833, %v1836
      %v1838 = vsel %vm1651, %v1829, %v1837
      %v1840 = vshrl.u32 %v1549, 16
      %v1842 = vrot.slane %v1840, 4
      %v1843 = vshll.u32 %v1549, 16
      %v1845 = vrot.slane %v1843, 5
      %v1846 = vor.u32 %v1842, %v1845
      %v1848 = vshrl.u32 %v1646, 16
      %v1850 = vrot.slane %v1848, 4
      %v1851 = vshll.u32 %v1646, 16
      %v1853 = vrot.slane %v1851, 5
      %v1854 = vor.u32 %v1850, %v1853
      %v1855 = vsel %vm1651, %v1846, %v1854
      %v1857 = vshrl.u32 %v1550, 16
      %v1859 = vrot.slane %v1857, 4
      %v1860 = vshll.u32 %v1550, 16
      %v1862 = vrot.slane %v1860, 5
      %v1863 = vor.u32 %v1859, %v1862
      %v1865 = vshrl.u32 %v1647, 16
      %v1867 = vrot.slane %v1865, 4
      %v1868 = vshll.u32 %v1647, 16
      %v1870 = vrot.slane %v1868, 5
      %v1871 = vor.u32 %v1867, %v1870
      %v1872 = vsel %vm1651, %v1863, %v1871
      %v1874 = vshrl.u32 %v1551, 16
      %v1876 = vrot.slane %v1874, 4
      %v1877 = vshll.u32 %v1551, 16
      %v1879 = vrot.slane %v1877, 5
      %v1880 = vor.u32 %v1876, %v1879
      %v1882 = vshrl.u32 %v1648, 16
      %v1884 = vrot.slane %v1882, 4
      %v1885 = vshll.u32 %v1648, 16
      %v1887 = vrot.slane %v1885, 5
      %v1888 = vor.u32 %v1884, %v1887
      %v1889 = vsel %vm1651, %v1880, %v1888
      %v1891 = vshrl.u32 %v1552, 16
      %v1893 = vrot.slane %v1891, 4
      %v1894 = vshll.u32 %v1552, 16
      %v1896 = vrot.slane %v1894, 5
      %v1897 = vor.u32 %v1893, %v1896
      %v1899 = vshrl.u32 %v1649, 16
      %v1901 = vrot.slane %v1899, 4
      %v1902 = vshll.u32 %v1649, 16
      %v1904 = vrot.slane %v1902, 5
      %v1905 = vor.u32 %v1901, %v1904
      %v1906 = vsel %vm1651, %v1897, %v1905
      %v1908 = vshrl.u32 %v1553, 16
      %v1910 = vrot.slane %v1908, 4
      %v1911 = vshll.u32 %v1553, 16
      %v1913 = vrot.slane %v1911, 5
      %v1914 = vor.u32 %v1910, %v1913
      %v1916 = vshrl.u32 %v1650, 16
      %v1918 = vrot.slane %v1916, 4
      %v1919 = vshll.u32 %v1650, 16
      %v1921 = vrot.slane %v1919, 5
      %v1922 = vor.u32 %v1918, %v1921
      %v1923 = vsel %vm1651, %v1914, %v1922
      %v1924 = vld [vmem:[%s1035] sm:$0xf8]
      %v1925 = vld [vmem:[%s1035 + $0x8] sm:$0xf]
      %v1926 = vld [vmem:[%s1035 + $0x10] sm:$0xf8]
      %v1927 = vld [vmem:[%s1035 + $0x18] sm:$0xf]
      %v1928 = vld [vmem:[%s1035 + $0x20] sm:$0xf8]
      %v1929 = vld [vmem:[%s1035 + $0x28] sm:$0xf]
      %v1930 = vld [vmem:[%s1035 + $0x30] sm:$0xf8]
      %v1931 = vld [vmem:[%s1035 + $0x38] sm:$0xf]
      %v1932 = vld [vmem:[%s1035 + $0x40] sm:$0xf8]
      %v1933 = vld [vmem:[%s1035 + $0x48] sm:$0xf]
      %v1934 = vld [vmem:[%s1035 + $0x50] sm:$0xf8]
      %v1935 = vld [vmem:[%s1035 + $0x58] sm:$0xf]
      %v1936 = vld [vmem:[%s1035 + $0x60] sm:$0xf8]
      %v1937 = vld [vmem:[%s1035 + $0x68] sm:$0xf]
      %v1938 = vld [vmem:[%s1035 + $0x70] sm:$0xf8]
      %v1939 = vld [vmem:[%s1035 + $0x78] sm:$0xf]
      %v1940 = vld [vmem:[%s1035 + $0x80] sm:$0xf8]
      %v1941 = vld [vmem:[%s1035 + $0x88] sm:$0xf]
      %v1942 = vld [vmem:[%s1035 + $0x90] sm:$0xf8]
      %v1943 = vld [vmem:[%s1035 + $0x98] sm:$0xf]
      %v1944 = vld [vmem:[%s1035 + $0xa0] sm:$0xf8]
      %v1945 = vld [vmem:[%s1035 + $0xa8] sm:$0xf]
      %v1946 = vld [vmem:[%s1035 + $0xb0] sm:$0xf8]
      %v1947 = vld [vmem:[%s1035 + $0xb8] sm:$0xf]
      %v1948 = vld [vmem:[%s1035 + $0xc0] sm:$0xf8]
      %v1949 = vld [vmem:[%s1035 + $0xc8] sm:$0xf]
      %v1950 = vld [vmem:[%s1035 + $0xd0] sm:$0xf8]
      %v1951 = vld [vmem:[%s1035 + $0xd8] sm:$0xf]
      %v1952 = vld [vmem:[%s1035 + $0xe0] sm:$0xf8]
      %v1953 = vld [vmem:[%s1035 + $0xe8] sm:$0xf]
      %v1954 = vld [vmem:[%s1035 + $0xf0] sm:$0xf8]
      %v1955 = vld [vmem:[%s1035 + $0xf8] sm:$0xf]
      %v1957 = vshrl.u32 %v1924, 16
      %v1959 = vrot.slane %v1957, 3
      %v1960 = vshll.u32 %v1924, 16
      %v1962 = vrot.slane %v1960, 4
      %v1963 = vor.u32 %v1959, %v1962
      %v1965 = vshrl.u32 %v1925, 16
      %v1967 = vrot.slane %v1965, 3
      %v1968 = vshll.u32 %v1925, 16
      %v1970 = vrot.slane %v1968, 4
      %v1971 = vor.u32 %v1967, %v1970
      %v1972 = vsel %vm1023, %v1963, %v1971
      %v1974 = vshrl.u32 %v1926, 16
      %v1976 = vrot.slane %v1974, 3
      %v1977 = vshll.u32 %v1926, 16
      %v1979 = vrot.slane %v1977, 4
      %v1980 = vor.u32 %v1976, %v1979
      %v1982 = vshrl.u32 %v1927, 16
      %v1984 = vrot.slane %v1982, 3
      %v1985 = vshll.u32 %v1927, 16
      %v1987 = vrot.slane %v1985, 4
      %v1988 = vor.u32 %v1984, %v1987
      %v1989 = vsel %vm1023, %v1980, %v1988
      %v1991 = vshrl.u32 %v1928, 16
      %v1993 = vrot.slane %v1991, 3
      %v1994 = vshll.u32 %v1928, 16
      %v1996 = vrot.slane %v1994, 4
      %v1997 = vor.u32 %v1993, %v1996
      %v1999 = vshrl.u32 %v1929, 16
      %v2001 = vrot.slane %v1999, 3
      %v2002 = vshll.u32 %v1929, 16
      %v2004 = vrot.slane %v2002, 4
      %v2005 = vor.u32 %v2001, %v2004
      %v2006 = vsel %vm1023, %v1997, %v2005
      %v2008 = vshrl.u32 %v1930, 16
      %v2010 = vrot.slane %v2008, 3
      %v2011 = vshll.u32 %v1930, 16
      %v2013 = vrot.slane %v2011, 4
      %v2014 = vor.u32 %v2010, %v2013
      %v2016 = vshrl.u32 %v1931, 16
      %v2018 = vrot.slane %v2016, 3
      %v2019 = vshll.u32 %v1931, 16
      %v2021 = vrot.slane %v2019, 4
      %v2022 = vor.u32 %v2018, %v2021
      %v2023 = vsel %vm1023, %v2014, %v2022
      %v2025 = vshrl.u32 %v1932, 16
      %v2027 = vrot.slane %v2025, 3
      %v2028 = vshll.u32 %v1932, 16
      %v2030 = vrot.slane %v2028, 4
      %v2031 = vor.u32 %v2027, %v2030
      %v2033 = vshrl.u32 %v1933, 16
      %v2035 = vrot.slane %v2033, 3
      %v2036 = vshll.u32 %v1933, 16
      %v2038 = vrot.slane %v2036, 4
      %v2039 = vor.u32 %v2035, %v2038
      %v2040 = vsel %vm1023, %v2031, %v2039
      %v2042 = vshrl.u32 %v1934, 16
      %v2044 = vrot.slane %v2042, 3
      %v2045 = vshll.u32 %v1934, 16
      %v2047 = vrot.slane %v2045, 4
      %v2048 = vor.u32 %v2044, %v2047
      %v2050 = vshrl.u32 %v1935, 16
      %v2052 = vrot.slane %v2050, 3
      %v2053 = vshll.u32 %v1935, 16
      %v2055 = vrot.slane %v2053, 4
      %v2056 = vor.u32 %v2052, %v2055
      %v2057 = vsel %vm1023, %v2048, %v2056
      %v2059 = vshrl.u32 %v1936, 16
      %v2061 = vrot.slane %v2059, 3
      %v2062 = vshll.u32 %v1936, 16
      %v2064 = vrot.slane %v2062, 4
      %v2065 = vor.u32 %v2061, %v2064
      %v2067 = vshrl.u32 %v1937, 16
      %v2069 = vrot.slane %v2067, 3
      %v2070 = vshll.u32 %v1937, 16
      %v2072 = vrot.slane %v2070, 4
      %v2073 = vor.u32 %v2069, %v2072
      %v2074 = vsel %vm1023, %v2065, %v2073
      %v2076 = vshrl.u32 %v1938, 16
      %v2078 = vrot.slane %v2076, 3
      %v2079 = vshll.u32 %v1938, 16
      %v2081 = vrot.slane %v2079, 4
      %v2082 = vor.u32 %v2078, %v2081
      %v2084 = vshrl.u32 %v1939, 16
      %v2086 = vrot.slane %v2084, 3
      %v2087 = vshll.u32 %v1939, 16
      %v2089 = vrot.slane %v2087, 4
      %v2090 = vor.u32 %v2086, %v2089
      %v2091 = vsel %vm1023, %v2082, %v2090
      %v2093 = vshrl.u32 %v1940, 16
      %v2095 = vrot.slane %v2093, 3
      %v2096 = vshll.u32 %v1940, 16
      %v2098 = vrot.slane %v2096, 4
      %v2099 = vor.u32 %v2095, %v2098
      %v2101 = vshrl.u32 %v1941, 16
      %v2103 = vrot.slane %v2101, 3
      %v2104 = vshll.u32 %v1941, 16
      %v2106 = vrot.slane %v2104, 4
      %v2107 = vor.u32 %v2103, %v2106
      %v2108 = vsel %vm1023, %v2099, %v2107
      %v2110 = vshrl.u32 %v1942, 16
      %v2112 = vrot.slane %v2110, 3
      %v2113 = vshll.u32 %v1942, 16
      %v2115 = vrot.slane %v2113, 4
      %v2116 = vor.u32 %v2112, %v2115
      %v2118 = vshrl.u32 %v1943, 16
      %v2120 = vrot.slane %v2118, 3
      %v2121 = vshll.u32 %v1943, 16
      %v2123 = vrot.slane %v2121, 4
      %v2124 = vor.u32 %v2120, %v2123
      %v2125 = vsel %vm1023, %v2116, %v2124
      %v2127 = vshrl.u32 %v1944, 16
      %v2129 = vrot.slane %v2127, 3
      %v2130 = vshll.u32 %v1944, 16
      %v2132 = vrot.slane %v2130, 4
      %v2133 = vor.u32 %v2129, %v2132
      %v2135 = vshrl.u32 %v1945, 16
      %v2137 = vrot.slane %v2135, 3
      %v2138 = vshll.u32 %v1945, 16
      %v2140 = vrot.slane %v2138, 4
      %v2141 = vor.u32 %v2137, %v2140
      %v2142 = vsel %vm1023, %v2133, %v2141
      %v2144 = vshrl.u32 %v1946, 16
      %v2146 = vrot.slane %v2144, 3
      %v2147 = vshll.u32 %v1946, 16
      %v2149 = vrot.slane %v2147, 4
      %v2150 = vor.u32 %v2146, %v2149
      %v2152 = vshrl.u32 %v1947, 16
      %v2154 = vrot.slane %v2152, 3
      %v2155 = vshll.u32 %v1947, 16
      %v2157 = vrot.slane %v2155, 4
      %v2158 = vor.u32 %v2154, %v2157
      %v2159 = vsel %vm1023, %v2150, %v2158
      %v2161 = vshrl.u32 %v1948, 16
      %v2163 = vrot.slane %v2161, 3
      %v2164 = vshll.u32 %v1948, 16
      %v2166 = vrot.slane %v2164, 4
      %v2167 = vor.u32 %v2163, %v2166
      %v2169 = vshrl.u32 %v1949, 16
      %v2171 = vrot.slane %v2169, 3
      %v2172 = vshll.u32 %v1949, 16
      %v2174 = vrot.slane %v2172, 4
      %v2175 = vor.u32 %v2171, %v2174
      %v2176 = vsel %vm1023, %v2167, %v2175
      %v2178 = vshrl.u32 %v1950, 16
      %v2180 = vrot.slane %v2178, 3
      %v2181 = vshll.u32 %v1950, 16
      %v2183 = vrot.slane %v2181, 4
      %v2184 = vor.u32 %v2180, %v2183
      %v2186 = vshrl.u32 %v1951, 16
      %v2188 = vrot.slane %v2186, 3
      %v2189 = vshll.u32 %v1951, 16
      %v2191 = vrot.slane %v2189, 4
      %v2192 = vor.u32 %v2188, %v2191
      %v2193 = vsel %vm1023, %v2184, %v2192
      %v2195 = vshrl.u32 %v1952, 16
      %v2197 = vrot.slane %v2195, 3
      %v2198 = vshll.u32 %v1952, 16
      %v2200 = vrot.slane %v2198, 4
      %v2201 = vor.u32 %v2197, %v2200
      %v2203 = vshrl.u32 %v1953, 16
      %v2205 = vrot.slane %v2203, 3
      %v2206 = vshll.u32 %v1953, 16
      %v2208 = vrot.slane %v2206, 4
      %v2209 = vor.u32 %v2205, %v2208
      %v2210 = vsel %vm1023, %v2201, %v2209
      %v2212 = vshrl.u32 %v1954, 16
      %v2214 = vrot.slane %v2212, 3
      %v2215 = vshll.u32 %v1954, 16
      %v2217 = vrot.slane %v2215, 4
      %v2218 = vor.u32 %v2214, %v2217
      %v2220 = vshrl.u32 %v1955, 16
      %v2222 = vrot.slane %v2220, 3
      %v2223 = vshll.u32 %v1955, 16
      %v2225 = vrot.slane %v2223, 4
      %v2226 = vor.u32 %v2222, %v2225
      %v2227 = vsel %vm1023, %v2218, %v2226
      %v2228 = vld [vmem:[%s1035] sm:$0xf0]
      %v2229 = vld [vmem:[%s1035 + $0x10] sm:$0xf0]
      %v2230 = vld [vmem:[%s1035 + $0x20] sm:$0xf0]
      %v2231 = vld [vmem:[%s1035 + $0x30] sm:$0xf0]
      %v2232 = vld [vmem:[%s1035 + $0x40] sm:$0xf0]
      %v2233 = vld [vmem:[%s1035 + $0x50] sm:$0xf0]
      %v2234 = vld [vmem:[%s1035 + $0x60] sm:$0xf0]
      %v2235 = vld [vmem:[%s1035 + $0x70] sm:$0xf0]
      %v2236 = vld [vmem:[%s1035 + $0x80] sm:$0xf0]
      %v2237 = vld [vmem:[%s1035 + $0x90] sm:$0xf0]
      %v2238 = vld [vmem:[%s1035 + $0xa0] sm:$0xf0]
      %v2239 = vld [vmem:[%s1035 + $0xb0] sm:$0xf0]
      %v2240 = vld [vmem:[%s1035 + $0xc0] sm:$0xf0]
      %v2241 = vld [vmem:[%s1035 + $0xd0] sm:$0xf0]
      %v2242 = vld [vmem:[%s1035 + $0xe0] sm:$0xf0]
      %v2243 = vld [vmem:[%s1035 + $0xf0] sm:$0xf0]
      %v2276 = vrot.slane %v2228, 4
      %v2277 = vrot.slane %v1925, 4
      %v2278 = vsel %vm1586, %v2276, %v2277
      %v2279 = vrot.slane %v2229, 4
      %v2280 = vrot.slane %v1927, 4
      %v2281 = vsel %vm1586, %v2279, %v2280
      %v2282 = vrot.slane %v2230, 4
      %v2283 = vrot.slane %v1929, 4
      %v2284 = vsel %vm1586, %v2282, %v2283
      %v2285 = vrot.slane %v2231, 4
      %v2286 = vrot.slane %v1931, 4
      %v2287 = vsel %vm1586, %v2285, %v2286
      %v2288 = vrot.slane %v2232, 4
      %v2289 = vrot.slane %v1933, 4
      %v2290 = vsel %vm1586, %v2288, %v2289
      %v2291 = vrot.slane %v2233, 4
      %v2292 = vrot.slane %v1935, 4
      %v2293 = vsel %vm1586, %v2291, %v2292
      %v2294 = vrot.slane %v2234, 4
      %v2295 = vrot.slane %v1937, 4
      %v2296 = vsel %vm1586, %v2294, %v2295
      %v2297 = vrot.slane %v2235, 4
      %v2298 = vrot.slane %v1939, 4
      %v2299 = vsel %vm1586, %v2297, %v2298
      %v2300 = vrot.slane %v2236, 4
      %v2301 = vrot.slane %v1941, 4
      %v2302 = vsel %vm1586, %v2300, %v2301
      %v2303 = vrot.slane %v2237, 4
      %v2304 = vrot.slane %v1943, 4
      %v2305 = vsel %vm1586, %v2303, %v2304
      %v2306 = vrot.slane %v2238, 4
      %v2307 = vrot.slane %v1945, 4
      %v2308 = vsel %vm1586, %v2306, %v2307
      %v2309 = vrot.slane %v2239, 4
      %v2310 = vrot.slane %v1947, 4
      %v2311 = vsel %vm1586, %v2309, %v2310
      %v2312 = vrot.slane %v2240, 4
      %v2313 = vrot.slane %v1949, 4
      %v2314 = vsel %vm1586, %v2312, %v2313
      %v2315 = vrot.slane %v2241, 4
      %v2316 = vrot.slane %v1951, 4
      %v2317 = vsel %vm1586, %v2315, %v2316
      %v2318 = vrot.slane %v2242, 4
      %v2319 = vrot.slane %v1953, 4
      %v2320 = vsel %vm1586, %v2318, %v2319
      %v2321 = vrot.slane %v2243, 4
      %v2322 = vrot.slane %v1955, 4
      %v2323 = vsel %vm1586, %v2321, %v2322
      %v2324 = vld [vmem:[%s1035 + $0x8] sm:$0x1f]
      %v2325 = vld [vmem:[%s1035 + $0x18] sm:$0x1f]
      %v2326 = vld [vmem:[%s1035 + $0x28] sm:$0x1f]
      %v2327 = vld [vmem:[%s1035 + $0x38] sm:$0x1f]
      %v2328 = vld [vmem:[%s1035 + $0x48] sm:$0x1f]
      %v2329 = vld [vmem:[%s1035 + $0x58] sm:$0x1f]
      %v2330 = vld [vmem:[%s1035 + $0x68] sm:$0x1f]
      %v2331 = vld [vmem:[%s1035 + $0x78] sm:$0x1f]
      %v2332 = vld [vmem:[%s1035 + $0x88] sm:$0x1f]
      %v2333 = vld [vmem:[%s1035 + $0x98] sm:$0x1f]
      %v2334 = vld [vmem:[%s1035 + $0xa8] sm:$0x1f]
      %v2335 = vld [vmem:[%s1035 + $0xb8] sm:$0x1f]
      %v2336 = vld [vmem:[%s1035 + $0xc8] sm:$0x1f]
      %v2337 = vld [vmem:[%s1035 + $0xd8] sm:$0x1f]
      %v2338 = vld [vmem:[%s1035 + $0xe8] sm:$0x1f]
      %v2339 = vld [vmem:[%s1035 + $0xf8] sm:$0x1f]
      %v2341 = vshrl.u32 %v2228, 16
      %v2343 = vrot.slane %v2341, 4
      %v2344 = vshll.u32 %v2228, 16
      %v2346 = vrot.slane %v2344, 5
      %v2347 = vor.u32 %v2343, %v2346
      %v2349 = vshrl.u32 %v2324, 16
      %v2351 = vrot.slane %v2349, 4
      %v2352 = vshll.u32 %v2324, 16
      %v2354 = vrot.slane %v2352, 5
      %v2355 = vor.u32 %v2351, %v2354
      %v2356 = vsel %vm1651, %v2347, %v2355
      %v2358 = vshrl.u32 %v2229, 16
      %v2360 = vrot.slane %v2358, 4
      %v2361 = vshll.u32 %v2229, 16
      %v2363 = vrot.slane %v2361, 5
      %v2364 = vor.u32 %v2360, %v2363
      %v2366 = vshrl.u32 %v2325, 16
      %v2368 = vrot.slane %v2366, 4
      %v2369 = vshll.u32 %v2325, 16
      %v2371 = vrot.slane %v2369, 5
      %v2372 = vor.u32 %v2368, %v2371
      %v2373 = vsel %vm1651, %v2364, %v2372
      %v2375 = vshrl.u32 %v2230, 16
      %v2377 = vrot.slane %v2375, 4
      %v2378 = vshll.u32 %v2230, 16
      %v2380 = vrot.slane %v2378, 5
      %v2381 = vor.u32 %v2377, %v2380
      %v2383 = vshrl.u32 %v2326, 16
      %v2385 = vrot.slane %v2383, 4
      %v2386 = vshll.u32 %v2326, 16
      %v2388 = vrot.slane %v2386, 5
      %v2389 = vor.u32 %v2385, %v2388
      %v2390 = vsel %vm1651, %v2381, %v2389
      %v2392 = vshrl.u32 %v2231, 16
      %v2394 = vrot.slane %v2392, 4
      %v2395 = vshll.u32 %v2231, 16
      %v2397 = vrot.slane %v2395, 5
      %v2398 = vor.u32 %v2394, %v2397
      %v2400 = vshrl.u32 %v2327, 16
      %v2402 = vrot.slane %v2400, 4
      %v2403 = vshll.u32 %v2327, 16
      %v2405 = vrot.slane %v2403, 5
      %v2406 = vor.u32 %v2402, %v2405
      %v2407 = vsel %vm1651, %v2398, %v2406
      %v2409 = vshrl.u32 %v2232, 16
      %v2411 = vrot.slane %v2409, 4
      %v2412 = vshll.u32 %v2232, 16
      %v2414 = vrot.slane %v2412, 5
      %v2415 = vor.u32 %v2411, %v2414
      %v2417 = vshrl.u32 %v2328, 16
      %v2419 = vrot.slane %v2417, 4
      %v2420 = vshll.u32 %v2328, 16
      %v2422 = vrot.slane %v2420, 5
      %v2423 = vor.u32 %v2419, %v2422
      %v2424 = vsel %vm1651, %v2415, %v2423
      %v2426 = vshrl.u32 %v2233, 16
      %v2428 = vrot.slane %v2426, 4
      %v2429 = vshll.u32 %v2233, 16
      %v2431 = vrot.slane %v2429, 5
      %v2432 = vor.u32 %v2428, %v2431
      %v2434 = vshrl.u32 %v2329, 16
      %v2436 = vrot.slane %v2434, 4
      %v2437 = vshll.u32 %v2329, 16
      %v2439 = vrot.slane %v2437, 5
      %v2440 = vor.u32 %v2436, %v2439
      %v2441 = vsel %vm1651, %v2432, %v2440
      %v2443 = vshrl.u32 %v2234, 16
      %v2445 = vrot.slane %v2443, 4
      %v2446 = vshll.u32 %v2234, 16
      %v2448 = vrot.slane %v2446, 5
      %v2449 = vor.u32 %v2445, %v2448
      %v2451 = vshrl.u32 %v2330, 16
      %v2453 = vrot.slane %v2451, 4
      %v2454 = vshll.u32 %v2330, 16
      %v2456 = vrot.slane %v2454, 5
      %v2457 = vor.u32 %v2453, %v2456
      %v2458 = vsel %vm1651, %v2449, %v2457
      %v2460 = vshrl.u32 %v2235, 16
      %v2462 = vrot.slane %v2460, 4
      %v2463 = vshll.u32 %v2235, 16
      %v2465 = vrot.slane %v2463, 5
      %v2466 = vor.u32 %v2462, %v2465
      %v2468 = vshrl.u32 %v2331, 16
      %v2470 = vrot.slane %v2468, 4
      %v2471 = vshll.u32 %v2331, 16
      %v2473 = vrot.slane %v2471, 5
      %v2474 = vor.u32 %v2470, %v2473
      %v2475 = vsel %vm1651, %v2466, %v2474
      %v2477 = vshrl.u32 %v2236, 16
      %v2479 = vrot.slane %v2477, 4
      %v2480 = vshll.u32 %v2236, 16
      %v2482 = vrot.slane %v2480, 5
      %v2483 = vor.u32 %v2479, %v2482
      %v2485 = vshrl.u32 %v2332, 16
      %v2487 = vrot.slane %v2485, 4
      %v2488 = vshll.u32 %v2332, 16
      %v2490 = vrot.slane %v2488, 5
      %v2491 = vor.u32 %v2487, %v2490
      %v2492 = vsel %vm1651, %v2483, %v2491
      %v2494 = vshrl.u32 %v2237, 16
      %v2496 = vrot.slane %v2494, 4
      %v2497 = vshll.u32 %v2237, 16
      %v2499 = vrot.slane %v2497, 5
      %v2500 = vor.u32 %v2496, %v2499
      %v2502 = vshrl.u32 %v2333, 16
      %v2504 = vrot.slane %v2502, 4
      %v2505 = vshll.u32 %v2333, 16
      %v2507 = vrot.slane %v2505, 5
      %v2508 = vor.u32 %v2504, %v2507
      %v2509 = vsel %vm1651, %v2500, %v2508
      %v2511 = vshrl.u32 %v2238, 16
      %v2513 = vrot.slane %v2511, 4
      %v2514 = vshll.u32 %v2238, 16
      %v2516 = vrot.slane %v2514, 5
      %v2517 = vor.u32 %v2513, %v2516
      %v2519 = vshrl.u32 %v2334, 16
      %v2521 = vrot.slane %v2519, 4
      %v2522 = vshll.u32 %v2334, 16
      %v2524 = vrot.slane %v2522, 5
      %v2525 = vor.u32 %v2521, %v2524
      %v2526 = vsel %vm1651, %v2517, %v2525
      %v2528 = vshrl.u32 %v2239, 16
      %v2530 = vrot.slane %v2528, 4
      %v2531 = vshll.u32 %v2239, 16
      %v2533 = vrot.slane %v2531, 5
      %v2534 = vor.u32 %v2530, %v2533
      %v2536 = vshrl.u32 %v2335, 16
      %v2538 = vrot.slane %v2536, 4
      %v2539 = vshll.u32 %v2335, 16
      %v2541 = vrot.slane %v2539, 5
      %v2542 = vor.u32 %v2538, %v2541
      %v2543 = vsel %vm1651, %v2534, %v2542
      %v2545 = vshrl.u32 %v2240, 16
      %v2547 = vrot.slane %v2545, 4
      %v2548 = vshll.u32 %v2240, 16
      %v2550 = vrot.slane %v2548, 5
      %v2551 = vor.u32 %v2547, %v2550
      %v2553 = vshrl.u32 %v2336, 16
      %v2555 = vrot.slane %v2553, 4
      %v2556 = vshll.u32 %v2336, 16
      %v2558 = vrot.slane %v2556, 5
      %v2559 = vor.u32 %v2555, %v2558
      %v2560 = vsel %vm1651, %v2551, %v2559
      %v2562 = vshrl.u32 %v2241, 16
      %v2564 = vrot.slane %v2562, 4
      %v2565 = vshll.u32 %v2241, 16
      %v2567 = vrot.slane %v2565, 5
      %v2568 = vor.u32 %v2564, %v2567
      %v2570 = vshrl.u32 %v2337, 16
      %v2572 = vrot.slane %v2570, 4
      %v2573 = vshll.u32 %v2337, 16
      %v2575 = vrot.slane %v2573, 5
      %v2576 = vor.u32 %v2572, %v2575
      %v2577 = vsel %vm1651, %v2568, %v2576
      %v2579 = vshrl.u32 %v2242, 16
      %v2581 = vrot.slane %v2579, 4
      %v2582 = vshll.u32 %v2242, 16
      %v2584 = vrot.slane %v2582, 5
      %v2585 = vor.u32 %v2581, %v2584
      %v2587 = vshrl.u32 %v2338, 16
      %v2589 = vrot.slane %v2587, 4
      %v2590 = vshll.u32 %v2338, 16
      %v2592 = vrot.slane %v2590, 5
      %v2593 = vor.u32 %v2589, %v2592
      %v2594 = vsel %vm1651, %v2585, %v2593
      %v2596 = vshrl.u32 %v2243, 16
      %v2598 = vrot.slane %v2596, 4
      %v2599 = vshll.u32 %v2243, 16
      %v2601 = vrot.slane %v2599, 5
      %v2602 = vor.u32 %v2598, %v2601
      %v2604 = vshrl.u32 %v2339, 16
      %v2606 = vrot.slane %v2604, 4
      %v2607 = vshll.u32 %v2339, 16
      %v2609 = vrot.slane %v2607, 5
      %v2610 = vor.u32 %v2606, %v2609
      %v2611 = vsel %vm1651, %v2602, %v2610
      %s2612 = scalar_lea.vmem [#allocation2], 32
      %v2613 = vld [vmem:[%s2612] sm:$0xf8]
      %v2614 = vld [vmem:[%s2612 + $0x8] sm:$0xf]
      %v2615 = vld [vmem:[%s2612 + $0x10] sm:$0xf8]
      %v2616 = vld [vmem:[%s2612 + $0x18] sm:$0xf]
      %v2617 = vld [vmem:[%s2612 + $0x20] sm:$0xf8]
      %v2618 = vld [vmem:[%s2612 + $0x28] sm:$0xf]
      %v2619 = vld [vmem:[%s2612 + $0x30] sm:$0xf8]
      %v2620 = vld [vmem:[%s2612 + $0x38] sm:$0xf]
      %v2621 = vld [vmem:[%s2612 + $0x40] sm:$0xf8]
      %v2622 = vld [vmem:[%s2612 + $0x48] sm:$0xf]
      %v2623 = vld [vmem:[%s2612 + $0x50] sm:$0xf8]
      %v2624 = vld [vmem:[%s2612 + $0x58] sm:$0xf]
      %v2625 = vld [vmem:[%s2612 + $0x60] sm:$0xf8]
      %v2626 = vld [vmem:[%s2612 + $0x68] sm:$0xf]
      %v2627 = vld [vmem:[%s2612 + $0x70] sm:$0xf8]
      %v2628 = vld [vmem:[%s2612 + $0x78] sm:$0xf]
      %v2629 = vld [vmem:[%s2612 + $0x80] sm:$0xf8]
      %v2630 = vld [vmem:[%s2612 + $0x88] sm:$0xf]
      %v2631 = vld [vmem:[%s2612 + $0x90] sm:$0xf8]
      %v2632 = vld [vmem:[%s2612 + $0x98] sm:$0xf]
      %v2633 = vld [vmem:[%s2612 + $0xa0] sm:$0xf8]
      %v2634 = vld [vmem:[%s2612 + $0xa8] sm:$0xf]
      %v2635 = vld [vmem:[%s2612 + $0xb0] sm:$0xf8]
      %v2636 = vld [vmem:[%s2612 + $0xb8] sm:$0xf]
      %v2637 = vld [vmem:[%s2612 + $0xc0] sm:$0xf8]
      %v2638 = vld [vmem:[%s2612 + $0xc8] sm:$0xf]
      %v2639 = vld [vmem:[%s2612 + $0xd0] sm:$0xf8]
      %v2640 = vld [vmem:[%s2612 + $0xd8] sm:$0xf]
      %v2641 = vld [vmem:[%s2612 + $0xe0] sm:$0xf8]
      %v2642 = vld [vmem:[%s2612 + $0xe8] sm:$0xf]
      %v2643 = vld [vmem:[%s2612 + $0xf0] sm:$0xf8]
      %v2644 = vld [vmem:[%s2612 + $0xf8] sm:$0xf]
      %v2646 = vshrl.u32 %v2613, 16
      %v2648 = vrot.slane %v2646, 3
      %v2649 = vshll.u32 %v2613, 16
      %v2651 = vrot.slane %v2649, 4
      %v2652 = vor.u32 %v2648, %v2651
      %v2654 = vshrl.u32 %v2614, 16
      %v2656 = vrot.slane %v2654, 3
      %v2657 = vshll.u32 %v2614, 16
      %v2659 = vrot.slane %v2657, 4
      %v2660 = vor.u32 %v2656, %v2659
      %v2661 = vsel %vm1023, %v2652, %v2660
      %v2663 = vshrl.u32 %v2615, 16
      %v2665 = vrot.slane %v2663, 3
      %v2666 = vshll.u32 %v2615, 16
      %v2668 = vrot.slane %v2666, 4
      %v2669 = vor.u32 %v2665, %v2668
      %v2671 = vshrl.u32 %v2616, 16
      %v2673 = vrot.slane %v2671, 3
      %v2674 = vshll.u32 %v2616, 16
      %v2676 = vrot.slane %v2674, 4
      %v2677 = vor.u32 %v2673, %v2676
      %v2678 = vsel %vm1023, %v2669, %v2677
      %v2680 = vshrl.u32 %v2617, 16
      %v2682 = vrot.slane %v2680, 3
      %v2683 = vshll.u32 %v2617, 16
      %v2685 = vrot.slane %v2683, 4
      %v2686 = vor.u32 %v2682, %v2685
      %v2688 = vshrl.u32 %v2618, 16
      %v2690 = vrot.slane %v2688, 3
      %v2691 = vshll.u32 %v2618, 16
      %v2693 = vrot.slane %v2691, 4
      %v2694 = vor.u32 %v2690, %v2693
      %v2695 = vsel %vm1023, %v2686, %v2694
      %v2697 = vshrl.u32 %v2619, 16
      %v2699 = vrot.slane %v2697, 3
      %v2700 = vshll.u32 %v2619, 16
      %v2702 = vrot.slane %v2700, 4
      %v2703 = vor.u32 %v2699, %v2702
      %v2705 = vshrl.u32 %v2620, 16
      %v2707 = vrot.slane %v2705, 3
      %v2708 = vshll.u32 %v2620, 16
      %v2710 = vrot.slane %v2708, 4
      %v2711 = vor.u32 %v2707, %v2710
      %v2712 = vsel %vm1023, %v2703, %v2711
      %v2714 = vshrl.u32 %v2621, 16
      %v2716 = vrot.slane %v2714, 3
      %v2717 = vshll.u32 %v2621, 16
      %v2719 = vrot.slane %v2717, 4
      %v2720 = vor.u32 %v2716, %v2719
      %v2722 = vshrl.u32 %v2622, 16
      %v2724 = vrot.slane %v2722, 3
      %v2725 = vshll.u32 %v2622, 16
      %v2727 = vrot.slane %v2725, 4
      %v2728 = vor.u32 %v2724, %v2727
      %v2729 = vsel %vm1023, %v2720, %v2728
      %v2731 = vshrl.u32 %v2623, 16
      %v2733 = vrot.slane %v2731, 3
      %v2734 = vshll.u32 %v2623, 16
      %v2736 = vrot.slane %v2734, 4
      %v2737 = vor.u32 %v2733, %v2736
      %v2739 = vshrl.u32 %v2624, 16
      %v2741 = vrot.slane %v2739, 3
      %v2742 = vshll.u32 %v2624, 16
      %v2744 = vrot.slane %v2742, 4
      %v2745 = vor.u32 %v2741, %v2744
      %v2746 = vsel %vm1023, %v2737, %v2745
      %v2748 = vshrl.u32 %v2625, 16
      %v2750 = vrot.slane %v2748, 3
      %v2751 = vshll.u32 %v2625, 16
      %v2753 = vrot.slane %v2751, 4
      %v2754 = vor.u32 %v2750, %v2753
      %v2756 = vshrl.u32 %v2626, 16
      %v2758 = vrot.slane %v2756, 3
      %v2759 = vshll.u32 %v2626, 16
      %v2761 = vrot.slane %v2759, 4
      %v2762 = vor.u32 %v2758, %v2761
      %v2763 = vsel %vm1023, %v2754, %v2762
      %v2765 = vshrl.u32 %v2627, 16
      %v2767 = vrot.slane %v2765, 3
      %v2768 = vshll.u32 %v2627, 16
      %v2770 = vrot.slane %v2768, 4
      %v2771 = vor.u32 %v2767, %v2770
      %v2773 = vshrl.u32 %v2628, 16
      %v2775 = vrot.slane %v2773, 3
      %v2776 = vshll.u32 %v2628, 16
      %v2778 = vrot.slane %v2776, 4
      %v2779 = vor.u32 %v2775, %v2778
      %v2780 = vsel %vm1023, %v2771, %v2779
      %v2782 = vshrl.u32 %v2629, 16
      %v2784 = vrot.slane %v2782, 3
      %v2785 = vshll.u32 %v2629, 16
      %v2787 = vrot.slane %v2785, 4
      %v2788 = vor.u32 %v2784, %v2787
      %v2790 = vshrl.u32 %v2630, 16
      %v2792 = vrot.slane %v2790, 3
      %v2793 = vshll.u32 %v2630, 16
      %v2795 = vrot.slane %v2793, 4
      %v2796 = vor.u32 %v2792, %v2795
      %v2797 = vsel %vm1023, %v2788, %v2796
      %v2799 = vshrl.u32 %v2631, 16
      %v2801 = vrot.slane %v2799, 3
      %v2802 = vshll.u32 %v2631, 16
      %v2804 = vrot.slane %v2802, 4
      %v2805 = vor.u32 %v2801, %v2804
      %v2807 = vshrl.u32 %v2632, 16
      %v2809 = vrot.slane %v2807, 3
      %v2810 = vshll.u32 %v2632, 16
      %v2812 = vrot.slane %v2810, 4
      %v2813 = vor.u32 %v2809, %v2812
      %v2814 = vsel %vm1023, %v2805, %v2813
      %v2816 = vshrl.u32 %v2633, 16
      %v2818 = vrot.slane %v2816, 3
      %v2819 = vshll.u32 %v2633, 16
      %v2821 = vrot.slane %v2819, 4
      %v2822 = vor.u32 %v2818, %v2821
      %v2824 = vshrl.u32 %v2634, 16
      %v2826 = vrot.slane %v2824, 3
      %v2827 = vshll.u32 %v2634, 16
      %v2829 = vrot.slane %v2827, 4
      %v2830 = vor.u32 %v2826, %v2829
      %v2831 = vsel %vm1023, %v2822, %v2830
      %v2833 = vshrl.u32 %v2635, 16
      %v2835 = vrot.slane %v2833, 3
      %v2836 = vshll.u32 %v2635, 16
      %v2838 = vrot.slane %v2836, 4
      %v2839 = vor.u32 %v2835, %v2838
      %v2841 = vshrl.u32 %v2636, 16
      %v2843 = vrot.slane %v2841, 3
      %v2844 = vshll.u32 %v2636, 16
      %v2846 = vrot.slane %v2844, 4
      %v2847 = vor.u32 %v2843, %v2846
      %v2848 = vsel %vm1023, %v2839, %v2847
      %v2850 = vshrl.u32 %v2637, 16
      %v2852 = vrot.slane %v2850, 3
      %v2853 = vshll.u32 %v2637, 16
      %v2855 = vrot.slane %v2853, 4
      %v2856 = vor.u32 %v2852, %v2855
      %v2858 = vshrl.u32 %v2638, 16
      %v2860 = vrot.slane %v2858, 3
      %v2861 = vshll.u32 %v2638, 16
      %v2863 = vrot.slane %v2861, 4
      %v2864 = vor.u32 %v2860, %v2863
      %v2865 = vsel %vm1023, %v2856, %v2864
      %v2867 = vshrl.u32 %v2639, 16
      %v2869 = vrot.slane %v2867, 3
      %v2870 = vshll.u32 %v2639, 16
      %v2872 = vrot.slane %v2870, 4
      %v2873 = vor.u32 %v2869, %v2872
      %v2875 = vshrl.u32 %v2640, 16
      %v2877 = vrot.slane %v2875, 3
      %v2878 = vshll.u32 %v2640, 16
      %v2880 = vrot.slane %v2878, 4
      %v2881 = vor.u32 %v2877, %v2880
      %v2882 = vsel %vm1023, %v2873, %v2881
      %v2884 = vshrl.u32 %v2641, 16
      %v2886 = vrot.slane %v2884, 3
      %v2887 = vshll.u32 %v2641, 16
      %v2889 = vrot.slane %v2887, 4
      %v2890 = vor.u32 %v2886, %v2889
      %v2892 = vshrl.u32 %v2642, 16
      %v2894 = vrot.slane %v2892, 3
      %v2895 = vshll.u32 %v2642, 16
      %v2897 = vrot.slane %v2895, 4
      %v2898 = vor.u32 %v2894, %v2897
      %v2899 = vsel %vm1023, %v2890, %v2898
      %v2901 = vshrl.u32 %v2643, 16
      %v2903 = vrot.slane %v2901, 3
      %v2904 = vshll.u32 %v2643, 16
      %v2906 = vrot.slane %v2904, 4
      %v2907 = vor.u32 %v2903, %v2906
      %v2909 = vshrl.u32 %v2644, 16
      %v2911 = vrot.slane %v2909, 3
      %v2912 = vshll.u32 %v2644, 16
      %v2914 = vrot.slane %v2912, 4
      %v2915 = vor.u32 %v2911, %v2914
      %v2916 = vsel %vm1023, %v2907, %v2915
      %v2917 = vld [vmem:[%s2612] sm:$0xf0]
      %v2918 = vld [vmem:[%s2612 + $0x10] sm:$0xf0]
      %v2919 = vld [vmem:[%s2612 + $0x20] sm:$0xf0]
      %v2920 = vld [vmem:[%s2612 + $0x30] sm:$0xf0]
      %v2921 = vld [vmem:[%s2612 + $0x40] sm:$0xf0]
      %v2922 = vld [vmem:[%s2612 + $0x50] sm:$0xf0]
      %v2923 = vld [vmem:[%s2612 + $0x60] sm:$0xf0]
      %v2924 = vld [vmem:[%s2612 + $0x70] sm:$0xf0]
      %v2925 = vld [vmem:[%s2612 + $0x80] sm:$0xf0]
      %v2926 = vld [vmem:[%s2612 + $0x90] sm:$0xf0]
      %v2927 = vld [vmem:[%s2612 + $0xa0] sm:$0xf0]
      %v2928 = vld [vmem:[%s2612 + $0xb0] sm:$0xf0]
      %v2929 = vld [vmem:[%s2612 + $0xc0] sm:$0xf0]
      %v2930 = vld [vmem:[%s2612 + $0xd0] sm:$0xf0]
      %v2931 = vld [vmem:[%s2612 + $0xe0] sm:$0xf0]
      %v2932 = vld [vmem:[%s2612 + $0xf0] sm:$0xf0]
      %v2965 = vrot.slane %v2917, 4
      %v2966 = vrot.slane %v2614, 4
      %v2967 = vsel %vm1586, %v2965, %v2966
      %v2968 = vrot.slane %v2918, 4
      %v2969 = vrot.slane %v2616, 4
      %v2970 = vsel %vm1586, %v2968, %v2969
      %v2971 = vrot.slane %v2919, 4
      %v2972 = vrot.slane %v2618, 4
      %v2973 = vsel %vm1586, %v2971, %v2972
      %v2974 = vrot.slane %v2920, 4
      %v2975 = vrot.slane %v2620, 4
      %v2976 = vsel %vm1586, %v2974, %v2975
      %v2977 = vrot.slane %v2921, 4
      %v2978 = vrot.slane %v2622, 4
      %v2979 = vsel %vm1586, %v2977, %v2978
      %v2980 = vrot.slane %v2922, 4
      %v2981 = vrot.slane %v2624, 4
      %v2982 = vsel %vm1586, %v2980, %v2981
      %v2983 = vrot.slane %v2923, 4
      %v2984 = vrot.slane %v2626, 4
      %v2985 = vsel %vm1586, %v2983, %v2984
      %v2986 = vrot.slane %v2924, 4
      %v2987 = vrot.slane %v2628, 4
      %v2988 = vsel %vm1586, %v2986, %v2987
      %v2989 = vrot.slane %v2925, 4
      %v2990 = vrot.slane %v2630, 4
      %v2991 = vsel %vm1586, %v2989, %v2990
      %v2992 = vrot.slane %v2926, 4
      %v2993 = vrot.slane %v2632, 4
      %v2994 = vsel %vm1586, %v2992, %v2993
      %v2995 = vrot.slane %v2927, 4
      %v2996 = vrot.slane %v2634, 4
      %v2997 = vsel %vm1586, %v2995, %v2996
      %v2998 = vrot.slane %v2928, 4
      %v2999 = vrot.slane %v2636, 4
      %v3000 = vsel %vm1586, %v2998, %v2999
      %v3001 = vrot.slane %v2929, 4
      %v3002 = vrot.slane %v2638, 4
      %v3003 = vsel %vm1586, %v3001, %v3002
      %v3004 = vrot.slane %v2930, 4
      %v3005 = vrot.slane %v2640, 4
      %v3006 = vsel %vm1586, %v3004, %v3005
      %v3007 = vrot.slane %v2931, 4
      %v3008 = vrot.slane %v2642, 4
      %v3009 = vsel %vm1586, %v3007, %v3008
      %v3010 = vrot.slane %v2932, 4
      %v3011 = vrot.slane %v2644, 4
      %v3012 = vsel %vm1586, %v3010, %v3011
      %v3013 = vld [vmem:[%s2612 + $0x8] sm:$0x1f]
      %v3014 = vld [vmem:[%s2612 + $0x18] sm:$0x1f]
      %v3015 = vld [vmem:[%s2612 + $0x28] sm:$0x1f]
      %v3016 = vld [vmem:[%s2612 + $0x38] sm:$0x1f]
      %v3017 = vld [vmem:[%s2612 + $0x48] sm:$0x1f]
      %v3018 = vld [vmem:[%s2612 + $0x58] sm:$0x1f]
      %v3019 = vld [vmem:[%s2612 + $0x68] sm:$0x1f]
      %v3020 = vld [vmem:[%s2612 + $0x78] sm:$0x1f]
      %v3021 = vld [vmem:[%s2612 + $0x88] sm:$0x1f]
      %v3022 = vld [vmem:[%s2612 + $0x98] sm:$0x1f]
      %v3023 = vld [vmem:[%s2612 + $0xa8] sm:$0x1f]
      %v3024 = vld [vmem:[%s2612 + $0xb8] sm:$0x1f]
      %v3025 = vld [vmem:[%s2612 + $0xc8] sm:$0x1f]
      %v3026 = vld [vmem:[%s2612 + $0xd8] sm:$0x1f]
      %v3027 = vld [vmem:[%s2612 + $0xe8] sm:$0x1f]
      %v3028 = vld [vmem:[%s2612 + $0xf8] sm:$0x1f]
      %v3030 = vshrl.u32 %v2917, 16
      %v3032 = vrot.slane %v3030, 4
      %v3033 = vshll.u32 %v2917, 16
      %v3035 = vrot.slane %v3033, 5
      %v3036 = vor.u32 %v3032, %v3035
      %v3038 = vshrl.u32 %v3013, 16
      %v3040 = vrot.slane %v3038, 4
      %v3041 = vshll.u32 %v3013, 16
      %v3043 = vrot.slane %v3041, 5
      %v3044 = vor.u32 %v3040, %v3043
      %v3045 = vsel %vm1651, %v3036, %v3044
      %v3047 = vshrl.u32 %v2918, 16
      %v3049 = vrot.slane %v3047, 4
      %v3050 = vshll.u32 %v2918, 16
      %v3052 = vrot.slane %v3050, 5
      %v3053 = vor.u32 %v3049, %v3052
      %v3055 = vshrl.u32 %v3014, 16
      %v3057 = vrot.slane %v3055, 4
      %v3058 = vshll.u32 %v3014, 16
      %v3060 = vrot.slane %v3058, 5
      %v3061 = vor.u32 %v3057, %v3060
      %v3062 = vsel %vm1651, %v3053, %v3061
      %v3064 = vshrl.u32 %v2919, 16
      %v3066 = vrot.slane %v3064, 4
      %v3067 = vshll.u32 %v2919, 16
      %v3069 = vrot.slane %v3067, 5
      %v3070 = vor.u32 %v3066, %v3069
      %v3072 = vshrl.u32 %v3015, 16
      %v3074 = vrot.slane %v3072, 4
      %v3075 = vshll.u32 %v3015, 16
      %v3077 = vrot.slane %v3075, 5
      %v3078 = vor.u32 %v3074, %v3077
      %v3079 = vsel %vm1651, %v3070, %v3078
      %v3081 = vshrl.u32 %v2920, 16
      %v3083 = vrot.slane %v3081, 4
      %v3084 = vshll.u32 %v2920, 16
      %v3086 = vrot.slane %v3084, 5
      %v3087 = vor.u32 %v3083, %v3086
      %v3089 = vshrl.u32 %v3016, 16
      %v3091 = vrot.slane %v3089, 4
      %v3092 = vshll.u32 %v3016, 16
      %v3094 = vrot.slane %v3092, 5
      %v3095 = vor.u32 %v3091, %v3094
      %v3096 = vsel %vm1651, %v3087, %v3095
      %v3098 = vshrl.u32 %v2921, 16
      %v3100 = vrot.slane %v3098, 4
      %v3101 = vshll.u32 %v2921, 16
      %v3103 = vrot.slane %v3101, 5
      %v3104 = vor.u32 %v3100, %v3103
      %v3106 = vshrl.u32 %v3017, 16
      %v3108 = vrot.slane %v3106, 4
      %v3109 = vshll.u32 %v3017, 16
      %v3111 = vrot.slane %v3109, 5
      %v3112 = vor.u32 %v3108, %v3111
      %v3113 = vsel %vm1651, %v3104, %v3112
      %v3115 = vshrl.u32 %v2922, 16
      %v3117 = vrot.slane %v3115, 4
      %v3118 = vshll.u32 %v2922, 16
      %v3120 = vrot.slane %v3118, 5
      %v3121 = vor.u32 %v3117, %v3120
      %v3123 = vshrl.u32 %v3018, 16
      %v3125 = vrot.slane %v3123, 4
      %v3126 = vshll.u32 %v3018, 16
      %v3128 = vrot.slane %v3126, 5
      %v3129 = vor.u32 %v3125, %v3128
      %v3130 = vsel %vm1651, %v3121, %v3129
      %v3132 = vshrl.u32 %v2923, 16
      %v3134 = vrot.slane %v3132, 4
      %v3135 = vshll.u32 %v2923, 16
      %v3137 = vrot.slane %v3135, 5
      %v3138 = vor.u32 %v3134, %v3137
      %v3140 = vshrl.u32 %v3019, 16
      %v3142 = vrot.slane %v3140, 4
      %v3143 = vshll.u32 %v3019, 16
      %v3145 = vrot.slane %v3143, 5
      %v3146 = vor.u32 %v3142, %v3145
      %v3147 = vsel %vm1651, %v3138, %v3146
      %v3149 = vshrl.u32 %v2924, 16
      %v3151 = vrot.slane %v3149, 4
      %v3152 = vshll.u32 %v2924, 16
      %v3154 = vrot.slane %v3152, 5
      %v3155 = vor.u32 %v3151, %v3154
      %v3157 = vshrl.u32 %v3020, 16
      %v3159 = vrot.slane %v3157, 4
      %v3160 = vshll.u32 %v3020, 16
      %v3162 = vrot.slane %v3160, 5
      %v3163 = vor.u32 %v3159, %v3162
      %v3164 = vsel %vm1651, %v3155, %v3163
      %v3166 = vshrl.u32 %v2925, 16
      %v3168 = vrot.slane %v3166, 4
      %v3169 = vshll.u32 %v2925, 16
      %v3171 = vrot.slane %v3169, 5
      %v3172 = vor.u32 %v3168, %v3171
      %v3174 = vshrl.u32 %v3021, 16
      %v3176 = vrot.slane %v3174, 4
      %v3177 = vshll.u32 %v3021, 16
      %v3179 = vrot.slane %v3177, 5
      %v3180 = vor.u32 %v3176, %v3179
      %v3181 = vsel %vm1651, %v3172, %v3180
      %v3183 = vshrl.u32 %v2926, 16
      %v3185 = vrot.slane %v3183, 4
      %v3186 = vshll.u32 %v2926, 16
      %v3188 = vrot.slane %v3186, 5
      %v3189 = vor.u32 %v3185, %v3188
      %v3191 = vshrl.u32 %v3022, 16
      %v3193 = vrot.slane %v3191, 4
      %v3194 = vshll.u32 %v3022, 16
      %v3196 = vrot.slane %v3194, 5
      %v3197 = vor.u32 %v3193, %v3196
      %v3198 = vsel %vm1651, %v3189, %v3197
      %v3200 = vshrl.u32 %v2927, 16
      %v3202 = vrot.slane %v3200, 4
      %v3203 = vshll.u32 %v2927, 16
      %v3205 = vrot.slane %v3203, 5
      %v3206 = vor.u32 %v3202, %v3205
      %v3208 = vshrl.u32 %v3023, 16
      %v3210 = vrot.slane %v3208, 4
      %v3211 = vshll.u32 %v3023, 16
      %v3213 = vrot.slane %v3211, 5
      %v3214 = vor.u32 %v3210, %v3213
      %v3215 = vsel %vm1651, %v3206, %v3214
      %v3217 = vshrl.u32 %v2928, 16
      %v3219 = vrot.slane %v3217, 4
      %v3220 = vshll.u32 %v2928, 16
      %v3222 = vrot.slane %v3220, 5
      %v3223 = vor.u32 %v3219, %v3222
      %v3225 = vshrl.u32 %v3024, 16
      %v3227 = vrot.slane %v3225, 4
      %v3228 = vshll.u32 %v3024, 16
      %v3230 = vrot.slane %v3228, 5
      %v3231 = vor.u32 %v3227, %v3230
      %v3232 = vsel %vm1651, %v3223, %v3231
      %v3234 = vshrl.u32 %v2929, 16
      %v3236 = vrot.slane %v3234, 4
      %v3237 = vshll.u32 %v2929, 16
      %v3239 = vrot.slane %v3237, 5
      %v3240 = vor.u32 %v3236, %v3239
      %v3242 = vshrl.u32 %v3025, 16
      %v3244 = vrot.slane %v3242, 4
      %v3245 = vshll.u32 %v3025, 16
      %v3247 = vrot.slane %v3245, 5
      %v3248 = vor.u32 %v3244, %v3247
      %v3249 = vsel %vm1651, %v3240, %v3248
      %v3251 = vshrl.u32 %v2930, 16
      %v3253 = vrot.slane %v3251, 4
      %v3254 = vshll.u32 %v2930, 16
      %v3256 = vrot.slane %v3254, 5
      %v3257 = vor.u32 %v3253, %v3256
      %v3259 = vshrl.u32 %v3026, 16
      %v3261 = vrot.slane %v3259, 4
      %v3262 = vshll.u32 %v3026, 16
      %v3264 = vrot.slane %v3262, 5
      %v3265 = vor.u32 %v3261, %v3264
      %v3266 = vsel %vm1651, %v3257, %v3265
      %v3268 = vshrl.u32 %v2931, 16
      %v3270 = vrot.slane %v3268, 4
      %v3271 = vshll.u32 %v2931, 16
      %v3273 = vrot.slane %v3271, 5
      %v3274 = vor.u32 %v3270, %v3273
      %v3276 = vshrl.u32 %v3027, 16
      %v3278 = vrot.slane %v3276, 4
      %v3279 = vshll.u32 %v3027, 16
      %v3281 = vrot.slane %v3279, 5
      %v3282 = vor.u32 %v3278, %v3281
      %v3283 = vsel %vm1651, %v3274, %v3282
      %v3285 = vshrl.u32 %v2932, 16
      %v3287 = vrot.slane %v3285, 4
      %v3288 = vshll.u32 %v2932, 16
      %v3290 = vrot.slane %v3288, 5
      %v3291 = vor.u32 %v3287, %v3290
      %v3293 = vshrl.u32 %v3028, 16
      %v3295 = vrot.slane %v3293, 4
      %v3296 = vshll.u32 %v3028, 16
      %v3298 = vrot.slane %v3296, 5
      %v3299 = vor.u32 %v3295, %v3298
      %v3300 = vsel %vm1651, %v3291, %v3299
      %3301 = vrot.lane.b32.xlu0 %v1589, 32
      %v3302 = vpop.permute.xlu0 %3301
      %3303 = vrot.lane.b32.xlu0 %v1592, 32
      %v3304 = vpop.permute.xlu0 %3303
      %3305 = vrot.lane.b32.xlu0 %v1595, 32
      %v3306 = vpop.permute.xlu0 %3305
      %3307 = vrot.lane.b32.xlu0 %v1598, 32
      %v3308 = vpop.permute.xlu0 %3307
      %3309 = vrot.lane.b32.xlu0 %v1601, 32
      %v3310 = vpop.permute.xlu0 %3309
      %3311 = vrot.lane.b32.xlu0 %v1604, 32
      %v3312 = vpop.permute.xlu0 %3311
      %3313 = vrot.lane.b32.xlu0 %v1607, 32
      %v3314 = vpop.permute.xlu0 %3313
      %3315 = vrot.lane.b32.xlu0 %v1610, 32
      %v3316 = vpop.permute.xlu0 %3315
      %3317 = vrot.lane.b32.xlu0 %v1613, 32
      %v3318 = vpop.permute.xlu0 %3317
      %3319 = vrot.lane.b32.xlu0 %v1616, 32
      %v3320 = vpop.permute.xlu0 %3319
      %3321 = vrot.lane.b32.xlu0 %v1619, 32
      %v3322 = vpop.permute.xlu0 %3321
      %3323 = vrot.lane.b32.xlu0 %v1622, 32
      %v3324 = vpop.permute.xlu0 %3323
      %3325 = vrot.lane.b32.xlu0 %v1625, 32
      %v3326 = vpop.permute.xlu0 %3325
      %3327 = vrot.lane.b32.xlu0 %v1628, 32
      %v3328 = vpop.permute.xlu0 %3327
      %3329 = vrot.lane.b32.xlu0 %v1631, 32
      %v3330 = vpop.permute.xlu0 %3329
      %3331 = vrot.lane.b32.xlu0 %v1634, 32
      %v3332 = vpop.permute.xlu0 %3331
      %3333 = vrot.lane.b32.xlu0 %v1668, 64
      %v3334 = vpop.permute.xlu0 %3333
      %3335 = vrot.lane.b32.xlu0 %v1685, 64
      %v3336 = vpop.permute.xlu0 %3335
      %3337 = vrot.lane.b32.xlu0 %v1702, 64
      %v3338 = vpop.permute.xlu0 %3337
      %3339 = vrot.lane.b32.xlu0 %v1719, 64
      %v3340 = vpop.permute.xlu0 %3339
      %3341 = vrot.lane.b32.xlu0 %v1736, 64
      %v3342 = vpop.permute.xlu0 %3341
      %3343 = vrot.lane.b32.xlu0 %v1753, 64
      %v3344 = vpop.permute.xlu0 %3343
      %3345 = vrot.lane.b32.xlu0 %v1770, 64
      %v3346 = vpop.permute.xlu0 %3345
      %3347 = vrot.lane.b32.xlu0 %v1787, 64
      %v3348 = vpop.permute.xlu0 %3347
      %3349 = vrot.lane.b32.xlu0 %v1804, 64
      %v3350 = vpop.permute.xlu0 %3349
      %3351 = vrot.lane.b32.xlu0 %v1821, 64
      %v3352 = vpop.permute.xlu0 %3351
      %3353 = vrot.lane.b32.xlu0 %v1838, 64
      %v3354 = vpop.permute.xlu0 %3353
      %3355 = vrot.lane.b32.xlu0 %v1855, 64
      %v3356 = vpop.permute.xlu0 %3355
      %3357 = vrot.lane.b32.xlu0 %v1872, 64
      %v3358 = vpop.permute.xlu0 %3357
      %3359 = vrot.lane.b32.xlu0 %v1889, 64
      %v3360 = vpop.permute.xlu0 %3359
      %3361 = vrot.lane.b32.xlu0 %v1906, 64
      %v3362 = vpop.permute.xlu0 %3361
      %3363 = vrot.lane.b32.xlu0 %v1923, 64
      %v3364 = vpop.permute.xlu0 %3363
      %3365 = vrot.lane.b32.xlu0 %v1972, 96
      %v3366 = vpop.permute.xlu0 %3365
      %3367 = vrot.lane.b32.xlu0 %v1989, 96
      %v3368 = vpop.permute.xlu0 %3367
      %3369 = vrot.lane.b32.xlu0 %v2006, 96
      %v3370 = vpop.permute.xlu0 %3369
      %3371 = vrot.lane.b32.xlu0 %v2023, 96
      %v3372 = vpop.permute.xlu0 %3371
      %3373 = vrot.lane.b32.xlu0 %v2040, 96
      %v3374 = vpop.permute.xlu0 %3373
      %3375 = vrot.lane.b32.xlu0 %v2057, 96
      %v3376 = vpop.permute.xlu0 %3375
      %3377 = vrot.lane.b32.xlu0 %v2074, 96
      %v3378 = vpop.permute.xlu0 %3377
      %3379 = vrot.lane.b32.xlu0 %v2091, 96
      %v3380 = vpop.permute.xlu0 %3379
      %3381 = vrot.lane.b32.xlu0 %v2108, 96
      %v3382 = vpop.permute.xlu0 %3381
      %3383 = vrot.lane.b32.xlu0 %v2125, 96
      %v3384 = vpop.permute.xlu0 %3383
      %3385 = vrot.lane.b32.xlu0 %v2142, 96
      %v3386 = vpop.permute.xlu0 %3385
      %3387 = vrot.lane.b32.xlu0 %v2159, 96
      %v3388 = vpop.permute.xlu0 %3387
      %3389 = vrot.lane.b32.xlu0 %v2176, 96
      %v3390 = vpop.permute.xlu0 %3389
      %3391 = vrot.lane.b32.xlu0 %v2193, 96
      %v3392 = vpop.permute.xlu0 %3391
      %3393 = vrot.lane.b32.xlu0 %v2210, 96
      %v3394 = vpop.permute.xlu0 %3393
      %3395 = vrot.lane.b32.xlu0 %v2227, 96
      %v3396 = vpop.permute.xlu0 %3395
      %3397 = vrot.lane.b32.xlu0 %v2356, 32
      %v3398 = vpop.permute.xlu0 %3397
      %3399 = vrot.lane.b32.xlu0 %v2373, 32
      %v3400 = vpop.permute.xlu0 %3399
      %3401 = vrot.lane.b32.xlu0 %v2390, 32
      %v3402 = vpop.permute.xlu0 %3401
      %3403 = vrot.lane.b32.xlu0 %v2407, 32
      %v3404 = vpop.permute.xlu0 %3403
      %3405 = vrot.lane.b32.xlu0 %v2424, 32
      %v3406 = vpop.permute.xlu0 %3405
      %3407 = vrot.lane.b32.xlu0 %v2441, 32
      %v3408 = vpop.permute.xlu0 %3407
      %3409 = vrot.lane.b32.xlu0 %v2458, 32
      %v3410 = vpop.permute.xlu0 %3409
      %3411 = vrot.lane.b32.xlu0 %v2475, 32
      %v3412 = vpop.permute.xlu0 %3411
      %3413 = vrot.lane.b32.xlu0 %v2492, 32
      %v3414 = vpop.permute.xlu0 %3413
      %3415 = vrot.lane.b32.xlu0 %v2509, 32
      %v3416 = vpop.permute.xlu0 %3415
      %3417 = vrot.lane.b32.xlu0 %v2526, 32
      %v3418 = vpop.permute.xlu0 %3417
      %3419 = vrot.lane.b32.xlu0 %v2543, 32
      %v3420 = vpop.permute.xlu0 %3419
      %3421 = vrot.lane.b32.xlu0 %v2560, 32
      %v3422 = vpop.permute.xlu0 %3421
      %3423 = vrot.lane.b32.xlu0 %v2577, 32
      %v3424 = vpop.permute.xlu0 %3423
      %3425 = vrot.lane.b32.xlu0 %v2594, 32
      %v3426 = vpop.permute.xlu0 %3425
      %3427 = vrot.lane.b32.xlu0 %v2611, 32
      %v3428 = vpop.permute.xlu0 %3427
      %3429 = vrot.lane.b32.xlu0 %v2661, 64
      %v3430 = vpop.permute.xlu0 %3429
      %3431 = vrot.lane.b32.xlu0 %v2678, 64
      %v3432 = vpop.permute.xlu0 %3431
      %3433 = vrot.lane.b32.xlu0 %v2695, 64
      %v3434 = vpop.permute.xlu0 %3433
      %3435 = vrot.lane.b32.xlu0 %v2712, 64
      %v3436 = vpop.permute.xlu0 %3435
      %3437 = vrot.lane.b32.xlu0 %v2729, 64
      %v3438 = vpop.permute.xlu0 %3437
      %3439 = vrot.lane.b32.xlu0 %v2746, 64
      %v3440 = vpop.permute.xlu0 %3439
      %3441 = vrot.lane.b32.xlu0 %v2763, 64
      %v3442 = vpop.permute.xlu0 %3441
      %3443 = vrot.lane.b32.xlu0 %v2780, 64
      %v3444 = vpop.permute.xlu0 %3443
      %3445 = vrot.lane.b32.xlu0 %v2797, 64
      %v3446 = vpop.permute.xlu0 %3445
      %3447 = vrot.lane.b32.xlu0 %v2814, 64
      %v3448 = vpop.permute.xlu0 %3447
      %3449 = vrot.lane.b32.xlu0 %v2831, 64
      %v3450 = vpop.permute.xlu0 %3449
      %3451 = vrot.lane.b32.xlu0 %v2848, 64
      %v3452 = vpop.permute.xlu0 %3451
      %3453 = vrot.lane.b32.xlu0 %v2865, 64
      %v3454 = vpop.permute.xlu0 %3453
      %3455 = vrot.lane.b32.xlu0 %v2882, 64
      %v3456 = vpop.permute.xlu0 %3455
      %3457 = vrot.lane.b32.xlu0 %v2899, 64
      %v3458 = vpop.permute.xlu0 %3457
      %3459 = vrot.lane.b32.xlu0 %v2916, 64
      %v3460 = vpop.permute.xlu0 %3459
      %3461 = vrot.lane.b32.xlu0 %v2967, 96
      %v3462 = vpop.permute.xlu0 %3461
      %3463 = vrot.lane.b32.xlu0 %v2970, 96
      %v3464 = vpop.permute.xlu0 %3463
      %3465 = vrot.lane.b32.xlu0 %v2973, 96
      %v3466 = vpop.permute.xlu0 %3465
      %3467 = vrot.lane.b32.xlu0 %v2976, 96
      %v3468 = vpop.permute.xlu0 %3467
      %3469 = vrot.lane.b32.xlu0 %v2979, 96
      %v3470 = vpop.permute.xlu0 %3469
      %3471 = vrot.lane.b32.xlu0 %v2982, 96
      %v3472 = vpop.permute.xlu0 %3471
      %3473 = vrot.lane.b32.xlu0 %v2985, 96
      %v3474 = vpop.permute.xlu0 %3473
      %3475 = vrot.lane.b32.xlu0 %v2988, 96
      %v3476 = vpop.permute.xlu0 %3475
      %3477 = vrot.lane.b32.xlu0 %v2991, 96
      %v3478 = vpop.permute.xlu0 %3477
      %3479 = vrot.lane.b32.xlu0 %v2994, 96
      %v3480 = vpop.permute.xlu0 %3479
      %3481 = vrot.lane.b32.xlu0 %v2997, 96
      %v3482 = vpop.permute.xlu0 %3481
      %3483 = vrot.lane.b32.xlu0 %v3000, 96
      %v3484 = vpop.permute.xlu0 %3483
      %3485 = vrot.lane.b32.xlu0 %v3003, 96
      %v3486 = vpop.permute.xlu0 %3485
      %3487 = vrot.lane.b32.xlu0 %v3006, 96
      %v3488 = vpop.permute.xlu0 %3487
      %3489 = vrot.lane.b32.xlu0 %v3009, 96
      %v3490 = vpop.permute.xlu0 %3489
      %3491 = vrot.lane.b32.xlu0 %v3012, 96
      %v3492 = vpop.permute.xlu0 %3491
      %vm3493 = vcmask 261120
      %v3496 = vsel %vm3493, %v1282, %v3302
      %v3499 = vsel %vm3493, %v1299, %v3304
      %v3502 = vsel %vm3493, %v1316, %v3306
      %v3505 = vsel %vm3493, %v1333, %v3308
      %v3508 = vsel %vm3493, %v1350, %v3310
      %v3511 = vsel %vm3493, %v1367, %v3312
      %v3514 = vsel %vm3493, %v1384, %v3314
      %v3517 = vsel %vm3493, %v1401, %v3316
      %v3520 = vsel %vm3493, %v1418, %v3318
      %v3523 = vsel %vm3493, %v1435, %v3320
      %v3526 = vsel %vm3493, %v1452, %v3322
      %v3529 = vsel %vm3493, %v1469, %v3324
      %v3532 = vsel %vm3493, %v1486, %v3326
      %v3535 = vsel %vm3493, %v1503, %v3328
      %v3538 = vsel %vm3493, %v1520, %v3330
      %v3541 = vsel %vm3493, %v1537, %v3332
      %vm3542 = vcmask 523264
      %v3544 = vsel %vm3542, %v3496, %v3334
      %v3546 = vsel %vm3542, %v3499, %v3336
      %v3548 = vsel %vm3542, %v3502, %v3338
      %v3550 = vsel %vm3542, %v3505, %v3340
      %v3552 = vsel %vm3542, %v3508, %v3342
      %v3554 = vsel %vm3542, %v3511, %v3344
      %v3556 = vsel %vm3542, %v3514, %v3346
      %v3558 = vsel %vm3542, %v3517, %v3348
      %v3560 = vsel %vm3542, %v3520, %v3350
      %v3562 = vsel %vm3542, %v3523, %v3352
      %v3564 = vsel %vm3542, %v3526, %v3354
      %v3566 = vsel %vm3542, %v3529, %v3356
      %v3568 = vsel %vm3542, %v3532, %v3358
      %v3570 = vsel %vm3542, %v3535, %v3360
      %v3572 = vsel %vm3542, %v3538, %v3362
      %v3574 = vsel %vm3542, %v3541, %v3364
      %vm3575 = vcmask 785408
      %v3577 = vsel %vm3575, %v3544, %v3366
      %v3580 = vsel %vm3575, %v3546, %v3368
      %v3583 = vsel %vm3575, %v3548, %v3370
      %v3586 = vsel %vm3575, %v3550, %v3372
      %v3589 = vsel %vm3575, %v3552, %v3374
      %v3592 = vsel %vm3575, %v3554, %v3376
      %v3595 = vsel %vm3575, %v3556, %v3378
      %v3598 = vsel %vm3575, %v3558, %v3380
      %v3601 = vsel %vm3575, %v3560, %v3382
      %v3604 = vsel %vm3575, %v3562, %v3384
      %v3607 = vsel %vm3575, %v3564, %v3386
      %v3610 = vsel %vm3575, %v3566, %v3388
      %v3613 = vsel %vm3575, %v3568, %v3390
      %v3616 = vsel %vm3575, %v3570, %v3392
      %v3619 = vsel %vm3575, %v3572, %v3394
      %v3622 = vsel %vm3575, %v3574, %v3396
      %v3626 = vsel %vm3493, %v2278, %v3398
      %v3629 = vsel %vm3493, %v2281, %v3400
      %v3632 = vsel %vm3493, %v2284, %v3402
      %v3635 = vsel %vm3493, %v2287, %v3404
      %v3638 = vsel %vm3493, %v2290, %v3406
      %v3641 = vsel %vm3493, %v2293, %v3408
      %v3644 = vsel %vm3493, %v2296, %v3410
      %v3647 = vsel %vm3493, %v2299, %v3412
      %v3650 = vsel %vm3493, %v2302, %v3414
      %v3653 = vsel %vm3493, %v2305, %v3416
      %v3656 = vsel %vm3493, %v2308, %v3418
      %v3659 = vsel %vm3493, %v2311, %v3420
      %v3662 = vsel %vm3493, %v2314, %v3422
      %v3665 = vsel %vm3493, %v2317, %v3424
      %v3668 = vsel %vm3493, %v2320, %v3426
      %v3671 = vsel %vm3493, %v2323, %v3428
      %v3673 = vsel %vm3542, %v3626, %v3430
      %v3675 = vsel %vm3542, %v3629, %v3432
      %v3677 = vsel %vm3542, %v3632, %v3434
      %v3679 = vsel %vm3542, %v3635, %v3436
      %v3681 = vsel %vm3542, %v3638, %v3438
      %v3683 = vsel %vm3542, %v3641, %v3440
      %v3685 = vsel %vm3542, %v3644, %v3442
      %v3687 = vsel %vm3542, %v3647, %v3444
      %v3689 = vsel %vm3542, %v3650, %v3446
      %v3691 = vsel %vm3542, %v3653, %v3448
      %v3693 = vsel %vm3542, %v3656, %v3450
      %v3695 = vsel %vm3542, %v3659, %v3452
      %v3697 = vsel %vm3542, %v3662, %v3454
      %v3699 = vsel %vm3542, %v3665, %v3456
      %v3701 = vsel %vm3542, %v3668, %v3458
      %v3703 = vsel %vm3542, %v3671, %v3460
      %v3705 = vsel %vm3575, %v3673, %v3462
      %v3708 = vsel %vm3575, %v3675, %v3464
      %v3711 = vsel %vm3575, %v3677, %v3466
      %v3714 = vsel %vm3575, %v3679, %v3468
      %v3717 = vsel %vm3575, %v3681, %v3470
      %v3720 = vsel %vm3575, %v3683, %v3472
      %v3723 = vsel %vm3575, %v3685, %v3474
      %v3726 = vsel %vm3575, %v3687, %v3476
      %v3729 = vsel %vm3575, %v3689, %v3478
      %v3732 = vsel %vm3575, %v3691, %v3480
      %v3735 = vsel %vm3575, %v3693, %v3482
      %v3738 = vsel %vm3575, %v3695, %v3484
      %v3741 = vsel %vm3575, %v3697, %v3486
      %v3744 = vsel %vm3575, %v3699, %v3488
      %v3747 = vsel %vm3575, %v3701, %v3490
      %v3750 = vsel %vm3575, %v3703, %v3492
      %v3752 = vld [vmem:[%s3] sm:$0xf]
      %v3753 = vld [vmem:[%s3 + $0x4] sm:$0xf]
      %v3754 = vld [vmem:[%s3 + $0x8] sm:$0xf]
      %v3755 = vld [vmem:[%s3 + $0xc] sm:$0xf]
      %v3756 = vld [vmem:[%s3 + $0x10] sm:$0xf]
      %v3757 = vld [vmem:[%s3 + $0x14] sm:$0xf]
      %v3758 = vld [vmem:[%s3 + $0x18] sm:$0xf]
      %v3759 = vld [vmem:[%s3 + $0x1c] sm:$0xf]
      %v3760 = vld [vmem:[%s3 + $0x20] sm:$0xf]
      %v3761 = vld [vmem:[%s3 + $0x24] sm:$0xf]
      %v3762 = vld [vmem:[%s3 + $0x28] sm:$0xf]
      %v3763 = vld [vmem:[%s3 + $0x2c] sm:$0xf]
      %v3764 = vld [vmem:[%s3 + $0x30] sm:$0xf]
      %v3765 = vld [vmem:[%s3 + $0x34] sm:$0xf]
      %v3766 = vld [vmem:[%s3 + $0x38] sm:$0xf]
      %v3767 = vld [vmem:[%s3 + $0x3c] sm:$0xf]
      %v3768 = vld [vmem:[%s3 + $0x40] sm:$0xf]
      %v3769 = vld [vmem:[%s3 + $0x44] sm:$0xf]
      %v3770 = vld [vmem:[%s3 + $0x48] sm:$0xf]
      %v3771 = vld [vmem:[%s3 + $0x4c] sm:$0xf]
      %v3772 = vld [vmem:[%s3 + $0x50] sm:$0xf]
      %v3773 = vld [vmem:[%s3 + $0x54] sm:$0xf]
      %v3774 = vld [vmem:[%s3 + $0x58] sm:$0xf]
      %v3775 = vld [vmem:[%s3 + $0x5c] sm:$0xf]
      %v3776 = vld [vmem:[%s3 + $0x60] sm:$0xf]
      %v3777 = vld [vmem:[%s3 + $0x64] sm:$0xf]
      %v3778 = vld [vmem:[%s3 + $0x68] sm:$0xf]
      %v3779 = vld [vmem:[%s3 + $0x6c] sm:$0xf]
      %v3780 = vld [vmem:[%s3 + $0x70] sm:$0xf]
      %v3781 = vld [vmem:[%s3 + $0x74] sm:$0xf]
      %v3782 = vld [vmem:[%s3 + $0x78] sm:$0xf]
      %v3783 = vld [vmem:[%s3 + $0x7c] sm:$0xf]
      %v3784 = vld [vmem:[%s3 + $0x80] sm:$0xf]
      %v3785 = vld [vmem:[%s3 + $0x84] sm:$0xf]
      %v3786 = vld [vmem:[%s3 + $0x88] sm:$0xf]
      %v3787 = vld [vmem:[%s3 + $0x8c] sm:$0xf]
      %v3788 = vld [vmem:[%s4] sm:$0x1]
      %v3790 = vlaneseq
      %v3791 = vshrl.u32 %v3790, 7
      %v3792 = vsub.s32 0, %v3791
      %v3793 = vrot.slane %v3788, %v3792
      %v3831 = vunpack.c.l.b16 %v3752
      %v3832 = vunpack.c.l.b16 %v3753
      %v3833 = vunpack.c.l.b16 %v3754
      %v3834 = vunpack.c.l.b16 %v3755
      %v3835 = vunpack.c.l.b16 %v3756
      %v3836 = vunpack.c.l.b16 %v3757
      %v3837 = vunpack.c.l.b16 %v3758
      %v3838 = vunpack.c.l.b16 %v3759
      %v3839 = vunpack.c.l.b16 %v3760
      %v3840 = vunpack.c.l.b16 %v3761
      %v3841 = vunpack.c.l.b16 %v3762
      %v3842 = vunpack.c.l.b16 %v3763
      %v3843 = vunpack.c.l.b16 %v3764
      %v3844 = vunpack.c.l.b16 %v3765
      %v3845 = vunpack.c.l.b16 %v3766
      %v3846 = vunpack.c.l.b16 %v3767
      %v3847 = vunpack.c.l.b16 %v3768
      %v3848 = vunpack.c.l.b16 %v3769
      %v3849 = vunpack.c.l.b16 %v3770
      %v3850 = vunpack.c.l.b16 %v3771
      %v3851 = vunpack.c.l.b16 %v3772
      %v3852 = vunpack.c.l.b16 %v3773
      %v3853 = vunpack.c.l.b16 %v3774
      %v3854 = vunpack.c.l.b16 %v3775
      %v3855 = vunpack.c.l.b16 %v3776
      %v3856 = vunpack.c.l.b16 %v3777
      %v3857 = vunpack.c.l.b16 %v3778
      %v3858 = vunpack.c.l.b16 %v3779
      %v3859 = vunpack.c.l.b16 %v3780
      %v3860 = vunpack.c.l.b16 %v3781
      %v3861 = vunpack.c.l.b16 %v3782
      %v3862 = vunpack.c.l.b16 %v3783
      %v3863 = vunpack.c.l.b16 %v3784
      %v3864 = vunpack.c.l.b16 %v3785
      %v3865 = vunpack.c.l.b16 %v3786
      %v3866 = vunpack.c.l.b16 %v3787
      %v3867 = vpack.c.b16 %v3832, %v3831
      %v3868 = vpack.c.b16 %v3834, %v3833
      %v3869 = vpack.c.b16 %v3836, %v3835
      %v3870 = vpack.c.b16 %v3838, %v3837
      %v3871 = vpack.c.b16 %v3840, %v3839
      %v3872 = vpack.c.b16 %v3842, %v3841
      %v3873 = vpack.c.b16 %v3844, %v3843
      %v3874 = vpack.c.b16 %v3846, %v3845
      %v3875 = vpack.c.b16 %v3848, %v3847
      %v3876 = vpack.c.b16 %v3850, %v3849
      %v3877 = vpack.c.b16 %v3852, %v3851
      %v3878 = vpack.c.b16 %v3854, %v3853
      %v3879 = vpack.c.b16 %v3856, %v3855
      %v3880 = vpack.c.b16 %v3858, %v3857
      %v3881 = vpack.c.b16 %v3860, %v3859
      %v3882 = vpack.c.b16 %v3862, %v3861
      %v3883 = vpack.c.b16 %v3864, %v3863
      %v3884 = vpack.c.b16 %v3866, %v3865
      %v3904 = vsel %vm3493, %v3045, 0
      %v3907 = vsel %vm3493, %v3062, 0
      %v3910 = vsel %vm3493, %v3079, 0
      %v3913 = vsel %vm3493, %v3096, 0
      %v3916 = vsel %vm3493, %v3113, 0
      %v3919 = vsel %vm3493, %v3130, 0
      %v3922 = vsel %vm3493, %v3147, 0
      %v3925 = vsel %vm3493, %v3164, 0
      %v3928 = vsel %vm3493, %v3181, 0
      %v3931 = vsel %vm3493, %v3198, 0
      %v3934 = vsel %vm3493, %v3215, 0
      %v3937 = vsel %vm3493, %v3232, 0
      %v3940 = vsel %vm3493, %v3249, 0
      %v3943 = vsel %vm3493, %v3266, 0
      %v3946 = vsel %vm3493, %v3283, 0
      %v3949 = vsel %vm3493, %v3300, 0
      %3951 = vmatprep.subr.bf16.mxu0 0
      %3952 = vmatpush1.bf16.msra.mxu0 %v3867
      %3953 = vmatprep.subr.bf16.mxu0 0
      %3954 = vmatpush1.bf16.msra.mxu0 %v3868
      %3955 = vmatprep.subr.bf16.mxu0 0
      %3956 = vmatpush1.bf16.msra.mxu0 %v3869
      %3957 = vmatprep.subr.bf16.mxu0 0
      %3958 = vmatpush1.bf16.msra.mxu0 %v3870
      %3959 = vmatprep.subr.bf16.mxu0 0
      %3960 = vmatpush1.bf16.msra.mxu0 %v3871
      %3961 = vmatprep.subr.bf16.mxu0 0
      %3962 = vmatpush1.bf16.msra.mxu0 %v3872
      %3963 = vmatprep.subr.bf16.mxu0 0
      %3964 = vmatpush1.bf16.msra.mxu0 %v3873
      %3965 = vmatprep.subr.bf16.mxu0 0
      %3966 = vmatpush1.bf16.msra.mxu0 %v3874
      %3967 = vmatprep.subr.bf16.mxu0 0
      %3968 = vmatpush1.bf16.msra.mxu0 %v3875
      %3969 = vmatprep.subr.bf16.mxu0 0
      %3970 = vmatpush1.bf16.msra.mxu0 %v3876
      %3971 = vmatprep.subr.bf16.mxu0 0
      %3972 = vmatpush1.bf16.msra.mxu0 %v3877
      %3973 = vmatprep.subr.bf16.mxu0 0
      %3974 = vmatpush1.bf16.msra.mxu0 %v3878
      %3975 = vmatprep.subr.bf16.mxu0 0
      %3976 = vmatpush1.bf16.msra.mxu0 %v3879
      %3977 = vmatprep.subr.bf16.mxu0 0
      %3978 = vmatpush1.bf16.msra.mxu0 %v3880
      %3979 = vmatprep.subr.bf16.mxu0 0
      %3980 = vmatpush1.bf16.msra.mxu0 %v3881
      %3981 = vmatprep.subr.bf16.mxu0 0
      %3982 = vmatpush1.bf16.msra.mxu0 %v3882
      %3983 = vmatprep.mubr.bf16.mxu0 %v3705
      %3984 = vmatmul.mubr.bf16.gmra.mrb[0].mxu0 %v3577
      %v3985 = vpop.f32.mrb[0].mxu0
      %v3986 = vadd.f32 %v3793, %v3985
      %v3987 = vpop.f32.mrb[0].mxu0
      %v3988 = vpop.f32.mrb[0].mxu0
      %v3989 = vadd.f32 %v3793, %v3988
      %v3990 = vpop.f32.mrb[0].mxu0
      %3991 = vmatprep.mubr.bf16.mxu0 %v3708
      %3992 = vmatmul.mubr.bf16.gmra.mrb[0].mxu0 %v3580
      %v3993 = vpop.f32.mrb[0].mxu0
      %v3994 = vadd.f32 %v3793, %v3993
      %v3995 = vpop.f32.mrb[0].mxu0
      %v3996 = vpop.f32.mrb[0].mxu0
      %v3997 = vadd.f32 %v3793, %v3996
      %v3998 = vpop.f32.mrb[0].mxu0
      %3999 = vmatprep.mubr.bf16.mxu0 %v3711
      %4000 = vmatmul.mubr.bf16.gmra.mrb[0].mxu0 %v3583
      %v4001 = vpop.f32.mrb[0].mxu0
      %v4002 = vadd.f32 %v3793, %v4001
      %v4003 = vpop.f32.mrb[0].mxu0
      %v4004 = vpop.f32.mrb[0].mxu0
      %v4005 = vadd.f32 %v3793, %v4004
      %v4006 = vpop.f32.mrb[0].mxu0
      %4007 = vmatprep.mubr.bf16.mxu0 %v3714
      %4008 = vmatmul.mubr.bf16.gmra.mrb[0].mxu0 %v3586
      %v4009 = vpop.f32.mrb[0].mxu0
      %v4010 = vadd.f32 %v3793, %v4009
      %v4011 = vpop.f32.mrb[0].mxu0
      %v4012 = vpop.f32.mrb[0].mxu0
      %v4013 = vadd.f32 %v3793, %v4012
      %v4014 = vpop.f32.mrb[0].mxu0
      %4015 = vmatprep.mubr.bf16.mxu0 %v3717
      %4016 = vmatmul.mubr.bf16.gmra.mrb[0].mxu0 %v3589
      %v4017 = vpop.f32.mrb[0].mxu0
      %v4018 = vadd.f32 %v3793, %v4017
      %v4019 = vpop.f32.mrb[0].mxu0
      %v4020 = vpop.f32.mrb[0].mxu0
      %v4021 = vadd.f32 %v3793, %v4020
      %v4022 = vpop.f32.mrb[0].mxu0
      %4023 = vmatprep.mubr.bf16.mxu0 %v3720
      %4024 = vmatmul.mubr.bf16.gmra.mrb[0].mxu0 %v3592
      %v4025 = vpop.f32.mrb[0].mxu0
      %v4026 = vadd.f32 %v3793, %v4025
      %v4027 = vpop.f32.mrb[0].mxu0
      %v4028 = vpop.f32.mrb[0].mxu0
      %v4029 = vadd.f32 %v3793, %v4028
      %v4030 = vpop.f32.mrb[0].mxu0
      %4031 = vmatprep.mubr.bf16.mxu0 %v3723
      %4032 = vmatmul.mubr.bf16.gmra.mrb[0].mxu0 %v3595
      %v4033 = vpop.f32.mrb[0].mxu0
      %v4034 = vadd.f32 %v3793, %v4033
      %v4035 = vpop.f32.mrb[0].mxu0
      %v4036 = vpop.f32.mrb[0].mxu0
      %v4037 = vadd.f32 %v3793, %v4036
      %v4038 = vpop.f32.mrb[0].mxu0
      %4039 = vmatprep.mubr.bf16.mxu0 %v3726
      %4040 = vmatmul.mubr.bf16.gmra.mrb[0].mxu0 %v3598
      %v4041 = vpop.f32.mrb[0].mxu0
      %v4042 = vadd.f32 %v3793, %v4041
      %v4043 = vpop.f32.mrb[0].mxu0
      %v4044 = vpop.f32.mrb[0].mxu0
      %v4045 = vadd.f32 %v3793, %v4044
      %v4046 = vpop.f32.mrb[0].mxu0
      %4047 = vmatprep.mubr.bf16.mxu0 %v3729
      %4048 = vmatmul.mubr.bf16.gmra.mrb[0].mxu0 %v3601
      %v4049 = vpop.f32.mrb[0].mxu0
      %v4050 = vadd.f32 %v3793, %v4049
      %v4051 = vpop.f32.mrb[0].mxu0
      %v4052 = vpop.f32.mrb[0].mxu0
      %v4053 = vadd.f32 %v3793, %v4052
      %v4054 = vpop.f32.mrb[0].mxu0
      %4055 = vmatprep.mubr.bf16.mxu0 %v3732
      %4056 = vmatmul.mubr.bf16.gmra.mrb[0].mxu0 %v3604
      %v4057 = vpop.f32.mrb[0].mxu0
      %v4058 = vadd.f32 %v3793, %v4057
      %v4059 = vpop.f32.mrb[0].mxu0
      %v4060 = vpop.f32.mrb[0].mxu0
      %v4061 = vadd.f32 %v3793, %v4060
      %v4062 = vpop.f32.mrb[0].mxu0
      %4063 = vmatprep.mubr.bf16.mxu0 %v3735
      %4064 = vmatmul.mubr.bf16.gmra.mrb[0].mxu0 %v3607
      %v4065 = vpop.f32.mrb[0].mxu0
      %v4066 = vadd.f32 %v3793, %v4065
      %v4067 = vpop.f32.mrb[0].mxu0
      %v4068 = vpop.f32.mrb[0].mxu0
      %v4069 = vadd.f32 %v3793, %v4068
      %v4070 = vpop.f32.mrb[0].mxu0
      %4071 = vmatprep.mubr.bf16.mxu0 %v3738
      %4072 = vmatmul.mubr.bf16.gmra.mrb[0].mxu0 %v3610
      %v4073 = vpop.f32.mrb[0].mxu0
      %v4074 = vadd.f32 %v3793, %v4073
      %v4075 = vpop.f32.mrb[0].mxu0
      %v4076 = vpop.f32.mrb[0].mxu0
      %v4077 = vadd.f32 %v3793, %v4076
      %v4078 = vpop.f32.mrb[0].mxu0
      %4079 = vmatprep.mubr.bf16.mxu0 %v3741
      %4080 = vmatmul.mubr.bf16.gmra.mrb[0].mxu0 %v3613
      %v4081 = vpop.f32.mrb[0].mxu0
      %v4082 = vadd.f32 %v3793, %v4081
      %v4083 = vpop.f32.mrb[0].mxu0
      %v4084 = vpop.f32.mrb[0].mxu0
      %v4085 = vadd.f32 %v3793, %v4084
      %v4086 = vpop.f32.mrb[0].mxu0
      %4087 = vmatprep.mubr.bf16.mxu0 %v3744
      %4088 = vmatmul.mubr.bf16.gmra.mrb[0].mxu0 %v3616
      %v4089 = vpop.f32.mrb[0].mxu0
      %v4090 = vadd.f32 %v3793, %v4089
      %v4091 = vpop.f32.mrb[0].mxu0
      %v4092 = vpop.f32.mrb[0].mxu0
      %v4093 = vadd.f32 %v3793, %v4092
      %v4094 = vpop.f32.mrb[0].mxu0
      %4095 = vmatprep.mubr.bf16.mxu0 %v3747
      %4096 = vmatmul.mubr.bf16.gmra.mrb[0].mxu0 %v3619
      %v4097 = vpop.f32.mrb[0].mxu0
      %v4098 = vadd.f32 %v3793, %v4097
      %v4099 = vpop.f32.mrb[0].mxu0
      %v4100 = vpop.f32.mrb[0].mxu0
      %v4101 = vadd.f32 %v3793, %v4100
      %v4102 = vpop.f32.mrb[0].mxu0
      %4103 = vmatprep.mubr.bf16.mxu0 %v3750
      %4104 = vmatmul.mubr.bf16.gmra.mrb[0].mxu0 %v3622
      %v4105 = vpop.f32.mrb[0].mxu0
      %v4106 = vadd.f32 %v3793, %v4105
      %v4107 = vpop.f32.mrb[0].mxu0
      %v4108 = vpop.f32.mrb[0].mxu0
      %v4109 = vadd.f32 %v3793, %v4108
      %v4110 = vpop.f32.mrb[0].mxu0
      %4111 = vdwg.mxu0
      %4112 = vmatprep.subr.bf16.mxu0 0
      %4113 = vmatpush1.bf16.msra.mxu0 %v3883
      %4114 = vmatprep.subr.bf16.mxu0 0
      %4115 = vmatpush1.bf16.msra.mxu0 %v3884
      %4116 = vmatprep.subr.bf16.mxu0 0
      %4117 = vmatpush1.bf16.msra.mxu0 0
      %4118 = vmatprep.subr.bf16.mxu0 0
      %4119 = vmatpush1.bf16.msra.mxu0 0
      %4120 = vmatprep.subr.bf16.mxu0 0
      %4121 = vmatpush1.bf16.msra.mxu0 0
      %4122 = vmatprep.subr.bf16.mxu0 0
      %4123 = vmatpush1.bf16.msra.mxu0 0
      %4124 = vmatprep.subr.bf16.mxu0 0
      %4125 = vmatpush1.bf16.msra.mxu0 0
      %4126 = vmatprep.subr.bf16.mxu0 0
      %4127 = vmatpush1.bf16.msra.mxu0 0
      %4128 = vmatprep.subr.bf16.mxu0 0
      %4129 = vmatpush1.bf16.msra.mxu0 0
      %4130 = vmatprep.subr.bf16.mxu0 0
      %4131 = vmatpush1.bf16.msra.mxu0 0
      %4132 = vmatprep.subr.bf16.mxu0 0
      %4133 = vmatpush1.bf16.msra.mxu0 0
      %4134 = vmatprep.subr.bf16.mxu0 0
      %4135 = vmatpush1.bf16.msra.mxu0 0
      %4136 = vmatprep.subr.bf16.mxu0 0
      %4137 = vmatpush1.bf16.msra.mxu0 0
      %4138 = vmatprep.subr.bf16.mxu0 0
      %4139 = vmatpush1.bf16.msra.mxu0 0
      %4140 = vmatprep.subr.bf16.mxu0 0
      %4141 = vmatpush1.bf16.msra.mxu0 0
      %4142 = vmatprep.subr.bf16.mxu0 0
      %4143 = vmatpush1.bf16.msra.mxu0 0
      %4144 = vmatprep.mubr.bf16.mxu0 0
      %4145 = vmatmul.mubr.bf16.gmra.mrb[0].mxu0 %v3904
      %v4146 = vpop.f32.mrb[0].mxu0
      %v4147 = vadd.f32 %v3986, %v4146
      %v4148 = vpop.f32.mrb[0].mxu0
      %v4149 = vpop.f32.mrb[0].mxu0
      %v4150 = vadd.f32 %v3989, %v4149
      %v4151 = vpop.f32.mrb[0].mxu0
      %4152 = vmatprep.mubr.bf16.mxu0 0
      %4153 = vmatmul.mubr.bf16.gmra.mrb[0].mxu0 %v3907
      %v4154 = vpop.f32.mrb[0].mxu0
      %v4155 = vadd.f32 %v3994, %v4154
      %v4156 = vpop.f32.mrb[0].mxu0
      %v4157 = vpop.f32.mrb[0].mxu0
      %v4158 = vadd.f32 %v3997, %v4157
      %v4159 = vpop.f32.mrb[0].mxu0
      %4160 = vmatprep.mubr.bf16.mxu0 0
      %4161 = vmatmul.mubr.bf16.gmra.mrb[0].mxu0 %v3910
      %v4162 = vpop.f32.mrb[0].mxu0
      %v4163 = vadd.f32 %v4002, %v4162
      %v4164 = vpop.f32.mrb[0].mxu0
      %v4165 = vpop.f32.mrb[0].mxu0
      %v4166 = vadd.f32 %v4005, %v4165
      %v4167 = vpop.f32.mrb[0].mxu0
      %4168 = vmatprep.mubr.bf16.mxu0 0
      %4169 = vmatmul.mubr.bf16.gmra.mrb[0].mxu0 %v3913
      %v4170 = vpop.f32.mrb[0].mxu0
      %v4171 = vadd.f32 %v4010, %v4170
      %v4172 = vpop.f32.mrb[0].mxu0
      %v4173 = vpop.f32.mrb[0].mxu0
      %v4174 = vadd.f32 %v4013, %v4173
      %v4175 = vpop.f32.mrb[0].mxu0
      %4176 = vmatprep.mubr.bf16.mxu0 0
      %4177 = vmatmul.mubr.bf16.gmra.mrb[0].mxu0 %v3916
      %v4178 = vpop.f32.mrb[0].mxu0
      %v4179 = vadd.f32 %v4018, %v4178
      %v4180 = vpop.f32.mrb[0].mxu0
      %v4181 = vpop.f32.mrb[0].mxu0
      %v4182 = vadd.f32 %v4021, %v4181
      %v4183 = vpop.f32.mrb[0].mxu0
      %4184 = vmatprep.mubr.bf16.mxu0 0
      %4185 = vmatmul.mubr.bf16.gmra.mrb[0].mxu0 %v3919
      %v4186 = vpop.f32.mrb[0].mxu0
      %v4187 = vadd.f32 %v4026, %v4186
      %v4188 = vpop.f32.mrb[0].mxu0
      %v4189 = vpop.f32.mrb[0].mxu0
      %v4190 = vadd.f32 %v4029, %v4189
      %v4191 = vpop.f32.mrb[0].mxu0
      %4192 = vmatprep.mubr.bf16.mxu0 0
      %4193 = vmatmul.mubr.bf16.gmra.mrb[0].mxu0 %v3922
      %v4194 = vpop.f32.mrb[0].mxu0
      %v4195 = vadd.f32 %v4034, %v4194
      %v4196 = vpop.f32.mrb[0].mxu0
      %v4197 = vpop.f32.mrb[0].mxu0
      %v4198 = vadd.f32 %v4037, %v4197
      %v4199 = vpop.f32.mrb[0].mxu0
      %4200 = vmatprep.mubr.bf16.mxu0 0
      %4201 = vmatmul.mubr.bf16.gmra.mrb[0].mxu0 %v3925
      %v4202 = vpop.f32.mrb[0].mxu0
      %v4203 = vadd.f32 %v4042, %v4202
      %v4204 = vpop.f32.mrb[0].mxu0
      %v4205 = vpop.f32.mrb[0].mxu0
      %v4206 = vadd.f32 %v4045, %v4205
      %v4207 = vpop.f32.mrb[0].mxu0
      %4208 = vmatprep.mubr.bf16.mxu0 0
      %4209 = vmatmul.mubr.bf16.gmra.mrb[0].mxu0 %v3928
      %v4210 = vpop.f32.mrb[0].mxu0
      %v4211 = vadd.f32 %v4050, %v4210
      %v4212 = vpop.f32.mrb[0].mxu0
      %v4213 = vpop.f32.mrb[0].mxu0
      %v4214 = vadd.f32 %v4053, %v4213
      %v4215 = vpop.f32.mrb[0].mxu0
      %4216 = vmatprep.mubr.bf16.mxu0 0
      %4217 = vmatmul.mubr.bf16.gmra.mrb[0].mxu0 %v3931
      %v4218 = vpop.f32.mrb[0].mxu0
      %v4219 = vadd.f32 %v4058, %v4218
      %v4220 = vpop.f32.mrb[0].mxu0
      %v4221 = vpop.f32.mrb[0].mxu0
      %v4222 = vadd.f32 %v4061, %v4221
      %v4223 = vpop.f32.mrb[0].mxu0
      %4224 = vmatprep.mubr.bf16.mxu0 0
      %4225 = vmatmul.mubr.bf16.gmra.mrb[0].mxu0 %v3934
      %v4226 = vpop.f32.mrb[0].mxu0
      %v4227 = vadd.f32 %v4066, %v4226
      %v4228 = vpop.f32.mrb[0].mxu0
      %v4229 = vpop.f32.mrb[0].mxu0
      %v4230 = vadd.f32 %v4069, %v4229
      %v4231 = vpop.f32.mrb[0].mxu0
      %4232 = vmatprep.mubr.bf16.mxu0 0
      %4233 = vmatmul.mubr.bf16.gmra.mrb[0].mxu0 %v3937
      %v4234 = vpop.f32.mrb[0].mxu0
      %v4235 = vadd.f32 %v4074, %v4234
      %v4236 = vpop.f32.mrb[0].mxu0
      %v4237 = vpop.f32.mrb[0].mxu0
      %v4238 = vadd.f32 %v4077, %v4237
      %v4239 = vpop.f32.mrb[0].mxu0
      %4240 = vmatprep.mubr.bf16.mxu0 0
      %4241 = vmatmul.mubr.bf16.gmra.mrb[0].mxu0 %v3940
      %v4242 = vpop.f32.mrb[0].mxu0
      %v4243 = vadd.f32 %v4082, %v4242
      %v4244 = vpop.f32.mrb[0].mxu0
      %v4245 = vpop.f32.mrb[0].mxu0
      %v4246 = vadd.f32 %v4085, %v4245
      %v4247 = vpop.f32.mrb[0].mxu0
      %4248 = vmatprep.mubr.bf16.mxu0 0
      %4249 = vmatmul.mubr.bf16.gmra.mrb[0].mxu0 %v3943
      %v4250 = vpop.f32.mrb[0].mxu0
      %v4251 = vadd.f32 %v4090, %v4250
      %v4252 = vpop.f32.mrb[0].mxu0
      %v4253 = vpop.f32.mrb[0].mxu0
      %v4254 = vadd.f32 %v4093, %v4253
      %v4255 = vpop.f32.mrb[0].mxu0
      %4256 = vmatprep.mubr.bf16.mxu0 0
      %4257 = vmatmul.mubr.bf16.gmra.mrb[0].mxu0 %v3946
      %v4258 = vpop.f32.mrb[0].mxu0
      %v4259 = vadd.f32 %v4098, %v4258
      %v4260 = vpop.f32.mrb[0].mxu0
      %v4261 = vpop.f32.mrb[0].mxu0
      %v4262 = vadd.f32 %v4101, %v4261
      %v4263 = vpop.f32.mrb[0].mxu0
      %4264 = vmatprep.mubr.bf16.mxu0 0
      %4265 = vmatmul.mubr.bf16.gmra.mrb[0].mxu0 %v3949
      %v4266 = vpop.f32.mrb[0].mxu0
      %v4267 = vadd.f32 %v4106, %v4266
      %v4268 = vpop.f32.mrb[0].mxu0
      %v4269 = vpop.f32.mrb[0].mxu0
      %v4270 = vadd.f32 %v4109, %v4269
      %v4271 = vpop.f32.mrb[0].mxu0
      %4272 = vdwg.mxu0
      %v4273 = vmax.f32 %v4147, 0.0
      %v4274 = vmax.f32 %v4150, 0.0
      %v4275 = vmax.f32 %v4155, 0.0
      %v4276 = vmax.f32 %v4158, 0.0
      %v4277 = vmax.f32 %v4163, 0.0
      %v4278 = vmax.f32 %v4166, 0.0
      %v4279 = vmax.f32 %v4171, 0.0
      %v4280 = vmax.f32 %v4174, 0.0
      %v4281 = vmax.f32 %v4179, 0.0
      %v4282 = vmax.f32 %v4182, 0.0
      %v4283 = vmax.f32 %v4187, 0.0
      %v4284 = vmax.f32 %v4190, 0.0
      %v4285 = vmax.f32 %v4195, 0.0
      %v4286 = vmax.f32 %v4198, 0.0
      %v4287 = vmax.f32 %v4203, 0.0
      %v4288 = vmax.f32 %v4206, 0.0
      %v4289 = vmax.f32 %v4211, 0.0
      %v4290 = vmax.f32 %v4214, 0.0
      %v4291 = vmax.f32 %v4219, 0.0
      %v4292 = vmax.f32 %v4222, 0.0
      %v4293 = vmax.f32 %v4227, 0.0
      %v4294 = vmax.f32 %v4230, 0.0
      %v4295 = vmax.f32 %v4235, 0.0
      %v4296 = vmax.f32 %v4238, 0.0
      %v4297 = vmax.f32 %v4243, 0.0
      %v4298 = vmax.f32 %v4246, 0.0
      %v4299 = vmax.f32 %v4251, 0.0
      %v4300 = vmax.f32 %v4254, 0.0
      %v4301 = vmax.f32 %v4259, 0.0
      %v4302 = vmax.f32 %v4262, 0.0
      %v4303 = vmax.f32 %v4267, 0.0
      %v4304 = vmax.f32 %v4270, 0.0
      %4305 = vst.msk [vmem:[#allocation3 + $0x7] sm:$0xff] %vm3493, 0.0
      %4306 = vst.msk [vmem:[#allocation3 + $0xf] sm:$0xff] %vm3493, 0.0
      %vm4307 = vcmask 254976
      %4308 = vst.msk [vmem:[#allocation3 + $0x17] sm:$0x3] %vm4307, 0.0
      %s4309 = scalar_lea.vmem [#allocation3], 544
      %4310 = vst.msk [vmem:[%s4309 + $0x7] sm:$0xff] %vm3493, 0.0
      %4311 = vst.msk [vmem:[%s4309 + $0xf] sm:$0xff] %vm3493, 0.0
      %4312 = vst.msk [vmem:[%s4309 + $0x17] sm:$0x3] %vm4307, 0.0
      %s4313 = scalar_lea.vmem [#allocation3], 32
      %vm4314 = vcmask 253952
      %4315 = vst.msk [vmem:[%s4313 + $0x7] sm:$0x1] %vm4314, 0.0
      %4316 = vst.msk [vmem:[%s4313 + $0x27] sm:$0x1] %vm4314, 0.0
      %4317 = vst.msk [vmem:[%s4313 + $0x47] sm:$0x1] %vm4314, 0.0
      %4318 = vst.msk [vmem:[%s4313 + $0x67] sm:$0x1] %vm4314, 0.0
      %4319 = vst.msk [vmem:[%s4313 + $0x87] sm:$0x1] %vm4314, 0.0
      %4320 = vst.msk [vmem:[%s4313 + $0xa7] sm:$0x1] %vm4314, 0.0
      %4321 = vst.msk [vmem:[%s4313 + $0xc7] sm:$0x1] %vm4314, 0.0
      %4322 = vst.msk [vmem:[%s4313 + $0xe7] sm:$0x1] %vm4314, 0.0
      %4323 = vst.msk [vmem:[%s4313 + $0x107] sm:$0x1] %vm4314, 0.0
      %4324 = vst.msk [vmem:[%s4313 + $0x127] sm:$0x1] %vm4314, 0.0
      %4325 = vst.msk [vmem:[%s4313 + $0x147] sm:$0x1] %vm4314, 0.0
      %4326 = vst.msk [vmem:[%s4313 + $0x167] sm:$0x1] %vm4314, 0.0
      %4327 = vst.msk [vmem:[%s4313 + $0x187] sm:$0x1] %vm4314, 0.0
      %4328 = vst.msk [vmem:[%s4313 + $0x1a7] sm:$0x1] %vm4314, 0.0
      %4329 = vst.msk [vmem:[%s4313 + $0x1c7] sm:$0x1] %vm4314, 0.0
      %4330 = vst.msk [vmem:[%s4313 + $0x1e7] sm:$0x1] %vm4314, 0.0
      %4331 = vst.msk [vmem:[%s4313 + $0x18] sm:$0x1] %vm4314, 0.0
      %4332 = vst.msk [vmem:[%s4313 + $0x38] sm:$0x1] %vm4314, 0.0
      %4333 = vst.msk [vmem:[%s4313 + $0x58] sm:$0x1] %vm4314, 0.0
      %4334 = vst.msk [vmem:[%s4313 + $0x78] sm:$0x1] %vm4314, 0.0
      %4335 = vst.msk [vmem:[%s4313 + $0x98] sm:$0x1] %vm4314, 0.0
      %4336 = vst.msk [vmem:[%s4313 + $0xb8] sm:$0x1] %vm4314, 0.0
      %4337 = vst.msk [vmem:[%s4313 + $0xd8] sm:$0x1] %vm4314, 0.0
      %4338 = vst.msk [vmem:[%s4313 + $0xf8] sm:$0x1] %vm4314, 0.0
      %4339 = vst.msk [vmem:[%s4313 + $0x118] sm:$0x1] %vm4314, 0.0
      %4340 = vst.msk [vmem:[%s4313 + $0x138] sm:$0x1] %vm4314, 0.0
      %4341 = vst.msk [vmem:[%s4313 + $0x158] sm:$0x1] %vm4314, 0.0
      %4342 = vst.msk [vmem:[%s4313 + $0x178] sm:$0x1] %vm4314, 0.0
      %4343 = vst.msk [vmem:[%s4313 + $0x198] sm:$0x1] %vm4314, 0.0
      %4344 = vst.msk [vmem:[%s4313 + $0x1b8] sm:$0x1] %vm4314, 0.0
      %4345 = vst.msk [vmem:[%s4313 + $0x1d8] sm:$0x1] %vm4314, 0.0
      %4346 = vst.msk [vmem:[%s4313 + $0x1f8] sm:$0x1] %vm4314, 0.0
      %4347 = vst.msk [vmem:[%s4313 + $0x8] sm:$0xff] %vm3493, %v4273
      %4348 = vst.msk [vmem:[%s4313 + $0x10] sm:$0xff] %vm3493, %v4274
      %4349 = vst.msk [vmem:[%s4313 + $0x28] sm:$0xff] %vm3493, %v4275
      %4350 = vst.msk [vmem:[%s4313 + $0x30] sm:$0xff] %vm3493, %v4276
      %4351 = vst.msk [vmem:[%s4313 + $0x48] sm:$0xff] %vm3493, %v4277
      %4352 = vst.msk [vmem:[%s4313 + $0x50] sm:$0xff] %vm3493, %v4278
      %4353 = vst.msk [vmem:[%s4313 + $0x68] sm:$0xff] %vm3493, %v4279
      %4354 = vst.msk [vmem:[%s4313 + $0x70] sm:$0xff] %vm3493, %v4280
      %4355 = vst.msk [vmem:[%s4313 + $0x88] sm:$0xff] %vm3493, %v4281
      %4356 = vst.msk [vmem:[%s4313 + $0x90] sm:$0xff] %vm3493, %v4282
      %4357 = vst.msk [vmem:[%s4313 + $0xa8] sm:$0xff] %vm3493, %v4283
      %4358 = vst.msk [vmem:[%s4313 + $0xb0] sm:$0xff] %vm3493, %v4284
      %4359 = vst.msk [vmem:[%s4313 + $0xc8] sm:$0xff] %vm3493, %v4285
      %4360 = vst.msk [vmem:[%s4313 + $0xd0] sm:$0xff] %vm3493, %v4286
      %4361 = vst.msk [vmem:[%s4313 + $0xe8] sm:$0xff] %vm3493, %v4287
      %4362 = vst.msk [vmem:[%s4313 + $0xf0] sm:$0xff] %vm3493, %v4288
      %4363 = vst.msk [vmem:[%s4313 + $0x108] sm:$0xff] %vm3493, %v4289
      %4364 = vst.msk [vmem:[%s4313 + $0x110] sm:$0xff] %vm3493, %v4290
      %4365 = vst.msk [vmem:[%s4313 + $0x128] sm:$0xff] %vm3493, %v4291
      %4366 = vst.msk [vmem:[%s4313 + $0x130] sm:$0xff] %vm3493, %v4292
      %4367 = vst.msk [vmem:[%s4313 + $0x148] sm:$0xff] %vm3493, %v4293
      %4368 = vst.msk [vmem:[%s4313 + $0x150] sm:$0xff] %vm3493, %v4294
      %4369 = vst.msk [vmem:[%s4313 + $0x168] sm:$0xff] %vm3493, %v4295
      %4370 = vst.msk [vmem:[%s4313 + $0x170] sm:$0xff] %vm3493, %v4296
      %4371 = vst.msk [vmem:[%s4313 + $0x188] sm:$0xff] %vm3493, %v4297
      %4372 = vst.msk [vmem:[%s4313 + $0x190] sm:$0xff] %vm3493, %v4298
      %4373 = vst.msk [vmem:[%s4313 + $0x1a8] sm:$0xff] %vm3493, %v4299
      %4374 = vst.msk [vmem:[%s4313 + $0x1b0] sm:$0xff] %vm3493, %v4300
      %4375 = vst.msk [vmem:[%s4313 + $0x1c8] sm:$0xff] %vm3493, %v4301
      %4376 = vst.msk [vmem:[%s4313 + $0x1d0] sm:$0xff] %vm3493, %v4302
      %4377 = vst.msk [vmem:[%s4313 + $0x1e8] sm:$0xff] %vm3493, %v4303
      %4378 = vst.msk [vmem:[%s4313 + $0x1f0] sm:$0xff] %vm3493, %v4304
      %s4379 = scalar_lea.vmem [#allocation3], 7
      %v4380 = vld [vmem:[%s4379] ss:$2 sm:$0xff]
      %s4381 = scalar_lea.vmem [#allocation3], 71
      %v4382 = vld [vmem:[%s4381] ss:$2 sm:$0xff]
      %s4383 = scalar_lea.vmem [#allocation3], 135
      %v4384 = vld [vmem:[%s4383] ss:$2 sm:$0xff]
      %s4385 = scalar_lea.vmem [#allocation3], 199
      %v4386 = vld [vmem:[%s4385] ss:$2 sm:$0xff]
      %s4387 = scalar_lea.vmem [#allocation3], 263
      %v4388 = vld [vmem:[%s4387] ss:$2 sm:$0xff]
      %s4389 = scalar_lea.vmem [#allocation3], 327
      %v4390 = vld [vmem:[%s4389] ss:$2 sm:$0xff]
      %s4391 = scalar_lea.vmem [#allocation3], 391
      %v4392 = vld [vmem:[%s4391] ss:$2 sm:$0xff]
      %s4393 = scalar_lea.vmem [#allocation3], 455
      %v4394 = vld [vmem:[%s4393] ss:$2 sm:$0xff]
      %s4395 = scalar_lea.vmem [#allocation3], 8
      %v4396 = vld [vmem:[%s4395] ss:$2 sm:$0xff]
      %s4397 = scalar_lea.vmem [#allocation3], 72
      %v4398 = vld [vmem:[%s4397] ss:$2 sm:$0xff]
      %s4399 = scalar_lea.vmem [#allocation3], 136
      %v4400 = vld [vmem:[%s4399] ss:$2 sm:$0xff]
      %s4401 = scalar_lea.vmem [#allocation3], 200
      %v4402 = vld [vmem:[%s4401] ss:$2 sm:$0xff]
      %s4403 = scalar_lea.vmem [#allocation3], 264
      %v4404 = vld [vmem:[%s4403] ss:$2 sm:$0xff]
      %s4405 = scalar_lea.vmem [#allocation3], 328
      %v4406 = vld [vmem:[%s4405] ss:$2 sm:$0xff]
      %s4407 = scalar_lea.vmem [#allocation3], 392
      %v4408 = vld [vmem:[%s4407] ss:$2 sm:$0xff]
      %s4409 = scalar_lea.vmem [#allocation3], 456
      %v4410 = vld [vmem:[%s4409] ss:$2 sm:$0xff]
      %s4411 = scalar_lea.vmem [#allocation3], 9
      %v4412 = vld [vmem:[%s4411] ss:$2 sm:$0xff]
      %s4413 = scalar_lea.vmem [#allocation3], 73
      %v4414 = vld [vmem:[%s4413] ss:$2 sm:$0xff]
      %s4415 = scalar_lea.vmem [#allocation3], 137
      %v4416 = vld [vmem:[%s4415] ss:$2 sm:$0xff]
      %s4417 = scalar_lea.vmem [#allocation3], 201
      %v4418 = vld [vmem:[%s4417] ss:$2 sm:$0xff]
      %s4419 = scalar_lea.vmem [#allocation3], 265
      %v4420 = vld [vmem:[%s4419] ss:$2 sm:$0xff]
      %s4421 = scalar_lea.vmem [#allocation3], 329
      %v4422 = vld [vmem:[%s4421] ss:$2 sm:$0xff]
      %s4423 = scalar_lea.vmem [#allocation3], 393
      %v4424 = vld [vmem:[%s4423] ss:$2 sm:$0xff]
      %s4425 = scalar_lea.vmem [#allocation3], 457
      %v4426 = vld [vmem:[%s4425] ss:$2 sm:$0xff]
      %s4427 = scalar_lea.vmem %s4313, 7 [#allocation3]
      %v4428 = vld [vmem:[%s4427] ss:$2 sm:$0xff]
      %s4429 = scalar_lea.vmem %s4313, 71 [#allocation3]
      %v4430 = vld [vmem:[%s4429] ss:$2 sm:$0xff]
      %s4431 = scalar_lea.vmem %s4313, 135 [#allocation3]
      %v4432 = vld [vmem:[%s4431] ss:$2 sm:$0xff]
      %s4433 = scalar_lea.vmem %s4313, 199 [#allocation3]
      %v4434 = vld [vmem:[%s4433] ss:$2 sm:$0xff]
      %s4435 = scalar_lea.vmem %s4313, 263 [#allocation3]
      %v4436 = vld [vmem:[%s4435] ss:$2 sm:$0xff]
      %s4437 = scalar_lea.vmem %s4313, 327 [#allocation3]
      %v4438 = vld [vmem:[%s4437] ss:$2 sm:$0xff]
      %s4439 = scalar_lea.vmem %s4313, 391 [#allocation3]
      %v4440 = vld [vmem:[%s4439] ss:$2 sm:$0xff]
      %s4441 = scalar_lea.vmem %s4313, 455 [#allocation3]
      %v4442 = vld [vmem:[%s4441] ss:$2 sm:$0xff]
      %s4443 = scalar_lea.vmem %s4313, 8 [#allocation3]
      %v4444 = vld [vmem:[%s4443] ss:$2 sm:$0xff]
      %s4445 = scalar_lea.vmem %s4313, 72 [#allocation3]
      %v4446 = vld [vmem:[%s4445] ss:$2 sm:$0xff]
      %s4447 = scalar_lea.vmem %s4313, 136 [#allocation3]
      %v4448 = vld [vmem:[%s4447] ss:$2 sm:$0xff]
      %s4449 = scalar_lea.vmem %s4313, 200 [#allocation3]
      %v4450 = vld [vmem:[%s4449] ss:$2 sm:$0xff]
      %s4451 = scalar_lea.vmem %s4313, 264 [#allocation3]
      %v4452 = vld [vmem:[%s4451] ss:$2 sm:$0xff]
      %s4453 = scalar_lea.vmem %s4313, 328 [#allocation3]
      %v4454 = vld [vmem:[%s4453] ss:$2 sm:$0xff]
      %s4455 = scalar_lea.vmem %s4313, 392 [#allocation3]
      %v4456 = vld [vmem:[%s4455] ss:$2 sm:$0xff]
      %s4457 = scalar_lea.vmem %s4313, 456 [#allocation3]
      %v4458 = vld [vmem:[%s4457] ss:$2 sm:$0xff]
      %s4459 = scalar_lea.vmem %s4313, 9 [#allocation3]
      %v4460 = vld [vmem:[%s4459] ss:$2 sm:$0xff]
      %s4461 = scalar_lea.vmem %s4313, 73 [#allocation3]
      %v4462 = vld [vmem:[%s4461] ss:$2 sm:$0xff]
      %s4463 = scalar_lea.vmem %s4313, 137 [#allocation3]
      %v4464 = vld [vmem:[%s4463] ss:$2 sm:$0xff]
      %s4465 = scalar_lea.vmem %s4313, 201 [#allocation3]
      %v4466 = vld [vmem:[%s4465] ss:$2 sm:$0xff]
      %s4467 = scalar_lea.vmem %s4313, 265 [#allocation3]
      %v4468 = vld [vmem:[%s4467] ss:$2 sm:$0xff]
      %s4469 = scalar_lea.vmem %s4313, 329 [#allocation3]
      %v4470 = vld [vmem:[%s4469] ss:$2 sm:$0xff]
      %s4471 = scalar_lea.vmem %s4313, 393 [#allocation3]
      %v4472 = vld [vmem:[%s4471] ss:$2 sm:$0xff]
      %s4473 = scalar_lea.vmem %s4313, 457 [#allocation3]
      %v4474 = vld [vmem:[%s4473] ss:$2 sm:$0xff]
      %s4475 = scalar_lea.vmem [#allocation3], 64
      %s4476 = scalar_lea.vmem %s4475, 7 [#allocation3]
      %v4477 = vld [vmem:[%s4476] ss:$2 sm:$0xff]
      %s4478 = scalar_lea.vmem %s4475, 71 [#allocation3]
      %v4479 = vld [vmem:[%s4478] ss:$2 sm:$0xff]
      %s4480 = scalar_lea.vmem %s4475, 135 [#allocation3]
      %v4481 = vld [vmem:[%s4480] ss:$2 sm:$0xff]
      %s4482 = scalar_lea.vmem %s4475, 199 [#allocation3]
      %v4483 = vld [vmem:[%s4482] ss:$2 sm:$0xff]
      %s4484 = scalar_lea.vmem %s4475, 263 [#allocation3]
      %v4485 = vld [vmem:[%s4484] ss:$2 sm:$0xff]
      %s4486 = scalar_lea.vmem %s4475, 327 [#allocation3]
      %v4487 = vld [vmem:[%s4486] ss:$2 sm:$0xff]
      %s4488 = scalar_lea.vmem %s4475, 391 [#allocation3]
      %v4489 = vld [vmem:[%s4488] ss:$2 sm:$0xff]
      %s4490 = scalar_lea.vmem %s4475, 455 [#allocation3]
      %v4491 = vld [vmem:[%s4490] ss:$2 sm:$0xff]
      %s4492 = scalar_lea.vmem %s4475, 8 [#allocation3]
      %v4493 = vld [vmem:[%s4492] ss:$2 sm:$0xff]
      %s4494 = scalar_lea.vmem %s4475, 72 [#allocation3]
      %v4495 = vld [vmem:[%s4494] ss:$2 sm:$0xff]
      %s4496 = scalar_lea.vmem %s4475, 136 [#allocation3]
      %v4497 = vld [vmem:[%s4496] ss:$2 sm:$0xff]
      %s4498 = scalar_lea.vmem %s4475, 200 [#allocation3]
      %v4499 = vld [vmem:[%s4498] ss:$2 sm:$0xff]
      %s4500 = scalar_lea.vmem %s4475, 264 [#allocation3]
      %v4501 = vld [vmem:[%s4500] ss:$2 sm:$0xff]
      %s4502 = scalar_lea.vmem %s4475, 328 [#allocation3]
      %v4503 = vld [vmem:[%s4502] ss:$2 sm:$0xff]
      %s4504 = scalar_lea.vmem %s4475, 392 [#allocation3]
      %v4505 = vld [vmem:[%s4504] ss:$2 sm:$0xff]
      %s4506 = scalar_lea.vmem %s4475, 456 [#allocation3]
      %v4507 = vld [vmem:[%s4506] ss:$2 sm:$0xff]
      %s4508 = scalar_lea.vmem %s4475, 9 [#allocation3]
      %v4509 = vld [vmem:[%s4508] ss:$2 sm:$0xff]
      %s4510 = scalar_lea.vmem %s4475, 73 [#allocation3]
      %v4511 = vld [vmem:[%s4510] ss:$2 sm:$0xff]
      %s4512 = scalar_lea.vmem %s4475, 137 [#allocation3]
      %v4513 = vld [vmem:[%s4512] ss:$2 sm:$0xff]
      %s4514 = scalar_lea.vmem %s4475, 201 [#allocation3]
      %v4515 = vld [vmem:[%s4514] ss:$2 sm:$0xff]
      %s4516 = scalar_lea.vmem %s4475, 265 [#allocation3]
      %v4517 = vld [vmem:[%s4516] ss:$2 sm:$0xff]
      %s4518 = scalar_lea.vmem %s4475, 329 [#allocation3]
      %v4519 = vld [vmem:[%s4518] ss:$2 sm:$0xff]
      %s4520 = scalar_lea.vmem %s4475, 393 [#allocation3]
      %v4521 = vld [vmem:[%s4520] ss:$2 sm:$0xff]
      %s4522 = scalar_lea.vmem %s4475, 457 [#allocation3]
      %v4523 = vld [vmem:[%s4522] ss:$2 sm:$0xff]
      %4532 = vrot.lane.b32.xlu0 %v4396, 32
      %v4533 = vpop.permute.xlu0 %4532
      %4534 = vrot.lane.b32.xlu0 %v4398, 32
      %v4535 = vpop.permute.xlu0 %4534
      %4536 = vrot.lane.b32.xlu0 %v4400, 32
      %v4537 = vpop.permute.xlu0 %4536
      %4538 = vrot.lane.b32.xlu0 %v4402, 32
      %v4539 = vpop.permute.xlu0 %4538
      %4540 = vrot.lane.b32.xlu0 %v4404, 32
      %v4541 = vpop.permute.xlu0 %4540
      %4542 = vrot.lane.b32.xlu0 %v4406, 32
      %v4543 = vpop.permute.xlu0 %4542
      %4544 = vrot.lane.b32.xlu0 %v4408, 32
      %v4545 = vpop.permute.xlu0 %4544
      %4546 = vrot.lane.b32.xlu0 %v4410, 32
      %v4547 = vpop.permute.xlu0 %4546
      %4564 = vrot.lane.b32.xlu0 %v4412, 64
      %v4565 = vpop.permute.xlu0 %4564
      %4566 = vrot.lane.b32.xlu0 %v4414, 64
      %v4567 = vpop.permute.xlu0 %4566
      %4568 = vrot.lane.b32.xlu0 %v4416, 64
      %v4569 = vpop.permute.xlu0 %4568
      %4570 = vrot.lane.b32.xlu0 %v4418, 64
      %v4571 = vpop.permute.xlu0 %4570
      %4572 = vrot.lane.b32.xlu0 %v4420, 64
      %v4573 = vpop.permute.xlu0 %4572
      %4574 = vrot.lane.b32.xlu0 %v4422, 64
      %v4575 = vpop.permute.xlu0 %4574
      %4576 = vrot.lane.b32.xlu0 %v4424, 64
      %v4577 = vpop.permute.xlu0 %4576
      %4578 = vrot.lane.b32.xlu0 %v4426, 64
      %v4579 = vpop.permute.xlu0 %4578
      %4596 = vrot.lane.b32.xlu0 %v4428, 96
      %v4597 = vpop.permute.xlu0 %4596
      %4598 = vrot.lane.b32.xlu0 %v4430, 96
      %v4599 = vpop.permute.xlu0 %4598
      %4600 = vrot.lane.b32.xlu0 %v4432, 96
      %v4601 = vpop.permute.xlu0 %4600
      %4602 = vrot.lane.b32.xlu0 %v4434, 96
      %v4603 = vpop.permute.xlu0 %4602
      %4604 = vrot.lane.b32.xlu0 %v4436, 96
      %v4605 = vpop.permute.xlu0 %4604
      %4606 = vrot.lane.b32.xlu0 %v4438, 96
      %v4607 = vpop.permute.xlu0 %4606
      %4608 = vrot.lane.b32.xlu0 %v4440, 96
      %v4609 = vpop.permute.xlu0 %4608
      %4610 = vrot.lane.b32.xlu0 %v4442, 96
      %v4611 = vpop.permute.xlu0 %4610
      %4628 = vrot.lane.b32.xlu0 %v4460, 32
      %v4629 = vpop.permute.xlu0 %4628
      %4630 = vrot.lane.b32.xlu0 %v4462, 32
      %v4631 = vpop.permute.xlu0 %4630
      %4632 = vrot.lane.b32.xlu0 %v4464, 32
      %v4633 = vpop.permute.xlu0 %4632
      %4634 = vrot.lane.b32.xlu0 %v4466, 32
      %v4635 = vpop.permute.xlu0 %4634
      %4636 = vrot.lane.b32.xlu0 %v4468, 32
      %v4637 = vpop.permute.xlu0 %4636
      %4638 = vrot.lane.b32.xlu0 %v4470, 32
      %v4639 = vpop.permute.xlu0 %4638
      %4640 = vrot.lane.b32.xlu0 %v4472, 32
      %v4641 = vpop.permute.xlu0 %4640
      %4642 = vrot.lane.b32.xlu0 %v4474, 32
      %v4643 = vpop.permute.xlu0 %4642
      %4660 = vrot.lane.b32.xlu0 %v4477, 64
      %v4661 = vpop.permute.xlu0 %4660
      %4662 = vrot.lane.b32.xlu0 %v4479, 64
      %v4663 = vpop.permute.xlu0 %4662
      %4664 = vrot.lane.b32.xlu0 %v4481, 64
      %v4665 = vpop.permute.xlu0 %4664
      %4666 = vrot.lane.b32.xlu0 %v4483, 64
      %v4667 = vpop.permute.xlu0 %4666
      %4668 = vrot.lane.b32.xlu0 %v4485, 64
      %v4669 = vpop.permute.xlu0 %4668
      %4670 = vrot.lane.b32.xlu0 %v4487, 64
      %v4671 = vpop.permute.xlu0 %4670
      %4672 = vrot.lane.b32.xlu0 %v4489, 64
      %v4673 = vpop.permute.xlu0 %4672
      %4674 = vrot.lane.b32.xlu0 %v4491, 64
      %v4675 = vpop.permute.xlu0 %4674
      %4692 = vrot.lane.b32.xlu0 %v4493, 96
      %v4693 = vpop.permute.xlu0 %4692
      %4694 = vrot.lane.b32.xlu0 %v4495, 96
      %v4695 = vpop.permute.xlu0 %4694
      %4696 = vrot.lane.b32.xlu0 %v4497, 96
      %v4697 = vpop.permute.xlu0 %4696
      %4698 = vrot.lane.b32.xlu0 %v4499, 96
      %v4699 = vpop.permute.xlu0 %4698
      %4700 = vrot.lane.b32.xlu0 %v4501, 96
      %v4701 = vpop.permute.xlu0 %4700
      %4702 = vrot.lane.b32.xlu0 %v4503, 96
      %v4703 = vpop.permute.xlu0 %4702
      %4704 = vrot.lane.b32.xlu0 %v4505, 96
      %v4705 = vpop.permute.xlu0 %4704
      %4706 = vrot.lane.b32.xlu0 %v4507, 96
      %v4707 = vpop.permute.xlu0 %4706
      %v4716 = vsel %vm3493, %v4380, %v4533
      %v4717 = vsel %vm3493, %v4382, %v4535
      %v4718 = vsel %vm3493, %v4384, %v4537
      %v4719 = vsel %vm3493, %v4386, %v4539
      %v4720 = vsel %vm3493, %v4388, %v4541
      %v4721 = vsel %vm3493, %v4390, %v4543
      %v4722 = vsel %vm3493, %v4392, %v4545
      %v4723 = vsel %vm3493, %v4394, %v4547
      %v4724 = vsel %vm3542, %v4716, %v4565
      %v4725 = vsel %vm3542, %v4717, %v4567
      %v4726 = vsel %vm3542, %v4718, %v4569
      %v4727 = vsel %vm3542, %v4719, %v4571
      %v4728 = vsel %vm3542, %v4720, %v4573
      %v4729 = vsel %vm3542, %v4721, %v4575
      %v4730 = vsel %vm3542, %v4722, %v4577
      %v4731 = vsel %vm3542, %v4723, %v4579
      %v4732 = vsel %vm3575, %v4724, %v4597
      %v4733 = vsel %vm3575, %v4725, %v4599
      %v4734 = vsel %vm3575, %v4726, %v4601
      %v4735 = vsel %vm3575, %v4727, %v4603
      %v4736 = vsel %vm3575, %v4728, %v4605
      %v4737 = vsel %vm3575, %v4729, %v4607
      %v4738 = vsel %vm3575, %v4730, %v4609
      %v4739 = vsel %vm3575, %v4731, %v4611
      %v4740 = vsel %vm3493, %v4444, %v4629
      %v4741 = vsel %vm3493, %v4446, %v4631
      %v4742 = vsel %vm3493, %v4448, %v4633
      %v4743 = vsel %vm3493, %v4450, %v4635
      %v4744 = vsel %vm3493, %v4452, %v4637
      %v4745 = vsel %vm3493, %v4454, %v4639
      %v4746 = vsel %vm3493, %v4456, %v4641
      %v4747 = vsel %vm3493, %v4458, %v4643
      %v4748 = vsel %vm3542, %v4740, %v4661
      %v4749 = vsel %vm3542, %v4741, %v4663
      %v4750 = vsel %vm3542, %v4742, %v4665
      %v4751 = vsel %vm3542, %v4743, %v4667
      %v4752 = vsel %vm3542, %v4744, %v4669
      %v4753 = vsel %vm3542, %v4745, %v4671
      %v4754 = vsel %vm3542, %v4746, %v4673
      %v4755 = vsel %vm3542, %v4747, %v4675
      %v4756 = vsel %vm3575, %v4748, %v4693
      %v4757 = vsel %vm3575, %v4749, %v4695
      %v4758 = vsel %vm3575, %v4750, %v4697
      %v4759 = vsel %vm3575, %v4751, %v4699
      %v4760 = vsel %vm3575, %v4752, %v4701
      %v4761 = vsel %vm3575, %v4753, %v4703
      %v4762 = vsel %vm3575, %v4754, %v4705
      %v4763 = vsel %vm3575, %v4755, %v4707
      %v4764 = vpack.c.bf16 %v4733, %v4732
      %v4765 = vpack.c.bf16 %v4757, %v4756
      %v4766 = vpack.c.bf16 %v4511, %v4509
      %v4767 = vpack.c.bf16 %v4735, %v4734
      %v4768 = vpack.c.bf16 %v4759, %v4758
      %v4769 = vpack.c.bf16 %v4515, %v4513
      %v4770 = vpack.c.bf16 %v4737, %v4736
      %v4771 = vpack.c.bf16 %v4761, %v4760
      %v4772 = vpack.c.bf16 %v4519, %v4517
      %v4773 = vpack.c.bf16 %v4739, %v4738
      %v4774 = vpack.c.bf16 %v4763, %v4762
      %v4775 = vpack.c.bf16 %v4523, %v4521
      %v4776 = vld [vmem:[%s5] sm:$0xf]
      %v4777 = vld [vmem:[%s5 + $0x4] sm:$0xf]
      %v4778 = vld [vmem:[%s5 + $0x8] sm:$0xf]
      %v4779 = vld [vmem:[%s5 + $0xc] sm:$0xf]
      %v4780 = vld [vmem:[%s5 + $0x10] sm:$0xf]
      %v4781 = vld [vmem:[%s5 + $0x14] sm:$0xf]
      %v4782 = vld [vmem:[%s5 + $0x18] sm:$0xf]
      %v4783 = vld [vmem:[%s5 + $0x1c] sm:$0xf]
      %v4784 = vld [vmem:[%s5 + $0x20] sm:$0xf]
      %v4785 = vld [vmem:[%s5 + $0x24] sm:$0xf]
      %v4786 = vld [vmem:[%s5 + $0x28] sm:$0xf]
      %v4787 = vld [vmem:[%s5 + $0x2c] sm:$0xf]
      %v4788 = vld [vmem:[%s5 + $0x30] sm:$0xf]
      %v4789 = vld [vmem:[%s5 + $0x34] sm:$0xf]
      %v4790 = vld [vmem:[%s5 + $0x38] sm:$0xf]
      %v4791 = vld [vmem:[%s5 + $0x3c] sm:$0xf]
      %v4792 = vld [vmem:[%s5 + $0x40] sm:$0xf]
      %v4793 = vld [vmem:[%s5 + $0x44] sm:$0xf]
      %v4794 = vld [vmem:[%s5 + $0x48] sm:$0xf]
      %v4795 = vld [vmem:[%s5 + $0x4c] sm:$0xf]
      %v4796 = vld [vmem:[%s5 + $0x50] sm:$0xf]
      %v4797 = vld [vmem:[%s5 + $0x54] sm:$0xf]
      %v4798 = vld [vmem:[%s5 + $0x58] sm:$0xf]
      %v4799 = vld [vmem:[%s5 + $0x5c] sm:$0xf]
      %v4800 = vld [vmem:[%s5 + $0x60] sm:$0xf]
      %v4801 = vld [vmem:[%s5 + $0x64] sm:$0xf]
      %v4802 = vld [vmem:[%s5 + $0x68] sm:$0xf]
      %v4803 = vld [vmem:[%s5 + $0x6c] sm:$0xf]
      %v4804 = vld [vmem:[%s5 + $0x70] sm:$0xf]
      %v4805 = vld [vmem:[%s5 + $0x74] sm:$0xf]
      %v4806 = vld [vmem:[%s5 + $0x78] sm:$0xf]
      %v4807 = vld [vmem:[%s5 + $0x7c] sm:$0xf]
      %v4808 = vld [vmem:[%s5 + $0x80] sm:$0xf]
      %v4809 = vld [vmem:[%s5 + $0x84] sm:$0xf]
      %v4810 = vld [vmem:[%s5 + $0x88] sm:$0xf]
      %v4811 = vld [vmem:[%s5 + $0x8c] sm:$0xf]
      %v4812 = vld [vmem:[%s6] sm:$0x1]
      %v4814 = vlaneseq
      %v4815 = vshrl.u32 %v4814, 7
      %v4816 = vsub.s32 0, %v4815
      %v4817 = vrot.slane %v4812, %v4816
      %v4855 = vunpack.c.l.b16 %v4776
      %v4856 = vunpack.c.l.b16 %v4777
      %v4857 = vunpack.c.l.b16 %v4778
      %v4858 = vunpack.c.l.b16 %v4779
      %v4859 = vunpack.c.l.b16 %v4780
      %v4860 = vunpack.c.l.b16 %v4781
      %v4861 = vunpack.c.l.b16 %v4782
      %v4862 = vunpack.c.l.b16 %v4783
      %v4863 = vunpack.c.l.b16 %v4784
      %v4864 = vunpack.c.l.b16 %v4785
      %v4865 = vunpack.c.l.b16 %v4786
      %v4866 = vunpack.c.l.b16 %v4787
      %v4867 = vunpack.c.l.b16 %v4788
      %v4868 = vunpack.c.l.b16 %v4789
      %v4869 = vunpack.c.l.b16 %v4790
      %v4870 = vunpack.c.l.b16 %v4791
      %v4871 = vunpack.c.l.b16 %v4792
      %v4872 = vunpack.c.l.b16 %v4793
      %v4873 = vunpack.c.l.b16 %v4794
      %v4874 = vunpack.c.l.b16 %v4795
      %v4875 = vunpack.c.l.b16 %v4796
      %v4876 = vunpack.c.l.b16 %v4797
      %v4877 = vunpack.c.l.b16 %v4798
      %v4878 = vunpack.c.l.b16 %v4799
      %v4879 = vunpack.c.l.b16 %v4800
      %v4880 = vunpack.c.l.b16 %v4801
      %v4881 = vunpack.c.l.b16 %v4802
      %v4882 = vunpack.c.l.b16 %v4803
      %v4883 = vunpack.c.l.b16 %v4804
      %v4884 = vunpack.c.l.b16 %v4805
      %v4885 = vunpack.c.l.b16 %v4806
      %v4886 = vunpack.c.l.b16 %v4807
      %v4887 = vunpack.c.l.b16 %v4808
      %v4888 = vunpack.c.l.b16 %v4809
      %v4889 = vunpack.c.l.b16 %v4810
      %v4890 = vunpack.c.l.b16 %v4811
      %v4891 = vpack.c.b16 %v4856, %v4855
      %v4892 = vpack.c.b16 %v4858, %v4857
      %v4893 = vpack.c.b16 %v4860, %v4859
      %v4894 = vpack.c.b16 %v4862, %v4861
      %v4895 = vpack.c.b16 %v4864, %v4863
      %v4896 = vpack.c.b16 %v4866, %v4865
      %v4897 = vpack.c.b16 %v4868, %v4867
      %v4898 = vpack.c.b16 %v4870, %v4869
      %v4899 = vpack.c.b16 %v4872, %v4871
      %v4900 = vpack.c.b16 %v4874, %v4873
      %v4901 = vpack.c.b16 %v4876, %v4875
      %v4902 = vpack.c.b16 %v4878, %v4877
      %v4903 = vpack.c.b16 %v4880, %v4879
      %v4904 = vpack.c.b16 %v4882, %v4881
      %v4905 = vpack.c.b16 %v4884, %v4883
      %v4906 = vpack.c.b16 %v4886, %v4885
      %v4907 = vpack.c.b16 %v4888, %v4887
      %v4908 = vpack.c.b16 %v4890, %v4889
      %v4928 = vsel %vm3493, %v4766, 0
      %v4931 = vsel %vm3493, %v4769, 0
      %v4934 = vsel %vm3493, %v4772, 0
      %v4937 = vsel %vm3493, %v4775, 0
      %4939 = vmatprep.subr.bf16.mxu0 0
      %4940 = vmatpush1.bf16.msra.mxu0 %v4891
      %4941 = vmatprep.subr.bf16.mxu0 0
      %4942 = vmatpush1.bf16.msra.mxu0 %v4892
      %4943 = vmatprep.subr.bf16.mxu0 0
      %4944 = vmatpush1.bf16.msra.mxu0 %v4893
      %4945 = vmatprep.subr.bf16.mxu0 0
      %4946 = vmatpush1.bf16.msra.mxu0 %v4894
      %4947 = vmatprep.subr.bf16.mxu0 0
      %4948 = vmatpush1.bf16.msra.mxu0 %v4895
      %4949 = vmatprep.subr.bf16.mxu0 0
      %4950 = vmatpush1.bf16.msra.mxu0 %v4896
      %4951 = vmatprep.subr.bf16.mxu0 0
      %4952 = vmatpush1.bf16.msra.mxu0 %v4897
      %4953 = vmatprep.subr.bf16.mxu0 0
      %4954 = vmatpush1.bf16.msra.mxu0 %v4898
      %4955 = vmatprep.subr.bf16.mxu0 0
      %4956 = vmatpush1.bf16.msra.mxu0 %v4899
      %4957 = vmatprep.subr.bf16.mxu0 0
      %4958 = vmatpush1.bf16.msra.mxu0 %v4900
      %4959 = vmatprep.subr.bf16.mxu0 0
      %4960 = vmatpush1.bf16.msra.mxu0 %v4901
      %4961 = vmatprep.subr.bf16.mxu0 0
      %4962 = vmatpush1.bf16.msra.mxu0 %v4902
      %4963 = vmatprep.subr.bf16.mxu0 0
      %4964 = vmatpush1.bf16.msra.mxu0 %v4903
      %4965 = vmatprep.subr.bf16.mxu0 0
      %4966 = vmatpush1.bf16.msra.mxu0 %v4904
      %4967 = vmatprep.subr.bf16.mxu0 0
      %4968 = vmatpush1.bf16.msra.mxu0 %v4905
      %4969 = vmatprep.subr.bf16.mxu0 0
      %4970 = vmatpush1.bf16.msra.mxu0 %v4906
      %4971 = vmatprep.mubr.bf16.mxu0 %v4765
      %4972 = vmatmul.mubr.bf16.gmra.mrb[0].mxu0 %v4764
      %v4973 = vpop.f32.mrb[0].mxu0
      %v4974 = vadd.f32 %v4817, %v4973
      %v4975 = vpop.f32.mrb[0].mxu0
      %v4976 = vpop.f32.mrb[0].mxu0
      %v4977 = vadd.f32 %v4817, %v4976
      %v4978 = vpop.f32.mrb[0].mxu0
      %4979 = vmatprep.mubr.bf16.mxu0 %v4768
      %4980 = vmatmul.mubr.bf16.gmra.mrb[0].mxu0 %v4767
      %v4981 = vpop.f32.mrb[0].mxu0
      %v4982 = vadd.f32 %v4817, %v4981
      %v4983 = vpop.f32.mrb[0].mxu0
      %v4984 = vpop.f32.mrb[0].mxu0
      %v4985 = vadd.f32 %v4817, %v4984
      %v4986 = vpop.f32.mrb[0].mxu0
      %4987 = vmatprep.mubr.bf16.mxu0 %v4771
      %4988 = vmatmul.mubr.bf16.gmra.mrb[0].mxu0 %v4770
      %v4989 = vpop.f32.mrb[0].mxu0
      %v4990 = vadd.f32 %v4817, %v4989
      %v4991 = vpop.f32.mrb[0].mxu0
      %v4992 = vpop.f32.mrb[0].mxu0
      %v4993 = vadd.f32 %v4817, %v4992
      %v4994 = vpop.f32.mrb[0].mxu0
      %4995 = vmatprep.mubr.bf16.mxu0 %v4774
      %4996 = vmatmul.mubr.bf16.gmra.mrb[0].mxu0 %v4773
      %v4997 = vpop.f32.mrb[0].mxu0
      %v4998 = vadd.f32 %v4817, %v4997
      %v4999 = vpop.f32.mrb[0].mxu0
      %v5000 = vpop.f32.mrb[0].mxu0
      %v5001 = vadd.f32 %v4817, %v5000
      %v5002 = vpop.f32.mrb[0].mxu0
      %5003 = vdwg.mxu0
      %5004 = vmatprep.subr.bf16.mxu0 0
      %5005 = vmatpush1.bf16.msra.mxu0 %v4907
      %5006 = vmatprep.subr.bf16.mxu0 0
      %5007 = vmatpush1.bf16.msra.mxu0 %v4908
      %5008 = vmatprep.subr.bf16.mxu0 0
      %5009 = vmatpush1.bf16.msra.mxu0 0
      %5010 = vmatprep.subr.bf16.mxu0 0
      %5011 = vmatpush1.bf16.msra.mxu0 0
      %5012 = vmatprep.subr.bf16.mxu0 0
      %5013 = vmatpush1.bf16.msra.mxu0 0
      %5014 = vmatprep.subr.bf16.mxu0 0
      %5015 = vmatpush1.bf16.msra.mxu0 0
      %5016 = vmatprep.subr.bf16.mxu0 0
      %5017 = vmatpush1.bf16.msra.mxu0 0
      %5018 = vmatprep.subr.bf16.mxu0 0
      %5019 = vmatpush1.bf16.msra.mxu0 0
      %5020 = vmatprep.subr.bf16.mxu0 0
      %5021 = vmatpush1.bf16.msra.mxu0 0
      %5022 = vmatprep.subr.bf16.mxu0 0
      %5023 = vmatpush1.bf16.msra.mxu0 0
      %5024 = vmatprep.subr.bf16.mxu0 0
      %5025 = vmatpush1.bf16.msra.mxu0 0
      %5026 = vmatprep.subr.bf16.mxu0 0
      %5027 = vmatpush1.bf16.msra.mxu0 0
      %5028 = vmatprep.subr.bf16.mxu0 0
      %5029 = vmatpush1.bf16.msra.mxu0 0
      %5030 = vmatprep.subr.bf16.mxu0 0
      %5031 = vmatpush1.bf16.msra.mxu0 0
      %5032 = vmatprep.subr.bf16.mxu0 0
      %5033 = vmatpush1.bf16.msra.mxu0 0
      %5034 = vmatprep.subr.bf16.mxu0 0
      %5035 = vmatpush1.bf16.msra.mxu0 0
      %5036 = vmatprep.mubr.bf16.mxu0 0
      %5037 = vmatmul.mubr.bf16.gmra.mrb[0].mxu0 %v4928
      %v5038 = vpop.f32.mrb[0].mxu0
      %v5039 = vadd.f32 %v4974, %v5038
      %v5040 = vpop.f32.mrb[0].mxu0
      %v5041 = vpop.f32.mrb[0].mxu0
      %v5042 = vadd.f32 %v4977, %v5041
      %v5043 = vpop.f32.mrb[0].mxu0
      %5044 = vmatprep.mubr.bf16.mxu0 0
      %5045 = vmatmul.mubr.bf16.gmra.mrb[0].mxu0 %v4931
      %v5046 = vpop.f32.mrb[0].mxu0
      %v5047 = vadd.f32 %v4982, %v5046
      %v5048 = vpop.f32.mrb[0].mxu0
      %v5049 = vpop.f32.mrb[0].mxu0
      %v5050 = vadd.f32 %v4985, %v5049
      %v5051 = vpop.f32.mrb[0].mxu0
      %5052 = vmatprep.mubr.bf16.mxu0 0
      %5053 = vmatmul.mubr.bf16.gmra.mrb[0].mxu0 %v4934
      %v5054 = vpop.f32.mrb[0].mxu0
      %v5055 = vadd.f32 %v4990, %v5054
      %v5056 = vpop.f32.mrb[0].mxu0
      %v5057 = vpop.f32.mrb[0].mxu0
      %v5058 = vadd.f32 %v4993, %v5057
      %v5059 = vpop.f32.mrb[0].mxu0
      %5060 = vmatprep.mubr.bf16.mxu0 0
      %5061 = vmatmul.mubr.bf16.gmra.mrb[0].mxu0 %v4937
      %v5062 = vpop.f32.mrb[0].mxu0
      %v5063 = vadd.f32 %v4998, %v5062
      %v5064 = vpop.f32.mrb[0].mxu0
      %v5065 = vpop.f32.mrb[0].mxu0
      %v5066 = vadd.f32 %v5001, %v5065
      %v5067 = vpop.f32.mrb[0].mxu0
      %5068 = vdwg.mxu0
      %v5069 = vmax.f32 %v5039, 0.0
      %v5070 = vmax.f32 %v5042, 0.0
      %v5071 = vmax.f32 %v5047, 0.0
      %v5072 = vmax.f32 %v5050, 0.0
      %v5073 = vmax.f32 %v5055, 0.0
      %v5074 = vmax.f32 %v5058, 0.0
      %v5075 = vmax.f32 %v5063, 0.0
      %v5076 = vmax.f32 %v5066, 0.0
      %vm5077 = vcmask 523267
      %vm5078 = vmand %vm5077, %vm1017
      %v5079 = vld [vmem:[#allocation2] sm:$0xf8]
      %v5080 = vsel %vm5078, 0, %v5079
      %5081 = vst [vmem:[#allocation2] sm:$0xf8] %v5080
      %vm5082 = vcmask 516096
      %vm5083 = vsmask.f32 256
      %vm5084 = vmand %vm5082, %vm5083
      %v5085 = vld [vmem:[#allocation2 + $0x8] sm:$0x1]
      %v5086 = vsel %vm5084, 0, %v5085
      %5087 = vst [vmem:[#allocation2 + $0x8] sm:$0x1] %v5086
      %s5088 = scalar_lea.vmem [#allocation2], 144
      %v5089 = vld [vmem:[%s5088] sm:$0xf8]
      %v5090 = vsel %vm5078, 0, %v5089
      %5091 = vst [vmem:[%s5088] sm:$0xf8] %v5090
      %v5092 = vld [vmem:[%s5088 + $0x8] sm:$0x1]
      %v5093 = vsel %vm5084, 0, %v5092
      %5094 = vst [vmem:[%s5088 + $0x8] sm:$0x1] %v5093
      %vm5095 = vcmask 519171
      %vm5096 = vmand %vm5095, %vm1017
      %v5097 = vld [vmem:[%s1035] sm:$0x8]
      %v5098 = vsel %vm5096, 0, %v5097
      %5099 = vst [vmem:[%s1035] sm:$0x8] %v5098
      %v5100 = vld [vmem:[%s1035 + $0x10] sm:$0x8]
      %v5101 = vsel %vm5096, 0, %v5100
      %5102 = vst [vmem:[%s1035 + $0x10] sm:$0x8] %v5101
      %v5103 = vld [vmem:[%s1035 + $0x20] sm:$0x8]
      %v5104 = vsel %vm5096, 0, %v5103
      %5105 = vst [vmem:[%s1035 + $0x20] sm:$0x8] %v5104
      %v5106 = vld [vmem:[%s1035 + $0x30] sm:$0x8]
      %v5107 = vsel %vm5096, 0, %v5106
      %5108 = vst [vmem:[%s1035 + $0x30] sm:$0x8] %v5107
      %v5109 = vld [vmem:[%s1035 + $0x40] sm:$0x8]
      %v5110 = vsel %vm5096, 0, %v5109
      %5111 = vst [vmem:[%s1035 + $0x40] sm:$0x8] %v5110
      %v5112 = vld [vmem:[%s1035 + $0x50] sm:$0x8]
      %v5113 = vsel %vm5096, 0, %v5112
      %5114 = vst [vmem:[%s1035 + $0x50] sm:$0x8] %v5113
      %v5115 = vld [vmem:[%s1035 + $0x60] sm:$0x8]
      %v5116 = vsel %vm5096, 0, %v5115
      %5117 = vst [vmem:[%s1035 + $0x60] sm:$0x8] %v5116
      %v5118 = vld [vmem:[%s1035 + $0x70] sm:$0x8]
      %v5119 = vsel %vm5096, 0, %v5118
      %5120 = vst [vmem:[%s1035 + $0x70] sm:$0x8] %v5119
      %v5121 = vld [vmem:[%s1035 + $0x8] sm:$0x1]
      %v5122 = vsel %vm5084, 0, %v5121
      %5123 = vst [vmem:[%s1035 + $0x8] sm:$0x1] %v5122
      %v5124 = vld [vmem:[%s1035 + $0x18] sm:$0x1]
      %v5125 = vsel %vm5084, 0, %v5124
      %5126 = vst [vmem:[%s1035 + $0x18] sm:$0x1] %v5125
      %v5127 = vld [vmem:[%s1035 + $0x28] sm:$0x1]
      %v5128 = vsel %vm5084, 0, %v5127
      %5129 = vst [vmem:[%s1035 + $0x28] sm:$0x1] %v5128
      %v5130 = vld [vmem:[%s1035 + $0x38] sm:$0x1]
      %v5131 = vsel %vm5084, 0, %v5130
      %5132 = vst [vmem:[%s1035 + $0x38] sm:$0x1] %v5131
      %v5133 = vld [vmem:[%s1035 + $0x48] sm:$0x1]
      %v5134 = vsel %vm5084, 0, %v5133
      %5135 = vst [vmem:[%s1035 + $0x48] sm:$0x1] %v5134
      %v5136 = vld [vmem:[%s1035 + $0x58] sm:$0x1]
      %v5137 = vsel %vm5084, 0, %v5136
      %5138 = vst [vmem:[%s1035 + $0x58] sm:$0x1] %v5137
      %v5139 = vld [vmem:[%s1035 + $0x68] sm:$0x1]
      %v5140 = vsel %vm5084, 0, %v5139
      %5141 = vst [vmem:[%s1035 + $0x68] sm:$0x1] %v5140
      %v5142 = vld [vmem:[%s1035 + $0x78] sm:$0x1]
      %v5143 = vsel %vm5084, 0, %v5142
      %5144 = vst [vmem:[%s1035 + $0x78] sm:$0x1] %v5143
      %v5145 = vpack.c.bf16 %v5069, %v5069
      %v5146 = vpack.c.bf16 %v5070, %v5070
      %v5147 = vpack.c.bf16 %v5071, %v5071
      %v5148 = vpack.c.bf16 %v5072, %v5072
      %v5149 = vpack.c.bf16 %v5073, %v5073
      %v5150 = vpack.c.bf16 %v5074, %v5074
      %v5151 = vpack.c.bf16 %v5075, %v5075
      %v5152 = vpack.c.bf16 %v5076, %v5076
      %v5161 = vrot.slane %v5145, 4
      %v5162 = vrot.slane %v5146, 4
      %v5163 = vrot.slane %v5147, 4
      %v5164 = vrot.slane %v5148, 4
      %v5165 = vrot.slane %v5149, 4
      %v5166 = vrot.slane %v5150, 4
      %v5167 = vrot.slane %v5151, 4
      %v5168 = vrot.slane %v5152, 4
      %vm5177 = vcmask 523268
      %5178 = vst.msk [vmem:[%s1035] sm:$0xf0] %vm5177, %v5161
      %5179 = vst.msk [vmem:[%s1035 + $0x10] sm:$0xf0] %vm5177, %v5162
      %5180 = vst.msk [vmem:[%s1035 + $0x20] sm:$0xf0] %vm5177, %v5163
      %5181 = vst.msk [vmem:[%s1035 + $0x30] sm:$0xf0] %vm5177, %v5164
      %5182 = vst.msk [vmem:[%s1035 + $0x40] sm:$0xf0] %vm5177, %v5165
      %5183 = vst.msk [vmem:[%s1035 + $0x50] sm:$0xf0] %vm5177, %v5166
      %5184 = vst.msk [vmem:[%s1035 + $0x60] sm:$0xf0] %vm5177, %v5167
      %5185 = vst.msk [vmem:[%s1035 + $0x70] sm:$0xf0] %vm5177, %v5168
      %v5186 = vld [vmem:[#allocation2] sm:$0xf8]
      %v5187 = vld [vmem:[#allocation2 + $0x10] sm:$0xf8]
      %v5188 = vld [vmem:[#allocation2 + $0x20] sm:$0xf8]
      %v5189 = vld [vmem:[#allocation2 + $0x30] sm:$0xf8]
      %v5190 = vld [vmem:[#allocation2 + $0x40] sm:$0xf8]
      %v5191 = vld [vmem:[#allocation2 + $0x50] sm:$0xf8]
      %v5192 = vld [vmem:[#allocation2 + $0x60] sm:$0xf8]
      %v5193 = vld [vmem:[#allocation2 + $0x70] sm:$0xf8]
      %v5202 = vunpack.c.l.b16 %v5186
      %v5203 = vunpack.c.h.b16 %v5186
      %v5204 = vunpack.c.l.b16 %v5187
      %v5205 = vunpack.c.h.b16 %v5187
      %v5206 = vunpack.c.l.b16 %v5188
      %v5207 = vunpack.c.h.b16 %v5188
      %v5208 = vunpack.c.l.b16 %v5189
      %v5209 = vunpack.c.h.b16 %v5189
      %v5210 = vunpack.c.l.b16 %v5190
      %v5211 = vunpack.c.h.b16 %v5190
      %v5212 = vunpack.c.l.b16 %v5191
      %v5213 = vunpack.c.h.b16 %v5191
      %v5214 = vunpack.c.l.b16 %v5192
      %v5215 = vunpack.c.h.b16 %v5192
      %v5216 = vunpack.c.l.b16 %v5193
      %v5217 = vunpack.c.h.b16 %v5193
      %v5218 = vpack.c.b16 %v5202, %v5202
      %v5219 = vpack.c.b16 %v5203, %v5203
      %v5220 = vpack.c.b16 %v5204, %v5204
      %v5221 = vpack.c.b16 %v5205, %v5205
      %v5222 = vpack.c.b16 %v5206, %v5206
      %v5223 = vpack.c.b16 %v5207, %v5207
      %v5224 = vpack.c.b16 %v5208, %v5208
      %v5225 = vpack.c.b16 %v5209, %v5209
      %v5226 = vpack.c.b16 %v5210, %v5210
      %v5227 = vpack.c.b16 %v5211, %v5211
      %v5228 = vpack.c.b16 %v5212, %v5212
      %v5229 = vpack.c.b16 %v5213, %v5213
      %v5230 = vpack.c.b16 %v5214, %v5214
      %v5231 = vpack.c.b16 %v5215, %v5215
      %v5232 = vpack.c.b16 %v5216, %v5216
      %v5233 = vpack.c.b16 %v5217, %v5217
      %vm5234 = vsmask.f32 4368
      %vm5235 = vmor %vm5083, %vm5234
      %v5237 = vshrl.u32 %v5218, 16
      %v5239 = vrot.slane %v5237, 7
      %v5240 = vrot.slane %v5239, 4
      %v5242 = vshrl.u32 %v5219, 16
      %v5244 = vrot.slane %v5242, 7
      %v5245 = vshll.u32 %v5219, 16
      %v5247 = vor.u32 %v5244, %v5245
      %v5248 = vsel %vm5235, %v5240, %v5247
      %v5250 = vshrl.u32 %v5220, 16
      %v5252 = vrot.slane %v5250, 7
      %v5253 = vrot.slane %v5252, 4
      %v5255 = vshrl.u32 %v5221, 16
      %v5257 = vrot.slane %v5255, 7
      %v5258 = vshll.u32 %v5221, 16
      %v5260 = vor.u32 %v5257, %v5258
      %v5261 = vsel %vm5235, %v5253, %v5260
      %v5263 = vshrl.u32 %v5222, 16
      %v5265 = vrot.slane %v5263, 7
      %v5266 = vrot.slane %v5265, 4
      %v5268 = vshrl.u32 %v5223, 16
      %v5270 = vrot.slane %v5268, 7
      %v5271 = vshll.u32 %v5223, 16
      %v5273 = vor.u32 %v5270, %v5271
      %v5274 = vsel %vm5235, %v5266, %v5273
      %v5276 = vshrl.u32 %v5224, 16
      %v5278 = vrot.slane %v5276, 7
      %v5279 = vrot.slane %v5278, 4
      %v5281 = vshrl.u32 %v5225, 16
      %v5283 = vrot.slane %v5281, 7
      %v5284 = vshll.u32 %v5225, 16
      %v5286 = vor.u32 %v5283, %v5284
      %v5287 = vsel %vm5235, %v5279, %v5286
      %v5289 = vshrl.u32 %v5226, 16
      %v5291 = vrot.slane %v5289, 7
      %v5292 = vrot.slane %v5291, 4
      %v5294 = vshrl.u32 %v5227, 16
      %v5296 = vrot.slane %v5294, 7
      %v5297 = vshll.u32 %v5227, 16
      %v5299 = vor.u32 %v5296, %v5297
      %v5300 = vsel %vm5235, %v5292, %v5299
      %v5302 = vshrl.u32 %v5228, 16
      %v5304 = vrot.slane %v5302, 7
      %v5305 = vrot.slane %v5304, 4
      %v5307 = vshrl.u32 %v5229, 16
      %v5309 = vrot.slane %v5307, 7
      %v5310 = vshll.u32 %v5229, 16
      %v5312 = vor.u32 %v5309, %v5310
      %v5313 = vsel %vm5235, %v5305, %v5312
      %v5315 = vshrl.u32 %v5230, 16
      %v5317 = vrot.slane %v5315, 7
      %v5318 = vrot.slane %v5317, 4
      %v5320 = vshrl.u32 %v5231, 16
      %v5322 = vrot.slane %v5320, 7
      %v5323 = vshll.u32 %v5231, 16
      %v5325 = vor.u32 %v5322, %v5323
      %v5326 = vsel %vm5235, %v5318, %v5325
      %v5328 = vshrl.u32 %v5232, 16
      %v5330 = vrot.slane %v5328, 7
      %v5331 = vrot.slane %v5330, 4
      %v5333 = vshrl.u32 %v5233, 16
      %v5335 = vrot.slane %v5333, 7
      %v5336 = vshll.u32 %v5233, 16
      %v5338 = vor.u32 %v5335, %v5336
      %v5339 = vsel %vm5235, %v5331, %v5338
      %v5340 = vld [vmem:[#allocation2] sm:$0xf0]
      %v5341 = vld [vmem:[#allocation2 + $0x10] sm:$0xf0]
      %v5342 = vld [vmem:[#allocation2 + $0x20] sm:$0xf0]
      %v5343 = vld [vmem:[#allocation2 + $0x30] sm:$0xf0]
      %v5344 = vld [vmem:[#allocation2 + $0x40] sm:$0xf0]
      %v5345 = vld [vmem:[#allocation2 + $0x50] sm:$0xf0]
      %v5346 = vld [vmem:[#allocation2 + $0x60] sm:$0xf0]
      %v5347 = vld [vmem:[#allocation2 + $0x70] sm:$0xf0]
      %v5356 = vunpack.c.h.b16 %v5340
      %v5357 = vunpack.c.h.b16 %v5341
      %v5358 = vunpack.c.h.b16 %v5342
      %v5359 = vunpack.c.h.b16 %v5343
      %v5360 = vunpack.c.h.b16 %v5344
      %v5361 = vunpack.c.h.b16 %v5345
      %v5362 = vunpack.c.h.b16 %v5346
      %v5363 = vunpack.c.h.b16 %v5347
      %v5364 = vld [vmem:[#allocation2 + $0x8] sm:$0x1]
      %v5365 = vld [vmem:[#allocation2 + $0x18] sm:$0x1]
      %v5366 = vld [vmem:[#allocation2 + $0x28] sm:$0x1]
      %v5367 = vld [vmem:[#allocation2 + $0x38] sm:$0x1]
      %v5368 = vld [vmem:[#allocation2 + $0x48] sm:$0x1]
      %v5369 = vld [vmem:[#allocation2 + $0x58] sm:$0x1]
      %v5370 = vld [vmem:[#allocation2 + $0x68] sm:$0x1]
      %v5371 = vld [vmem:[#allocation2 + $0x78] sm:$0x1]
      %v5380 = vunpack.c.l.b16 %v5364
      %v5381 = vunpack.c.l.b16 %v5365
      %v5382 = vunpack.c.l.b16 %v5366
      %v5383 = vunpack.c.l.b16 %v5367
      %v5384 = vunpack.c.l.b16 %v5368
      %v5385 = vunpack.c.l.b16 %v5369
      %v5386 = vunpack.c.l.b16 %v5370
      %v5387 = vunpack.c.l.b16 %v5371
      %v5388 = vpack.c.b16 %v5356, %v5356
      %v5389 = vpack.c.b16 %v5380, %v5380
      %v5390 = vpack.c.b16 %v5357, %v5357
      %v5391 = vpack.c.b16 %v5381, %v5381
      %v5392 = vpack.c.b16 %v5358, %v5358
      %v5393 = vpack.c.b16 %v5382, %v5382
      %v5394 = vpack.c.b16 %v5359, %v5359
      %v5395 = vpack.c.b16 %v5383, %v5383
      %v5396 = vpack.c.b16 %v5360, %v5360
      %v5397 = vpack.c.b16 %v5384, %v5384
      %v5398 = vpack.c.b16 %v5361, %v5361
      %v5399 = vpack.c.b16 %v5385, %v5385
      %v5400 = vpack.c.b16 %v5362, %v5362
      %v5401 = vpack.c.b16 %v5386, %v5386
      %v5402 = vpack.c.b16 %v5363, %v5363
      %v5403 = vpack.c.b16 %v5387, %v5387
      %vm5404 = vsmask.f32 7440
      %vm5405 = vmor %vm1651, %vm5404
      %v5407 = vshrl.u32 %v5388, 16
      %v5409 = vrot.slane %v5407, 4
      %v5410 = vshll.u32 %v5388, 16
      %v5412 = vrot.slane %v5410, 5
      %v5413 = vor.u32 %v5409, %v5412
      %v5414 = vrot.slane %v5413, 4
      %v5416 = vshll.u32 %v5389, 16
      %v5418 = vrot.slane %v5416, 5
      %v5419 = vsel %vm5405, %v5414, %v5418
      %v5421 = vshrl.u32 %v5390, 16
      %v5423 = vrot.slane %v5421, 4
      %v5424 = vshll.u32 %v5390, 16
      %v5426 = vrot.slane %v5424, 5
      %v5427 = vor.u32 %v5423, %v5426
      %v5428 = vrot.slane %v5427, 4
      %v5430 = vshll.u32 %v5391, 16
      %v5432 = vrot.slane %v5430, 5
      %v5433 = vsel %vm5405, %v5428, %v5432
      %v5435 = vshrl.u32 %v5392, 16
      %v5437 = vrot.slane %v5435, 4
      %v5438 = vshll.u32 %v5392, 16
      %v5440 = vrot.slane %v5438, 5
      %v5441 = vor.u32 %v5437, %v5440
      %v5442 = vrot.slane %v5441, 4
      %v5444 = vshll.u32 %v5393, 16
      %v5446 = vrot.slane %v5444, 5
      %v5447 = vsel %vm5405, %v5442, %v5446
      %v5449 = vshrl.u32 %v5394, 16
      %v5451 = vrot.slane %v5449, 4
      %v5452 = vshll.u32 %v5394, 16
      %v5454 = vrot.slane %v5452, 5
      %v5455 = vor.u32 %v5451, %v5454
      %v5456 = vrot.slane %v5455, 4
      %v5458 = vshll.u32 %v5395, 16
      %v5460 = vrot.slane %v5458, 5
      %v5461 = vsel %vm5405, %v5456, %v5460
      %v5463 = vshrl.u32 %v5396, 16
      %v5465 = vrot.slane %v5463, 4
      %v5466 = vshll.u32 %v5396, 16
      %v5468 = vrot.slane %v5466, 5
      %v5469 = vor.u32 %v5465, %v5468
      %v5470 = vrot.slane %v5469, 4
      %v5472 = vshll.u32 %v5397, 16
      %v5474 = vrot.slane %v5472, 5
      %v5475 = vsel %vm5405, %v5470, %v5474
      %v5477 = vshrl.u32 %v5398, 16
      %v5479 = vrot.slane %v5477, 4
      %v5480 = vshll.u32 %v5398, 16
      %v5482 = vrot.slane %v5480, 5
      %v5483 = vor.u32 %v5479, %v5482
      %v5484 = vrot.slane %v5483, 4
      %v5486 = vshll.u32 %v5399, 16
      %v5488 = vrot.slane %v5486, 5
      %v5489 = vsel %vm5405, %v5484, %v5488
      %v5491 = vshrl.u32 %v5400, 16
      %v5493 = vrot.slane %v5491, 4
      %v5494 = vshll.u32 %v5400, 16
      %v5496 = vrot.slane %v5494, 5
      %v5497 = vor.u32 %v5493, %v5496
      %v5498 = vrot.slane %v5497, 4
      %v5500 = vshll.u32 %v5401, 16
      %v5502 = vrot.slane %v5500, 5
      %v5503 = vsel %vm5405, %v5498, %v5502
      %v5505 = vshrl.u32 %v5402, 16
      %v5507 = vrot.slane %v5505, 4
      %v5508 = vshll.u32 %v5402, 16
      %v5510 = vrot.slane %v5508, 5
      %v5511 = vor.u32 %v5507, %v5510
      %v5512 = vrot.slane %v5511, 4
      %v5514 = vshll.u32 %v5403, 16
      %v5516 = vrot.slane %v5514, 5
      %v5517 = vsel %vm5405, %v5512, %v5516
      %v5518 = vld [vmem:[%s1035] sm:$0xf8]
      %v5519 = vld [vmem:[%s1035 + $0x10] sm:$0xf8]
      %v5520 = vld [vmem:[%s1035 + $0x20] sm:$0xf8]
      %v5521 = vld [vmem:[%s1035 + $0x30] sm:$0xf8]
      %v5522 = vld [vmem:[%s1035 + $0x40] sm:$0xf8]
      %v5523 = vld [vmem:[%s1035 + $0x50] sm:$0xf8]
      %v5524 = vld [vmem:[%s1035 + $0x60] sm:$0xf8]
      %v5525 = vld [vmem:[%s1035 + $0x70] sm:$0xf8]
      %v5534 = vunpack.c.l.b16 %v5518
      %v5535 = vunpack.c.h.b16 %v5518
      %v5536 = vunpack.c.l.b16 %v5519
      %v5537 = vunpack.c.h.b16 %v5519
      %v5538 = vunpack.c.l.b16 %v5520
      %v5539 = vunpack.c.h.b16 %v5520
      %v5540 = vunpack.c.l.b16 %v5521
      %v5541 = vunpack.c.h.b16 %v5521
      %v5542 = vunpack.c.l.b16 %v5522
      %v5543 = vunpack.c.h.b16 %v5522
      %v5544 = vunpack.c.l.b16 %v5523
      %v5545 = vunpack.c.h.b16 %v5523
      %v5546 = vunpack.c.l.b16 %v5524
      %v5547 = vunpack.c.h.b16 %v5524
      %v5548 = vunpack.c.l.b16 %v5525
      %v5549 = vunpack.c.h.b16 %v5525
      %v5550 = vpack.c.b16 %v5534, %v5534
      %v5551 = vpack.c.b16 %v5535, %v5535
      %v5552 = vpack.c.b16 %v5536, %v5536
      %v5553 = vpack.c.b16 %v5537, %v5537
      %v5554 = vpack.c.b16 %v5538, %v5538
      %v5555 = vpack.c.b16 %v5539, %v5539
      %v5556 = vpack.c.b16 %v5540, %v5540
      %v5557 = vpack.c.b16 %v5541, %v5541
      %v5558 = vpack.c.b16 %v5542, %v5542
      %v5559 = vpack.c.b16 %v5543, %v5543
      %v5560 = vpack.c.b16 %v5544, %v5544
      %v5561 = vpack.c.b16 %v5545, %v5545
      %v5562 = vpack.c.b16 %v5546, %v5546
      %v5563 = vpack.c.b16 %v5547, %v5547
      %v5564 = vpack.c.b16 %v5548, %v5548
      %v5565 = vpack.c.b16 %v5549, %v5549
      %v5567 = vshrl.u32 %v5550, 16
      %v5569 = vrot.slane %v5567, 7
      %v5570 = vrot.slane %v5569, 4
      %v5572 = vshrl.u32 %v5551, 16
      %v5574 = vrot.slane %v5572, 7
      %v5575 = vshll.u32 %v5551, 16
      %v5577 = vor.u32 %v5574, %v5575
      %v5578 = vsel %vm5235, %v5570, %v5577
      %v5580 = vshrl.u32 %v5552, 16
      %v5582 = vrot.slane %v5580, 7
      %v5583 = vrot.slane %v5582, 4
      %v5585 = vshrl.u32 %v5553, 16
      %v5587 = vrot.slane %v5585, 7
      %v5588 = vshll.u32 %v5553, 16
      %v5590 = vor.u32 %v5587, %v5588
      %v5591 = vsel %vm5235, %v5583, %v5590
      %v5593 = vshrl.u32 %v5554, 16
      %v5595 = vrot.slane %v5593, 7
      %v5596 = vrot.slane %v5595, 4
      %v5598 = vshrl.u32 %v5555, 16
      %v5600 = vrot.slane %v5598, 7
      %v5601 = vshll.u32 %v5555, 16
      %v5603 = vor.u32 %v5600, %v5601
      %v5604 = vsel %vm5235, %v5596, %v5603
      %v5606 = vshrl.u32 %v5556, 16
      %v5608 = vrot.slane %v5606, 7
      %v5609 = vrot.slane %v5608, 4
      %v5611 = vshrl.u32 %v5557, 16
      %v5613 = vrot.slane %v5611, 7
      %v5614 = vshll.u32 %v5557, 16
      %v5616 = vor.u32 %v5613, %v5614
      %v5617 = vsel %vm5235, %v5609, %v5616
      %v5619 = vshrl.u32 %v5558, 16
      %v5621 = vrot.slane %v5619, 7
      %v5622 = vrot.slane %v5621, 4
      %v5624 = vshrl.u32 %v5559, 16
      %v5626 = vrot.slane %v5624, 7
      %v5627 = vshll.u32 %v5559, 16
      %v5629 = vor.u32 %v5626, %v5627
      %v5630 = vsel %vm5235, %v5622, %v5629
      %v5632 = vshrl.u32 %v5560, 16
      %v5634 = vrot.slane %v5632, 7
      %v5635 = vrot.slane %v5634, 4
      %v5637 = vshrl.u32 %v5561, 16
      %v5639 = vrot.slane %v5637, 7
      %v5640 = vshll.u32 %v5561, 16
      %v5642 = vor.u32 %v5639, %v5640
      %v5643 = vsel %vm5235, %v5635, %v5642
      %v5645 = vshrl.u32 %v5562, 16
      %v5647 = vrot.slane %v5645, 7
      %v5648 = vrot.slane %v5647, 4
      %v5650 = vshrl.u32 %v5563, 16
      %v5652 = vrot.slane %v5650, 7
      %v5653 = vshll.u32 %v5563, 16
      %v5655 = vor.u32 %v5652, %v5653
      %v5656 = vsel %vm5235, %v5648, %v5655
      %v5658 = vshrl.u32 %v5564, 16
      %v5660 = vrot.slane %v5658, 7
      %v5661 = vrot.slane %v5660, 4
      %v5663 = vshrl.u32 %v5565, 16
      %v5665 = vrot.slane %v5663, 7
      %v5666 = vshll.u32 %v5565, 16
      %v5668 = vor.u32 %v5665, %v5666
      %v5669 = vsel %vm5235, %v5661, %v5668
      %v5670 = vld [vmem:[%s1035] sm:$0xf0]
      %v5671 = vld [vmem:[%s1035 + $0x10] sm:$0xf0]
      %v5672 = vld [vmem:[%s1035 + $0x20] sm:$0xf0]
      %v5673 = vld [vmem:[%s1035 + $0x30] sm:$0xf0]
      %v5674 = vld [vmem:[%s1035 + $0x40] sm:$0xf0]
      %v5675 = vld [vmem:[%s1035 + $0x50] sm:$0xf0]
      %v5676 = vld [vmem:[%s1035 + $0x60] sm:$0xf0]
      %v5677 = vld [vmem:[%s1035 + $0x70] sm:$0xf0]
      %v5686 = vunpack.c.h.b16 %v5670
      %v5687 = vunpack.c.h.b16 %v5671
      %v5688 = vunpack.c.h.b16 %v5672
      %v5689 = vunpack.c.h.b16 %v5673
      %v5690 = vunpack.c.h.b16 %v5674
      %v5691 = vunpack.c.h.b16 %v5675
      %v5692 = vunpack.c.h.b16 %v5676
      %v5693 = vunpack.c.h.b16 %v5677
      %v5694 = vld [vmem:[%s1035 + $0x8] sm:$0x1]
      %v5695 = vld [vmem:[%s1035 + $0x18] sm:$0x1]
      %v5696 = vld [vmem:[%s1035 + $0x28] sm:$0x1]
      %v5697 = vld [vmem:[%s1035 + $0x38] sm:$0x1]
      %v5698 = vld [vmem:[%s1035 + $0x48] sm:$0x1]
      %v5699 = vld [vmem:[%s1035 + $0x58] sm:$0x1]
      %v5700 = vld [vmem:[%s1035 + $0x68] sm:$0x1]
      %v5701 = vld [vmem:[%s1035 + $0x78] sm:$0x1]
      %v5710 = vunpack.c.l.b16 %v5694
      %v5711 = vunpack.c.l.b16 %v5695
      %v5712 = vunpack.c.l.b16 %v5696
      %v5713 = vunpack.c.l.b16 %v5697
      %v5714 = vunpack.c.l.b16 %v5698
      %v5715 = vunpack.c.l.b16 %v5699
      %v5716 = vunpack.c.l.b16 %v5700
      %v5717 = vunpack.c.l.b16 %v5701
      %v5718 = vpack.c.b16 %v5686, %v5686
      %v5719 = vpack.c.b16 %v5710, %v5710
      %v5720 = vpack.c.b16 %v5687, %v5687
      %v5721 = vpack.c.b16 %v5711, %v5711
      %v5722 = vpack.c.b16 %v5688, %v5688
      %v5723 = vpack.c.b16 %v5712, %v5712
      %v5724 = vpack.c.b16 %v5689, %v5689
      %v5725 = vpack.c.b16 %v5713, %v5713
      %v5726 = vpack.c.b16 %v5690, %v5690
      %v5727 = vpack.c.b16 %v5714, %v5714
      %v5728 = vpack.c.b16 %v5691, %v5691
      %v5729 = vpack.c.b16 %v5715, %v5715
      %v5730 = vpack.c.b16 %v5692, %v5692
      %v5731 = vpack.c.b16 %v5716, %v5716
      %v5732 = vpack.c.b16 %v5693, %v5693
      %v5733 = vpack.c.b16 %v5717, %v5717
      %v5735 = vshrl.u32 %v5718, 16
      %v5737 = vrot.slane %v5735, 4
      %v5738 = vshll.u32 %v5718, 16
      %v5740 = vrot.slane %v5738, 5
      %v5741 = vor.u32 %v5737, %v5740
      %v5742 = vrot.slane %v5741, 4
      %v5744 = vshll.u32 %v5719, 16
      %v5746 = vrot.slane %v5744, 5
      %v5747 = vsel %vm5405, %v5742, %v5746
      %v5749 = vshrl.u32 %v5720, 16
      %v5751 = vrot.slane %v5749, 4
      %v5752 = vshll.u32 %v5720, 16
      %v5754 = vrot.slane %v5752, 5
      %v5755 = vor.u32 %v5751, %v5754
      %v5756 = vrot.slane %v5755, 4
      %v5758 = vshll.u32 %v5721, 16
      %v5760 = vrot.slane %v5758, 5
      %v5761 = vsel %vm5405, %v5756, %v5760
      %v5763 = vshrl.u32 %v5722, 16
      %v5765 = vrot.slane %v5763, 4
      %v5766 = vshll.u32 %v5722, 16
      %v5768 = vrot.slane %v5766, 5
      %v5769 = vor.u32 %v5765, %v5768
      %v5770 = vrot.slane %v5769, 4
      %v5772 = vshll.u32 %v5723, 16
      %v5774 = vrot.slane %v5772, 5
      %v5775 = vsel %vm5405, %v5770, %v5774
      %v5777 = vshrl.u32 %v5724, 16
      %v5779 = vrot.slane %v5777, 4
      %v5780 = vshll.u32 %v5724, 16
      %v5782 = vrot.slane %v5780, 5
      %v5783 = vor.u32 %v5779, %v5782
      %v5784 = vrot.slane %v5783, 4
      %v5786 = vshll.u32 %v5725, 16
      %v5788 = vrot.slane %v5786, 5
      %v5789 = vsel %vm5405, %v5784, %v5788
      %v5791 = vshrl.u32 %v5726, 16
      %v5793 = vrot.slane %v5791, 4
      %v5794 = vshll.u32 %v5726, 16
      %v5796 = vrot.slane %v5794, 5
      %v5797 = vor.u32 %v5793, %v5796
      %v5798 = vrot.slane %v5797, 4
      %v5800 = vshll.u32 %v5727, 16
      %v5802 = vrot.slane %v5800, 5
      %v5803 = vsel %vm5405, %v5798, %v5802
      %v5805 = vshrl.u32 %v5728, 16
      %v5807 = vrot.slane %v5805, 4
      %v5808 = vshll.u32 %v5728, 16
      %v5810 = vrot.slane %v5808, 5
      %v5811 = vor.u32 %v5807, %v5810
      %v5812 = vrot.slane %v5811, 4
      %v5814 = vshll.u32 %v5729, 16
      %v5816 = vrot.slane %v5814, 5
      %v5817 = vsel %vm5405, %v5812, %v5816
      %v5819 = vshrl.u32 %v5730, 16
      %v5821 = vrot.slane %v5819, 4
      %v5822 = vshll.u32 %v5730, 16
      %v5824 = vrot.slane %v5822, 5
      %v5825 = vor.u32 %v5821, %v5824
      %v5826 = vrot.slane %v5825, 4
      %v5828 = vshll.u32 %v5731, 16
      %v5830 = vrot.slane %v5828, 5
      %v5831 = vsel %vm5405, %v5826, %v5830
      %v5833 = vshrl.u32 %v5732, 16
      %v5835 = vrot.slane %v5833, 4
      %v5836 = vshll.u32 %v5732, 16
      %v5838 = vrot.slane %v5836, 5
      %v5839 = vor.u32 %v5835, %v5838
      %v5840 = vrot.slane %v5839, 4
      %v5842 = vshll.u32 %v5733, 16
      %v5844 = vrot.slane %v5842, 5
      %v5845 = vsel %vm5405, %v5840, %v5844
      %v5846 = vld [vmem:[%s2612] sm:$0xf8]
      %v5847 = vld [vmem:[%s2612 + $0x10] sm:$0xf8]
      %v5848 = vld [vmem:[%s2612 + $0x20] sm:$0xf8]
      %v5849 = vld [vmem:[%s2612 + $0x30] sm:$0xf8]
      %v5850 = vld [vmem:[%s2612 + $0x40] sm:$0xf8]
      %v5851 = vld [vmem:[%s2612 + $0x50] sm:$0xf8]
      %v5852 = vld [vmem:[%s2612 + $0x60] sm:$0xf8]
      %v5853 = vld [vmem:[%s2612 + $0x70] sm:$0xf8]
      %v5862 = vunpack.c.l.b16 %v5846
      %v5863 = vunpack.c.h.b16 %v5846
      %v5864 = vunpack.c.l.b16 %v5847
      %v5865 = vunpack.c.h.b16 %v5847
      %v5866 = vunpack.c.l.b16 %v5848
      %v5867 = vunpack.c.h.b16 %v5848
      %v5868 = vunpack.c.l.b16 %v5849
      %v5869 = vunpack.c.h.b16 %v5849
      %v5870 = vunpack.c.l.b16 %v5850
      %v5871 = vunpack.c.h.b16 %v5850
      %v5872 = vunpack.c.l.b16 %v5851
      %v5873 = vunpack.c.h.b16 %v5851
      %v5874 = vunpack.c.l.b16 %v5852
      %v5875 = vunpack.c.h.b16 %v5852
      %v5876 = vunpack.c.l.b16 %v5853
      %v5877 = vunpack.c.h.b16 %v5853
      %v5878 = vpack.c.b16 %v5862, %v5862
      %v5879 = vpack.c.b16 %v5863, %v5863
      %v5880 = vpack.c.b16 %v5864, %v5864
      %v5881 = vpack.c.b16 %v5865, %v5865
      %v5882 = vpack.c.b16 %v5866, %v5866
      %v5883 = vpack.c.b16 %v5867, %v5867
      %v5884 = vpack.c.b16 %v5868, %v5868
      %v5885 = vpack.c.b16 %v5869, %v5869
      %v5886 = vpack.c.b16 %v5870, %v5870
      %v5887 = vpack.c.b16 %v5871, %v5871
      %v5888 = vpack.c.b16 %v5872, %v5872
      %v5889 = vpack.c.b16 %v5873, %v5873
      %v5890 = vpack.c.b16 %v5874, %v5874
      %v5891 = vpack.c.b16 %v5875, %v5875
      %v5892 = vpack.c.b16 %v5876, %v5876
      %v5893 = vpack.c.b16 %v5877, %v5877
      %v5895 = vshrl.u32 %v5878, 16
      %v5897 = vrot.slane %v5895, 7
      %v5898 = vrot.slane %v5897, 4
      %v5900 = vshrl.u32 %v5879, 16
      %v5902 = vrot.slane %v5900, 7
      %v5903 = vshll.u32 %v5879, 16
      %v5905 = vor.u32 %v5902, %v5903
      %v5906 = vsel %vm5235, %v5898, %v5905
      %v5908 = vshrl.u32 %v5880, 16
      %v5910 = vrot.slane %v5908, 7
      %v5911 = vrot.slane %v5910, 4
      %v5913 = vshrl.u32 %v5881, 16
      %v5915 = vrot.slane %v5913, 7
      %v5916 = vshll.u32 %v5881, 16
      %v5918 = vor.u32 %v5915, %v5916
      %v5919 = vsel %vm5235, %v5911, %v5918
      %v5921 = vshrl.u32 %v5882, 16
      %v5923 = vrot.slane %v5921, 7
      %v5924 = vrot.slane %v5923, 4
      %v5926 = vshrl.u32 %v5883, 16
      %v5928 = vrot.slane %v5926, 7
      %v5929 = vshll.u32 %v5883, 16
      %v5931 = vor.u32 %v5928, %v5929
      %v5932 = vsel %vm5235, %v5924, %v5931
      %v5934 = vshrl.u32 %v5884, 16
      %v5936 = vrot.slane %v5934, 7
      %v5937 = vrot.slane %v5936, 4
      %v5939 = vshrl.u32 %v5885, 16
      %v5941 = vrot.slane %v5939, 7
      %v5942 = vshll.u32 %v5885, 16
      %v5944 = vor.u32 %v5941, %v5942
      %v5945 = vsel %vm5235, %v5937, %v5944
      %v5947 = vshrl.u32 %v5886, 16
      %v5949 = vrot.slane %v5947, 7
      %v5950 = vrot.slane %v5949, 4
      %v5952 = vshrl.u32 %v5887, 16
      %v5954 = vrot.slane %v5952, 7
      %v5955 = vshll.u32 %v5887, 16
      %v5957 = vor.u32 %v5954, %v5955
      %v5958 = vsel %vm5235, %v5950, %v5957
      %v5960 = vshrl.u32 %v5888, 16
      %v5962 = vrot.slane %v5960, 7
      %v5963 = vrot.slane %v5962, 4
      %v5965 = vshrl.u32 %v5889, 16
      %v5967 = vrot.slane %v5965, 7
      %v5968 = vshll.u32 %v5889, 16
      %v5970 = vor.u32 %v5967, %v5968
      %v5971 = vsel %vm5235, %v5963, %v5970
      %v5973 = vshrl.u32 %v5890, 16
      %v5975 = vrot.slane %v5973, 7
      %v5976 = vrot.slane %v5975, 4
      %v5978 = vshrl.u32 %v5891, 16
      %v5980 = vrot.slane %v5978, 7
      %v5981 = vshll.u32 %v5891, 16
      %v5983 = vor.u32 %v5980, %v5981
      %v5984 = vsel %vm5235, %v5976, %v5983
      %v5986 = vshrl.u32 %v5892, 16
      %v5988 = vrot.slane %v5986, 7
      %v5989 = vrot.slane %v5988, 4
      %v5991 = vshrl.u32 %v5893, 16
      %v5993 = vrot.slane %v5991, 7
      %v5994 = vshll.u32 %v5893, 16
      %v5996 = vor.u32 %v5993, %v5994
      %v5997 = vsel %vm5235, %v5989, %v5996
      %v5998 = vld [vmem:[%s2612] sm:$0xf0]
      %v5999 = vld [vmem:[%s2612 + $0x10] sm:$0xf0]
      %v6000 = vld [vmem:[%s2612 + $0x20] sm:$0xf0]
      %v6001 = vld [vmem:[%s2612 + $0x30] sm:$0xf0]
      %v6002 = vld [vmem:[%s2612 + $0x40] sm:$0xf0]
      %v6003 = vld [vmem:[%s2612 + $0x50] sm:$0xf0]
      %v6004 = vld [vmem:[%s2612 + $0x60] sm:$0xf0]
      %v6005 = vld [vmem:[%s2612 + $0x70] sm:$0xf0]
      %v6014 = vunpack.c.h.b16 %v5998
      %v6015 = vunpack.c.h.b16 %v5999
      %v6016 = vunpack.c.h.b16 %v6000
      %v6017 = vunpack.c.h.b16 %v6001
      %v6018 = vunpack.c.h.b16 %v6002
      %v6019 = vunpack.c.h.b16 %v6003
      %v6020 = vunpack.c.h.b16 %v6004
      %v6021 = vunpack.c.h.b16 %v6005
      %v6022 = vld [vmem:[%s2612 + $0x8] sm:$0x1]
      %v6023 = vld [vmem:[%s2612 + $0x18] sm:$0x1]
      %v6024 = vld [vmem:[%s2612 + $0x28] sm:$0x1]
      %v6025 = vld [vmem:[%s2612 + $0x38] sm:$0x1]
      %v6026 = vld [vmem:[%s2612 + $0x48] sm:$0x1]
      %v6027 = vld [vmem:[%s2612 + $0x58] sm:$0x1]
      %v6028 = vld [vmem:[%s2612 + $0x68] sm:$0x1]
      %v6029 = vld [vmem:[%s2612 + $0x78] sm:$0x1]
      %v6038 = vunpack.c.l.b16 %v6022
      %v6039 = vunpack.c.l.b16 %v6023
      %v6040 = vunpack.c.l.b16 %v6024
      %v6041 = vunpack.c.l.b16 %v6025
      %v6042 = vunpack.c.l.b16 %v6026
      %v6043 = vunpack.c.l.b16 %v6027
      %v6044 = vunpack.c.l.b16 %v6028
      %v6045 = vunpack.c.l.b16 %v6029
      %v6046 = vpack.c.b16 %v6014, %v6014
      %v6047 = vpack.c.b16 %v6038, %v6038
      %v6048 = vpack.c.b16 %v6015, %v6015
      %v6049 = vpack.c.b16 %v6039, %v6039
      %v6050 = vpack.c.b16 %v6016, %v6016
      %v6051 = vpack.c.b16 %v6040, %v6040
      %v6052 = vpack.c.b16 %v6017, %v6017
      %v6053 = vpack.c.b16 %v6041, %v6041
      %v6054 = vpack.c.b16 %v6018, %v6018
      %v6055 = vpack.c.b16 %v6042, %v6042
      %v6056 = vpack.c.b16 %v6019, %v6019
      %v6057 = vpack.c.b16 %v6043, %v6043
      %v6058 = vpack.c.b16 %v6020, %v6020
      %v6059 = vpack.c.b16 %v6044, %v6044
      %v6060 = vpack.c.b16 %v6021, %v6021
      %v6061 = vpack.c.b16 %v6045, %v6045
      %v6063 = vshrl.u32 %v6046, 16
      %v6065 = vrot.slane %v6063, 4
      %v6066 = vshll.u32 %v6046, 16
      %v6068 = vrot.slane %v6066, 5
      %v6069 = vor.u32 %v6065, %v6068
      %v6070 = vrot.slane %v6069, 4
      %v6072 = vshll.u32 %v6047, 16
      %v6074 = vrot.slane %v6072, 5
      %v6075 = vsel %vm5405, %v6070, %v6074
      %v6077 = vshrl.u32 %v6048, 16
      %v6079 = vrot.slane %v6077, 4
      %v6080 = vshll.u32 %v6048, 16
      %v6082 = vrot.slane %v6080, 5
      %v6083 = vor.u32 %v6079, %v6082
      %v6084 = vrot.slane %v6083, 4
      %v6086 = vshll.u32 %v6049, 16
      %v6088 = vrot.slane %v6086, 5
      %v6089 = vsel %vm5405, %v6084, %v6088
      %v6091 = vshrl.u32 %v6050, 16
      %v6093 = vrot.slane %v6091, 4
      %v6094 = vshll.u32 %v6050, 16
      %v6096 = vrot.slane %v6094, 5
      %v6097 = vor.u32 %v6093, %v6096
      %v6098 = vrot.slane %v6097, 4
      %v6100 = vshll.u32 %v6051, 16
      %v6102 = vrot.slane %v6100, 5
      %v6103 = vsel %vm5405, %v6098, %v6102
      %v6105 = vshrl.u32 %v6052, 16
      %v6107 = vrot.slane %v6105, 4
      %v6108 = vshll.u32 %v6052, 16
      %v6110 = vrot.slane %v6108, 5
      %v6111 = vor.u32 %v6107, %v6110
      %v6112 = vrot.slane %v6111, 4
      %v6114 = vshll.u32 %v6053, 16
      %v6116 = vrot.slane %v6114, 5
      %v6117 = vsel %vm5405, %v6112, %v6116
      %v6119 = vshrl.u32 %v6054, 16
      %v6121 = vrot.slane %v6119, 4
      %v6122 = vshll.u32 %v6054, 16
      %v6124 = vrot.slane %v6122, 5
      %v6125 = vor.u32 %v6121, %v6124
      %v6126 = vrot.slane %v6125, 4
      %v6128 = vshll.u32 %v6055, 16
      %v6130 = vrot.slane %v6128, 5
      %v6131 = vsel %vm5405, %v6126, %v6130
      %v6133 = vshrl.u32 %v6056, 16
      %v6135 = vrot.slane %v6133, 4
      %v6136 = vshll.u32 %v6056, 16
      %v6138 = vrot.slane %v6136, 5
      %v6139 = vor.u32 %v6135, %v6138
      %v6140 = vrot.slane %v6139, 4
      %v6142 = vshll.u32 %v6057, 16
      %v6144 = vrot.slane %v6142, 5
      %v6145 = vsel %vm5405, %v6140, %v6144
      %v6147 = vshrl.u32 %v6058, 16
      %v6149 = vrot.slane %v6147, 4
      %v6150 = vshll.u32 %v6058, 16
      %v6152 = vrot.slane %v6150, 5
      %v6153 = vor.u32 %v6149, %v6152
      %v6154 = vrot.slane %v6153, 4
      %v6156 = vshll.u32 %v6059, 16
      %v6158 = vrot.slane %v6156, 5
      %v6159 = vsel %vm5405, %v6154, %v6158
      %v6161 = vshrl.u32 %v6060, 16
      %v6163 = vrot.slane %v6161, 4
      %v6164 = vshll.u32 %v6060, 16
      %v6166 = vrot.slane %v6164, 5
      %v6167 = vor.u32 %v6163, %v6166
      %v6168 = vrot.slane %v6167, 4
      %v6170 = vshll.u32 %v6061, 16
      %v6172 = vrot.slane %v6170, 5
      %v6173 = vsel %vm5405, %v6168, %v6172
      %v6174 = vunpack.c.l.b16 %v5248
      %v6175 = vunpack.c.l.b16 %v5261
      %v6176 = vunpack.c.l.b16 %v5274
      %v6177 = vunpack.c.l.b16 %v5287
      %v6178 = vunpack.c.l.b16 %v5300
      %v6179 = vunpack.c.l.b16 %v5313
      %v6180 = vunpack.c.l.b16 %v5326
      %v6181 = vunpack.c.l.b16 %v5339
      %v6182 = vpack.c.b16 %v6175, %v6174
      %v6183 = vpack.c.b16 %v6177, %v6176
      %v6184 = vpack.c.b16 %v6179, %v6178
      %v6185 = vpack.c.b16 %v6181, %v6180
      %v6186 = vpack.c.b16 %v5357, %v5356
      %v6187 = vpack.c.b16 %v5359, %v5358
      %v6188 = vpack.c.b16 %v5361, %v5360
      %v6189 = vpack.c.b16 %v5363, %v5362
      %6190 = vrot.lane.b32.xlu0 %v6186, 64
      %v6191 = vpop.permute.xlu0 %6190
      %6192 = vrot.lane.b32.xlu0 %v6187, 64
      %v6193 = vpop.permute.xlu0 %6192
      %6194 = vrot.lane.b32.xlu0 %v6188, 64
      %v6195 = vpop.permute.xlu0 %6194
      %6196 = vrot.lane.b32.xlu0 %v6189, 64
      %v6197 = vpop.permute.xlu0 %6196
      %v6198 = vunpack.c.l.b16 %v5419
      %v6199 = vunpack.c.l.b16 %v5433
      %v6200 = vunpack.c.l.b16 %v5447
      %v6201 = vunpack.c.l.b16 %v5461
      %v6202 = vunpack.c.l.b16 %v5475
      %v6203 = vunpack.c.l.b16 %v5489
      %v6204 = vunpack.c.l.b16 %v5503
      %v6205 = vunpack.c.l.b16 %v5517
      %v6206 = vpack.c.b16 %v6199, %v6198
      %v6207 = vpack.c.b16 %v6201, %v6200
      %v6208 = vpack.c.b16 %v6203, %v6202
      %v6209 = vpack.c.b16 %v6205, %v6204
      %v6210 = vunpack.c.l.b16 %v5578
      %v6211 = vunpack.c.l.b16 %v5591
      %v6212 = vunpack.c.l.b16 %v5604
      %v6213 = vunpack.c.l.b16 %v5617
      %v6214 = vunpack.c.l.b16 %v5630
      %v6215 = vunpack.c.l.b16 %v5643
      %v6216 = vunpack.c.l.b16 %v5656
      %v6217 = vunpack.c.l.b16 %v5669
      %v6218 = vpack.c.b16 %v6211, %v6210
      %v6219 = vpack.c.b16 %v6213, %v6212
      %v6220 = vpack.c.b16 %v6215, %v6214
      %v6221 = vpack.c.b16 %v6217, %v6216
      %6222 = vrot.lane.b32.xlu0 %v6218, 64
      %v6223 = vpop.permute.xlu0 %6222
      %6224 = vrot.lane.b32.xlu0 %v6219, 64
      %v6225 = vpop.permute.xlu0 %6224
      %6226 = vrot.lane.b32.xlu0 %v6220, 64
      %v6227 = vpop.permute.xlu0 %6226
      %6228 = vrot.lane.b32.xlu0 %v6221, 64
      %v6229 = vpop.permute.xlu0 %6228
      %v6230 = vpack.c.b16 %v5687, %v5686
      %v6231 = vpack.c.b16 %v5689, %v5688
      %v6232 = vpack.c.b16 %v5691, %v5690
      %v6233 = vpack.c.b16 %v5693, %v5692
      %v6234 = vunpack.c.l.b16 %v5747
      %v6235 = vunpack.c.l.b16 %v5761
      %v6236 = vunpack.c.l.b16 %v5775
      %v6237 = vunpack.c.l.b16 %v5789
      %v6238 = vunpack.c.l.b16 %v5803
      %v6239 = vunpack.c.l.b16 %v5817
      %v6240 = vunpack.c.l.b16 %v5831
      %v6241 = vunpack.c.l.b16 %v5845
      %v6242 = vpack.c.b16 %v6235, %v6234
      %v6243 = vpack.c.b16 %v6237, %v6236
      %v6244 = vpack.c.b16 %v6239, %v6238
      %v6245 = vpack.c.b16 %v6241, %v6240
      %6246 = vrot.lane.b32.xlu0 %v6242, 64
      %v6247 = vpop.permute.xlu0 %6246
      %6248 = vrot.lane.b32.xlu0 %v6243, 64
      %v6249 = vpop.permute.xlu0 %6248
      %6250 = vrot.lane.b32.xlu0 %v6244, 64
      %v6251 = vpop.permute.xlu0 %6250
      %6252 = vrot.lane.b32.xlu0 %v6245, 64
      %v6253 = vpop.permute.xlu0 %6252
      %v6254 = vunpack.c.l.b16 %v5906
      %v6255 = vunpack.c.l.b16 %v5919
      %v6256 = vunpack.c.l.b16 %v5932
      %v6257 = vunpack.c.l.b16 %v5945
      %v6258 = vunpack.c.l.b16 %v5958
      %v6259 = vunpack.c.l.b16 %v5971
      %v6260 = vunpack.c.l.b16 %v5984
      %v6261 = vunpack.c.l.b16 %v5997
      %v6262 = vpack.c.b16 %v6255, %v6254
      %v6263 = vpack.c.b16 %v6257, %v6256
      %v6264 = vpack.c.b16 %v6259, %v6258
      %v6265 = vpack.c.b16 %v6261, %v6260
      %v6266 = vpack.c.b16 %v6015, %v6014
      %v6267 = vpack.c.b16 %v6017, %v6016
      %v6268 = vpack.c.b16 %v6019, %v6018
      %v6269 = vpack.c.b16 %v6021, %v6020
      %6270 = vrot.lane.b32.xlu0 %v6266, 64
      %v6271 = vpop.permute.xlu0 %6270
      %6272 = vrot.lane.b32.xlu0 %v6267, 64
      %v6273 = vpop.permute.xlu0 %6272
      %6274 = vrot.lane.b32.xlu0 %v6268, 64
      %v6275 = vpop.permute.xlu0 %6274
      %6276 = vrot.lane.b32.xlu0 %v6269, 64
      %v6277 = vpop.permute.xlu0 %6276
      %v6278 = vunpack.c.l.b16 %v6075
      %v6279 = vunpack.c.l.b16 %v6089
      %v6280 = vunpack.c.l.b16 %v6103
      %v6281 = vunpack.c.l.b16 %v6117
      %v6282 = vunpack.c.l.b16 %v6131
      %v6283 = vunpack.c.l.b16 %v6145
      %v6284 = vunpack.c.l.b16 %v6159
      %v6285 = vunpack.c.l.b16 %v6173
      %v6286 = vpack.c.b16 %v6279, %v6278
      %v6287 = vpack.c.b16 %v6281, %v6280
      %v6288 = vpack.c.b16 %v6283, %v6282
      %v6289 = vpack.c.b16 %v6285, %v6284
      %v6292 = vsel %vm3542, %v6182, %v6191
      %v6296 = vsel %vm3542, %v6183, %v6193
      %v6300 = vsel %vm3542, %v6184, %v6195
      %v6304 = vsel %vm3542, %v6185, %v6197
      %v6308 = vsel %vm3542, %v6206, %v6223
      %v6312 = vsel %vm3542, %v6207, %v6225
      %v6316 = vsel %vm3542, %v6208, %v6227
      %v6320 = vsel %vm3542, %v6209, %v6229
      %v6324 = vsel %vm3542, %v6230, %v6247
      %v6328 = vsel %vm3542, %v6231, %v6249
      %v6332 = vsel %vm3542, %v6232, %v6251
      %v6336 = vsel %vm3542, %v6233, %v6253
      %v6340 = vsel %vm3542, %v6262, %v6271
      %v6344 = vsel %vm3542, %v6263, %v6273
      %v6348 = vsel %vm3542, %v6264, %v6275
      %v6352 = vsel %vm3542, %v6265, %v6277
      %v6354 = vld [vmem:[%s7] sm:$0xf]
      %v6355 = vld [vmem:[%s7 + $0x4] sm:$0xf]
      %v6356 = vld [vmem:[%s7 + $0x8] sm:$0xf]
      %v6357 = vld [vmem:[%s7 + $0xc] sm:$0xf]
      %v6358 = vld [vmem:[%s7 + $0x10] sm:$0xf]
      %v6359 = vld [vmem:[%s7 + $0x14] sm:$0xf]
      %v6360 = vld [vmem:[%s7 + $0x18] sm:$0xf]
      %v6361 = vld [vmem:[%s7 + $0x1c] sm:$0xf]
      %v6362 = vld [vmem:[%s7 + $0x20] sm:$0xf]
      %v6363 = vld [vmem:[%s7 + $0x24] sm:$0xf]
      %v6364 = vld [vmem:[%s7 + $0x28] sm:$0xf]
      %v6365 = vld [vmem:[%s7 + $0x2c] sm:$0xf]
      %v6366 = vld [vmem:[%s7 + $0x30] sm:$0xf]
      %v6367 = vld [vmem:[%s7 + $0x34] sm:$0xf]
      %v6368 = vld [vmem:[%s7 + $0x38] sm:$0xf]
      %v6369 = vld [vmem:[%s7 + $0x3c] sm:$0xf]
      %v6370 = vld [vmem:[%s7 + $0x40] sm:$0xf]
      %v6371 = vld [vmem:[%s7 + $0x44] sm:$0xf]
      %v6372 = vld [vmem:[%s7 + $0x48] sm:$0xf]
      %v6373 = vld [vmem:[%s7 + $0x4c] sm:$0xf]
      %v6374 = vld [vmem:[%s7 + $0x50] sm:$0xf]
      %v6375 = vld [vmem:[%s7 + $0x54] sm:$0xf]
      %v6376 = vld [vmem:[%s7 + $0x58] sm:$0xf]
      %v6377 = vld [vmem:[%s7 + $0x5c] sm:$0xf]
      %v6378 = vld [vmem:[%s7 + $0x60] sm:$0xf]
      %v6379 = vld [vmem:[%s7 + $0x64] sm:$0xf]
      %v6380 = vld [vmem:[%s7 + $0x68] sm:$0xf]
      %v6381 = vld [vmem:[%s7 + $0x6c] sm:$0xf]
      %v6382 = vld [vmem:[%s7 + $0x70] sm:$0xf]
      %v6383 = vld [vmem:[%s7 + $0x74] sm:$0xf]
      %v6384 = vld [vmem:[%s7 + $0x78] sm:$0xf]
      %v6385 = vld [vmem:[%s7 + $0x7c] sm:$0xf]
      %v6386 = vld [vmem:[%s7 + $0x80] sm:$0xf]
      %v6387 = vld [vmem:[%s7 + $0x84] sm:$0xf]
      %v6388 = vld [vmem:[%s7 + $0x88] sm:$0xf]
      %v6389 = vld [vmem:[%s7 + $0x8c] sm:$0xf]
      %v6390 = vld [vmem:[%s7 + $0x90] sm:$0xf]
      %v6391 = vld [vmem:[%s7 + $0x94] sm:$0xf]
      %v6392 = vld [vmem:[%s7 + $0x98] sm:$0xf]
      %v6393 = vld [vmem:[%s7 + $0x9c] sm:$0xf]
      %v6394 = vld [vmem:[%s7 + $0xa0] sm:$0xf]
      %v6395 = vld [vmem:[%s7 + $0xa4] sm:$0xf]
      %v6396 = vld [vmem:[%s7 + $0xa8] sm:$0xf]
      %v6397 = vld [vmem:[%s7 + $0xac] sm:$0xf]
      %v6398 = vld [vmem:[%s7 + $0xb0] sm:$0xf]
      %v6399 = vld [vmem:[%s7 + $0xb4] sm:$0xf]
      %v6400 = vld [vmem:[%s7 + $0xb8] sm:$0xf]
      %v6401 = vld [vmem:[%s7 + $0xbc] sm:$0xf]
      %v6402 = vld [vmem:[%s7 + $0xc0] sm:$0xf]
      %v6403 = vld [vmem:[%s7 + $0xc4] sm:$0xf]
      %v6404 = vld [vmem:[%s7 + $0xc8] sm:$0xf]
      %v6405 = vld [vmem:[%s7 + $0xcc] sm:$0xf]
      %v6406 = vld [vmem:[%s7 + $0xd0] sm:$0xf]
      %v6407 = vld [vmem:[%s7 + $0xd4] sm:$0xf]
      %v6408 = vld [vmem:[%s7 + $0xd8] sm:$0xf]
      %v6409 = vld [vmem:[%s7 + $0xdc] sm:$0xf]
      %v6410 = vld [vmem:[%s7 + $0xe0] sm:$0xf]
      %v6411 = vld [vmem:[%s7 + $0xe4] sm:$0xf]
      %v6412 = vld [vmem:[%s7 + $0xe8] sm:$0xf]
      %v6413 = vld [vmem:[%s7 + $0xec] sm:$0xf]
      %v6414 = vld [vmem:[%s7 + $0xf0] sm:$0xf]
      %v6415 = vld [vmem:[%s7 + $0xf4] sm:$0xf]
      %v6416 = vld [vmem:[%s7 + $0xf8] sm:$0xf]
      %v6417 = vld [vmem:[%s7 + $0xfc] sm:$0xf]
      %v6418 = vld [vmem:[%s7 + $0x100] sm:$0xf]
      %v6419 = vld [vmem:[%s7 + $0x104] sm:$0xf]
      %v6420 = vld [vmem:[%s7 + $0x108] sm:$0xf]
      %v6421 = vld [vmem:[%s7 + $0x10c] sm:$0xf]
      %v6422 = vld [vmem:[%s7 + $0x110] sm:$0xf]
      %v6423 = vld [vmem:[%s7 + $0x114] sm:$0xf]
      %v6424 = vld [vmem:[%s7 + $0x118] sm:$0xf]
      %v6425 = vld [vmem:[%s7 + $0x11c] sm:$0xf]
      %v6426 = vld [vmem:[%s8] sm:$0x1]
      %v6428 = vlaneseq
      %v6429 = vshrl.u32 %v6428, 7
      %v6430 = vsub.s32 0, %v6429
      %v6431 = vrot.slane %v6426, %v6430
      %v6505 = vunpack.c.l.b16 %v6354
      %v6506 = vunpack.c.l.b16 %v6355
      %v6507 = vunpack.c.l.b16 %v6356
      %v6508 = vunpack.c.l.b16 %v6357
      %v6509 = vunpack.c.l.b16 %v6358
      %v6510 = vunpack.c.l.b16 %v6359
      %v6511 = vunpack.c.l.b16 %v6360
      %v6512 = vunpack.c.l.b16 %v6361
      %v6513 = vunpack.c.l.b16 %v6362
      %v6514 = vunpack.c.l.b16 %v6363
      %v6515 = vunpack.c.l.b16 %v6364
      %v6516 = vunpack.c.l.b16 %v6365
      %v6517 = vunpack.c.l.b16 %v6366
      %v6518 = vunpack.c.l.b16 %v6367
      %v6519 = vunpack.c.l.b16 %v6368
      %v6520 = vunpack.c.l.b16 %v6369
      %v6521 = vunpack.c.l.b16 %v6370
      %v6522 = vunpack.c.l.b16 %v6371
      %v6523 = vunpack.c.l.b16 %v6372
      %v6524 = vunpack.c.l.b16 %v6373
      %v6525 = vunpack.c.l.b16 %v6374
      %v6526 = vunpack.c.l.b16 %v6375
      %v6527 = vunpack.c.l.b16 %v6376
      %v6528 = vunpack.c.l.b16 %v6377
      %v6529 = vunpack.c.l.b16 %v6378
      %v6530 = vunpack.c.l.b16 %v6379
      %v6531 = vunpack.c.l.b16 %v6380
      %v6532 = vunpack.c.l.b16 %v6381
      %v6533 = vunpack.c.l.b16 %v6382
      %v6534 = vunpack.c.l.b16 %v6383
      %v6535 = vunpack.c.l.b16 %v6384
      %v6536 = vunpack.c.l.b16 %v6385
      %v6537 = vunpack.c.l.b16 %v6386
      %v6538 = vunpack.c.l.b16 %v6387
      %v6539 = vunpack.c.l.b16 %v6388
      %v6540 = vunpack.c.l.b16 %v6389
      %v6541 = vunpack.c.l.b16 %v6390
      %v6542 = vunpack.c.l.b16 %v6391
      %v6543 = vunpack.c.l.b16 %v6392
      %v6544 = vunpack.c.l.b16 %v6393
      %v6545 = vunpack.c.l.b16 %v6394
      %v6546 = vunpack.c.l.b16 %v6395
      %v6547 = vunpack.c.l.b16 %v6396
      %v6548 = vunpack.c.l.b16 %v6397
      %v6549 = vunpack.c.l.b16 %v6398
      %v6550 = vunpack.c.l.b16 %v6399
      %v6551 = vunpack.c.l.b16 %v6400
      %v6552 = vunpack.c.l.b16 %v6401
      %v6553 = vunpack.c.l.b16 %v6402
      %v6554 = vunpack.c.l.b16 %v6403
      %v6555 = vunpack.c.l.b16 %v6404
      %v6556 = vunpack.c.l.b16 %v6405
      %v6557 = vunpack.c.l.b16 %v6406
      %v6558 = vunpack.c.l.b16 %v6407
      %v6559 = vunpack.c.l.b16 %v6408
      %v6560 = vunpack.c.l.b16 %v6409
      %v6561 = vunpack.c.l.b16 %v6410
      %v6562 = vunpack.c.l.b16 %v6411
      %v6563 = vunpack.c.l.b16 %v6412
      %v6564 = vunpack.c.l.b16 %v6413
      %v6565 = vunpack.c.l.b16 %v6414
      %v6566 = vunpack.c.l.b16 %v6415
      %v6567 = vunpack.c.l.b16 %v6416
      %v6568 = vunpack.c.l.b16 %v6417
      %v6569 = vunpack.c.l.b16 %v6418
      %v6570 = vunpack.c.l.b16 %v6419
      %v6571 = vunpack.c.l.b16 %v6420
      %v6572 = vunpack.c.l.b16 %v6421
      %v6573 = vunpack.c.l.b16 %v6422
      %v6574 = vunpack.c.l.b16 %v6423
      %v6575 = vunpack.c.l.b16 %v6424
      %v6576 = vunpack.c.l.b16 %v6425
      %v6577 = vpack.c.b16 %v6506, %v6505
      %v6578 = vpack.c.b16 %v6508, %v6507
      %v6579 = vpack.c.b16 %v6510, %v6509
      %v6580 = vpack.c.b16 %v6512, %v6511
      %v6581 = vpack.c.b16 %v6514, %v6513
      %v6582 = vpack.c.b16 %v6516, %v6515
      %v6583 = vpack.c.b16 %v6518, %v6517
      %v6584 = vpack.c.b16 %v6520, %v6519
      %v6585 = vpack.c.b16 %v6522, %v6521
      %v6586 = vpack.c.b16 %v6524, %v6523
      %v6587 = vpack.c.b16 %v6526, %v6525
      %v6588 = vpack.c.b16 %v6528, %v6527
      %v6589 = vpack.c.b16 %v6530, %v6529
      %v6590 = vpack.c.b16 %v6532, %v6531
      %v6591 = vpack.c.b16 %v6534, %v6533
      %v6592 = vpack.c.b16 %v6536, %v6535
      %v6593 = vpack.c.b16 %v6538, %v6537
      %v6594 = vpack.c.b16 %v6540, %v6539
      %v6595 = vpack.c.b16 %v6542, %v6541
      %v6596 = vpack.c.b16 %v6544, %v6543
      %v6597 = vpack.c.b16 %v6546, %v6545
      %v6598 = vpack.c.b16 %v6548, %v6547
      %v6599 = vpack.c.b16 %v6550, %v6549
      %v6600 = vpack.c.b16 %v6552, %v6551
      %v6601 = vpack.c.b16 %v6554, %v6553
      %v6602 = vpack.c.b16 %v6556, %v6555
      %v6603 = vpack.c.b16 %v6558, %v6557
      %v6604 = vpack.c.b16 %v6560, %v6559
      %v6605 = vpack.c.b16 %v6562, %v6561
      %v6606 = vpack.c.b16 %v6564, %v6563
      %v6607 = vpack.c.b16 %v6566, %v6565
      %v6608 = vpack.c.b16 %v6568, %v6567
      %v6609 = vpack.c.b16 %v6570, %v6569
      %v6610 = vpack.c.b16 %v6572, %v6571
      %v6611 = vpack.c.b16 %v6574, %v6573
      %v6612 = vpack.c.b16 %v6576, %v6575
      %v6650 = vsel %vm3542, %v6286, 0
      %v6653 = vsel %vm3542, %v6287, 0
      %v6656 = vsel %vm3542, %v6288, 0
      %v6659 = vsel %vm3542, %v6289, 0
      %6661 = vmatprep.subr.bf16.mxu0 0
      %6662 = vmatpush1.bf16.msra.mxu0 %v6577
      %6663 = vmatprep.subr.bf16.mxu0 0
      %6664 = vmatpush1.bf16.msra.mxu0 %v6578
      %6665 = vmatprep.subr.bf16.mxu0 0
      %6666 = vmatpush1.bf16.msra.mxu0 %v6579
      %6667 = vmatprep.subr.bf16.mxu0 0
      %6668 = vmatpush1.bf16.msra.mxu0 %v6580
      %6669 = vmatprep.subr.bf16.mxu0 0
      %6670 = vmatpush1.bf16.msra.mxu0 %v6581
      %6671 = vmatprep.subr.bf16.mxu0 0
      %6672 = vmatpush1.bf16.msra.mxu0 %v6582
      %6673 = vmatprep.subr.bf16.mxu0 0
      %6674 = vmatpush1.bf16.msra.mxu0 %v6583
      %6675 = vmatprep.subr.bf16.mxu0 0
      %6676 = vmatpush1.bf16.msra.mxu0 %v6584
      %6677 = vmatprep.subr.bf16.mxu0 0
      %6678 = vmatpush1.bf16.msra.mxu0 %v6585
      %6679 = vmatprep.subr.bf16.mxu0 0
      %6680 = vmatpush1.bf16.msra.mxu0 %v6586
      %6681 = vmatprep.subr.bf16.mxu0 0
      %6682 = vmatpush1.bf16.msra.mxu0 %v6587
      %6683 = vmatprep.subr.bf16.mxu0 0
      %6684 = vmatpush1.bf16.msra.mxu0 %v6588
      %6685 = vmatprep.subr.bf16.mxu0 0
      %6686 = vmatpush1.bf16.msra.mxu0 %v6589
      %6687 = vmatprep.subr.bf16.mxu0 0
      %6688 = vmatpush1.bf16.msra.mxu0 %v6590
      %6689 = vmatprep.subr.bf16.mxu0 0
      %6690 = vmatpush1.bf16.msra.mxu0 %v6591
      %6691 = vmatprep.subr.bf16.mxu0 0
      %6692 = vmatpush1.bf16.msra.mxu0 %v6592
      %6693 = vmatprep.mubr.bf16.mxu0 %v6308
      %6694 = vmatmul.mubr.bf16.gmra.mrb[0].mxu0 %v6292
      %v6695 = vpop.f32.mrb[0].mxu0
      %v6696 = vadd.f32 %v6431, %v6695
      %v6697 = vpop.f32.mrb[0].mxu0
      %v6698 = vpop.f32.mrb[0].mxu0
      %v6699 = vadd.f32 %v6431, %v6698
      %v6700 = vpop.f32.mrb[0].mxu0
      %6701 = vmatprep.mubr.bf16.mxu0 %v6312
      %6702 = vmatmul.mubr.bf16.gmra.mrb[0].mxu0 %v6296
      %v6703 = vpop.f32.mrb[0].mxu0
      %v6704 = vadd.f32 %v6431, %v6703
      %v6705 = vpop.f32.mrb[0].mxu0
      %v6706 = vpop.f32.mrb[0].mxu0
      %v6707 = vadd.f32 %v6431, %v6706
      %v6708 = vpop.f32.mrb[0].mxu0
      %6709 = vmatprep.mubr.bf16.mxu0 %v6316
      %6710 = vmatmul.mubr.bf16.gmra.mrb[0].mxu0 %v6300
      %v6711 = vpop.f32.mrb[0].mxu0
      %v6712 = vadd.f32 %v6431, %v6711
      %v6713 = vpop.f32.mrb[0].mxu0
      %v6714 = vpop.f32.mrb[0].mxu0
      %v6715 = vadd.f32 %v6431, %v6714
      %v6716 = vpop.f32.mrb[0].mxu0
      %6717 = vmatprep.mubr.bf16.mxu0 %v6320
      %6718 = vmatmul.mubr.bf16.gmra.mrb[0].mxu0 %v6304
      %v6719 = vpop.f32.mrb[0].mxu0
      %v6720 = vadd.f32 %v6431, %v6719
      %v6721 = vpop.f32.mrb[0].mxu0
      %v6722 = vpop.f32.mrb[0].mxu0
      %v6723 = vadd.f32 %v6431, %v6722
      %v6724 = vpop.f32.mrb[0].mxu0
      %6725 = vdwg.mxu0
      %6726 = vmatprep.subr.bf16.mxu0 0
      %6727 = vmatpush1.bf16.msra.mxu0 %v6593
      %6728 = vmatprep.subr.bf16.mxu0 0
      %6729 = vmatpush1.bf16.msra.mxu0 %v6594
      %6730 = vmatprep.subr.bf16.mxu0 0
      %6731 = vmatpush1.bf16.msra.mxu0 %v6595
      %6732 = vmatprep.subr.bf16.mxu0 0
      %6733 = vmatpush1.bf16.msra.mxu0 %v6596
      %6734 = vmatprep.subr.bf16.mxu0 0
      %6735 = vmatpush1.bf16.msra.mxu0 %v6597
      %6736 = vmatprep.subr.bf16.mxu0 0
      %6737 = vmatpush1.bf16.msra.mxu0 %v6598
      %6738 = vmatprep.subr.bf16.mxu0 0
      %6739 = vmatpush1.bf16.msra.mxu0 %v6599
      %6740 = vmatprep.subr.bf16.mxu0 0
      %6741 = vmatpush1.bf16.msra.mxu0 %v6600
      %6742 = vmatprep.subr.bf16.mxu0 0
      %6743 = vmatpush1.bf16.msra.mxu0 %v6601
      %6744 = vmatprep.subr.bf16.mxu0 0
      %6745 = vmatpush1.bf16.msra.mxu0 %v6602
      %6746 = vmatprep.subr.bf16.mxu0 0
      %6747 = vmatpush1.bf16.msra.mxu0 %v6603
      %6748 = vmatprep.subr.bf16.mxu0 0
      %6749 = vmatpush1.bf16.msra.mxu0 %v6604
      %6750 = vmatprep.subr.bf16.mxu0 0
      %6751 = vmatpush1.bf16.msra.mxu0 %v6605
      %6752 = vmatprep.subr.bf16.mxu0 0
      %6753 = vmatpush1.bf16.msra.mxu0 %v6606
      %6754 = vmatprep.subr.bf16.mxu0 0
      %6755 = vmatpush1.bf16.msra.mxu0 %v6607
      %6756 = vmatprep.subr.bf16.mxu0 0
      %6757 = vmatpush1.bf16.msra.mxu0 %v6608
      %6758 = vmatprep.mubr.bf16.mxu0 %v6340
      %6759 = vmatmul.mubr.bf16.gmra.mrb[0].mxu0 %v6324
      %v6760 = vpop.f32.mrb[0].mxu0
      %v6761 = vadd.f32 %v6696, %v6760
      %v6762 = vpop.f32.mrb[0].mxu0
      %v6763 = vpop.f32.mrb[0].mxu0
      %v6764 = vadd.f32 %v6699, %v6763
      %v6765 = vpop.f32.mrb[0].mxu0
      %6766 = vmatprep.mubr.bf16.mxu0 %v6344
      %6767 = vmatmul.mubr.bf16.gmra.mrb[0].mxu0 %v6328
      %v6768 = vpop.f32.mrb[0].mxu0
      %v6769 = vadd.f32 %v6704, %v6768
      %v6770 = vpop.f32.mrb[0].mxu0
      %v6771 = vpop.f32.mrb[0].mxu0
      %v6772 = vadd.f32 %v6707, %v6771
      %v6773 = vpop.f32.mrb[0].mxu0
      %6774 = vmatprep.mubr.bf16.mxu0 %v6348
      %6775 = vmatmul.mubr.bf16.gmra.mrb[0].mxu0 %v6332
      %v6776 = vpop.f32.mrb[0].mxu0
      %v6777 = vadd.f32 %v6712, %v6776
      %v6778 = vpop.f32.mrb[0].mxu0
      %v6779 = vpop.f32.mrb[0].mxu0
      %v6780 = vadd.f32 %v6715, %v6779
      %v6781 = vpop.f32.mrb[0].mxu0
      %6782 = vmatprep.mubr.bf16.mxu0 %v6352
      %6783 = vmatmul.mubr.bf16.gmra.mrb[0].mxu0 %v6336
      %v6784 = vpop.f32.mrb[0].mxu0
      %v6785 = vadd.f32 %v6720, %v6784
      %v6786 = vpop.f32.mrb[0].mxu0
      %v6787 = vpop.f32.mrb[0].mxu0
      %v6788 = vadd.f32 %v6723, %v6787
      %v6789 = vpop.f32.mrb[0].mxu0
      %6790 = vdwg.mxu0
      %6791 = vmatprep.subr.bf16.mxu0 0
      %6792 = vmatpush1.bf16.msra.mxu0 %v6609
      %6793 = vmatprep.subr.bf16.mxu0 0
      %6794 = vmatpush1.bf16.msra.mxu0 %v6610
      %6795 = vmatprep.subr.bf16.mxu0 0
      %6796 = vmatpush1.bf16.msra.mxu0 %v6611
      %6797 = vmatprep.subr.bf16.mxu0 0
      %6798 = vmatpush1.bf16.msra.mxu0 %v6612
      %6799 = vmatprep.subr.bf16.mxu0 0
      %6800 = vmatpush1.bf16.msra.mxu0 0
      %6801 = vmatprep.subr.bf16.mxu0 0
      %6802 = vmatpush1.bf16.msra.mxu0 0
      %6803 = vmatprep.subr.bf16.mxu0 0
      %6804 = vmatpush1.bf16.msra.mxu0 0
      %6805 = vmatprep.subr.bf16.mxu0 0
      %6806 = vmatpush1.bf16.msra.mxu0 0
      %6807 = vmatprep.subr.bf16.mxu0 0
      %6808 = vmatpush1.bf16.msra.mxu0 0
      %6809 = vmatprep.subr.bf16.mxu0 0
      %6810 = vmatpush1.bf16.msra.mxu0 0
      %6811 = vmatprep.subr.bf16.mxu0 0
      %6812 = vmatpush1.bf16.msra.mxu0 0
      %6813 = vmatprep.subr.bf16.mxu0 0
      %6814 = vmatpush1.bf16.msra.mxu0 0
      %6815 = vmatprep.subr.bf16.mxu0 0
      %6816 = vmatpush1.bf16.msra.mxu0 0
      %6817 = vmatprep.subr.bf16.mxu0 0
      %6818 = vmatpush1.bf16.msra.mxu0 0
      %6819 = vmatprep.subr.bf16.mxu0 0
      %6820 = vmatpush1.bf16.msra.mxu0 0
      %6821 = vmatprep.subr.bf16.mxu0 0
      %6822 = vmatpush1.bf16.msra.mxu0 0
      %6823 = vmatprep.mubr.bf16.mxu0 0
      %6824 = vmatmul.mubr.bf16.gmra.mrb[0].mxu0 %v6650
      %v6825 = vpop.f32.mrb[0].mxu0
      %v6826 = vadd.f32 %v6761, %v6825
      %v6827 = vpop.f32.mrb[0].mxu0
      %v6828 = vpop.f32.mrb[0].mxu0
      %v6829 = vadd.f32 %v6764, %v6828
      %v6830 = vpop.f32.mrb[0].mxu0
      %6831 = vmatprep.mubr.bf16.mxu0 0
      %6832 = vmatmul.mubr.bf16.gmra.mrb[0].mxu0 %v6653
      %v6833 = vpop.f32.mrb[0].mxu0
      %v6834 = vadd.f32 %v6769, %v6833
      %v6835 = vpop.f32.mrb[0].mxu0
      %v6836 = vpop.f32.mrb[0].mxu0
      %v6837 = vadd.f32 %v6772, %v6836
      %v6838 = vpop.f32.mrb[0].mxu0
      %6839 = vmatprep.mubr.bf16.mxu0 0
      %6840 = vmatmul.mubr.bf16.gmra.mrb[0].mxu0 %v6656
      %v6841 = vpop.f32.mrb[0].mxu0
      %v6842 = vadd.f32 %v6777, %v6841
      %v6843 = vpop.f32.mrb[0].mxu0
      %v6844 = vpop.f32.mrb[0].mxu0
      %v6845 = vadd.f32 %v6780, %v6844
      %v6846 = vpop.f32.mrb[0].mxu0
      %6847 = vmatprep.mubr.bf16.mxu0 0
      %6848 = vmatmul.mubr.bf16.gmra.mrb[0].mxu0 %v6659
      %v6849 = vpop.f32.mrb[0].mxu0
      %v6850 = vadd.f32 %v6785, %v6849
      %v6851 = vpop.f32.mrb[0].mxu0
      %v6852 = vpop.f32.mrb[0].mxu0
      %v6853 = vadd.f32 %v6788, %v6852
      %v6854 = vpop.f32.mrb[0].mxu0
      %6855 = vdwg.mxu0
      %v6856 = vmax.f32 %v6826, 0.0
      %v6857 = vmax.f32 %v6829, 0.0
      %v6858 = vmax.f32 %v6834, 0.0
      %v6859 = vmax.f32 %v6837, 0.0
      %v6860 = vmax.f32 %v6842, 0.0
      %v6861 = vmax.f32 %v6845, 0.0
      %v6862 = vmax.f32 %v6850, 0.0
      %v6863 = vmax.f32 %v6853, 0.0
      %6864 = vst.msk [vmem:[#allocation3 + $0x7] sm:$0xff] %vm3542, 0.0
      %vm6865 = vcmask 517120
      %6866 = vst.msk [vmem:[#allocation3 + $0xf] sm:$0x3] %vm6865, 0.0
      %s6867 = scalar_lea.vmem [#allocation3], 288
      %6868 = vst.msk [vmem:[%s6867 + $0x7] sm:$0xff] %vm3542, 0.0
      %6869 = vst.msk [vmem:[%s6867 + $0xf] sm:$0x3] %vm6865, 0.0
      %vm6870 = vcmask 516096
      %6871 = vst.msk [vmem:[%s4313 + $0x7] sm:$0x1] %vm6870, 0.0
      %6872 = vst.msk [vmem:[%s4313 + $0x27] sm:$0x1] %vm6870, 0.0
      %6873 = vst.msk [vmem:[%s4313 + $0x47] sm:$0x1] %vm6870, 0.0
      %6874 = vst.msk [vmem:[%s4313 + $0x67] sm:$0x1] %vm6870, 0.0
      %6875 = vst.msk [vmem:[%s4313 + $0x87] sm:$0x1] %vm6870, 0.0
      %6876 = vst.msk [vmem:[%s4313 + $0xa7] sm:$0x1] %vm6870, 0.0
      %6877 = vst.msk [vmem:[%s4313 + $0xc7] sm:$0x1] %vm6870, 0.0
      %6878 = vst.msk [vmem:[%s4313 + $0xe7] sm:$0x1] %vm6870, 0.0
      %6879 = vst.msk [vmem:[%s4313 + $0x10] sm:$0x1] %vm6870, 0.0
      %6880 = vst.msk [vmem:[%s4313 + $0x30] sm:$0x1] %vm6870, 0.0
      %6881 = vst.msk [vmem:[%s4313 + $0x50] sm:$0x1] %vm6870, 0.0
      %6882 = vst.msk [vmem:[%s4313 + $0x70] sm:$0x1] %vm6870, 0.0
      %6883 = vst.msk [vmem:[%s4313 + $0x90] sm:$0x1] %vm6870, 0.0
      %6884 = vst.msk [vmem:[%s4313 + $0xb0] sm:$0x1] %vm6870, 0.0
      %6885 = vst.msk [vmem:[%s4313 + $0xd0] sm:$0x1] %vm6870, 0.0
      %6886 = vst.msk [vmem:[%s4313 + $0xf0] sm:$0x1] %vm6870, 0.0
      %6887 = vst.msk [vmem:[%s4313 + $0x8] sm:$0xff] %vm3542, %v6856
      %6888 = vst.msk [vmem:[%s4313 + $0x28] sm:$0xff] %vm3542, %v6857
      %6889 = vst.msk [vmem:[%s4313 + $0x48] sm:$0xff] %vm3542, %v6858
      %6890 = vst.msk [vmem:[%s4313 + $0x68] sm:$0xff] %vm3542, %v6859
      %6891 = vst.msk [vmem:[%s4313 + $0x88] sm:$0xff] %vm3542, %v6860
      %6892 = vst.msk [vmem:[%s4313 + $0xa8] sm:$0xff] %vm3542, %v6861
      %6893 = vst.msk [vmem:[%s4313 + $0xc8] sm:$0xff] %vm3542, %v6862
      %6894 = vst.msk [vmem:[%s4313 + $0xe8] sm:$0xff] %vm3542, %v6863
      %v6895 = vld [vmem:[%s4379] ss:$2 sm:$0xf]
      %v6896 = vld [vmem:[%s4381] ss:$2 sm:$0xf]
      %v6897 = vld [vmem:[%s4383] ss:$2 sm:$0xf]
      %v6898 = vld [vmem:[%s4385] ss:$2 sm:$0xf]
      %v6899 = vld [vmem:[%s4395] ss:$2 sm:$0xf]
      %v6900 = vld [vmem:[%s4397] ss:$2 sm:$0xf]
      %v6901 = vld [vmem:[%s4399] ss:$2 sm:$0xf]
      %v6902 = vld [vmem:[%s4401] ss:$2 sm:$0xf]
      %v6903 = vld [vmem:[%s4411] ss:$2 sm:$0xf]
      %v6904 = vld [vmem:[%s4413] ss:$2 sm:$0xf]
      %v6905 = vld [vmem:[%s4415] ss:$2 sm:$0xf]
      %v6906 = vld [vmem:[%s4417] ss:$2 sm:$0xf]
      %v6907 = vld [vmem:[%s4427] ss:$2 sm:$0xf]
      %v6908 = vld [vmem:[%s4429] ss:$2 sm:$0xf]
      %v6909 = vld [vmem:[%s4431] ss:$2 sm:$0xf]
      %v6910 = vld [vmem:[%s4433] ss:$2 sm:$0xf]
      %v6911 = vld [vmem:[%s4443] ss:$2 sm:$0xf]
      %v6912 = vld [vmem:[%s4445] ss:$2 sm:$0xf]
      %v6913 = vld [vmem:[%s4447] ss:$2 sm:$0xf]
      %v6914 = vld [vmem:[%s4449] ss:$2 sm:$0xf]
      %v6915 = vld [vmem:[%s4459] ss:$2 sm:$0xf]
      %v6916 = vld [vmem:[%s4461] ss:$2 sm:$0xf]
      %v6917 = vld [vmem:[%s4463] ss:$2 sm:$0xf]
      %v6918 = vld [vmem:[%s4465] ss:$2 sm:$0xf]
      %v6919 = vld [vmem:[%s4476] ss:$2 sm:$0xf]
      %v6920 = vld [vmem:[%s4478] ss:$2 sm:$0xf]
      %v6921 = vld [vmem:[%s4480] ss:$2 sm:$0xf]
      %v6922 = vld [vmem:[%s4482] ss:$2 sm:$0xf]
      %v6923 = vld [vmem:[%s4492] ss:$2 sm:$0xf]
      %v6924 = vld [vmem:[%s4494] ss:$2 sm:$0xf]
      %v6925 = vld [vmem:[%s4496] ss:$2 sm:$0xf]
      %v6926 = vld [vmem:[%s4498] ss:$2 sm:$0xf]
      %v6927 = vld [vmem:[%s4508] ss:$2 sm:$0xf]
      %v6928 = vld [vmem:[%s4510] ss:$2 sm:$0xf]
      %v6929 = vld [vmem:[%s4512] ss:$2 sm:$0xf]
      %v6930 = vld [vmem:[%s4514] ss:$2 sm:$0xf]
      %v6935 = vcombine.low %v6895, %v6896
      %v6936 = vcombine.low %v6897, %v6898
      %v6943 = vcombine.low %v6899, %v6900
      %v6944 = vcombine.low %v6901, %v6902
      %6945 = vrot.lane.b32.xlu0 %v6943, 64
      %v6946 = vpop.permute.xlu0 %6945
      %6947 = vrot.lane.b32.xlu0 %v6944, 64
      %v6948 = vpop.permute.xlu0 %6947
      %v6955 = vcombine.low %v6903, %v6904
      %v6956 = vcombine.low %v6905, %v6906
      %v6963 = vcombine.low %v6907, %v6908
      %v6964 = vcombine.low %v6909, %v6910
      %6965 = vrot.lane.b32.xlu0 %v6963, 64
      %v6966 = vpop.permute.xlu0 %6965
      %6967 = vrot.lane.b32.xlu0 %v6964, 64
      %v6968 = vpop.permute.xlu0 %6967
      %v6975 = vcombine.low %v6911, %v6912
      %v6976 = vcombine.low %v6913, %v6914
      %v6983 = vcombine.low %v6915, %v6916
      %v6984 = vcombine.low %v6917, %v6918
      %6985 = vrot.lane.b32.xlu0 %v6983, 64
      %v6986 = vpop.permute.xlu0 %6985
      %6987 = vrot.lane.b32.xlu0 %v6984, 64
      %v6988 = vpop.permute.xlu0 %6987
      %v6995 = vcombine.low %v6919, %v6920
      %v6996 = vcombine.low %v6921, %v6922
      %v7003 = vcombine.low %v6923, %v6924
      %v7004 = vcombine.low %v6925, %v6926
      %7005 = vrot.lane.b32.xlu0 %v7003, 64
      %v7006 = vpop.permute.xlu0 %7005
      %7007 = vrot.lane.b32.xlu0 %v7004, 64
      %v7008 = vpop.permute.xlu0 %7007
      %v7015 = vcombine.low %v6927, %v6928
      %v7016 = vcombine.low %v6929, %v6930
      %v7019 = vsel %vm3542, %v6935, %v6946
      %v7020 = vsel %vm3542, %v6936, %v6948
      %v7021 = vsel %vm3542, %v6955, %v6966
      %v7022 = vsel %vm3542, %v6956, %v6968
      %v7023 = vsel %vm3542, %v6975, %v6986
      %v7024 = vsel %vm3542, %v6976, %v6988
      %v7025 = vsel %vm3542, %v6995, %v7006
      %v7026 = vsel %vm3542, %v6996, %v7008
      %v7027 = vpack.c.bf16 %v7020, %v7019
      %v7028 = vpack.c.bf16 %v7022, %v7021
      %v7029 = vpack.c.bf16 %v7024, %v7023
      %v7030 = vpack.c.bf16 %v7026, %v7025
      %v7031 = vpack.c.bf16 %v7016, %v7015
      %v7032 = vld [vmem:[%s9] sm:$0xf]
      %v7033 = vld [vmem:[%s9 + $0x4] sm:$0xf]
      %v7034 = vld [vmem:[%s9 + $0x8] sm:$0xf]
      %v7035 = vld [vmem:[%s9 + $0xc] sm:$0xf]
      %v7036 = vld [vmem:[%s9 + $0x10] sm:$0xf]
      %v7037 = vld [vmem:[%s9 + $0x14] sm:$0xf]
      %v7038 = vld [vmem:[%s9 + $0x18] sm:$0xf]
      %v7039 = vld [vmem:[%s9 + $0x1c] sm:$0xf]
      %v7040 = vld [vmem:[%s9 + $0x20] sm:$0xf]
      %v7041 = vld [vmem:[%s9 + $0x24] sm:$0xf]
      %v7042 = vld [vmem:[%s9 + $0x28] sm:$0xf]
      %v7043 = vld [vmem:[%s9 + $0x2c] sm:$0xf]
      %v7044 = vld [vmem:[%s9 + $0x30] sm:$0xf]
      %v7045 = vld [vmem:[%s9 + $0x34] sm:$0xf]
      %v7046 = vld [vmem:[%s9 + $0x38] sm:$0xf]
      %v7047 = vld [vmem:[%s9 + $0x3c] sm:$0xf]
      %v7048 = vld [vmem:[%s9 + $0x40] sm:$0xf]
      %v7049 = vld [vmem:[%s9 + $0x44] sm:$0xf]
      %v7050 = vld [vmem:[%s9 + $0x48] sm:$0xf]
      %v7051 = vld [vmem:[%s9 + $0x4c] sm:$0xf]
      %v7052 = vld [vmem:[%s9 + $0x50] sm:$0xf]
      %v7053 = vld [vmem:[%s9 + $0x54] sm:$0xf]
      %v7054 = vld [vmem:[%s9 + $0x58] sm:$0xf]
      %v7055 = vld [vmem:[%s9 + $0x5c] sm:$0xf]
      %v7056 = vld [vmem:[%s9 + $0x60] sm:$0xf]
      %v7057 = vld [vmem:[%s9 + $0x64] sm:$0xf]
      %v7058 = vld [vmem:[%s9 + $0x68] sm:$0xf]
      %v7059 = vld [vmem:[%s9 + $0x6c] sm:$0xf]
      %v7060 = vld [vmem:[%s9 + $0x70] sm:$0xf]
      %v7061 = vld [vmem:[%s9 + $0x74] sm:$0xf]
      %v7062 = vld [vmem:[%s9 + $0x78] sm:$0xf]
      %v7063 = vld [vmem:[%s9 + $0x7c] sm:$0xf]
      %v7064 = vld [vmem:[%s9 + $0x80] sm:$0xf]
      %v7065 = vld [vmem:[%s9 + $0x84] sm:$0xf]
      %v7066 = vld [vmem:[%s9 + $0x88] sm:$0xf]
      %v7067 = vld [vmem:[%s9 + $0x8c] sm:$0xf]
      %v7068 = vld [vmem:[%s9 + $0x90] sm:$0xf]
      %v7069 = vld [vmem:[%s9 + $0x94] sm:$0xf]
      %v7070 = vld [vmem:[%s9 + $0x98] sm:$0xf]
      %v7071 = vld [vmem:[%s9 + $0x9c] sm:$0xf]
      %v7072 = vld [vmem:[%s9 + $0xa0] sm:$0xf]
      %v7073 = vld [vmem:[%s9 + $0xa4] sm:$0xf]
      %v7074 = vld [vmem:[%s9 + $0xa8] sm:$0xf]
      %v7075 = vld [vmem:[%s9 + $0xac] sm:$0xf]
      %v7076 = vld [vmem:[%s9 + $0xb0] sm:$0xf]
      %v7077 = vld [vmem:[%s9 + $0xb4] sm:$0xf]
      %v7078 = vld [vmem:[%s9 + $0xb8] sm:$0xf]
      %v7079 = vld [vmem:[%s9 + $0xbc] sm:$0xf]
      %v7080 = vld [vmem:[%s9 + $0xc0] sm:$0xf]
      %v7081 = vld [vmem:[%s9 + $0xc4] sm:$0xf]
      %v7082 = vld [vmem:[%s9 + $0xc8] sm:$0xf]
      %v7083 = vld [vmem:[%s9 + $0xcc] sm:$0xf]
      %v7084 = vld [vmem:[%s9 + $0xd0] sm:$0xf]
      %v7085 = vld [vmem:[%s9 + $0xd4] sm:$0xf]
      %v7086 = vld [vmem:[%s9 + $0xd8] sm:$0xf]
      %v7087 = vld [vmem:[%s9 + $0xdc] sm:$0xf]
      %v7088 = vld [vmem:[%s9 + $0xe0] sm:$0xf]
      %v7089 = vld [vmem:[%s9 + $0xe4] sm:$0xf]
      %v7090 = vld [vmem:[%s9 + $0xe8] sm:$0xf]
      %v7091 = vld [vmem:[%s9 + $0xec] sm:$0xf]
      %v7092 = vld [vmem:[%s9 + $0xf0] sm:$0xf]
      %v7093 = vld [vmem:[%s9 + $0xf4] sm:$0xf]
      %v7094 = vld [vmem:[%s9 + $0xf8] sm:$0xf]
      %v7095 = vld [vmem:[%s9 + $0xfc] sm:$0xf]
      %v7096 = vld [vmem:[%s9 + $0x100] sm:$0xf]
      %v7097 = vld [vmem:[%s9 + $0x104] sm:$0xf]
      %v7098 = vld [vmem:[%s9 + $0x108] sm:$0xf]
      %v7099 = vld [vmem:[%s9 + $0x10c] sm:$0xf]
      %v7100 = vld [vmem:[%s9 + $0x110] sm:$0xf]
      %v7101 = vld [vmem:[%s9 + $0x114] sm:$0xf]
      %v7102 = vld [vmem:[%s9 + $0x118] sm:$0xf]
      %v7103 = vld [vmem:[%s9 + $0x11c] sm:$0xf]
      %v7104 = vld [vmem:[%s10] sm:$0x1]
      %v7106 = vlaneseq
      %v7107 = vshrl.u32 %v7106, 7
      %v7108 = vsub.s32 0, %v7107
      %v7109 = vrot.slane %v7104, %v7108
      %v7183 = vunpack.c.l.b16 %v7032
      %v7184 = vunpack.c.l.b16 %v7033
      %v7185 = vunpack.c.l.b16 %v7034
      %v7186 = vunpack.c.l.b16 %v7035
      %v7187 = vunpack.c.l.b16 %v7036
      %v7188 = vunpack.c.l.b16 %v7037
      %v7189 = vunpack.c.l.b16 %v7038
      %v7190 = vunpack.c.l.b16 %v7039
      %v7191 = vunpack.c.l.b16 %v7040
      %v7192 = vunpack.c.l.b16 %v7041
      %v7193 = vunpack.c.l.b16 %v7042
      %v7194 = vunpack.c.l.b16 %v7043
      %v7195 = vunpack.c.l.b16 %v7044
      %v7196 = vunpack.c.l.b16 %v7045
      %v7197 = vunpack.c.l.b16 %v7046
      %v7198 = vunpack.c.l.b16 %v7047
      %v7199 = vunpack.c.l.b16 %v7048
      %v7200 = vunpack.c.l.b16 %v7049
      %v7201 = vunpack.c.l.b16 %v7050
      %v7202 = vunpack.c.l.b16 %v7051
      %v7203 = vunpack.c.l.b16 %v7052
      %v7204 = vunpack.c.l.b16 %v7053
      %v7205 = vunpack.c.l.b16 %v7054
      %v7206 = vunpack.c.l.b16 %v7055
      %v7207 = vunpack.c.l.b16 %v7056
      %v7208 = vunpack.c.l.b16 %v7057
      %v7209 = vunpack.c.l.b16 %v7058
      %v7210 = vunpack.c.l.b16 %v7059
      %v7211 = vunpack.c.l.b16 %v7060
      %v7212 = vunpack.c.l.b16 %v7061
      %v7213 = vunpack.c.l.b16 %v7062
      %v7214 = vunpack.c.l.b16 %v7063
      %v7215 = vunpack.c.l.b16 %v7064
      %v7216 = vunpack.c.l.b16 %v7065
      %v7217 = vunpack.c.l.b16 %v7066
      %v7218 = vunpack.c.l.b16 %v7067
      %v7219 = vunpack.c.l.b16 %v7068
      %v7220 = vunpack.c.l.b16 %v7069
      %v7221 = vunpack.c.l.b16 %v7070
      %v7222 = vunpack.c.l.b16 %v7071
      %v7223 = vunpack.c.l.b16 %v7072
      %v7224 = vunpack.c.l.b16 %v7073
      %v7225 = vunpack.c.l.b16 %v7074
      %v7226 = vunpack.c.l.b16 %v7075
      %v7227 = vunpack.c.l.b16 %v7076
      %v7228 = vunpack.c.l.b16 %v7077
      %v7229 = vunpack.c.l.b16 %v7078
      %v7230 = vunpack.c.l.b16 %v7079
      %v7231 = vunpack.c.l.b16 %v7080
      %v7232 = vunpack.c.l.b16 %v7081
      %v7233 = vunpack.c.l.b16 %v7082
      %v7234 = vunpack.c.l.b16 %v7083
      %v7235 = vunpack.c.l.b16 %v7084
      %v7236 = vunpack.c.l.b16 %v7085
      %v7237 = vunpack.c.l.b16 %v7086
      %v7238 = vunpack.c.l.b16 %v7087
      %v7239 = vunpack.c.l.b16 %v7088
      %v7240 = vunpack.c.l.b16 %v7089
      %v7241 = vunpack.c.l.b16 %v7090
      %v7242 = vunpack.c.l.b16 %v7091
      %v7243 = vunpack.c.l.b16 %v7092
      %v7244 = vunpack.c.l.b16 %v7093
      %v7245 = vunpack.c.l.b16 %v7094
      %v7246 = vunpack.c.l.b16 %v7095
      %v7247 = vunpack.c.l.b16 %v7096
      %v7248 = vunpack.c.l.b16 %v7097
      %v7249 = vunpack.c.l.b16 %v7098
      %v7250 = vunpack.c.l.b16 %v7099
      %v7251 = vunpack.c.l.b16 %v7100
      %v7252 = vunpack.c.l.b16 %v7101
      %v7253 = vunpack.c.l.b16 %v7102
      %v7254 = vunpack.c.l.b16 %v7103
      %v7255 = vpack.c.b16 %v7184, %v7183
      %v7256 = vpack.c.b16 %v7186, %v7185
      %v7257 = vpack.c.b16 %v7188, %v7187
      %v7258 = vpack.c.b16 %v7190, %v7189
      %v7259 = vpack.c.b16 %v7192, %v7191
      %v7260 = vpack.c.b16 %v7194, %v7193
      %v7261 = vpack.c.b16 %v7196, %v7195
      %v7262 = vpack.c.b16 %v7198, %v7197
      %v7263 = vpack.c.b16 %v7200, %v7199
      %v7264 = vpack.c.b16 %v7202, %v7201
      %v7265 = vpack.c.b16 %v7204, %v7203
      %v7266 = vpack.c.b16 %v7206, %v7205
      %v7267 = vpack.c.b16 %v7208, %v7207
      %v7268 = vpack.c.b16 %v7210, %v7209
      %v7269 = vpack.c.b16 %v7212, %v7211
      %v7270 = vpack.c.b16 %v7214, %v7213
      %v7271 = vpack.c.b16 %v7216, %v7215
      %v7272 = vpack.c.b16 %v7218, %v7217
      %v7273 = vpack.c.b16 %v7220, %v7219
      %v7274 = vpack.c.b16 %v7222, %v7221
      %v7275 = vpack.c.b16 %v7224, %v7223
      %v7276 = vpack.c.b16 %v7226, %v7225
      %v7277 = vpack.c.b16 %v7228, %v7227
      %v7278 = vpack.c.b16 %v7230, %v7229
      %v7279 = vpack.c.b16 %v7232, %v7231
      %v7280 = vpack.c.b16 %v7234, %v7233
      %v7281 = vpack.c.b16 %v7236, %v7235
      %v7282 = vpack.c.b16 %v7238, %v7237
      %v7283 = vpack.c.b16 %v7240, %v7239
      %v7284 = vpack.c.b16 %v7242, %v7241
      %v7285 = vpack.c.b16 %v7244, %v7243
      %v7286 = vpack.c.b16 %v7246, %v7245
      %v7287 = vpack.c.b16 %v7248, %v7247
      %v7288 = vpack.c.b16 %v7250, %v7249
      %v7289 = vpack.c.b16 %v7252, %v7251
      %v7290 = vpack.c.b16 %v7254, %v7253
      %v7328 = vsel %vm3542, %v7031, 0
      %7330 = vmatprep.subr.bf16.mxu0 0
      %7331 = vmatpush1.bf16.msra.mxu0 %v7255
      %7332 = vmatprep.subr.bf16.mxu0 0
      %7333 = vmatpush1.bf16.msra.mxu0 %v7256
      %7334 = vmatprep.subr.bf16.mxu0 0
      %7335 = vmatpush1.bf16.msra.mxu0 %v7257
      %7336 = vmatprep.subr.bf16.mxu0 0
      %7337 = vmatpush1.bf16.msra.mxu0 %v7258
      %7338 = vmatprep.subr.bf16.mxu0 0
      %7339 = vmatpush1.bf16.msra.mxu0 %v7259
      %7340 = vmatprep.subr.bf16.mxu0 0
      %7341 = vmatpush1.bf16.msra.mxu0 %v7260
      %7342 = vmatprep.subr.bf16.mxu0 0
      %7343 = vmatpush1.bf16.msra.mxu0 %v7261
      %7344 = vmatprep.subr.bf16.mxu0 0
      %7345 = vmatpush1.bf16.msra.mxu0 %v7262
      %7346 = vmatprep.subr.bf16.mxu0 0
      %7347 = vmatpush1.bf16.msra.mxu0 %v7263
      %7348 = vmatprep.subr.bf16.mxu0 0
      %7349 = vmatpush1.bf16.msra.mxu0 %v7264
      %7350 = vmatprep.subr.bf16.mxu0 0
      %7351 = vmatpush1.bf16.msra.mxu0 %v7265
      %7352 = vmatprep.subr.bf16.mxu0 0
      %7353 = vmatpush1.bf16.msra.mxu0 %v7266
      %7354 = vmatprep.subr.bf16.mxu0 0
      %7355 = vmatpush1.bf16.msra.mxu0 %v7267
      %7356 = vmatprep.subr.bf16.mxu0 0
      %7357 = vmatpush1.bf16.msra.mxu0 %v7268
      %7358 = vmatprep.subr.bf16.mxu0 0
      %7359 = vmatpush1.bf16.msra.mxu0 %v7269
      %7360 = vmatprep.subr.bf16.mxu0 0
      %7361 = vmatpush1.bf16.msra.mxu0 %v7270
      %7362 = vmatprep.mubr.bf16.mxu0 %v7028
      %7363 = vmatmul.mubr.bf16.gmra.mrb[0].mxu0 %v7027
      %v7364 = vpop.f32.mrb[0].mxu0
      %v7365 = vadd.f32 %v7109, %v7364
      %v7366 = vpop.f32.mrb[0].mxu0
      %v7367 = vpop.f32.mrb[0].mxu0
      %v7368 = vadd.f32 %v7109, %v7367
      %v7369 = vpop.f32.mrb[0].mxu0
      %7370 = vdwg.mxu0
      %7371 = vmatprep.subr.bf16.mxu0 0
      %7372 = vmatpush1.bf16.msra.mxu0 %v7271
      %7373 = vmatprep.subr.bf16.mxu0 0
      %7374 = vmatpush1.bf16.msra.mxu0 %v7272
      %7375 = vmatprep.subr.bf16.mxu0 0
      %7376 = vmatpush1.bf16.msra.mxu0 %v7273
      %7377 = vmatprep.subr.bf16.mxu0 0
      %7378 = vmatpush1.bf16.msra.mxu0 %v7274
      %7379 = vmatprep.subr.bf16.mxu0 0
      %7380 = vmatpush1.bf16.msra.mxu0 %v7275
      %7381 = vmatprep.subr.bf16.mxu0 0
      %7382 = vmatpush1.bf16.msra.mxu0 %v7276
      %7383 = vmatprep.subr.bf16.mxu0 0
      %7384 = vmatpush1.bf16.msra.mxu0 %v7277
      %7385 = vmatprep.subr.bf16.mxu0 0
      %7386 = vmatpush1.bf16.msra.mxu0 %v7278
      %7387 = vmatprep.subr.bf16.mxu0 0
      %7388 = vmatpush1.bf16.msra.mxu0 %v7279
      %7389 = vmatprep.subr.bf16.mxu0 0
      %7390 = vmatpush1.bf16.msra.mxu0 %v7280
      %7391 = vmatprep.subr.bf16.mxu0 0
      %7392 = vmatpush1.bf16.msra.mxu0 %v7281
      %7393 = vmatprep.subr.bf16.mxu0 0
      %7394 = vmatpush1.bf16.msra.mxu0 %v7282
      %7395 = vmatprep.subr.bf16.mxu0 0
      %7396 = vmatpush1.bf16.msra.mxu0 %v7283
      %7397 = vmatprep.subr.bf16.mxu0 0
      %7398 = vmatpush1.bf16.msra.mxu0 %v7284
      %7399 = vmatprep.subr.bf16.mxu0 0
      %7400 = vmatpush1.bf16.msra.mxu0 %v7285
      %7401 = vmatprep.subr.bf16.mxu0 0
      %7402 = vmatpush1.bf16.msra.mxu0 %v7286
      %7403 = vmatprep.mubr.bf16.mxu0 %v7030
      %7404 = vmatmul.mubr.bf16.gmra.mrb[0].mxu0 %v7029
      %v7405 = vpop.f32.mrb[0].mxu0
      %v7406 = vadd.f32 %v7365, %v7405
      %v7407 = vpop.f32.mrb[0].mxu0
      %v7408 = vpop.f32.mrb[0].mxu0
      %v7409 = vadd.f32 %v7368, %v7408
      %v7410 = vpop.f32.mrb[0].mxu0
      %7411 = vdwg.mxu0
      %7412 = vmatprep.subr.bf16.mxu0 0
      %7413 = vmatpush1.bf16.msra.mxu0 %v7287
      %7414 = vmatprep.subr.bf16.mxu0 0
      %7415 = vmatpush1.bf16.msra.mxu0 %v7288
      %7416 = vmatprep.subr.bf16.mxu0 0
      %7417 = vmatpush1.bf16.msra.mxu0 %v7289
      %7418 = vmatprep.subr.bf16.mxu0 0
      %7419 = vmatpush1.bf16.msra.mxu0 %v7290
      %7420 = vmatprep.subr.bf16.mxu0 0
      %7421 = vmatpush1.bf16.msra.mxu0 0
      %7422 = vmatprep.subr.bf16.mxu0 0
      %7423 = vmatpush1.bf16.msra.mxu0 0
      %7424 = vmatprep.subr.bf16.mxu0 0
      %7425 = vmatpush1.bf16.msra.mxu0 0
      %7426 = vmatprep.subr.bf16.mxu0 0
      %7427 = vmatpush1.bf16.msra.mxu0 0
      %7428 = vmatprep.subr.bf16.mxu0 0
      %7429 = vmatpush1.bf16.msra.mxu0 0
      %7430 = vmatprep.subr.bf16.mxu0 0
      %7431 = vmatpush1.bf16.msra.mxu0 0
      %7432 = vmatprep.subr.bf16.mxu0 0
      %7433 = vmatpush1.bf16.msra.mxu0 0
      %7434 = vmatprep.subr.bf16.mxu0 0
      %7435 = vmatpush1.bf16.msra.mxu0 0
      %7436 = vmatprep.subr.bf16.mxu0 0
      %7437 = vmatpush1.bf16.msra.mxu0 0
      %7438 = vmatprep.subr.bf16.mxu0 0
      %7439 = vmatpush1.bf16.msra.mxu0 0
      %7440 = vmatprep.subr.bf16.mxu0 0
      %7441 = vmatpush1.bf16.msra.mxu0 0
      %7442 = vmatprep.subr.bf16.mxu0 0
      %7443 = vmatpush1.bf16.msra.mxu0 0
      %7444 = vmatprep.mubr.bf16.mxu0 0
      %7445 = vmatmul.mubr.bf16.gmra.mrb[0].mxu0 %v7328
      %v7446 = vpop.f32.mrb[0].mxu0
      %v7447 = vadd.f32 %v7406, %v7446
      %v7448 = vpop.f32.mrb[0].mxu0
      %v7449 = vpop.f32.mrb[0].mxu0
      %v7450 = vadd.f32 %v7409, %v7449
      %v7451 = vpop.f32.mrb[0].mxu0
      %7452 = vdwg.mxu0
      %v7453 = vmax.f32 %v7447, 0.0
      %v7454 = vmax.f32 %v7450, 0.0
      %vm7455 = vcmask 1046531
      %vm7456 = vsmask.f32 6414
      %vm7457 = vmand %vm7455, %vm7456
      %v7458 = vld [vmem:[#allocation2] sm:$0x78]
      %v7459 = vsel %vm7457, 0, %v7458
      %7460 = vst [vmem:[#allocation2] sm:$0x78] %v7459
      %s7461 = scalar_lea.vmem [#allocation2], 80
      %v7462 = vld [vmem:[%s7461] sm:$0x78]
      %v7463 = vsel %vm7457, 0, %v7462
      %7464 = vst [vmem:[%s7461] sm:$0x78] %v7463
      %vm7465 = vcmask 1043459
      %vm7466 = vmand %vm7465, %vm1017
      %v7467 = vld [vmem:[%s1035] sm:$0x8]
      %v7468 = vsel %vm7466, 0, %v7467
      %7469 = vst [vmem:[%s1035] sm:$0x8] %v7468
      %v7470 = vld [vmem:[%s1035 + $0x10] sm:$0x8]
      %v7471 = vsel %vm7466, 0, %v7470
      %7472 = vst [vmem:[%s1035 + $0x10] sm:$0x8] %v7471
      %v7473 = vld [vmem:[%s1035 + $0x20] sm:$0x8]
      %v7474 = vsel %vm7466, 0, %v7473
      %7475 = vst [vmem:[%s1035 + $0x20] sm:$0x8] %v7474
      %v7476 = vld [vmem:[%s1035 + $0x30] sm:$0x8]
      %v7477 = vsel %vm7466, 0, %v7476
      %7478 = vst [vmem:[%s1035 + $0x30] sm:$0x8] %v7477
      %vm7479 = vcmask 1046534
      %vm7480 = vsmask.f32 6400
      %vm7481 = vmand %vm7479, %vm7480
      %v7482 = vld [vmem:[%s1035] sm:$0x40]
      %v7483 = vsel %vm7481, 0, %v7482
      %7484 = vst [vmem:[%s1035] sm:$0x40] %v7483
      %v7485 = vld [vmem:[%s1035 + $0x10] sm:$0x40]
      %v7486 = vsel %vm7481, 0, %v7485
      %7487 = vst [vmem:[%s1035 + $0x10] sm:$0x40] %v7486
      %v7488 = vld [vmem:[%s1035 + $0x20] sm:$0x40]
      %v7489 = vsel %vm7481, 0, %v7488
      %7490 = vst [vmem:[%s1035 + $0x20] sm:$0x40] %v7489
      %v7491 = vld [vmem:[%s1035 + $0x30] sm:$0x40]
      %v7492 = vsel %vm7481, 0, %v7491
      %7493 = vst [vmem:[%s1035 + $0x30] sm:$0x40] %v7492
      %v7496 = vcombine.high %v7453, %v7453
      %v7497 = vcombine.high %v7454, %v7454
      %v7500 = vpack.c.bf16 %v7453, %v7453
      %v7501 = vpack.c.bf16 %v7496, %v7496
      %v7502 = vpack.c.bf16 %v7454, %v7454
      %v7503 = vpack.c.bf16 %v7497, %v7497
      %v7508 = vrot.slane %v7500, 4
      %v7509 = vrot.slane %v7501, 4
      %v7510 = vrot.slane %v7502, 4
      %v7511 = vrot.slane %v7503, 4
      %7516 = vst [vmem:[%s1035] sm:$0x30] %v7508
      %7517 = vst [vmem:[%s1035 + $0x10] sm:$0x30] %v7509
      %7518 = vst [vmem:[%s1035 + $0x20] sm:$0x30] %v7510
      %7519 = vst [vmem:[%s1035 + $0x30] sm:$0x30] %v7511
      %v7520 = vld [vmem:[#allocation2] sm:$0x38]
      %v7521 = vld [vmem:[#allocation2 + $0x10] sm:$0x38]
      %v7522 = vld [vmem:[#allocation2 + $0x20] sm:$0x38]
      %v7523 = vld [vmem:[#allocation2 + $0x30] sm:$0x38]
      %v7528 = vcombine.high %v7520, %v7520
      %v7530 = vunpack.c.l.s4 1983009808
      %v7531 = vunpack.c.0.s8 %v7530
      %v7532 = vlaneseq
      %v7533 = vshrl.u32 %v7532, 7
      %v7534 = vsub.s32 %v7531, %v7533
      %v7535 = vrot.slane %v7520, %v7534
      %v7537 = vunpack.c.l.s4 1983009808
      %v7538 = vunpack.c.0.s8 %v7537
      %v7539 = vlaneseq
      %v7540 = vshrl.u32 %v7539, 7
      %v7541 = vsub.s32 %v7538, %v7540
      %v7542 = vrot.slane %v7528, %v7541
      %v7543 = vcombine.high %v7535, %v7535
      %v7544 = vcombine.high %v7521, %v7521
      %v7546 = vunpack.c.l.s4 1983009808
      %v7547 = vunpack.c.0.s8 %v7546
      %v7548 = vlaneseq
      %v7549 = vshrl.u32 %v7548, 7
      %v7550 = vsub.s32 %v7547, %v7549
      %v7551 = vrot.slane %v7521, %v7550
      %v7553 = vunpack.c.l.s4 1983009808
      %v7554 = vunpack.c.0.s8 %v7553
      %v7555 = vlaneseq
      %v7556 = vshrl.u32 %v7555, 7
      %v7557 = vsub.s32 %v7554, %v7556
      %v7558 = vrot.slane %v7544, %v7557
      %v7559 = vcombine.high %v7551, %v7551
      %v7560 = vcombine.high %v7522, %v7522
      %v7562 = vunpack.c.l.s4 1983009808
      %v7563 = vunpack.c.0.s8 %v7562
      %v7564 = vlaneseq
      %v7565 = vshrl.u32 %v7564, 7
      %v7566 = vsub.s32 %v7563, %v7565
      %v7567 = vrot.slane %v7522, %v7566
      %v7569 = vunpack.c.l.s4 1983009808
      %v7570 = vunpack.c.0.s8 %v7569
      %v7571 = vlaneseq
      %v7572 = vshrl.u32 %v7571, 7
      %v7573 = vsub.s32 %v7570, %v7572
      %v7574 = vrot.slane %v7560, %v7573
      %v7575 = vcombine.high %v7567, %v7567
      %v7576 = vcombine.high %v7523, %v7523
      %v7578 = vunpack.c.l.s4 1983009808
      %v7579 = vunpack.c.0.s8 %v7578
      %v7580 = vlaneseq
      %v7581 = vshrl.u32 %v7580, 7
      %v7582 = vsub.s32 %v7579, %v7581
      %v7583 = vrot.slane %v7523, %v7582
      %v7585 = vunpack.c.l.s4 1983009808
      %v7586 = vunpack.c.0.s8 %v7585
      %v7587 = vlaneseq
      %v7588 = vshrl.u32 %v7587, 7
      %v7589 = vsub.s32 %v7586, %v7588
      %v7590 = vrot.slane %v7576, %v7589
      %v7591 = vcombine.high %v7583, %v7583
      %vm7592 = vsmask.f32 2312
      %vm7593 = vmor %vm5083, %vm7592
      %vm7594 = vmor %vm7593, %vm5234
      %vm7595 = vsmask.f32 6424
      %vm7596 = vmor %vm7594, %vm7595
      %v7598 = vshrl.u32 %v7543, 16
      %v7600 = vrot.slane %v7598, 7
      %v7601 = vrot.slane %v7600, 2
      %v7603 = vshrl.u32 %v7542, 16
      %v7605 = vrot.slane %v7603, 7
      %v7606 = vshll.u32 %v7542, 16
      %v7608 = vor.u32 %v7605, %v7606
      %v7609 = vsel %vm7596, %v7601, %v7608
      %v7611 = vshrl.u32 %v7559, 16
      %v7613 = vrot.slane %v7611, 7
      %v7614 = vrot.slane %v7613, 2
      %v7616 = vshrl.u32 %v7558, 16
      %v7618 = vrot.slane %v7616, 7
      %v7619 = vshll.u32 %v7558, 16
      %v7621 = vor.u32 %v7618, %v7619
      %v7622 = vsel %vm7596, %v7614, %v7621
      %v7624 = vshrl.u32 %v7575, 16
      %v7626 = vrot.slane %v7624, 7
      %v7627 = vrot.slane %v7626, 2
      %v7629 = vshrl.u32 %v7574, 16
      %v7631 = vrot.slane %v7629, 7
      %v7632 = vshll.u32 %v7574, 16
      %v7634 = vor.u32 %v7631, %v7632
      %v7635 = vsel %vm7596, %v7627, %v7634
      %v7637 = vshrl.u32 %v7591, 16
      %v7639 = vrot.slane %v7637, 7
      %v7640 = vrot.slane %v7639, 2
      %v7642 = vshrl.u32 %v7590, 16
      %v7644 = vrot.slane %v7642, 7
      %v7645 = vshll.u32 %v7590, 16
      %v7647 = vor.u32 %v7644, %v7645
      %v7648 = vsel %vm7596, %v7640, %v7647
      %v7649 = vld [vmem:[#allocation2] sm:$0x30]
      %v7650 = vld [vmem:[#allocation2 + $0x10] sm:$0x30]
      %v7651 = vld [vmem:[#allocation2 + $0x20] sm:$0x30]
      %v7652 = vld [vmem:[#allocation2 + $0x30] sm:$0x30]
      %v7657 = vcombine.high %v7649, %v7649
      %v7659 = vunpack.c.l.s4 1983009808
      %v7660 = vunpack.c.0.s8 %v7659
      %v7661 = vlaneseq
      %v7662 = vshrl.u32 %v7661, 7
      %v7663 = vsub.s32 %v7660, %v7662
      %v7664 = vrot.slane %v7657, %v7663
      %v7665 = vcombine.high %v7650, %v7650
      %v7667 = vunpack.c.l.s4 1983009808
      %v7668 = vunpack.c.0.s8 %v7667
      %v7669 = vlaneseq
      %v7670 = vshrl.u32 %v7669, 7
      %v7671 = vsub.s32 %v7668, %v7670
      %v7672 = vrot.slane %v7665, %v7671
      %v7673 = vcombine.high %v7651, %v7651
      %v7675 = vunpack.c.l.s4 1983009808
      %v7676 = vunpack.c.0.s8 %v7675
      %v7677 = vlaneseq
      %v7678 = vshrl.u32 %v7677, 7
      %v7679 = vsub.s32 %v7676, %v7678
      %v7680 = vrot.slane %v7673, %v7679
      %v7681 = vcombine.high %v7652, %v7652
      %v7683 = vunpack.c.l.s4 1983009808
      %v7684 = vunpack.c.0.s8 %v7683
      %v7685 = vlaneseq
      %v7686 = vshrl.u32 %v7685, 7
      %v7687 = vsub.s32 %v7684, %v7686
      %v7688 = vrot.slane %v7681, %v7687
      %v7689 = vld [vmem:[#allocation2] sm:$0x70]
      %v7690 = vld [vmem:[#allocation2 + $0x10] sm:$0x70]
      %v7691 = vld [vmem:[#allocation2 + $0x20] sm:$0x70]
      %v7692 = vld [vmem:[#allocation2 + $0x30] sm:$0x70]
      %v7697 = vcombine.high %v7689, %v7689
      %v7699 = vunpack.c.l.s4 1983009808
      %v7700 = vunpack.c.0.s8 %v7699
      %v7701 = vlaneseq
      %v7702 = vshrl.u32 %v7701, 7
      %v7703 = vsub.s32 %v7700, %v7702
      %v7704 = vrot.slane %v7697, %v7703
      %v7705 = vcombine.high %v7704, %v7704
      %v7706 = vcombine.high %v7690, %v7690
      %v7708 = vunpack.c.l.s4 1983009808
      %v7709 = vunpack.c.0.s8 %v7708
      %v7710 = vlaneseq
      %v7711 = vshrl.u32 %v7710, 7
      %v7712 = vsub.s32 %v7709, %v7711
      %v7713 = vrot.slane %v7706, %v7712
      %v7714 = vcombine.high %v7713, %v7713
      %v7715 = vcombine.high %v7691, %v7691
      %v7717 = vunpack.c.l.s4 1983009808
      %v7718 = vunpack.c.0.s8 %v7717
      %v7719 = vlaneseq
      %v7720 = vshrl.u32 %v7719, 7
      %v7721 = vsub.s32 %v7718, %v7720
      %v7722 = vrot.slane %v7715, %v7721
      %v7723 = vcombine.high %v7722, %v7722
      %v7724 = vcombine.high %v7692, %v7692
      %v7726 = vunpack.c.l.s4 1983009808
      %v7727 = vunpack.c.0.s8 %v7726
      %v7728 = vlaneseq
      %v7729 = vshrl.u32 %v7728, 7
      %v7730 = vsub.s32 %v7727, %v7729
      %v7731 = vrot.slane %v7724, %v7730
      %v7732 = vcombine.high %v7731, %v7731
      %vm7733 = vsmask.f32 1280
      %vm7734 = vsmask.f32 3336
      %vm7735 = vmor %vm7733, %vm7734
      %vm7736 = vsmask.f32 5392
      %vm7737 = vmor %vm7735, %vm7736
      %vm7738 = vsmask.f32 7448
      %vm7739 = vmor %vm7737, %vm7738
      %v7741 = vshrl.u32 %v7704, 16
      %v7743 = vrot.slane %v7741, 6
      %v7744 = vshll.u32 %v7704, 16
      %v7746 = vrot.slane %v7744, 7
      %v7747 = vor.u32 %v7743, %v7746
      %v7748 = vrot.slane %v7747, 2
      %v7750 = vshll.u32 %v7705, 16
      %v7752 = vrot.slane %v7750, 7
      %v7753 = vsel %vm7739, %v7748, %v7752
      %v7755 = vshrl.u32 %v7713, 16
      %v7757 = vrot.slane %v7755, 6
      %v7758 = vshll.u32 %v7713, 16
      %v7760 = vrot.slane %v7758, 7
      %v7761 = vor.u32 %v7757, %v7760
      %v7762 = vrot.slane %v7761, 2
      %v7764 = vshll.u32 %v7714, 16
      %v7766 = vrot.slane %v7764, 7
      %v7767 = vsel %vm7739, %v7762, %v7766
      %v7769 = vshrl.u32 %v7722, 16
      %v7771 = vrot.slane %v7769, 6
      %v7772 = vshll.u32 %v7722, 16
      %v7774 = vrot.slane %v7772, 7
      %v7775 = vor.u32 %v7771, %v7774
      %v7776 = vrot.slane %v7775, 2
      %v7778 = vshll.u32 %v7723, 16
      %v7780 = vrot.slane %v7778, 7
      %v7781 = vsel %vm7739, %v7776, %v7780
      %v7783 = vshrl.u32 %v7731, 16
      %v7785 = vrot.slane %v7783, 6
      %v7786 = vshll.u32 %v7731, 16
      %v7788 = vrot.slane %v7786, 7
      %v7789 = vor.u32 %v7785, %v7788
      %v7790 = vrot.slane %v7789, 2
      %v7792 = vshll.u32 %v7732, 16
      %v7794 = vrot.slane %v7792, 7
      %v7795 = vsel %vm7739, %v7790, %v7794
      %v7796 = vld [vmem:[%s1035] sm:$0x38]
      %v7797 = vld [vmem:[%s1035 + $0x10] sm:$0x38]
      %v7798 = vld [vmem:[%s1035 + $0x20] sm:$0x38]
      %v7799 = vld [vmem:[%s1035 + $0x30] sm:$0x38]
      %v7804 = vcombine.high %v7796, %v7796
      %v7806 = vunpack.c.l.s4 1983009808
      %v7807 = vunpack.c.0.s8 %v7806
      %v7808 = vlaneseq
      %v7809 = vshrl.u32 %v7808, 7
      %v7810 = vsub.s32 %v7807, %v7809
      %v7811 = vrot.slane %v7796, %v7810
      %v7813 = vunpack.c.l.s4 1983009808
      %v7814 = vunpack.c.0.s8 %v7813
      %v7815 = vlaneseq
      %v7816 = vshrl.u32 %v7815, 7
      %v7817 = vsub.s32 %v7814, %v7816
      %v7818 = vrot.slane %v7804, %v7817
      %v7819 = vcombine.high %v7811, %v7811
      %v7820 = vcombine.high %v7797, %v7797
      %v7822 = vunpack.c.l.s4 1983009808
      %v7823 = vunpack.c.0.s8 %v7822
      %v7824 = vlaneseq
      %v7825 = vshrl.u32 %v7824, 7
      %v7826 = vsub.s32 %v7823, %v7825
      %v7827 = vrot.slane %v7797, %v7826
      %v7829 = vunpack.c.l.s4 1983009808
      %v7830 = vunpack.c.0.s8 %v7829
      %v7831 = vlaneseq
      %v7832 = vshrl.u32 %v7831, 7
      %v7833 = vsub.s32 %v7830, %v7832
      %v7834 = vrot.slane %v7820, %v7833
      %v7835 = vcombine.high %v7827, %v7827
      %v7836 = vcombine.high %v7798, %v7798
      %v7838 = vunpack.c.l.s4 1983009808
      %v7839 = vunpack.c.0.s8 %v7838
      %v7840 = vlaneseq
      %v7841 = vshrl.u32 %v7840, 7
      %v7842 = vsub.s32 %v7839, %v7841
      %v7843 = vrot.slane %v7798, %v7842
      %v7845 = vunpack.c.l.s4 1983009808
      %v7846 = vunpack.c.0.s8 %v7845
      %v7847 = vlaneseq
      %v7848 = vshrl.u32 %v7847, 7
      %v7849 = vsub.s32 %v7846, %v7848
      %v7850 = vrot.slane %v7836, %v7849
      %v7851 = vcombine.high %v7843, %v7843
      %v7852 = vcombine.high %v7799, %v7799
      %v7854 = vunpack.c.l.s4 1983009808
      %v7855 = vunpack.c.0.s8 %v7854
      %v7856 = vlaneseq
      %v7857 = vshrl.u32 %v7856, 7
      %v7858 = vsub.s32 %v7855, %v7857
      %v7859 = vrot.slane %v7799, %v7858
      %v7861 = vunpack.c.l.s4 1983009808
      %v7862 = vunpack.c.0.s8 %v7861
      %v7863 = vlaneseq
      %v7864 = vshrl.u32 %v7863, 7
      %v7865 = vsub.s32 %v7862, %v7864
      %v7866 = vrot.slane %v7852, %v7865
      %v7867 = vcombine.high %v7859, %v7859
      %v7869 = vshrl.u32 %v7819, 16
      %v7871 = vrot.slane %v7869, 7
      %v7872 = vrot.slane %v7871, 2
      %v7874 = vshrl.u32 %v7818, 16
      %v7876 = vrot.slane %v7874, 7
      %v7877 = vshll.u32 %v7818, 16
      %v7879 = vor.u32 %v7876, %v7877
      %v7880 = vsel %vm7596, %v7872, %v7879
      %v7882 = vshrl.u32 %v7835, 16
      %v7884 = vrot.slane %v7882, 7
      %v7885 = vrot.slane %v7884, 2
      %v7887 = vshrl.u32 %v7834, 16
      %v7889 = vrot.slane %v7887, 7
      %v7890 = vshll.u32 %v7834, 16
      %v7892 = vor.u32 %v7889, %v7890
      %v7893 = vsel %vm7596, %v7885, %v7892
      %v7895 = vshrl.u32 %v7851, 16
      %v7897 = vrot.slane %v7895, 7
      %v7898 = vrot.slane %v7897, 2
      %v7900 = vshrl.u32 %v7850, 16
      %v7902 = vrot.slane %v7900, 7
      %v7903 = vshll.u32 %v7850, 16
      %v7905 = vor.u32 %v7902, %v7903
      %v7906 = vsel %vm7596, %v7898, %v7905
      %v7908 = vshrl.u32 %v7867, 16
      %v7910 = vrot.slane %v7908, 7
      %v7911 = vrot.slane %v7910, 2
      %v7913 = vshrl.u32 %v7866, 16
      %v7915 = vrot.slane %v7913, 7
      %v7916 = vshll.u32 %v7866, 16
      %v7918 = vor.u32 %v7915, %v7916
      %v7919 = vsel %vm7596, %v7911, %v7918
      %v7920 = vld [vmem:[%s1035] sm:$0x30]
      %v7921 = vld [vmem:[%s1035 + $0x10] sm:$0x30]
      %v7922 = vld [vmem:[%s1035 + $0x20] sm:$0x30]
      %v7923 = vld [vmem:[%s1035 + $0x30] sm:$0x30]
      %v7928 = vcombine.high %v7920, %v7920
      %v7930 = vunpack.c.l.s4 1983009808
      %v7931 = vunpack.c.0.s8 %v7930
      %v7932 = vlaneseq
      %v7933 = vshrl.u32 %v7932, 7
      %v7934 = vsub.s32 %v7931, %v7933
      %v7935 = vrot.slane %v7928, %v7934
      %v7936 = vcombine.high %v7921, %v7921
      %v7938 = vunpack.c.l.s4 1983009808
      %v7939 = vunpack.c.0.s8 %v7938
      %v7940 = vlaneseq
      %v7941 = vshrl.u32 %v7940, 7
      %v7942 = vsub.s32 %v7939, %v7941
      %v7943 = vrot.slane %v7936, %v7942
      %v7944 = vcombine.high %v7922, %v7922
      %v7946 = vunpack.c.l.s4 1983009808
      %v7947 = vunpack.c.0.s8 %v7946
      %v7948 = vlaneseq
      %v7949 = vshrl.u32 %v7948, 7
      %v7950 = vsub.s32 %v7947, %v7949
      %v7951 = vrot.slane %v7944, %v7950
      %v7952 = vcombine.high %v7923, %v7923
      %v7954 = vunpack.c.l.s4 1983009808
      %v7955 = vunpack.c.0.s8 %v7954
      %v7956 = vlaneseq
      %v7957 = vshrl.u32 %v7956, 7
      %v7958 = vsub.s32 %v7955, %v7957
      %v7959 = vrot.slane %v7952, %v7958
      %v7960 = vld [vmem:[%s1035] sm:$0x70]
      %v7961 = vld [vmem:[%s1035 + $0x10] sm:$0x70]
      %v7962 = vld [vmem:[%s1035 + $0x20] sm:$0x70]
      %v7963 = vld [vmem:[%s1035 + $0x30] sm:$0x70]
      %v7968 = vcombine.high %v7960, %v7960
      %v7970 = vunpack.c.l.s4 1983009808
      %v7971 = vunpack.c.0.s8 %v7970
      %v7972 = vlaneseq
      %v7973 = vshrl.u32 %v7972, 7
      %v7974 = vsub.s32 %v7971, %v7973
      %v7975 = vrot.slane %v7968, %v7974
      %v7976 = vcombine.high %v7975, %v7975
      %v7977 = vcombine.high %v7961, %v7961
      %v7979 = vunpack.c.l.s4 1983009808
      %v7980 = vunpack.c.0.s8 %v7979
      %v7981 = vlaneseq
      %v7982 = vshrl.u32 %v7981, 7
      %v7983 = vsub.s32 %v7980, %v7982
      %v7984 = vrot.slane %v7977, %v7983
      %v7985 = vcombine.high %v7984, %v7984
      %v7986 = vcombine.high %v7962, %v7962
      %v7988 = vunpack.c.l.s4 1983009808
      %v7989 = vunpack.c.0.s8 %v7988
      %v7990 = vlaneseq
      %v7991 = vshrl.u32 %v7990, 7
      %v7992 = vsub.s32 %v7989, %v7991
      %v7993 = vrot.slane %v7986, %v7992
      %v7994 = vcombine.high %v7993, %v7993
      %v7995 = vcombine.high %v7963, %v7963
      %v7997 = vunpack.c.l.s4 1983009808
      %v7998 = vunpack.c.0.s8 %v7997
      %v7999 = vlaneseq
      %v8000 = vshrl.u32 %v7999, 7
      %v8001 = vsub.s32 %v7998, %v8000
      %v8002 = vrot.slane %v7995, %v8001
      %v8003 = vcombine.high %v8002, %v8002
      %v8005 = vshrl.u32 %v7975, 16
      %v8007 = vrot.slane %v8005, 6
      %v8008 = vshll.u32 %v7975, 16
      %v8010 = vrot.slane %v8008, 7
      %v8011 = vor.u32 %v8007, %v8010
      %v8012 = vrot.slane %v8011, 2
      %v8014 = vshll.u32 %v7976, 16
      %v8016 = vrot.slane %v8014, 7
      %v8017 = vsel %vm7739, %v8012, %v8016
      %v8019 = vshrl.u32 %v7984, 16
      %v8021 = vrot.slane %v8019, 6
      %v8022 = vshll.u32 %v7984, 16
      %v8024 = vrot.slane %v8022, 7
      %v8025 = vor.u32 %v8021, %v8024
      %v8026 = vrot.slane %v8025, 2
      %v8028 = vshll.u32 %v7985, 16
      %v8030 = vrot.slane %v8028, 7
      %v8031 = vsel %vm7739, %v8026, %v8030
      %v8033 = vshrl.u32 %v7993, 16
      %v8035 = vrot.slane %v8033, 6
      %v8036 = vshll.u32 %v7993, 16
      %v8038 = vrot.slane %v8036, 7
      %v8039 = vor.u32 %v8035, %v8038
      %v8040 = vrot.slane %v8039, 2
      %v8042 = vshll.u32 %v7994, 16
      %v8044 = vrot.slane %v8042, 7
      %v8045 = vsel %vm7739, %v8040, %v8044
      %v8047 = vshrl.u32 %v8002, 16
      %v8049 = vrot.slane %v8047, 6
      %v8050 = vshll.u32 %v8002, 16
      %v8052 = vrot.slane %v8050, 7
      %v8053 = vor.u32 %v8049, %v8052
      %v8054 = vrot.slane %v8053, 2
      %v8056 = vshll.u32 %v8003, 16
      %v8058 = vrot.slane %v8056, 7
      %v8059 = vsel %vm7739, %v8054, %v8058
      %v8060 = vld [vmem:[%s2612] sm:$0x38]
      %v8061 = vld [vmem:[%s2612 + $0x10] sm:$0x38]
      %v8062 = vld [vmem:[%s2612 + $0x20] sm:$0x38]
      %v8063 = vld [vmem:[%s2612 + $0x30] sm:$0x38]
      %v8068 = vcombine.high %v8060, %v8060
      %v8070 = vunpack.c.l.s4 1983009808
      %v8071 = vunpack.c.0.s8 %v8070
      %v8072 = vlaneseq
      %v8073 = vshrl.u32 %v8072, 7
      %v8074 = vsub.s32 %v8071, %v8073
      %v8075 = vrot.slane %v8060, %v8074
      %v8077 = vunpack.c.l.s4 1983009808
      %v8078 = vunpack.c.0.s8 %v8077
      %v8079 = vlaneseq
      %v8080 = vshrl.u32 %v8079, 7
      %v8081 = vsub.s32 %v8078, %v8080
      %v8082 = vrot.slane %v8068, %v8081
      %v8083 = vcombine.high %v8075, %v8075
      %v8084 = vcombine.high %v8061, %v8061
      %v8086 = vunpack.c.l.s4 1983009808
      %v8087 = vunpack.c.0.s8 %v8086
      %v8088 = vlaneseq
      %v8089 = vshrl.u32 %v8088, 7
      %v8090 = vsub.s32 %v8087, %v8089
      %v8091 = vrot.slane %v8061, %v8090
      %v8093 = vunpack.c.l.s4 1983009808
      %v8094 = vunpack.c.0.s8 %v8093
      %v8095 = vlaneseq
      %v8096 = vshrl.u32 %v8095, 7
      %v8097 = vsub.s32 %v8094, %v8096
      %v8098 = vrot.slane %v8084, %v8097
      %v8099 = vcombine.high %v8091, %v8091
      %v8100 = vcombine.high %v8062, %v8062
      %v8102 = vunpack.c.l.s4 1983009808
      %v8103 = vunpack.c.0.s8 %v8102
      %v8104 = vlaneseq
      %v8105 = vshrl.u32 %v8104, 7
      %v8106 = vsub.s32 %v8103, %v8105
      %v8107 = vrot.slane %v8062, %v8106
      %v8109 = vunpack.c.l.s4 1983009808
      %v8110 = vunpack.c.0.s8 %v8109
      %v8111 = vlaneseq
      %v8112 = vshrl.u32 %v8111, 7
      %v8113 = vsub.s32 %v8110, %v8112
      %v8114 = vrot.slane %v8100, %v8113
      %v8115 = vcombine.high %v8107, %v8107
      %v8116 = vcombine.high %v8063, %v8063
      %v8118 = vunpack.c.l.s4 1983009808
      %v8119 = vunpack.c.0.s8 %v8118
      %v8120 = vlaneseq
      %v8121 = vshrl.u32 %v8120, 7
      %v8122 = vsub.s32 %v8119, %v8121
      %v8123 = vrot.slane %v8063, %v8122
      %v8125 = vunpack.c.l.s4 1983009808
      %v8126 = vunpack.c.0.s8 %v8125
      %v8127 = vlaneseq
      %v8128 = vshrl.u32 %v8127, 7
      %v8129 = vsub.s32 %v8126, %v8128
      %v8130 = vrot.slane %v8116, %v8129
      %v8131 = vcombine.high %v8123, %v8123
      %v8133 = vshrl.u32 %v8083, 16
      %v8135 = vrot.slane %v8133, 7
      %v8136 = vrot.slane %v8135, 2
      %v8138 = vshrl.u32 %v8082, 16
      %v8140 = vrot.slane %v8138, 7
      %v8141 = vshll.u32 %v8082, 16
      %v8143 = vor.u32 %v8140, %v8141
      %v8144 = vsel %vm7596, %v8136, %v8143
      %v8146 = vshrl.u32 %v8099, 16
      %v8148 = vrot.slane %v8146, 7
      %v8149 = vrot.slane %v8148, 2
      %v8151 = vshrl.u32 %v8098, 16
      %v8153 = vrot.slane %v8151, 7
      %v8154 = vshll.u32 %v8098, 16
      %v8156 = vor.u32 %v8153, %v8154
      %v8157 = vsel %vm7596, %v8149, %v8156
      %v8159 = vshrl.u32 %v8115, 16
      %v8161 = vrot.slane %v8159, 7
      %v8162 = vrot.slane %v8161, 2
      %v8164 = vshrl.u32 %v8114, 16
      %v8166 = vrot.slane %v8164, 7
      %v8167 = vshll.u32 %v8114, 16
      %v8169 = vor.u32 %v8166, %v8167
      %v8170 = vsel %vm7596, %v8162, %v8169
      %v8172 = vshrl.u32 %v8131, 16
      %v8174 = vrot.slane %v8172, 7
      %v8175 = vrot.slane %v8174, 2
      %v8177 = vshrl.u32 %v8130, 16
      %v8179 = vrot.slane %v8177, 7
      %v8180 = vshll.u32 %v8130, 16
      %v8182 = vor.u32 %v8179, %v8180
      %v8183 = vsel %vm7596, %v8175, %v8182
      %v8184 = vld [vmem:[%s2612] sm:$0x30]
      %v8185 = vld [vmem:[%s2612 + $0x10] sm:$0x30]
      %v8186 = vld [vmem:[%s2612 + $0x20] sm:$0x30]
      %v8187 = vld [vmem:[%s2612 + $0x30] sm:$0x30]
      %v8192 = vcombine.high %v8184, %v8184
      %v8194 = vunpack.c.l.s4 1983009808
      %v8195 = vunpack.c.0.s8 %v8194
      %v8196 = vlaneseq
      %v8197 = vshrl.u32 %v8196, 7
      %v8198 = vsub.s32 %v8195, %v8197
      %v8199 = vrot.slane %v8192, %v8198
      %v8200 = vcombine.high %v8185, %v8185
      %v8202 = vunpack.c.l.s4 1983009808
      %v8203 = vunpack.c.0.s8 %v8202
      %v8204 = vlaneseq
      %v8205 = vshrl.u32 %v8204, 7
      %v8206 = vsub.s32 %v8203, %v8205
      %v8207 = vrot.slane %v8200, %v8206
      %v8208 = vcombine.high %v8186, %v8186
      %v8210 = vunpack.c.l.s4 1983009808
      %v8211 = vunpack.c.0.s8 %v8210
      %v8212 = vlaneseq
      %v8213 = vshrl.u32 %v8212, 7
      %v8214 = vsub.s32 %v8211, %v8213
      %v8215 = vrot.slane %v8208, %v8214
      %v8216 = vcombine.high %v8187, %v8187
      %v8218 = vunpack.c.l.s4 1983009808
      %v8219 = vunpack.c.0.s8 %v8218
      %v8220 = vlaneseq
      %v8221 = vshrl.u32 %v8220, 7
      %v8222 = vsub.s32 %v8219, %v8221
      %v8223 = vrot.slane %v8216, %v8222
      %v8224 = vld [vmem:[%s2612] sm:$0x70]
      %v8225 = vld [vmem:[%s2612 + $0x10] sm:$0x70]
      %v8226 = vld [vmem:[%s2612 + $0x20] sm:$0x70]
      %v8227 = vld [vmem:[%s2612 + $0x30] sm:$0x70]
      %v8232 = vcombine.high %v8224, %v8224
      %v8234 = vunpack.c.l.s4 1983009808
      %v8235 = vunpack.c.0.s8 %v8234
      %v8236 = vlaneseq
      %v8237 = vshrl.u32 %v8236, 7
      %v8238 = vsub.s32 %v8235, %v8237
      %v8239 = vrot.slane %v8232, %v8238
      %v8240 = vcombine.high %v8239, %v8239
      %v8241 = vcombine.high %v8225, %v8225
      %v8243 = vunpack.c.l.s4 1983009808
      %v8244 = vunpack.c.0.s8 %v8243
      %v8245 = vlaneseq
      %v8246 = vshrl.u32 %v8245, 7
      %v8247 = vsub.s32 %v8244, %v8246
      %v8248 = vrot.slane %v8241, %v8247
      %v8249 = vcombine.high %v8248, %v8248
      %v8250 = vcombine.high %v8226, %v8226
      %v8252 = vunpack.c.l.s4 1983009808
      %v8253 = vunpack.c.0.s8 %v8252
      %v8254 = vlaneseq
      %v8255 = vshrl.u32 %v8254, 7
      %v8256 = vsub.s32 %v8253, %v8255
      %v8257 = vrot.slane %v8250, %v8256
      %v8258 = vcombine.high %v8257, %v8257
      %v8259 = vcombine.high %v8227, %v8227
      %v8261 = vunpack.c.l.s4 1983009808
      %v8262 = vunpack.c.0.s8 %v8261
      %v8263 = vlaneseq
      %v8264 = vshrl.u32 %v8263, 7
      %v8265 = vsub.s32 %v8262, %v8264
      %v8266 = vrot.slane %v8259, %v8265
      %v8267 = vcombine.high %v8266, %v8266
      %v8269 = vshrl.u32 %v8239, 16
      %v8271 = vrot.slane %v8269, 6
      %v8272 = vshll.u32 %v8239, 16
      %v8274 = vrot.slane %v8272, 7
      %v8275 = vor.u32 %v8271, %v8274
      %v8276 = vrot.slane %v8275, 2
      %v8278 = vshll.u32 %v8240, 16
      %v8280 = vrot.slane %v8278, 7
      %v8281 = vsel %vm7739, %v8276, %v8280
      %v8283 = vshrl.u32 %v8248, 16
      %v8285 = vrot.slane %v8283, 6
      %v8286 = vshll.u32 %v8248, 16
      %v8288 = vrot.slane %v8286, 7
      %v8289 = vor.u32 %v8285, %v8288
      %v8290 = vrot.slane %v8289, 2
      %v8292 = vshll.u32 %v8249, 16
      %v8294 = vrot.slane %v8292, 7
      %v8295 = vsel %vm7739, %v8290, %v8294
      %v8297 = vshrl.u32 %v8257, 16
      %v8299 = vrot.slane %v8297, 6
      %v8300 = vshll.u32 %v8257, 16
      %v8302 = vrot.slane %v8300, 7
      %v8303 = vor.u32 %v8299, %v8302
      %v8304 = vrot.slane %v8303, 2
      %v8306 = vshll.u32 %v8258, 16
      %v8308 = vrot.slane %v8306, 7
      %v8309 = vsel %vm7739, %v8304, %v8308
      %v8311 = vshrl.u32 %v8266, 16
      %v8313 = vrot.slane %v8311, 6
      %v8314 = vshll.u32 %v8266, 16
      %v8316 = vrot.slane %v8314, 7
      %v8317 = vor.u32 %v8313, %v8316
      %v8318 = vrot.slane %v8317, 2
      %v8320 = vshll.u32 %v8267, 16
      %v8322 = vrot.slane %v8320, 7
      %v8323 = vsel %vm7739, %v8318, %v8322
      %v8324 = vcombine.low %v7609, %v7622
      %v8325 = vcombine.low %v7635, %v7648
      %v8327 = vunpack.c.l.s4 1983009808
      %v8328 = vunpack.c.0.s8 %v8327
      %v8329 = vlaneseq
      %v8330 = vshrl.u32 %v8329, 7
      %v8331 = vsub.s32 %v8328, %v8330
      %v8332 = vrot.slane %v8324, %v8331
      %v8334 = vunpack.c.l.s4 1983009808
      %v8335 = vunpack.c.0.s8 %v8334
      %v8336 = vlaneseq
      %v8337 = vshrl.u32 %v8336, 7
      %v8338 = vsub.s32 %v8335, %v8337
      %v8339 = vrot.slane %v8325, %v8338
      %v8340 = vcombine.low %v8332, %v8339
      %v8342 = vcombine.low %v7664, %v7672
      %v8343 = vcombine.low %v7680, %v7688
      %v8345 = vunpack.c.l.s4 1983009808
      %v8346 = vunpack.c.0.s8 %v8345
      %v8347 = vlaneseq
      %v8348 = vshrl.u32 %v8347, 7
      %v8349 = vsub.s32 %v8346, %v8348
      %v8350 = vrot.slane %v8342, %v8349
      %v8352 = vunpack.c.l.s4 1983009808
      %v8353 = vunpack.c.0.s8 %v8352
      %v8354 = vlaneseq
      %v8355 = vshrl.u32 %v8354, 7
      %v8356 = vsub.s32 %v8353, %v8355
      %v8357 = vrot.slane %v8343, %v8356
      %v8358 = vcombine.low %v8350, %v8357
      %v8360 = vcombine.low %v7753, %v7767
      %v8361 = vcombine.low %v7781, %v7795
      %v8363 = vunpack.c.l.s4 1983009808
      %v8364 = vunpack.c.0.s8 %v8363
      %v8365 = vlaneseq
      %v8366 = vshrl.u32 %v8365, 7
      %v8367 = vsub.s32 %v8364, %v8366
      %v8368 = vrot.slane %v8360, %v8367
      %v8370 = vunpack.c.l.s4 1983009808
      %v8371 = vunpack.c.0.s8 %v8370
      %v8372 = vlaneseq
      %v8373 = vshrl.u32 %v8372, 7
      %v8374 = vsub.s32 %v8371, %v8373
      %v8375 = vrot.slane %v8361, %v8374
      %v8376 = vcombine.low %v8368, %v8375
      %v8378 = vcombine.low %v7880, %v7893
      %v8379 = vcombine.low %v7906, %v7919
      %v8381 = vunpack.c.l.s4 1983009808
      %v8382 = vunpack.c.0.s8 %v8381
      %v8383 = vlaneseq
      %v8384 = vshrl.u32 %v8383, 7
      %v8385 = vsub.s32 %v8382, %v8384
      %v8386 = vrot.slane %v8378, %v8385
      %v8388 = vunpack.c.l.s4 1983009808
      %v8389 = vunpack.c.0.s8 %v8388
      %v8390 = vlaneseq
      %v8391 = vshrl.u32 %v8390, 7
      %v8392 = vsub.s32 %v8389, %v8391
      %v8393 = vrot.slane %v8379, %v8392
      %v8394 = vcombine.low %v8386, %v8393
      %v8396 = vcombine.low %v7935, %v7943
      %v8397 = vcombine.low %v7951, %v7959
      %v8399 = vunpack.c.l.s4 1983009808
      %v8400 = vunpack.c.0.s8 %v8399
      %v8401 = vlaneseq
      %v8402 = vshrl.u32 %v8401, 7
      %v8403 = vsub.s32 %v8400, %v8402
      %v8404 = vrot.slane %v8396, %v8403
      %v8406 = vunpack.c.l.s4 1983009808
      %v8407 = vunpack.c.0.s8 %v8406
      %v8408 = vlaneseq
      %v8409 = vshrl.u32 %v8408, 7
      %v8410 = vsub.s32 %v8407, %v8409
      %v8411 = vrot.slane %v8397, %v8410
      %v8412 = vcombine.low %v8404, %v8411
      %v8414 = vcombine.low %v8017, %v8031
      %v8415 = vcombine.low %v8045, %v8059
      %v8417 = vunpack.c.l.s4 1983009808
      %v8418 = vunpack.c.0.s8 %v8417
      %v8419 = vlaneseq
      %v8420 = vshrl.u32 %v8419, 7
      %v8421 = vsub.s32 %v8418, %v8420
      %v8422 = vrot.slane %v8414, %v8421
      %v8424 = vunpack.c.l.s4 1983009808
      %v8425 = vunpack.c.0.s8 %v8424
      %v8426 = vlaneseq
      %v8427 = vshrl.u32 %v8426, 7
      %v8428 = vsub.s32 %v8425, %v8427
      %v8429 = vrot.slane %v8415, %v8428
      %v8430 = vcombine.low %v8422, %v8429
      %v8432 = vcombine.low %v8144, %v8157
      %v8433 = vcombine.low %v8170, %v8183
      %v8435 = vunpack.c.l.s4 1983009808
      %v8436 = vunpack.c.0.s8 %v8435
      %v8437 = vlaneseq
      %v8438 = vshrl.u32 %v8437, 7
      %v8439 = vsub.s32 %v8436, %v8438
      %v8440 = vrot.slane %v8432, %v8439
      %v8442 = vunpack.c.l.s4 1983009808
      %v8443 = vunpack.c.0.s8 %v8442
      %v8444 = vlaneseq
      %v8445 = vshrl.u32 %v8444, 7
      %v8446 = vsub.s32 %v8443, %v8445
      %v8447 = vrot.slane %v8433, %v8446
      %v8448 = vcombine.low %v8440, %v8447
      %v8450 = vcombine.low %v8199, %v8207
      %v8451 = vcombine.low %v8215, %v8223
      %v8453 = vunpack.c.l.s4 1983009808
      %v8454 = vunpack.c.0.s8 %v8453
      %v8455 = vlaneseq
      %v8456 = vshrl.u32 %v8455, 7
      %v8457 = vsub.s32 %v8454, %v8456
      %v8458 = vrot.slane %v8450, %v8457
      %v8460 = vunpack.c.l.s4 1983009808
      %v8461 = vunpack.c.0.s8 %v8460
      %v8462 = vlaneseq
      %v8463 = vshrl.u32 %v8462, 7
      %v8464 = vsub.s32 %v8461, %v8463
      %v8465 = vrot.slane %v8451, %v8464
      %v8466 = vcombine.low %v8458, %v8465
      %v8468 = vcombine.low %v8281, %v8295
      %v8469 = vcombine.low %v8309, %v8323
      %v8471 = vunpack.c.l.s4 1983009808
      %v8472 = vunpack.c.0.s8 %v8471
      %v8473 = vlaneseq
      %v8474 = vshrl.u32 %v8473, 7
      %v8475 = vsub.s32 %v8472, %v8474
      %v8476 = vrot.slane %v8468, %v8475
      %v8478 = vunpack.c.l.s4 1983009808
      %v8479 = vunpack.c.0.s8 %v8478
      %v8480 = vlaneseq
      %v8481 = vshrl.u32 %v8480, 7
      %v8482 = vsub.s32 %v8479, %v8481
      %v8483 = vrot.slane %v8469, %v8482
      %v8484 = vcombine.low %v8476, %v8483
      %v8486 = vld [vmem:[%s11] sm:$0xf]
      %v8487 = vld [vmem:[%s11 + $0x4] sm:$0xf]
      %v8488 = vld [vmem:[%s11 + $0x8] sm:$0xf]
      %v8489 = vld [vmem:[%s11 + $0xc] sm:$0xf]
      %v8490 = vld [vmem:[%s11 + $0x10] sm:$0xf]
      %v8491 = vld [vmem:[%s11 + $0x14] sm:$0xf]
      %v8492 = vld [vmem:[%s11 + $0x18] sm:$0xf]
      %v8493 = vld [vmem:[%s11 + $0x1c] sm:$0xf]
      %v8494 = vld [vmem:[%s11 + $0x20] sm:$0xf]
      %v8495 = vld [vmem:[%s11 + $0x24] sm:$0xf]
      %v8496 = vld [vmem:[%s11 + $0x28] sm:$0xf]
      %v8497 = vld [vmem:[%s11 + $0x2c] sm:$0xf]
      %v8498 = vld [vmem:[%s11 + $0x30] sm:$0xf]
      %v8499 = vld [vmem:[%s11 + $0x34] sm:$0xf]
      %v8500 = vld [vmem:[%s11 + $0x38] sm:$0xf]
      %v8501 = vld [vmem:[%s11 + $0x3c] sm:$0xf]
      %v8502 = vld [vmem:[%s11 + $0x40] sm:$0xf]
      %v8503 = vld [vmem:[%s11 + $0x44] sm:$0xf]
      %v8504 = vld [vmem:[%s11 + $0x48] sm:$0xf]
      %v8505 = vld [vmem:[%s11 + $0x4c] sm:$0xf]
      %v8506 = vld [vmem:[%s11 + $0x50] sm:$0xf]
      %v8507 = vld [vmem:[%s11 + $0x54] sm:$0xf]
      %v8508 = vld [vmem:[%s11 + $0x58] sm:$0xf]
      %v8509 = vld [vmem:[%s11 + $0x5c] sm:$0xf]
      %v8510 = vld [vmem:[%s11 + $0x60] sm:$0xf]
      %v8511 = vld [vmem:[%s11 + $0x64] sm:$0xf]
      %v8512 = vld [vmem:[%s11 + $0x68] sm:$0xf]
      %v8513 = vld [vmem:[%s11 + $0x6c] sm:$0xf]
      %v8514 = vld [vmem:[%s11 + $0x70] sm:$0xf]
      %v8515 = vld [vmem:[%s11 + $0x74] sm:$0xf]
      %v8516 = vld [vmem:[%s11 + $0x78] sm:$0xf]
      %v8517 = vld [vmem:[%s11 + $0x7c] sm:$0xf]
      %v8518 = vld [vmem:[%s11 + $0x80] sm:$0xf]
      %v8519 = vld [vmem:[%s11 + $0x84] sm:$0xf]
      %v8520 = vld [vmem:[%s11 + $0x88] sm:$0xf]
      %v8521 = vld [vmem:[%s11 + $0x8c] sm:$0xf]
      %v8522 = vld [vmem:[%s11 + $0x90] sm:$0xf]
      %v8523 = vld [vmem:[%s11 + $0x94] sm:$0xf]
      %v8524 = vld [vmem:[%s11 + $0x98] sm:$0xf]
      %v8525 = vld [vmem:[%s11 + $0x9c] sm:$0xf]
      %v8526 = vld [vmem:[%s11 + $0xa0] sm:$0xf]
      %v8527 = vld [vmem:[%s11 + $0xa4] sm:$0xf]
      %v8528 = vld [vmem:[%s11 + $0xa8] sm:$0xf]
      %v8529 = vld [vmem:[%s11 + $0xac] sm:$0xf]
      %v8530 = vld [vmem:[%s11 + $0xb0] sm:$0xf]
      %v8531 = vld [vmem:[%s11 + $0xb4] sm:$0xf]
      %v8532 = vld [vmem:[%s11 + $0xb8] sm:$0xf]
      %v8533 = vld [vmem:[%s11 + $0xbc] sm:$0xf]
      %v8534 = vld [vmem:[%s11 + $0xc0] sm:$0xf]
      %v8535 = vld [vmem:[%s11 + $0xc4] sm:$0xf]
      %v8536 = vld [vmem:[%s11 + $0xc8] sm:$0xf]
      %v8537 = vld [vmem:[%s11 + $0xcc] sm:$0xf]
      %v8538 = vld [vmem:[%s11 + $0xd0] sm:$0xf]
      %v8539 = vld [vmem:[%s11 + $0xd4] sm:$0xf]
      %v8540 = vld [vmem:[%s11 + $0xd8] sm:$0xf]
      %v8541 = vld [vmem:[%s11 + $0xdc] sm:$0xf]
      %v8542 = vld [vmem:[%s11 + $0xe0] sm:$0xf]
      %v8543 = vld [vmem:[%s11 + $0xe4] sm:$0xf]
      %v8544 = vld [vmem:[%s11 + $0xe8] sm:$0xf]
      %v8545 = vld [vmem:[%s11 + $0xec] sm:$0xf]
      %v8546 = vld [vmem:[%s11 + $0xf0] sm:$0xf]
      %v8547 = vld [vmem:[%s11 + $0xf4] sm:$0xf]
      %v8548 = vld [vmem:[%s11 + $0xf8] sm:$0xf]
      %v8549 = vld [vmem:[%s11 + $0xfc] sm:$0xf]
      %v8550 = vld [vmem:[%s11 + $0x100] sm:$0xf]
      %v8551 = vld [vmem:[%s11 + $0x104] sm:$0xf]
      %v8552 = vld [vmem:[%s11 + $0x108] sm:$0xf]
      %v8553 = vld [vmem:[%s11 + $0x10c] sm:$0xf]
      %v8554 = vld [vmem:[%s11 + $0x110] sm:$0xf]
      %v8555 = vld [vmem:[%s11 + $0x114] sm:$0xf]
      %v8556 = vld [vmem:[%s11 + $0x118] sm:$0xf]
      %v8557 = vld [vmem:[%s11 + $0x11c] sm:$0xf]
      %v8558 = vld [vmem:[%s11 + $0x120] sm:$0xf]
      %v8559 = vld [vmem:[%s11 + $0x124] sm:$0xf]
      %v8560 = vld [vmem:[%s11 + $0x128] sm:$0xf]
      %v8561 = vld [vmem:[%s11 + $0x12c] sm:$0xf]
      %v8562 = vld [vmem:[%s11 + $0x130] sm:$0xf]
      %v8563 = vld [vmem:[%s11 + $0x134] sm:$0xf]
      %v8564 = vld [vmem:[%s11 + $0x138] sm:$0xf]
      %v8565 = vld [vmem:[%s11 + $0x13c] sm:$0xf]
      %v8566 = vld [vmem:[%s11 + $0x140] sm:$0xf]
      %v8567 = vld [vmem:[%s11 + $0x144] sm:$0xf]
      %v8568 = vld [vmem:[%s11 + $0x148] sm:$0xf]
      %v8569 = vld [vmem:[%s11 + $0x14c] sm:$0xf]
      %v8570 = vld [vmem:[%s11 + $0x150] sm:$0xf]
      %v8571 = vld [vmem:[%s11 + $0x154] sm:$0xf]
      %v8572 = vld [vmem:[%s11 + $0x158] sm:$0xf]
      %v8573 = vld [vmem:[%s11 + $0x15c] sm:$0xf]
      %v8574 = vld [vmem:[%s11 + $0x160] sm:$0xf]
      %v8575 = vld [vmem:[%s11 + $0x164] sm:$0xf]
      %v8576 = vld [vmem:[%s11 + $0x168] sm:$0xf]
      %v8577 = vld [vmem:[%s11 + $0x16c] sm:$0xf]
      %v8578 = vld [vmem:[%s11 + $0x170] sm:$0xf]
      %v8579 = vld [vmem:[%s11 + $0x174] sm:$0xf]
      %v8580 = vld [vmem:[%s11 + $0x178] sm:$0xf]
      %v8581 = vld [vmem:[%s11 + $0x17c] sm:$0xf]
      %v8582 = vld [vmem:[%s11 + $0x180] sm:$0xf]
      %v8583 = vld [vmem:[%s11 + $0x184] sm:$0xf]
      %v8584 = vld [vmem:[%s11 + $0x188] sm:$0xf]
      %v8585 = vld [vmem:[%s11 + $0x18c] sm:$0xf]
      %v8586 = vld [vmem:[%s11 + $0x190] sm:$0xf]
      %v8587 = vld [vmem:[%s11 + $0x194] sm:$0xf]
      %v8588 = vld [vmem:[%s11 + $0x198] sm:$0xf]
      %v8589 = vld [vmem:[%s11 + $0x19c] sm:$0xf]
      %v8590 = vld [vmem:[%s11 + $0x1a0] sm:$0xf]
      %v8591 = vld [vmem:[%s11 + $0x1a4] sm:$0xf]
      %v8592 = vld [vmem:[%s11 + $0x1a8] sm:$0xf]
      %v8593 = vld [vmem:[%s11 + $0x1ac] sm:$0xf]
      %v8594 = vld [vmem:[%s11 + $0x1b0] sm:$0xf]
      %v8595 = vld [vmem:[%s11 + $0x1b4] sm:$0xf]
      %v8596 = vld [vmem:[%s11 + $0x1b8] sm:$0xf]
      %v8597 = vld [vmem:[%s11 + $0x1bc] sm:$0xf]
      %v8598 = vld [vmem:[%s11 + $0x1c0] sm:$0xf]
      %v8599 = vld [vmem:[%s11 + $0x1c4] sm:$0xf]
      %v8600 = vld [vmem:[%s11 + $0x1c8] sm:$0xf]
      %v8601 = vld [vmem:[%s11 + $0x1cc] sm:$0xf]
      %v8602 = vld [vmem:[%s11 + $0x1d0] sm:$0xf]
      %v8603 = vld [vmem:[%s11 + $0x1d4] sm:$0xf]
      %v8604 = vld [vmem:[%s11 + $0x1d8] sm:$0xf]
      %v8605 = vld [vmem:[%s11 + $0x1dc] sm:$0xf]
      %v8606 = vld [vmem:[%s11 + $0x1e0] sm:$0xf]
      %v8607 = vld [vmem:[%s11 + $0x1e4] sm:$0xf]
      %v8608 = vld [vmem:[%s11 + $0x1e8] sm:$0xf]
      %v8609 = vld [vmem:[%s11 + $0x1ec] sm:$0xf]
      %v8610 = vld [vmem:[%s11 + $0x1f0] sm:$0xf]
      %v8611 = vld [vmem:[%s11 + $0x1f4] sm:$0xf]
      %v8612 = vld [vmem:[%s11 + $0x1f8] sm:$0xf]
      %v8613 = vld [vmem:[%s11 + $0x1fc] sm:$0xf]
      %v8614 = vld [vmem:[%s11 + $0x200] sm:$0xf]
      %v8615 = vld [vmem:[%s11 + $0x204] sm:$0xf]
      %v8616 = vld [vmem:[%s11 + $0x208] sm:$0xf]
      %v8617 = vld [vmem:[%s11 + $0x20c] sm:$0xf]
      %v8618 = vld [vmem:[%s11 + $0x210] sm:$0xf]
      %v8619 = vld [vmem:[%s11 + $0x214] sm:$0xf]
      %v8620 = vld [vmem:[%s11 + $0x218] sm:$0xf]
      %v8621 = vld [vmem:[%s11 + $0x21c] sm:$0xf]
      %v8622 = vld [vmem:[%s11 + $0x220] sm:$0xf]
      %v8623 = vld [vmem:[%s11 + $0x224] sm:$0xf]
      %v8624 = vld [vmem:[%s11 + $0x228] sm:$0xf]
      %v8625 = vld [vmem:[%s11 + $0x22c] sm:$0xf]
      %v8626 = vld [vmem:[%s11 + $0x230] sm:$0xf]
      %v8627 = vld [vmem:[%s11 + $0x234] sm:$0xf]
      %v8628 = vld [vmem:[%s11 + $0x238] sm:$0xf]
      %v8629 = vld [vmem:[%s11 + $0x23c] sm:$0xf]
      %v8630 = vld [vmem:[%s12] sm:$0x1]
      %v8632 = vlaneseq
      %v8633 = vshrl.u32 %v8632, 7
      %v8634 = vsub.s32 0, %v8633
      %v8635 = vrot.slane %v8630, %v8634
      %v8781 = vunpack.c.l.b16 %v8486
      %v8782 = vunpack.c.l.b16 %v8487
      %v8783 = vunpack.c.l.b16 %v8488
      %v8784 = vunpack.c.l.b16 %v8489
      %v8785 = vunpack.c.l.b16 %v8490
      %v8786 = vunpack.c.l.b16 %v8491
      %v8787 = vunpack.c.l.b16 %v8492
      %v8788 = vunpack.c.l.b16 %v8493
      %v8789 = vunpack.c.l.b16 %v8494
      %v8790 = vunpack.c.l.b16 %v8495
      %v8791 = vunpack.c.l.b16 %v8496
      %v8792 = vunpack.c.l.b16 %v8497
      %v8793 = vunpack.c.l.b16 %v8498
      %v8794 = vunpack.c.l.b16 %v8499
      %v8795 = vunpack.c.l.b16 %v8500
      %v8796 = vunpack.c.l.b16 %v8501
      %v8797 = vunpack.c.l.b16 %v8502
      %v8798 = vunpack.c.l.b16 %v8503
      %v8799 = vunpack.c.l.b16 %v8504
      %v8800 = vunpack.c.l.b16 %v8505
      %v8801 = vunpack.c.l.b16 %v8506
      %v8802 = vunpack.c.l.b16 %v8507
      %v8803 = vunpack.c.l.b16 %v8508
      %v8804 = vunpack.c.l.b16 %v8509
      %v8805 = vunpack.c.l.b16 %v8510
      %v8806 = vunpack.c.l.b16 %v8511
      %v8807 = vunpack.c.l.b16 %v8512
      %v8808 = vunpack.c.l.b16 %v8513
      %v8809 = vunpack.c.l.b16 %v8514
      %v8810 = vunpack.c.l.b16 %v8515
      %v8811 = vunpack.c.l.b16 %v8516
      %v8812 = vunpack.c.l.b16 %v8517
      %v8813 = vunpack.c.l.b16 %v8518
      %v8814 = vunpack.c.l.b16 %v8519
      %v8815 = vunpack.c.l.b16 %v8520
      %v8816 = vunpack.c.l.b16 %v8521
      %v8817 = vunpack.c.l.b16 %v8522
      %v8818 = vunpack.c.l.b16 %v8523
      %v8819 = vunpack.c.l.b16 %v8524
      %v8820 = vunpack.c.l.b16 %v8525
      %v8821 = vunpack.c.l.b16 %v8526
      %v8822 = vunpack.c.l.b16 %v8527
      %v8823 = vunpack.c.l.b16 %v8528
      %v8824 = vunpack.c.l.b16 %v8529
      %v8825 = vunpack.c.l.b16 %v8530
      %v8826 = vunpack.c.l.b16 %v8531
      %v8827 = vunpack.c.l.b16 %v8532
      %v8828 = vunpack.c.l.b16 %v8533
      %v8829 = vunpack.c.l.b16 %v8534
      %v8830 = vunpack.c.l.b16 %v8535
      %v8831 = vunpack.c.l.b16 %v8536
      %v8832 = vunpack.c.l.b16 %v8537
      %v8833 = vunpack.c.l.b16 %v8538
      %v8834 = vunpack.c.l.b16 %v8539
      %v8835 = vunpack.c.l.b16 %v8540
      %v8836 = vunpack.c.l.b16 %v8541
      %v8837 = vunpack.c.l.b16 %v8542
      %v8838 = vunpack.c.l.b16 %v8543
      %v8839 = vunpack.c.l.b16 %v8544
      %v8840 = vunpack.c.l.b16 %v8545
      %v8841 = vunpack.c.l.b16 %v8546
      %v8842 = vunpack.c.l.b16 %v8547
      %v8843 = vunpack.c.l.b16 %v8548
      %v8844 = vunpack.c.l.b16 %v8549
      %v8845 = vunpack.c.l.b16 %v8550
      %v8846 = vunpack.c.l.b16 %v8551
      %v8847 = vunpack.c.l.b16 %v8552
      %v8848 = vunpack.c.l.b16 %v8553
      %v8849 = vunpack.c.l.b16 %v8554
      %v8850 = vunpack.c.l.b16 %v8555
      %v8851 = vunpack.c.l.b16 %v8556
      %v8852 = vunpack.c.l.b16 %v8557
      %v8853 = vunpack.c.l.b16 %v8558
      %v8854 = vunpack.c.l.b16 %v8559
      %v8855 = vunpack.c.l.b16 %v8560
      %v8856 = vunpack.c.l.b16 %v8561
      %v8857 = vunpack.c.l.b16 %v8562
      %v8858 = vunpack.c.l.b16 %v8563
      %v8859 = vunpack.c.l.b16 %v8564
      %v8860 = vunpack.c.l.b16 %v8565
      %v8861 = vunpack.c.l.b16 %v8566
      %v8862 = vunpack.c.l.b16 %v8567
      %v8863 = vunpack.c.l.b16 %v8568
      %v8864 = vunpack.c.l.b16 %v8569
      %v8865 = vunpack.c.l.b16 %v8570
      %v8866 = vunpack.c.l.b16 %v8571
      %v8867 = vunpack.c.l.b16 %v8572
      %v8868 = vunpack.c.l.b16 %v8573
      %v8869 = vunpack.c.l.b16 %v8574
      %v8870 = vunpack.c.l.b16 %v8575
      %v8871 = vunpack.c.l.b16 %v8576
      %v8872 = vunpack.c.l.b16 %v8577
      %v8873 = vunpack.c.l.b16 %v8578
      %v8874 = vunpack.c.l.b16 %v8579
      %v8875 = vunpack.c.l.b16 %v8580
      %v8876 = vunpack.c.l.b16 %v8581
      %v8877 = vunpack.c.l.b16 %v8582
      %v8878 = vunpack.c.l.b16 %v8583
      %v8879 = vunpack.c.l.b16 %v8584
      %v8880 = vunpack.c.l.b16 %v8585
      %v8881 = vunpack.c.l.b16 %v8586
      %v8882 = vunpack.c.l.b16 %v8587
      %v8883 = vunpack.c.l.b16 %v8588
      %v8884 = vunpack.c.l.b16 %v8589
      %v8885 = vunpack.c.l.b16 %v8590
      %v8886 = vunpack.c.l.b16 %v8591
      %v8887 = vunpack.c.l.b16 %v8592
      %v8888 = vunpack.c.l.b16 %v8593
      %v8889 = vunpack.c.l.b16 %v8594
      %v8890 = vunpack.c.l.b16 %v8595
      %v8891 = vunpack.c.l.b16 %v8596
      %v8892 = vunpack.c.l.b16 %v8597
      %v8893 = vunpack.c.l.b16 %v8598
      %v8894 = vunpack.c.l.b16 %v8599
      %v8895 = vunpack.c.l.b16 %v8600
      %v8896 = vunpack.c.l.b16 %v8601
      %v8897 = vunpack.c.l.b16 %v8602
      %v8898 = vunpack.c.l.b16 %v8603
      %v8899 = vunpack.c.l.b16 %v8604
      %v8900 = vunpack.c.l.b16 %v8605
      %v8901 = vunpack.c.l.b16 %v8606
      %v8902 = vunpack.c.l.b16 %v8607
      %v8903 = vunpack.c.l.b16 %v8608
      %v8904 = vunpack.c.l.b16 %v8609
      %v8905 = vunpack.c.l.b16 %v8610
      %v8906 = vunpack.c.l.b16 %v8611
      %v8907 = vunpack.c.l.b16 %v8612
      %v8908 = vunpack.c.l.b16 %v8613
      %v8909 = vunpack.c.l.b16 %v8614
      %v8910 = vunpack.c.l.b16 %v8615
      %v8911 = vunpack.c.l.b16 %v8616
      %v8912 = vunpack.c.l.b16 %v8617
      %v8913 = vunpack.c.l.b16 %v8618
      %v8914 = vunpack.c.l.b16 %v8619
      %v8915 = vunpack.c.l.b16 %v8620
      %v8916 = vunpack.c.l.b16 %v8621
      %v8917 = vunpack.c.l.b16 %v8622
      %v8918 = vunpack.c.l.b16 %v8623
      %v8919 = vunpack.c.l.b16 %v8624
      %v8920 = vunpack.c.l.b16 %v8625
      %v8921 = vunpack.c.l.b16 %v8626
      %v8922 = vunpack.c.l.b16 %v8627
      %v8923 = vunpack.c.l.b16 %v8628
      %v8924 = vunpack.c.l.b16 %v8629
      %v8925 = vpack.c.b16 %v8782, %v8781
      %v8926 = vpack.c.b16 %v8784, %v8783
      %v8927 = vpack.c.b16 %v8786, %v8785
      %v8928 = vpack.c.b16 %v8788, %v8787
      %v8929 = vpack.c.b16 %v8790, %v8789
      %v8930 = vpack.c.b16 %v8792, %v8791
      %v8931 = vpack.c.b16 %v8794, %v8793
      %v8932 = vpack.c.b16 %v8796, %v8795
      %v8933 = vpack.c.b16 %v8798, %v8797
      %v8934 = vpack.c.b16 %v8800, %v8799
      %v8935 = vpack.c.b16 %v8802, %v8801
      %v8936 = vpack.c.b16 %v8804, %v8803
      %v8937 = vpack.c.b16 %v8806, %v8805
      %v8938 = vpack.c.b16 %v8808, %v8807
      %v8939 = vpack.c.b16 %v8810, %v8809
      %v8940 = vpack.c.b16 %v8812, %v8811
      %v8941 = vpack.c.b16 %v8814, %v8813
      %v8942 = vpack.c.b16 %v8816, %v8815
      %v8943 = vpack.c.b16 %v8818, %v8817
      %v8944 = vpack.c.b16 %v8820, %v8819
      %v8945 = vpack.c.b16 %v8822, %v8821
      %v8946 = vpack.c.b16 %v8824, %v8823
      %v8947 = vpack.c.b16 %v8826, %v8825
      %v8948 = vpack.c.b16 %v8828, %v8827
      %v8949 = vpack.c.b16 %v8830, %v8829
      %v8950 = vpack.c.b16 %v8832, %v8831
      %v8951 = vpack.c.b16 %v8834, %v8833
      %v8952 = vpack.c.b16 %v8836, %v8835
      %v8953 = vpack.c.b16 %v8838, %v8837
      %v8954 = vpack.c.b16 %v8840, %v8839
      %v8955 = vpack.c.b16 %v8842, %v8841
      %v8956 = vpack.c.b16 %v8844, %v8843
      %v8957 = vpack.c.b16 %v8846, %v8845
      %v8958 = vpack.c.b16 %v8848, %v8847
      %v8959 = vpack.c.b16 %v8850, %v8849
      %v8960 = vpack.c.b16 %v8852, %v8851
      %v8961 = vpack.c.b16 %v8854, %v8853
      %v8962 = vpack.c.b16 %v8856, %v8855
      %v8963 = vpack.c.b16 %v8858, %v8857
      %v8964 = vpack.c.b16 %v8860, %v8859
      %v8965 = vpack.c.b16 %v8862, %v8861
      %v8966 = vpack.c.b16 %v8864, %v8863
      %v8967 = vpack.c.b16 %v8866, %v8865
      %v8968 = vpack.c.b16 %v8868, %v8867
      %v8969 = vpack.c.b16 %v8870, %v8869
      %v8970 = vpack.c.b16 %v8872, %v8871
      %v8971 = vpack.c.b16 %v8874, %v8873
      %v8972 = vpack.c.b16 %v8876, %v8875
      %v8973 = vpack.c.b16 %v8878, %v8877
      %v8974 = vpack.c.b16 %v8880, %v8879
      %v8975 = vpack.c.b16 %v8882, %v8881
      %v8976 = vpack.c.b16 %v8884, %v8883
      %v8977 = vpack.c.b16 %v8886, %v8885
      %v8978 = vpack.c.b16 %v8888, %v8887
      %v8979 = vpack.c.b16 %v8890, %v8889
      %v8980 = vpack.c.b16 %v8892, %v8891
      %v8981 = vpack.c.b16 %v8894, %v8893
      %v8982 = vpack.c.b16 %v8896, %v8895
      %v8983 = vpack.c.b16 %v8898, %v8897
      %v8984 = vpack.c.b16 %v8900, %v8899
      %v8985 = vpack.c.b16 %v8902, %v8901
      %v8986 = vpack.c.b16 %v8904, %v8903
      %v8987 = vpack.c.b16 %v8906, %v8905
      %v8988 = vpack.c.b16 %v8908, %v8907
      %v8989 = vpack.c.b16 %v8910, %v8909
      %v8990 = vpack.c.b16 %v8912, %v8911
      %v8991 = vpack.c.b16 %v8914, %v8913
      %v8992 = vpack.c.b16 %v8916, %v8915
      %v8993 = vpack.c.b16 %v8918, %v8917
      %v8994 = vpack.c.b16 %v8920, %v8919
      %v8995 = vpack.c.b16 %v8922, %v8921
      %v8996 = vpack.c.b16 %v8924, %v8923
      %9069 = vmatprep.subr.bf16.mxu0 0
      %9070 = vmatpush1.bf16.msra.mxu0 %v8925
      %9071 = vmatprep.subr.bf16.mxu0 0
      %9072 = vmatpush1.bf16.msra.mxu0 %v8926
      %9073 = vmatprep.subr.bf16.mxu0 0
      %9074 = vmatpush1.bf16.msra.mxu0 %v8927
      %9075 = vmatprep.subr.bf16.mxu0 0
      %9076 = vmatpush1.bf16.msra.mxu0 %v8928
      %9077 = vmatprep.subr.bf16.mxu0 0
      %9078 = vmatpush1.bf16.msra.mxu0 %v8929
      %9079 = vmatprep.subr.bf16.mxu0 0
      %9080 = vmatpush1.bf16.msra.mxu0 %v8930
      %9081 = vmatprep.subr.bf16.mxu0 0
      %9082 = vmatpush1.bf16.msra.mxu0 %v8931
      %9083 = vmatprep.subr.bf16.mxu0 0
      %9084 = vmatpush1.bf16.msra.mxu0 %v8932
      %9085 = vmatprep.subr.bf16.mxu0 0
      %9086 = vmatpush1.bf16.msra.mxu0 %v8933
      %9087 = vmatprep.subr.bf16.mxu0 0
      %9088 = vmatpush1.bf16.msra.mxu0 %v8934
      %9089 = vmatprep.subr.bf16.mxu0 0
      %9090 = vmatpush1.bf16.msra.mxu0 %v8935
      %9091 = vmatprep.subr.bf16.mxu0 0
      %9092 = vmatpush1.bf16.msra.mxu0 %v8936
      %9093 = vmatprep.subr.bf16.mxu0 0
      %9094 = vmatpush1.bf16.msra.mxu0 %v8937
      %9095 = vmatprep.subr.bf16.mxu0 0
      %9096 = vmatpush1.bf16.msra.mxu0 %v8938
      %9097 = vmatprep.subr.bf16.mxu0 0
      %9098 = vmatpush1.bf16.msra.mxu0 %v8939
      %9099 = vmatprep.subr.bf16.mxu0 0
      %9100 = vmatpush1.bf16.msra.mxu0 %v8940
      %9101 = vmatprep.mubr.bf16.mxu0 %v8358
      %9102 = vmatmul.mubr.bf16.gmra.mrb[0].mxu0 %v8340
      %v9103 = vpop.f32.mrb[0].mxu0
      %v9104 = vadd.f32 %v8635, %v9103
      %v9105 = vpop.f32.mrb[0].mxu0
      %v9106 = vpop.f32.mrb[0].mxu0
      %v9107 = vadd.f32 %v8635, %v9106
      %v9108 = vpop.f32.mrb[0].mxu0
      %9109 = vdwg.mxu0
      %9110 = vmatprep.subr.bf16.mxu0 0
      %9111 = vmatpush1.bf16.msra.mxu0 %v8941
      %9112 = vmatprep.subr.bf16.mxu0 0
      %9113 = vmatpush1.bf16.msra.mxu0 %v8942
      %9114 = vmatprep.subr.bf16.mxu0 0
      %9115 = vmatpush1.bf16.msra.mxu0 %v8943
      %9116 = vmatprep.subr.bf16.mxu0 0
      %9117 = vmatpush1.bf16.msra.mxu0 %v8944
      %9118 = vmatprep.subr.bf16.mxu0 0
      %9119 = vmatpush1.bf16.msra.mxu0 %v8945
      %9120 = vmatprep.subr.bf16.mxu0 0
      %9121 = vmatpush1.bf16.msra.mxu0 %v8946
      %9122 = vmatprep.subr.bf16.mxu0 0
      %9123 = vmatpush1.bf16.msra.mxu0 %v8947
      %9124 = vmatprep.subr.bf16.mxu0 0
      %9125 = vmatpush1.bf16.msra.mxu0 %v8948
      %9126 = vmatprep.subr.bf16.mxu0 0
      %9127 = vmatpush1.bf16.msra.mxu0 %v8949
      %9128 = vmatprep.subr.bf16.mxu0 0
      %9129 = vmatpush1.bf16.msra.mxu0 %v8950
      %9130 = vmatprep.subr.bf16.mxu0 0
      %9131 = vmatpush1.bf16.msra.mxu0 %v8951
      %9132 = vmatprep.subr.bf16.mxu0 0
      %9133 = vmatpush1.bf16.msra.mxu0 %v8952
      %9134 = vmatprep.subr.bf16.mxu0 0
      %9135 = vmatpush1.bf16.msra.mxu0 %v8953
      %9136 = vmatprep.subr.bf16.mxu0 0
      %9137 = vmatpush1.bf16.msra.mxu0 %v8954
      %9138 = vmatprep.subr.bf16.mxu0 0
      %9139 = vmatpush1.bf16.msra.mxu0 %v8955
      %9140 = vmatprep.subr.bf16.mxu0 0
      %9141 = vmatpush1.bf16.msra.mxu0 %v8956
      %9142 = vmatprep.mubr.bf16.mxu0 %v8394
      %9143 = vmatmul.mubr.bf16.gmra.mrb[0].mxu0 %v8376
      %v9144 = vpop.f32.mrb[0].mxu0
      %v9145 = vadd.f32 %v9104, %v9144
      %v9146 = vpop.f32.mrb[0].mxu0
      %v9147 = vpop.f32.mrb[0].mxu0
      %v9148 = vadd.f32 %v9107, %v9147
      %v9149 = vpop.f32.mrb[0].mxu0
      %9150 = vdwg.mxu0
      %9151 = vmatprep.subr.bf16.mxu0 0
      %9152 = vmatpush1.bf16.msra.mxu0 %v8957
      %9153 = vmatprep.subr.bf16.mxu0 0
      %9154 = vmatpush1.bf16.msra.mxu0 %v8958
      %9155 = vmatprep.subr.bf16.mxu0 0
      %9156 = vmatpush1.bf16.msra.mxu0 %v8959
      %9157 = vmatprep.subr.bf16.mxu0 0
      %9158 = vmatpush1.bf16.msra.mxu0 %v8960
      %9159 = vmatprep.subr.bf16.mxu0 0
      %9160 = vmatpush1.bf16.msra.mxu0 %v8961
      %9161 = vmatprep.subr.bf16.mxu0 0
      %9162 = vmatpush1.bf16.msra.mxu0 %v8962
      %9163 = vmatprep.subr.bf16.mxu0 0
      %9164 = vmatpush1.bf16.msra.mxu0 %v8963
      %9165 = vmatprep.subr.bf16.mxu0 0
      %9166 = vmatpush1.bf16.msra.mxu0 %v8964
      %9167 = vmatprep.subr.bf16.mxu0 0
      %9168 = vmatpush1.bf16.msra.mxu0 %v8965
      %9169 = vmatprep.subr.bf16.mxu0 0
      %9170 = vmatpush1.bf16.msra.mxu0 %v8966
      %9171 = vmatprep.subr.bf16.mxu0 0
      %9172 = vmatpush1.bf16.msra.mxu0 %v8967
      %9173 = vmatprep.subr.bf16.mxu0 0
      %9174 = vmatpush1.bf16.msra.mxu0 %v8968
      %9175 = vmatprep.subr.bf16.mxu0 0
      %9176 = vmatpush1.bf16.msra.mxu0 %v8969
      %9177 = vmatprep.subr.bf16.mxu0 0
      %9178 = vmatpush1.bf16.msra.mxu0 %v8970
      %9179 = vmatprep.subr.bf16.mxu0 0
      %9180 = vmatpush1.bf16.msra.mxu0 %v8971
      %9181 = vmatprep.subr.bf16.mxu0 0
      %9182 = vmatpush1.bf16.msra.mxu0 %v8972
      %9183 = vmatprep.mubr.bf16.mxu0 %v8430
      %9184 = vmatmul.mubr.bf16.gmra.mrb[0].mxu0 %v8412
      %v9185 = vpop.f32.mrb[0].mxu0
      %v9186 = vadd.f32 %v9145, %v9185
      %v9187 = vpop.f32.mrb[0].mxu0
      %v9188 = vpop.f32.mrb[0].mxu0
      %v9189 = vadd.f32 %v9148, %v9188
      %v9190 = vpop.f32.mrb[0].mxu0
      %9191 = vdwg.mxu0
      %9192 = vmatprep.subr.bf16.mxu0 0
      %9193 = vmatpush1.bf16.msra.mxu0 %v8973
      %9194 = vmatprep.subr.bf16.mxu0 0
      %9195 = vmatpush1.bf16.msra.mxu0 %v8974
      %9196 = vmatprep.subr.bf16.mxu0 0
      %9197 = vmatpush1.bf16.msra.mxu0 %v8975
      %9198 = vmatprep.subr.bf16.mxu0 0
      %9199 = vmatpush1.bf16.msra.mxu0 %v8976
      %9200 = vmatprep.subr.bf16.mxu0 0
      %9201 = vmatpush1.bf16.msra.mxu0 %v8977
      %9202 = vmatprep.subr.bf16.mxu0 0
      %9203 = vmatpush1.bf16.msra.mxu0 %v8978
      %9204 = vmatprep.subr.bf16.mxu0 0
      %9205 = vmatpush1.bf16.msra.mxu0 %v8979
      %9206 = vmatprep.subr.bf16.mxu0 0
      %9207 = vmatpush1.bf16.msra.mxu0 %v8980
      %9208 = vmatprep.subr.bf16.mxu0 0
      %9209 = vmatpush1.bf16.msra.mxu0 %v8981
      %9210 = vmatprep.subr.bf16.mxu0 0
      %9211 = vmatpush1.bf16.msra.mxu0 %v8982
      %9212 = vmatprep.subr.bf16.mxu0 0
      %9213 = vmatpush1.bf16.msra.mxu0 %v8983
      %9214 = vmatprep.subr.bf16.mxu0 0
      %9215 = vmatpush1.bf16.msra.mxu0 %v8984
      %9216 = vmatprep.subr.bf16.mxu0 0
      %9217 = vmatpush1.bf16.msra.mxu0 %v8985
      %9218 = vmatprep.subr.bf16.mxu0 0
      %9219 = vmatpush1.bf16.msra.mxu0 %v8986
      %9220 = vmatprep.subr.bf16.mxu0 0
      %9221 = vmatpush1.bf16.msra.mxu0 %v8987
      %9222 = vmatprep.subr.bf16.mxu0 0
      %9223 = vmatpush1.bf16.msra.mxu0 %v8988
      %9224 = vmatprep.mubr.bf16.mxu0 %v8466
      %9225 = vmatmul.mubr.bf16.gmra.mrb[0].mxu0 %v8448
      %v9226 = vpop.f32.mrb[0].mxu0
      %v9227 = vadd.f32 %v9186, %v9226
      %v9228 = vpop.f32.mrb[0].mxu0
      %v9229 = vpop.f32.mrb[0].mxu0
      %v9230 = vadd.f32 %v9189, %v9229
      %v9231 = vpop.f32.mrb[0].mxu0
      %9232 = vdwg.mxu0
      %9233 = vmatprep.subr.bf16.mxu0 0
      %9234 = vmatpush1.bf16.msra.mxu0 %v8989
      %9235 = vmatprep.subr.bf16.mxu0 0
      %9236 = vmatpush1.bf16.msra.mxu0 %v8990
      %9237 = vmatprep.subr.bf16.mxu0 0
      %9238 = vmatpush1.bf16.msra.mxu0 %v8991
      %9239 = vmatprep.subr.bf16.mxu0 0
      %9240 = vmatpush1.bf16.msra.mxu0 %v8992
      %9241 = vmatprep.subr.bf16.mxu0 0
      %9242 = vmatpush1.bf16.msra.mxu0 %v8993
      %9243 = vmatprep.subr.bf16.mxu0 0
      %9244 = vmatpush1.bf16.msra.mxu0 %v8994
      %9245 = vmatprep.subr.bf16.mxu0 0
      %9246 = vmatpush1.bf16.msra.mxu0 %v8995
      %9247 = vmatprep.subr.bf16.mxu0 0
      %9248 = vmatpush1.bf16.msra.mxu0 %v8996
      %9249 = vmatprep.subr.bf16.mxu0 0
      %9250 = vmatpush1.bf16.msra.mxu0 0
      %9251 = vmatprep.subr.bf16.mxu0 0
      %9252 = vmatpush1.bf16.msra.mxu0 0
      %9253 = vmatprep.subr.bf16.mxu0 0
      %9254 = vmatpush1.bf16.msra.mxu0 0
      %9255 = vmatprep.subr.bf16.mxu0 0
      %9256 = vmatpush1.bf16.msra.mxu0 0
      %9257 = vmatprep.subr.bf16.mxu0 0
      %9258 = vmatpush1.bf16.msra.mxu0 0
      %9259 = vmatprep.subr.bf16.mxu0 0
      %9260 = vmatpush1.bf16.msra.mxu0 0
      %9261 = vmatprep.subr.bf16.mxu0 0
      %9262 = vmatpush1.bf16.msra.mxu0 0
      %9263 = vmatprep.subr.bf16.mxu0 0
      %9264 = vmatpush1.bf16.msra.mxu0 0
      %9265 = vmatprep.mubr.bf16.mxu0 0
      %9266 = vmatmul.mubr.bf16.gmra.mrb[0].mxu0 %v8484
      %v9267 = vpop.f32.mrb[0].mxu0
      %v9268 = vadd.f32 %v9227, %v9267
      %v9269 = vpop.f32.mrb[0].mxu0
      %v9270 = vpop.f32.mrb[0].mxu0
      %v9271 = vadd.f32 %v9230, %v9270
      %v9272 = vpop.f32.mrb[0].mxu0
      %9273 = vdwg.mxu0
      %v9274 = vmax.f32 %v9268, 0.0
      %v9275 = vmax.f32 %v9271, 0.0
      %v9276 = vpack.c.bf16 %v9275, %v9274
      %v9277 = vld [vmem:[%s13] sm:$0xf]
      %v9278 = vld [vmem:[%s13 + $0x4] sm:$0xf]
      %v9279 = vld [vmem:[%s13 + $0x8] sm:$0xf]
      %v9280 = vld [vmem:[%s13 + $0xc] sm:$0xf]
      %v9281 = vld [vmem:[%s13 + $0x10] sm:$0xf]
      %v9282 = vld [vmem:[%s13 + $0x14] sm:$0xf]
      %v9283 = vld [vmem:[%s13 + $0x18] sm:$0xf]
      %v9284 = vld [vmem:[%s13 + $0x1c] sm:$0xf]
      %v9285 = vld [vmem:[%s13 + $0x20] sm:$0xf]
      %v9286 = vld [vmem:[%s13 + $0x24] sm:$0xf]
      %v9287 = vld [vmem:[%s13 + $0x28] sm:$0xf]
      %v9288 = vld [vmem:[%s13 + $0x2c] sm:$0xf]
      %v9289 = vld [vmem:[%s13 + $0x30] sm:$0xf]
      %v9290 = vld [vmem:[%s13 + $0x34] sm:$0xf]
      %v9291 = vld [vmem:[%s13 + $0x38] sm:$0xf]
      %v9292 = vld [vmem:[%s13 + $0x3c] sm:$0xf]
      %v9293 = vld [vmem:[%s14] sm:$0x1]
      %v9295 = vlaneseq
      %v9296 = vshrl.u32 %v9295, 7
      %v9297 = vsub.s32 0, %v9296
      %v9298 = vrot.slane %v9293, %v9297
      %v9316 = vunpack.c.l.b16 %v9277
      %v9317 = vunpack.c.l.b16 %v9278
      %v9318 = vunpack.c.l.b16 %v9279
      %v9319 = vunpack.c.l.b16 %v9280
      %v9320 = vunpack.c.l.b16 %v9281
      %v9321 = vunpack.c.l.b16 %v9282
      %v9322 = vunpack.c.l.b16 %v9283
      %v9323 = vunpack.c.l.b16 %v9284
      %v9324 = vunpack.c.l.b16 %v9285
      %v9325 = vunpack.c.l.b16 %v9286
      %v9326 = vunpack.c.l.b16 %v9287
      %v9327 = vunpack.c.l.b16 %v9288
      %v9328 = vunpack.c.l.b16 %v9289
      %v9329 = vunpack.c.l.b16 %v9290
      %v9330 = vunpack.c.l.b16 %v9291
      %v9331 = vunpack.c.l.b16 %v9292
      %v9332 = vpack.c.b16 %v9317, %v9316
      %v9333 = vpack.c.b16 %v9319, %v9318
      %v9334 = vpack.c.b16 %v9321, %v9320
      %v9335 = vpack.c.b16 %v9323, %v9322
      %v9336 = vpack.c.b16 %v9325, %v9324
      %v9337 = vpack.c.b16 %v9327, %v9326
      %v9338 = vpack.c.b16 %v9329, %v9328
      %v9339 = vpack.c.b16 %v9331, %v9330
      %9348 = vmatprep.subr.bf16.mxu0 0
      %9349 = vmatpush1.bf16.msra.mxu0 %v9332
      %9350 = vmatprep.subr.bf16.mxu0 0
      %9351 = vmatpush1.bf16.msra.mxu0 %v9333
      %9352 = vmatprep.subr.bf16.mxu0 0
      %9353 = vmatpush1.bf16.msra.mxu0 %v9334
      %9354 = vmatprep.subr.bf16.mxu0 0
      %9355 = vmatpush1.bf16.msra.mxu0 %v9335
      %9356 = vmatprep.subr.bf16.mxu0 0
      %9357 = vmatpush1.bf16.msra.mxu0 %v9336
      %9358 = vmatprep.subr.bf16.mxu0 0
      %9359 = vmatpush1.bf16.msra.mxu0 %v9337
      %9360 = vmatprep.subr.bf16.mxu0 0
      %9361 = vmatpush1.bf16.msra.mxu0 %v9338
      %9362 = vmatprep.subr.bf16.mxu0 0
      %9363 = vmatpush1.bf16.msra.mxu0 %v9339
      %9364 = vmatprep.subr.bf16.mxu0 0
      %9365 = vmatpush1.bf16.msra.mxu0 0
      %9366 = vmatprep.subr.bf16.mxu0 0
      %9367 = vmatpush1.bf16.msra.mxu0 0
      %9368 = vmatprep.subr.bf16.mxu0 0
      %9369 = vmatpush1.bf16.msra.mxu0 0
      %9370 = vmatprep.subr.bf16.mxu0 0
      %9371 = vmatpush1.bf16.msra.mxu0 0
      %9372 = vmatprep.subr.bf16.mxu0 0
      %9373 = vmatpush1.bf16.msra.mxu0 0
      %9374 = vmatprep.subr.bf16.mxu0 0
      %9375 = vmatpush1.bf16.msra.mxu0 0
      %9376 = vmatprep.subr.bf16.mxu0 0
      %9377 = vmatpush1.bf16.msra.mxu0 0
      %9378 = vmatprep.subr.bf16.mxu0 0
      %9379 = vmatpush1.bf16.msra.mxu0 0
      %9380 = vmatprep.mubr.bf16.mxu0 0
      %9381 = vmatmul.mubr.bf16.gmra.mrb[0].mxu0 %v9276
      %v9382 = vpop.f32.mrb[0].mxu0
      %v9383 = vadd.f32 %v9298, %v9382
      %v9384 = vpop.f32.mrb[0].mxu0
      %v9385 = vpop.f32.mrb[0].mxu0
      %v9386 = vadd.f32 %v9298, %v9385
      %v9387 = vpop.f32.mrb[0].mxu0
      %9388 = vdwg.mxu0
      %v9391 = vcombine.high %v9383, %v9383
      %v9392 = vcombine.high %v9386, %v9386
      %9395 = vst [vmem:[%s494] sm:$0xf] %v9383
      %9396 = vst [vmem:[%s494 + $0x4] sm:$0xf] %v9391
      %9397 = vst [vmem:[%s494 + $0x8] sm:$0xf] %v9386
      %9398 = vst [vmem:[%s494 + $0xc] sm:$0xf] %v9392
      %p9399 = scmp.lt.s32.totalorder %s26, 1
      %s9400 = scalar_select %p9399, %s26, 1
      %s9401 = smul.addr %s9400, 4
      %s9402 = smul.addr %s9401, 4
      %s9403 = scalar_lea.vmem %s15, %s9402
      // Predicated region
      $region81: #{jakab_conv_net.1} parent=79 // pred_check
        %p9404 = pneg %p364
      $region82: #{jakab_conv_net.1} parent=79 // pred_check_branch
        %9406 = sbr.rel (%p9404) target = $region84
      $region83: #{jakab_conv_net.1} parent=79 // pred_region
        _
      $region84: #{jakab_conv_net.1} parent=79 // pred_fallthru
        _
    $region80: #{jakab_conv_net.1} parent=5 // pred_fallthru
      _
    %p9407 = scmp.le.s32.totalorder 2, %s21
    // Predicated region
    $region85: #{jakab_conv_net.1} parent=5 // pred_check
      %p9408 = pneg %p9407
    $region86: #{jakab_conv_net.1} parent=5 // pred_check_branch
      %9410 = sbr.rel (%p9408) target = $region88
    $region87: #{jakab_conv_net.1} parent=5 // pred_region
      %s9411 = ssub.s32 %s21, 2
      // Predicated region
      $region89: #{jakab_conv_net.1} parent=87 // pred_check
        %p9412 = pneg %p370
      $region90: #{jakab_conv_net.1} parent=87 // pred_check_branch
        %9414 = sbr.rel (%p9412) target = $region92
      $region91: #{jakab_conv_net.1} parent=87 // pred_region
        %p9415 = scmp.lt.s32.totalorder %s27, 1
        %s9416 = scalar_select %p9415, %s27, 1
        %s9417 = smul.addr %s9416, 4
        %s9418 = smul.addr %s9417, 4
        %s9419 = scalar_lea.vmem %s15, %s9418
      $region92: #{jakab_conv_net.1} parent=87 // pred_fallthru
        _
    $region88: #{jakab_conv_net.1} parent=5 // pred_fallthru
      _
  $region6: #{jakab_conv_net.1} parent=0 // loop_footer
    %s25 = sadd.s32 1, %s21
  $region7: #{jakab_conv_net.1} parent=0 // loop_footer_branch
    %20 = sbr.rel target = $region3
  $region8: #{jakab_conv_net.1} parent=0 // loop_exit
    _

</llo_original>
